<compile_context>
chip_gen: v7x
topology: tpu7x:2x2x1
jax: 0.10.0
libtpu: 0.0.40
codegen_flags: <defaults>
</compile_context>

<pallas_src>
import math
import jax
import jax.numpy as jnp
from jax.experimental import pallas as pl
from jax.experimental.pallas import tpu as pltpu

_MIB = 1024 * 1024

# For output phase r (rows) / s (cols), conv tap ky reads input row offset
# _TAP_OFFSET[r][ky]; duplicate offsets fold into 2 distinct taps per axis.
_TAP_OFFSET = ((-1, 0, 0), (0, 0, 1))
_FOLD_GROUPS = (
    ((0,), (1, 2)),   # phase 0: folded tap 0 <- ky=0 (off -1); tap 1 <- ky=1,2 (off 0)
    ((0, 1), (2,)),   # phase 1: folded tap 0 <- ky=0,1 (off 0); tap 1 <- ky=2 (off +1)
)


def _fold_weights(weight, dtype):
    """OIHW (Co, C, 3, 3) -> (2, 2, 4*C, Co) per-phase folded 2x2-tap weights."""
    w = jnp.transpose(weight, (2, 3, 1, 0)).astype(jnp.float32)  # (ky, kx, C, Co)
    phase_rows = []
    for r in range(2):
        phase_cols = []
        for s in range(2):
            taps = []
            for ty in range(2):
                for tx in range(2):
                    acc = 0.0
                    for ky in _FOLD_GROUPS[r][ty]:
                        for kx in _FOLD_GROUPS[s][tx]:
                            acc = acc + w[ky, kx]
                    taps.append(acc)                            # (C, Co)
            phase_cols.append(jnp.concatenate(taps, axis=0))    # (4C, Co), order ty*2+tx
        phase_rows.append(jnp.stack(phase_cols, axis=0))        # (2, 4C, Co)
    return jnp.stack(phase_rows, axis=0).astype(dtype)          # (2, 2, 4C, Co)


def _upsample_conv_kernel(x_ref, wf_ref, b_ref, o_ref, xpad_ref):
    # x_ref:    (Nb, H, W, C)         input images, channels-last
    # wf_ref:   (2, 2, 4*C, Co)       folded per-phase weights (compute dtype)
    # b_ref:    (1, Co)               bias (f32)
    # o_ref:    (Nb, H, 2, W, 2*Co)   sub-pixel output; free reshape to (2H, 2W, Co)
    # xpad_ref: (Nb, H+2, W+2, C)     VMEM scratch (compute dtype) with zero border
    Nb, H, W, C = x_ref.shape
    Co = b_ref.shape[-1]
    M = Nb * H * W

    # Zero only the 1-pixel border; the interior is fully overwritten below.
    # (Kept unconditional: see header note about megacore-sharded grids.)
    xpad_ref[:, 0, :, :] = jnp.zeros((Nb, W + 2, C), xpad_ref.dtype)
    xpad_ref[:, H + 1, :, :] = jnp.zeros((Nb, W + 2, C), xpad_ref.dtype)
    xpad_ref[:, :, 0, :] = jnp.zeros((Nb, H + 2, C), xpad_ref.dtype)
    xpad_ref[:, :, W + 1, :] = jnp.zeros((Nb, H + 2, C), xpad_ref.dtype)
    xpad_ref[:, 1:H + 1, 1:W + 1, :] = x_ref[...].astype(xpad_ref.dtype)

    bias = b_ref[...].astype(jnp.float32)   # (1, Co)

    def patch(y0, x0):
        # Shifted (Nb, H, W, C) window out of the padded scratch, as matmul LHS.
        return xpad_ref[:, y0:y0 + H, x0:x0 + W, :].reshape(M, C)

    small_c = C < 128
    for r in range(2):
        for s in range(2):
            if small_c:
                # Small C: one big-K matmul per phase (K = 4C fills the MXU).
                p = jnp.concatenate(
                    [patch(r + ty, s + tx) for ty in range(2) for tx in range(2)],
                    axis=-1)                                     # (M, 4C)
                acc = jnp.dot(p, wf_ref[r, s],
                              preferred_element_type=jnp.float32)
            else:
                # Large C: 4 accumulating K=C matmuls, no (M, 4C) intermediate.
                acc = None
                for t, (ty, tx) in enumerate(((0, 0), (0, 1), (1, 0), (1, 1))):
                    part = jnp.dot(patch(r + ty, s + tx),
                                   wf_ref[r, s, t * C:(t + 1) * C, :],
                                   preferred_element_type=jnp.float32)
                    acc = part if acc is None else acc + part
            acc = acc + bias
            # Lane-dense store: last two dims of o_ref are (W, 2*Co).
            o_ref[:, :, r, :, s * Co:(s + 1) * Co] = (
                acc.reshape(Nb, H, W, Co).astype(o_ref.dtype))


def _upsample_nn_kernel(x_ref, o_ref):
    # Pure nearest-neighbour 2x upsample, written into the transpose-free
    # sub-pixel layout (Nb, H, 2, W, 2*C): two dense stores per step.
    x = x_ref[...]
    xx = jnp.concatenate([x, x], axis=-1)        # (Nb, H, W, 2*C)
    for r in range(2):
        o_ref[:, :, r, :, :] = xx


def _vmem_cap_bytes():
    """Per-generation usable-VMEM cap (~85% of physical), with a safe fallback."""
    try:
        cap = int(pltpu.get_tpu_info().vmem_capacity_bytes)
    except Exception:
        cap = 64 * _MIB            # conservative (v7x per-core VMEM)
    return min(max(int(0.85 * cap), 32 * _MIB), 128 * _MIB)


def _pick_images_per_step(n, per_image_bytes, budget_bytes):
    nb = 1
    for cand in range(1, n + 1):
        if n % cand == 0 and cand * per_image_bytes <= budget_bytes:
            nb = cand
    return nb


def upsample_forward_nhwc(x, weight=None, bias=None, *, with_conv=True,
                          compute_dtype=jnp.bfloat16):
    """2x nearest upsample (+ optional 3x3 conv, pad=1). x: (N, H, W, C), NHWC."""
    N, H, W, C = x.shape
    in_item = jnp.dtype(x.dtype).itemsize
    cap = _vmem_cap_bytes()

    if with_conv:
        Co = weight.shape[0]
        c_item = jnp.dtype(compute_dtype).itemsize
        wf = _fold_weights(weight, compute_dtype)              # (2, 2, 4C, Co)
        b_k = bias.reshape(1, Co).astype(jnp.float32)

        im2col_bytes = (H * W * 4 * C * c_item) if C < 128 else (H * W * C * c_item)
        per_img = (2 * H * W * C * in_item                     # double-buffered input
                   + 2 * H * 2 * W * 2 * Co * in_item          # double-buffered output
                   + (H + 2) * (W + 2) * C * c_item            # padded scratch
                   + im2col_bytes                              # per-phase patch buffer
                   + H * W * Co * 4)                           # f32 accumulator
        nb = _pick_images_per_step(N, per_img, cap // 2)
        need = int(1.25 * (nb * per_img + 2 * wf.size * c_item + b_k.size * 4))
        vmem_limit = int(min(max(need, 16 * _MIB), cap))

        cost = pl.CostEstimate(
            flops=2 * N * 4 * H * W * (4 * C) * Co,
            transcendentals=0,
            bytes_accessed=(x.size * in_item + wf.size * c_item + b_k.size * 4
                            + N * H * 2 * W * 2 * Co * in_item),
        )
        out = pl.pallas_call(
            _upsample_conv_kernel,
            out_shape=jax.ShapeDtypeStruct((N, H, 2, W, 2 * Co), x.dtype),
            grid_spec=pltpu.PrefetchScalarGridSpec(
                num_scalar_prefetch=0,
                grid=(N // nb,),
                in_specs=[
                    pl.BlockSpec((nb, H, W, C), lambda n: (n, 0, 0, 0)),
                    pl.BlockSpec((2, 2, 4 * C, Co), lambda n: (0, 0, 0, 0)),
                    pl.BlockSpec((1, Co), lambda n: (0, 0)),
                ],
                out_specs=pl.BlockSpec((nb, H, 2, W, 2 * Co),
                                       lambda n: (n, 0, 0, 0, 0)),
                scratch_shapes=[pltpu.VMEM((nb, H + 2, W + 2, C), compute_dtype)],
            ),
            compiler_params=pltpu.CompilerParams(
                dimension_semantics=("parallel",),
                vmem_limit_bytes=vmem_limit,
            ),
            cost_estimate=cost,
        )(x, wf, b_k)
        Cout = Co
    else:
        # NOTE: a plain XLA broadcast/reshape is already HBM-roofline-optimal
        # here; the Pallas path is kept for the transpose-free layout.
        per_img = (2 * H * W * C + 2 * H * 2 * W * 2 * C + H * W * 2 * C) * in_item
        nb = _pick_images_per_step(N, per_img, cap // 2)
        vmem_limit = int(min(max(int(1.25 * nb * per_img), 16 * _MIB), cap))
        cost = pl.CostEstimate(
            flops=0, transcendentals=0,
            bytes_accessed=5 * x.size * in_item,
        )
        out = pl.pallas_call(
            _upsample_nn_kernel,
            out_shape=jax.ShapeDtypeStruct((N, H, 2, W, 2 * C), x.dtype),
            grid_spec=pltpu.PrefetchScalarGridSpec(
                num_scalar_prefetch=0,
                grid=(N // nb,),
                in_specs=[pl.BlockSpec((nb, H, W, C), lambda n: (n, 0, 0, 0))],
                out_specs=pl.BlockSpec((nb, H, 2, W, 2 * C),
                                       lambda n: (n, 0, 0, 0, 0)),
            ),
            compiler_params=pltpu.CompilerParams(
                dimension_semantics=("parallel",),
                vmem_limit_bytes=vmem_limit,
            ),
            cost_estimate=cost,
        )(x)
        Cout = C

    # (N, H, 2, W, 2*Co) -> (N, 2H, 2W, Co): identical row-major bytes (free).
    return out.reshape(N, 2 * H, 2 * W, Cout)


def upsample_forward(x_nchw, weight=None, bias=None, *, with_conv=True,
                     compute_dtype=jnp.bfloat16):
    """PyTorch `Upsample`-compatible NCHW interface.  Prefer upsample_forward_nhwc
    in an NHWC network: each transpose here is a full extra HBM read+write pass
    (the output-side one over the 4x-sized tensor)."""
    x = jnp.transpose(x_nchw, (0, 2, 3, 1))                    # (N, H, W, C)
    out = upsample_forward_nhwc(x, weight, bias, with_conv=with_conv,
                                compute_dtype=compute_dtype)
    return jnp.transpose(out, (0, 3, 1, 2))


def _reference(x_nchw, weight, bias, with_conv):
    up = jnp.repeat(jnp.repeat(x_nchw, 2, axis=2), 2, axis=3)
    if not with_conv:
        return up
    out = jax.lax.conv_general_dilated(
        up, weight, window_strides=(1, 1), padding=((1, 1), (1, 1)),
        dimension_numbers=("NCHW", "OIHW", "NCHW"),
    )
    return out + bias[None, :, None, None]


if __name__ == "__main__":
    N, Cin, H, W = 2, 4, 16, 16
    Cout = Cin  # out_channels=None -> in_channels

    key = jax.random.PRNGKey(0)
    kx, kw, kb = jax.random.split(key, 3)

    x = jax.random.normal(kx, (N, Cin, H, W), dtype=jnp.float32)

    # Deterministic nn.Conv2d-style init (uniform with 1/sqrt(fan_in) bound).
    fan_in = Cin * 3 * 3
    bound = 1.0 / math.sqrt(fan_in)
    weight = jax.random.uniform(kw, (Cout, Cin, 3, 3), jnp.float32, -bound, bound)
    bias = jax.random.uniform(kb, (Cout,), jnp.float32, -bound, bound)

    # with_conv=True path (upsample + 3x3 conv); bf16 MXU operands, f32 accum.
    y = jax.block_until_ready(upsample_forward(x, weight, bias, with_conv=True))
    y_ref = _reference(x, weight, bias, True)
    assert y.shape == (N, Cout, 2 * H, 2 * W), y.shape
    assert jnp.allclose(y, y_ref, atol=1e-2, rtol=1e-2), "conv path mismatch"

    # with_conv=False path (pure nearest-neighbour upsample, exact).
    y2 = jax.block_until_ready(upsample_forward(x, with_conv=False))
    y2_ref = _reference(x, None, None, False)
    assert y2.shape == (N, Cin, 2 * H, 2 * W), y2.shape
    assert jnp.allclose(y2, y2_ref), "nearest path mismatch"

    print("KERNEL_OK")
</pallas_src>

<mosaic_0001>
module attributes {stable_mosaic.version = 11 : i64} {
  func.func @_upsample_conv_kernel(%arg0: i32, %arg1: memref<2x16x16x4xf32, #tpu.memory_space<vmem>>, %arg2: memref<2x2x16x4xbf16, #tpu.memory_space<vmem>>, %arg3: memref<1x4xf32, #tpu.memory_space<vmem>>, %arg4: memref<2x16x2x16x8xf32, #tpu.memory_space<vmem>>, %arg5: memref<2x18x18x4xbf16, #tpu.memory_space<vmem>>) attributes {dimension_semantics = [#tpu.dimension_semantics<parallel>], iteration_bounds = array<i64: 1>, scalar_prefetch = 0 : i64, scratch_operands = 1 : i64, tpu.core_type = #tpu.core_type<tc>, window_params = [{transform_indices = @transform_0, window_bounds = array<i64: 2, 16, 16, 4>}, {pipeline_mode = #tpu.pipeline_mode<synchronous>, transform_indices = @transform_1, window_bounds = array<i64: 2, 2, 16, 4>}, {pipeline_mode = #tpu.pipeline_mode<synchronous>, transform_indices = @transform_2, window_bounds = array<i64: 1, 4>}, {transform_indices = @transform_3, window_bounds = array<i64: 2, 16, 2, 16, 8>}]} {
    %cst = arith.constant 0.000000e+00 : bf16
    %0 = vector.broadcast %cst : bf16 to vector<2x18x4xbf16>
    %c0 = arith.constant 0 : index
    %c0_0 = arith.constant 0 : index
    %c0_1 = arith.constant 0 : index
    %c0_2 = arith.constant 0 : index
    %1 = vector.load %arg5[%c0, %c0_0, %c0_1, %c0_2] : memref<2x18x18x4xbf16, #tpu.memory_space<vmem>>, vector<2x1x18x4xbf16>
    %2 = vector.shape_cast %1 : vector<2x1x18x4xbf16> to vector<2x18x4xbf16>
    %3 = vector.shape_cast %0 : vector<2x18x4xbf16> to vector<2x1x18x4xbf16>
    tpu.vector_store %arg5[%c0, %c0_0, %c0_1, %c0_2], %3 {strides = array<i32>} : memref<2x18x18x4xbf16, #tpu.memory_space<vmem>>, vector<2x1x18x4xbf16>,
    %cst_3 = arith.constant 0.000000e+00 : bf16
    %4 = vector.broadcast %cst_3 : bf16 to vector<2x18x4xbf16>
    %c0_4 = arith.constant 0 : index
    %c17 = arith.constant 17 : index
    %c0_5 = arith.constant 0 : index
    %c0_6 = arith.constant 0 : index
    %5 = vector.load %arg5[%c0_4, %c17, %c0_5, %c0_6] : memref<2x18x18x4xbf16, #tpu.memory_space<vmem>>, vector<2x1x18x4xbf16>
    %6 = vector.shape_cast %5 : vector<2x1x18x4xbf16> to vector<2x18x4xbf16>
    %7 = vector.shape_cast %4 : vector<2x18x4xbf16> to vector<2x1x18x4xbf16>
    tpu.vector_store %arg5[%c0_4, %c17, %c0_5, %c0_6], %7 {strides = array<i32>} : memref<2x18x18x4xbf16, #tpu.memory_space<vmem>>, vector<2x1x18x4xbf16>,
    %cst_7 = arith.constant 0.000000e+00 : bf16
    %8 = vector.broadcast %cst_7 : bf16 to vector<2x18x4xbf16>
    %c0_8 = arith.constant 0 : index
    %c0_9 = arith.constant 0 : index
    %c0_10 = arith.constant 0 : index
    %c0_11 = arith.constant 0 : index
    %9 = vector.load %arg5[%c0_8, %c0_9, %c0_10, %c0_11] : memref<2x18x18x4xbf16, #tpu.memory_space<vmem>>, vector<2x18x1x4xbf16>
    %10 = vector.shape_cast %9 : vector<2x18x1x4xbf16> to vector<2x18x4xbf16>
    %11 = vector.shape_cast %8 : vector<2x18x4xbf16> to vector<2x18x1x4xbf16>
    tpu.vector_store %arg5[%c0_8, %c0_9, %c0_10, %c0_11], %11 {strides = array<i32>} : memref<2x18x18x4xbf16, #tpu.memory_space<vmem>>, vector<2x18x1x4xbf16>,
    %cst_12 = arith.constant 0.000000e+00 : bf16
    %12 = vector.broadcast %cst_12 : bf16 to vector<2x18x4xbf16>
    %c0_13 = arith.constant 0 : index
    %c0_14 = arith.constant 0 : index
    %c17_15 = arith.constant 17 : index
    %c0_16 = arith.constant 0 : index
    %13 = vector.load %arg5[%c0_13, %c0_14, %c17_15, %c0_16] : memref<2x18x18x4xbf16, #tpu.memory_space<vmem>>, vector<2x18x1x4xbf16>
    %14 = vector.shape_cast %13 : vector<2x18x1x4xbf16> to vector<2x18x4xbf16>
    %15 = vector.shape_cast %12 : vector<2x18x4xbf16> to vector<2x18x1x4xbf16>
    tpu.vector_store %arg5[%c0_13, %c0_14, %c17_15, %c0_16], %15 {strides = array<i32>} : memref<2x18x18x4xbf16, #tpu.memory_space<vmem>>, vector<2x18x1x4xbf16>,
    %c0_17 = arith.constant 0 : index
    %c0_18 = arith.constant 0 : index
    %c0_19 = arith.constant 0 : index
    %c0_20 = arith.constant 0 : index
    %16 = vector.load %arg1[%c0_17, %c0_18, %c0_19, %c0_20] : memref<2x16x16x4xf32, #tpu.memory_space<vmem>>, vector<2x16x16x4xf32>
    %17 = arith.truncf %16 : vector<2x16x16x4xf32> to vector<2x16x16x4xbf16>
    %c0_21 = arith.constant 0 : index
    %c1 = arith.constant 1 : index
    %c1_22 = arith.constant 1 : index
    %c0_23 = arith.constant 0 : index
    %18 = vector.load %arg5[%c0_21, %c1, %c1_22, %c0_23] : memref<2x18x18x4xbf16, #tpu.memory_space<vmem>>, vector<2x16x16x4xbf16>
    tpu.vector_store %arg5[%c0_21, %c1, %c1_22, %c0_23], %17 {strides = array<i32>} : memref<2x18x18x4xbf16, #tpu.memory_space<vmem>>, vector<2x16x16x4xbf16>,
    %c0_24 = arith.constant 0 : index
    %c0_25 = arith.constant 0 : index
    %19 = vector.load %arg3[%c0_24, %c0_25] : memref<1x4xf32, #tpu.memory_space<vmem>>, vector<1x4xf32>
    %c0_26 = arith.constant 0 : index
    %c0_27 = arith.constant 0 : index
    %c0_28 = arith.constant 0 : index
    %c0_29 = arith.constant 0 : index
    %20 = vector.load %arg5[%c0_26, %c0_27, %c0_28, %c0_29] : memref<2x18x18x4xbf16, #tpu.memory_space<vmem>>, vector<2x16x16x4xbf16>
    %21 = vector.shape_cast %20 : vector<2x16x16x4xbf16> to vector<512x4xbf16>
    %c0_30 = arith.constant 0 : index
    %c0_31 = arith.constant 0 : index
    %c1_32 = arith.constant 1 : index
    %c0_33 = arith.constant 0 : index
    %22 = vector.load %arg5[%c0_30, %c0_31, %c1_32, %c0_33] : memref<2x18x18x4xbf16, #tpu.memory_space<vmem>>, vector<2x16x16x4xbf16>
    %23 = vector.shape_cast %22 : vector<2x16x16x4xbf16> to vector<512x4xbf16>
    %c0_34 = arith.constant 0 : index
    %c1_35 = arith.constant 1 : index
    %c0_36 = arith.constant 0 : index
    %c0_37 = arith.constant 0 : index
    %24 = vector.load %arg5[%c0_34, %c1_35, %c0_36, %c0_37] : memref<2x18x18x4xbf16, #tpu.memory_space<vmem>>, vector<2x16x16x4xbf16>
    %25 = vector.shape_cast %24 : vector<2x16x16x4xbf16> to vector<512x4xbf16>
    %c0_38 = arith.constant 0 : index
    %c1_39 = arith.constant 1 : index
    %c1_40 = arith.constant 1 : index
    %c0_41 = arith.constant 0 : index
    %26 = vector.load %arg5[%c0_38, %c1_39, %c1_40, %c0_41] : memref<2x18x18x4xbf16, #tpu.memory_space<vmem>>, vector<2x16x16x4xbf16>
    %27 = vector.shape_cast %26 : vector<2x16x16x4xbf16> to vector<512x4xbf16>
    %28 = tpu.concatenate %21, %23, %25, %27 in 1 : vector<512x4xbf16>, vector<512x4xbf16>, vector<512x4xbf16>, vector<512x4xbf16> -> vector<512x16xbf16>
    %c0_42 = arith.constant 0 : index
    %c0_43 = arith.constant 0 : index
    %c0_44 = arith.constant 0 : index
    %c0_45 = arith.constant 0 : index
    %29 = vector.load %arg2[%c0_42, %c0_43, %c0_44, %c0_45] : memref<2x2x16x4xbf16, #tpu.memory_space<vmem>>, vector<1x1x16x4xbf16>
    %30 = vector.shape_cast %29 : vector<1x1x16x4xbf16> to vector<16x4xbf16>
    %cst_46 = arith.constant dense<0.000000e+00> : vector<512x4xf32>
    %31 = tpu.matmul %28, %30, %cst_46 {dimension_numbers = #tpu.dot_dimension_numbers<[1], [0], [0], [1], [0, 0, 1, 1], [], []>} : vector<512x16xbf16>, vector<16x4xbf16>, vector<512x4xf32> -> vector<512x4xf32>
    %32 = vector.broadcast %19 : vector<1x4xf32> to vector<512x4xf32>
    %33 = arith.addf %31, %32 : vector<512x4xf32>
    %34 = vector.shape_cast %33 : vector<512x4xf32> to vector<2x16x16x4xf32>
    %c0_47 = arith.constant 0 : index
    %c0_48 = arith.constant 0 : index
    %c0_49 = arith.constant 0 : index
    %c0_50 = arith.constant 0 : index
    %c0_51 = arith.constant 0 : index
    %35 = vector.load %arg4[%c0_47, %c0_48, %c0_49, %c0_50, %c0_51] : memref<2x16x2x16x8xf32, #tpu.memory_space<vmem>>, vector<2x16x1x16x4xf32>
    %36 = vector.shape_cast %35 : vector<2x16x1x16x4xf32> to vector<2x16x16x4xf32>
    %37 = vector.shape_cast %34 : vector<2x16x16x4xf32> to vector<2x16x1x16x4xf32>
    tpu.vector_store %arg4[%c0_47, %c0_48, %c0_49, %c0_50, %c0_51], %37 {strides = array<i32>} : memref<2x16x2x16x8xf32, #tpu.memory_space<vmem>>, vector<2x16x1x16x4xf32>,
    %c0_52 = arith.constant 0 : index
    %c0_53 = arith.constant 0 : index
    %c1_54 = arith.constant 1 : index
    %c0_55 = arith.constant 0 : index
    %38 = vector.load %arg5[%c0_52, %c0_53, %c1_54, %c0_55] : memref<2x18x18x4xbf16, #tpu.memory_space<vmem>>, vector<2x16x16x4xbf16>
    %39 = vector.shape_cast %38 : vector<2x16x16x4xbf16> to vector<512x4xbf16>
    %c0_56 = arith.constant 0 : index
    %c0_57 = arith.constant 0 : index
    %c2 = arith.constant 2 : index
    %c0_58 = arith.constant 0 : index
    %40 = vector.load %arg5[%c0_56, %c0_57, %c2, %c0_58] : memref<2x18x18x4xbf16, #tpu.memory_space<vmem>>, vector<2x16x16x4xbf16>
    %41 = vector.shape_cast %40 : vector<2x16x16x4xbf16> to vector<512x4xbf16>
    %c0_59 = arith.constant 0 : index
    %c1_60 = arith.constant 1 : index
    %c1_61 = arith.constant 1 : index
    %c0_62 = arith.constant 0 : index
    %42 = vector.load %arg5[%c0_59, %c1_60, %c1_61, %c0_62] : memref<2x18x18x4xbf16, #tpu.memory_space<vmem>>, vector<2x16x16x4xbf16>
    %43 = vector.shape_cast %42 : vector<2x16x16x4xbf16> to vector<512x4xbf16>
    %c0_63 = arith.constant 0 : index
    %c1_64 = arith.constant 1 : index
    %c2_65 = arith.constant 2 : index
    %c0_66 = arith.constant 0 : index
    %44 = vector.load %arg5[%c0_63, %c1_64, %c2_65, %c0_66] : memref<2x18x18x4xbf16, #tpu.memory_space<vmem>>, vector<2x16x16x4xbf16>
    %45 = vector.shape_cast %44 : vector<2x16x16x4xbf16> to vector<512x4xbf16>
    %46 = tpu.concatenate %39, %41, %43, %45 in 1 : vector<512x4xbf16>, vector<512x4xbf16>, vector<512x4xbf16>, vector<512x4xbf16> -> vector<512x16xbf16>
    %c0_67 = arith.constant 0 : index
    %c1_68 = arith.constant 1 : index
    %c0_69 = arith.constant 0 : index
    %c0_70 = arith.constant 0 : index
    %47 = vector.load %arg2[%c0_67, %c1_68, %c0_69, %c0_70] : memref<2x2x16x4xbf16, #tpu.memory_space<vmem>>, vector<1x1x16x4xbf16>
    %48 = vector.shape_cast %47 : vector<1x1x16x4xbf16> to vector<16x4xbf16>
    %cst_71 = arith.constant dense<0.000000e+00> : vector<512x4xf32>
    %49 = tpu.matmul %46, %48, %cst_71 {dimension_numbers = #tpu.dot_dimension_numbers<[1], [0], [0], [1], [0, 0, 1, 1], [], []>} : vector<512x16xbf16>, vector<16x4xbf16>, vector<512x4xf32> -> vector<512x4xf32>
    %50 = vector.broadcast %19 : vector<1x4xf32> to vector<512x4xf32>
    %51 = arith.addf %49, %50 : vector<512x4xf32>
    %52 = vector.shape_cast %51 : vector<512x4xf32> to vector<2x16x16x4xf32>
    %c0_72 = arith.constant 0 : index
    %c0_73 = arith.constant 0 : index
    %c0_74 = arith.constant 0 : index
    %c0_75 = arith.constant 0 : index
    %c4 = arith.constant 4 : index
    %53 = vector.load %arg4[%c0_72, %c0_73, %c0_74, %c0_75, %c4] : memref<2x16x2x16x8xf32, #tpu.memory_space<vmem>>, vector<2x16x1x16x4xf32>
    %54 = vector.shape_cast %53 : vector<2x16x1x16x4xf32> to vector<2x16x16x4xf32>
    %55 = vector.shape_cast %52 : vector<2x16x16x4xf32> to vector<2x16x1x16x4xf32>
    tpu.vector_store %arg4[%c0_72, %c0_73, %c0_74, %c0_75, %c4], %55 {strides = array<i32>} : memref<2x16x2x16x8xf32, #tpu.memory_space<vmem>>, vector<2x16x1x16x4xf32>,
    %c0_76 = arith.constant 0 : index
    %c1_77 = arith.constant 1 : index
    %c0_78 = arith.constant 0 : index
    %c0_79 = arith.constant 0 : index
    %56 = vector.load %arg5[%c0_76, %c1_77, %c0_78, %c0_79] : memref<2x18x18x4xbf16, #tpu.memory_space<vmem>>, vector<2x16x16x4xbf16>
    %57 = vector.shape_cast %56 : vector<2x16x16x4xbf16> to vector<512x4xbf16>
    %c0_80 = arith.constant 0 : index
    %c1_81 = arith.constant 1 : index
    %c1_82 = arith.constant 1 : index
    %c0_83 = arith.constant 0 : index
    %58 = vector.load %arg5[%c0_80, %c1_81, %c1_82, %c0_83] : memref<2x18x18x4xbf16, #tpu.memory_space<vmem>>, vector<2x16x16x4xbf16>
    %59 = vector.shape_cast %58 : vector<2x16x16x4xbf16> to vector<512x4xbf16>
    %c0_84 = arith.constant 0 : index
    %c2_85 = arith.constant 2 : index
    %c0_86 = arith.constant 0 : index
    %c0_87 = arith.constant 0 : index
    %60 = vector.load %arg5[%c0_84, %c2_85, %c0_86, %c0_87] : memref<2x18x18x4xbf16, #tpu.memory_space<vmem>>, vector<2x16x16x4xbf16>
    %61 = vector.shape_cast %60 : vector<2x16x16x4xbf16> to vector<512x4xbf16>
    %c0_88 = arith.constant 0 : index
    %c2_89 = arith.constant 2 : index
    %c1_90 = arith.constant 1 : index
    %c0_91 = arith.constant 0 : index
    %62 = vector.load %arg5[%c0_88, %c2_89, %c1_90, %c0_91] : memref<2x18x18x4xbf16, #tpu.memory_space<vmem>>, vector<2x16x16x4xbf16>
    %63 = vector.shape_cast %62 : vector<2x16x16x4xbf16> to vector<512x4xbf16>
    %64 = tpu.concatenate %57, %59, %61, %63 in 1 : vector<512x4xbf16>, vector<512x4xbf16>, vector<512x4xbf16>, vector<512x4xbf16> -> vector<512x16xbf16>
    %c1_92 = arith.constant 1 : index
    %c0_93 = arith.constant 0 : index
    %c0_94 = arith.constant 0 : index
    %c0_95 = arith.constant 0 : index
    %65 = vector.load %arg2[%c1_92, %c0_93, %c0_94, %c0_95] : memref<2x2x16x4xbf16, #tpu.memory_space<vmem>>, vector<1x1x16x4xbf16>
    %66 = vector.shape_cast %65 : vector<1x1x16x4xbf16> to vector<16x4xbf16>
    %cst_96 = arith.constant dense<0.000000e+00> : vector<512x4xf32>
    %67 = tpu.matmul %64, %66, %cst_96 {dimension_numbers = #tpu.dot_dimension_numbers<[1], [0], [0], [1], [0, 0, 1, 1], [], []>} : vector<512x16xbf16>, vector<16x4xbf16>, vector<512x4xf32> -> vector<512x4xf32>
    %68 = vector.broadcast %19 : vector<1x4xf32> to vector<512x4xf32>
    %69 = arith.addf %67, %68 : vector<512x4xf32>
    %70 = vector.shape_cast %69 : vector<512x4xf32> to vector<2x16x16x4xf32>
    %c0_97 = arith.constant 0 : index
    %c0_98 = arith.constant 0 : index
    %c1_99 = arith.constant 1 : index
    %c0_100 = arith.constant 0 : index
    %c0_101 = arith.constant 0 : index
    %71 = vector.load %arg4[%c0_97, %c0_98, %c1_99, %c0_100, %c0_101] : memref<2x16x2x16x8xf32, #tpu.memory_space<vmem>>, vector<2x16x1x16x4xf32>
    %72 = vector.shape_cast %71 : vector<2x16x1x16x4xf32> to vector<2x16x16x4xf32>
    %73 = vector.shape_cast %70 : vector<2x16x16x4xf32> to vector<2x16x1x16x4xf32>
    tpu.vector_store %arg4[%c0_97, %c0_98, %c1_99, %c0_100, %c0_101], %73 {strides = array<i32>} : memref<2x16x2x16x8xf32, #tpu.memory_space<vmem>>, vector<2x16x1x16x4xf32>,
    %c0_102 = arith.constant 0 : index
    %c1_103 = arith.constant 1 : index
    %c1_104 = arith.constant 1 : index
    %c0_105 = arith.constant 0 : index
    %74 = vector.load %arg5[%c0_102, %c1_103, %c1_104, %c0_105] : memref<2x18x18x4xbf16, #tpu.memory_space<vmem>>, vector<2x16x16x4xbf16>
    %75 = vector.shape_cast %74 : vector<2x16x16x4xbf16> to vector<512x4xbf16>
    %c0_106 = arith.constant 0 : index
    %c1_107 = arith.constant 1 : index
    %c2_108 = arith.constant 2 : index
    %c0_109 = arith.constant 0 : index
    %76 = vector.load %arg5[%c0_106, %c1_107, %c2_108, %c0_109] : memref<2x18x18x4xbf16, #tpu.memory_space<vmem>>, vector<2x16x16x4xbf16>
    %77 = vector.shape_cast %76 : vector<2x16x16x4xbf16> to vector<512x4xbf16>
    %c0_110 = arith.constant 0 : index
    %c2_111 = arith.constant 2 : index
    %c1_112 = arith.constant 1 : index
    %c0_113 = arith.constant 0 : index
    %78 = vector.load %arg5[%c0_110, %c2_111, %c1_112, %c0_113] : memref<2x18x18x4xbf16, #tpu.memory_space<vmem>>, vector<2x16x16x4xbf16>
    %79 = vector.shape_cast %78 : vector<2x16x16x4xbf16> to vector<512x4xbf16>
    %c0_114 = arith.constant 0 : index
    %c2_115 = arith.constant 2 : index
    %c2_116 = arith.constant 2 : index
    %c0_117 = arith.constant 0 : index
    %80 = vector.load %arg5[%c0_114, %c2_115, %c2_116, %c0_117] : memref<2x18x18x4xbf16, #tpu.memory_space<vmem>>, vector<2x16x16x4xbf16>
    %81 = vector.shape_cast %80 : vector<2x16x16x4xbf16> to vector<512x4xbf16>
    %82 = tpu.concatenate %75, %77, %79, %81 in 1 : vector<512x4xbf16>, vector<512x4xbf16>, vector<512x4xbf16>, vector<512x4xbf16> -> vector<512x16xbf16>
    %c1_118 = arith.constant 1 : index
    %c1_119 = arith.constant 1 : index
    %c0_120 = arith.constant 0 : index
    %c0_121 = arith.constant 0 : index
    %83 = vector.load %arg2[%c1_118, %c1_119, %c0_120, %c0_121] : memref<2x2x16x4xbf16, #tpu.memory_space<vmem>>, vector<1x1x16x4xbf16>
    %84 = vector.shape_cast %83 : vector<1x1x16x4xbf16> to vector<16x4xbf16>
    %cst_122 = arith.constant dense<0.000000e+00> : vector<512x4xf32>
    %85 = tpu.matmul %82, %84, %cst_122 {dimension_numbers = #tpu.dot_dimension_numbers<[1], [0], [0], [1], [0, 0, 1, 1], [], []>} : vector<512x16xbf16>, vector<16x4xbf16>, vector<512x4xf32> -> vector<512x4xf32>
    %86 = vector.broadcast %19 : vector<1x4xf32> to vector<512x4xf32>
    %87 = arith.addf %85, %86 : vector<512x4xf32>
    %88 = vector.shape_cast %87 : vector<512x4xf32> to vector<2x16x16x4xf32>
    %c0_123 = arith.constant 0 : index
    %c0_124 = arith.constant 0 : index
    %c1_125 = arith.constant 1 : index
    %c0_126 = arith.constant 0 : index
    %c4_127 = arith.constant 4 : index
    %89 = vector.load %arg4[%c0_123, %c0_124, %c1_125, %c0_126, %c4_127] : memref<2x16x2x16x8xf32, #tpu.memory_space<vmem>>, vector<2x16x1x16x4xf32>
    %90 = vector.shape_cast %89 : vector<2x16x1x16x4xf32> to vector<2x16x16x4xf32>
    %91 = vector.shape_cast %88 : vector<2x16x16x4xf32> to vector<2x16x1x16x4xf32>
    tpu.vector_store %arg4[%c0_123, %c0_124, %c1_125, %c0_126, %c4_127], %91 {strides = array<i32>} : memref<2x16x2x16x8xf32, #tpu.memory_space<vmem>>, vector<2x16x1x16x4xf32>,
    return
  }
  func.func @transform_0(%arg0: i32) -> (i32, i32, i32, i32) {
    %c0_i32 = arith.constant 0 : i32
    %c0_i32_0 = arith.constant 0 : i32
    %c0_i32_1 = arith.constant 0 : i32
    %c0_i32_2 = arith.constant 0 : i32
    return %arg0, %c0_i32, %c0_i32_0, %c0_i32_1 : i32, i32, i32, i32
  }
  func.func @transform_1(%arg0: i32) -> (i32, i32, i32, i32) {
    %c0_i32 = arith.constant 0 : i32
    %c0_i32_0 = arith.constant 0 : i32
    %c0_i32_1 = arith.constant 0 : i32
    %c0_i32_2 = arith.constant 0 : i32
    %c0_i32_3 = arith.constant 0 : i32
    return %c0_i32, %c0_i32_0, %c0_i32_1, %c0_i32_2 : i32, i32, i32, i32
  }
  func.func @transform_2(%arg0: i32) -> (i32, i32) {
    %c0_i32 = arith.constant 0 : i32
    %c0_i32_0 = arith.constant 0 : i32
    %c0_i32_1 = arith.constant 0 : i32
    return %c0_i32, %c0_i32_0 : i32, i32
  }
  func.func @transform_3(%arg0: i32) -> (i32, i32, i32, i32, i32) {
    %c0_i32 = arith.constant 0 : i32
    %c0_i32_0 = arith.constant 0 : i32
    %c0_i32_1 = arith.constant 0 : i32
    %c0_i32_2 = arith.constant 0 : i32
    %c0_i32_3 = arith.constant 0 : i32
    return %arg0, %c0_i32, %c0_i32_0, %c0_i32_1, %c0_i32_2 : i32, i32, i32, i32, i32
  }
}

</mosaic_0001>

<llo_original>
// kernel: tpu_custom_call.1
$region0: #{tpu_custom_call.1}
  #allocation0 [shape = 'u32[]', space=smem, size = 0x4, offset = 0x4, fixed_abs, tag = 'smem constant byte address 0x4 - core index']
  #allocation1 [shape = 'u32[144,128]{1,0:T(1,128)}', space=vmem, size = 0x12000, scoped, tag = 'internal scratch']
  #allocation2 [shape = 'bf16[2,18,18,4]{3,2,1,0:T(8,128)(2,1)}', space=vmem, size = 0x36000, scoped, tag = 'scratch operand']
  %s0 = inlined_call_operand.vmem [shape: f32[2,16,16,4], index: 0, kind: input, shape index: {}]
  %s1 = inlined_call_operand.vmem [shape: bf16[2,2,16,4], index: 1, kind: input, shape index: {}]
  %s2 = inlined_call_operand.vmem [shape: f32[1,4], index: 2, kind: input, shape index: {}]
  %s3 = inlined_call_operand.vmem [shape: f32[2,16,2,16,8], index: 3, kind: output, shape index: {}]
  %s4 = sld [smem:[#allocation0]]
  $region22: #{tpu_custom_call.1} parent=0
    _
  %s6 = ssub.s32 1, %s4
  %s7 = scalar_select 0, %s6, %s4
  // Predicated region
  $region2: #{tpu_custom_call.1} parent=0 // pred_check
    _
  $region3: #{tpu_custom_call.1} parent=0 // pred_check_branch
    %9 = sbr.rel (0) target = $region5
  $region4: #{tpu_custom_call.1} parent=0 // pred_region
    _
  $region5: #{tpu_custom_call.1} parent=0 // pred_fallthru
    _
  // Predicated region
  $region6: #{tpu_custom_call.1} parent=0 // pred_check
    _
  $region7: #{tpu_custom_call.1} parent=0 // pred_check_branch
    %11 = sbr.rel (0) target = $region9
  $region8: #{tpu_custom_call.1} parent=0 // pred_region
    _
  $region9: #{tpu_custom_call.1} parent=0 // pred_fallthru
    _
  // Predicated region
  $region10: #{tpu_custom_call.1} parent=0 // pred_check
    _
  $region11: #{tpu_custom_call.1} parent=0 // pred_check_branch
    %13 = sbr.rel (0) target = $region13
  $region12: #{tpu_custom_call.1} parent=0 // pred_region
    _
  $region13: #{tpu_custom_call.1} parent=0 // pred_fallthru
    _
  %vm15 = vcmask 27648
  %16 = vst.msk [vmem:[#allocation2] sm:$0xf] %vm15, 0
  %17 = vst.msk [vmem:[#allocation2 + $0x4] sm:$0xf] %vm15, 0
  %vm18 = vcmask 24576
  %19 = vst.msk [vmem:[#allocation2 + $0x8] sm:$0x1] %vm18, 0
  %20 = vst.msk [vmem:[#allocation2 + $0xd8] sm:$0xf] %vm15, 0
  %21 = vst.msk [vmem:[#allocation2 + $0xdc] sm:$0xf] %vm15, 0
  %22 = vst.msk [vmem:[#allocation2 + $0xe0] sm:$0x1] %vm18, 0
  %s23 = scalar_lea.vmem [#allocation2], 204
  %24 = vst.msk [vmem:[%s23] sm:$0xf] %vm15, 0
  %25 = vst.msk [vmem:[%s23 + $0x4] sm:$0xf] %vm15, 0
  %26 = vst.msk [vmem:[%s23 + $0x8] sm:$0x1] %vm18, 0
  %27 = vst.msk [vmem:[%s23 + $0xd8] sm:$0xf] %vm15, 0
  %28 = vst.msk [vmem:[%s23 + $0xdc] sm:$0xf] %vm15, 0
  %29 = vst.msk [vmem:[%s23 + $0xe0] sm:$0x1] %vm18, 0
  %vm30 = vcmask 24576
  %vm31 = vsmask.f32 256
  %vm32 = vmand %vm30, %vm31
  %v33 = vld [vmem:[#allocation2] sm:$0x1]
  %v34 = vsel %vm32, 0, %v33
  %35 = vst [vmem:[#allocation2] sm:$0x1] %v34
  %v36 = vld [vmem:[#allocation2 + $0xc] sm:$0x1]
  %v37 = vsel %vm32, 0, %v36
  %38 = vst [vmem:[#allocation2 + $0xc] sm:$0x1] %v37
  %v39 = vld [vmem:[#allocation2 + $0x18] sm:$0x1]
  %v40 = vsel %vm32, 0, %v39
  %41 = vst [vmem:[#allocation2 + $0x18] sm:$0x1] %v40
  %v42 = vld [vmem:[#allocation2 + $0x24] sm:$0x1]
  %v43 = vsel %vm32, 0, %v42
  %44 = vst [vmem:[#allocation2 + $0x24] sm:$0x1] %v43
  %v45 = vld [vmem:[#allocation2 + $0x30] sm:$0x1]
  %v46 = vsel %vm32, 0, %v45
  %47 = vst [vmem:[#allocation2 + $0x30] sm:$0x1] %v46
  %v48 = vld [vmem:[#allocation2 + $0x3c] sm:$0x1]
  %v49 = vsel %vm32, 0, %v48
  %50 = vst [vmem:[#allocation2 + $0x3c] sm:$0x1] %v49
  %v51 = vld [vmem:[#allocation2 + $0x48] sm:$0x1]
  %v52 = vsel %vm32, 0, %v51
  %53 = vst [vmem:[#allocation2 + $0x48] sm:$0x1] %v52
  %v54 = vld [vmem:[#allocation2 + $0x54] sm:$0x1]
  %v55 = vsel %vm32, 0, %v54
  %56 = vst [vmem:[#allocation2 + $0x54] sm:$0x1] %v55
  %v57 = vld [vmem:[#allocation2 + $0x60] sm:$0x1]
  %v58 = vsel %vm32, 0, %v57
  %59 = vst [vmem:[#allocation2 + $0x60] sm:$0x1] %v58
  %v60 = vld [vmem:[#allocation2 + $0x6c] sm:$0x1]
  %v61 = vsel %vm32, 0, %v60
  %62 = vst [vmem:[#allocation2 + $0x6c] sm:$0x1] %v61
  %v63 = vld [vmem:[#allocation2 + $0x78] sm:$0x1]
  %v64 = vsel %vm32, 0, %v63
  %65 = vst [vmem:[#allocation2 + $0x78] sm:$0x1] %v64
  %v66 = vld [vmem:[#allocation2 + $0x84] sm:$0x1]
  %v67 = vsel %vm32, 0, %v66
  %68 = vst [vmem:[#allocation2 + $0x84] sm:$0x1] %v67
  %v69 = vld [vmem:[#allocation2 + $0x90] sm:$0x1]
  %v70 = vsel %vm32, 0, %v69
  %71 = vst [vmem:[#allocation2 + $0x90] sm:$0x1] %v70
  %v72 = vld [vmem:[#allocation2 + $0x9c] sm:$0x1]
  %v73 = vsel %vm32, 0, %v72
  %74 = vst [vmem:[#allocation2 + $0x9c] sm:$0x1] %v73
  %v75 = vld [vmem:[#allocation2 + $0xa8] sm:$0x1]
  %v76 = vsel %vm32, 0, %v75
  %77 = vst [vmem:[#allocation2 + $0xa8] sm:$0x1] %v76
  %v78 = vld [vmem:[#allocation2 + $0xb4] sm:$0x1]
  %v79 = vsel %vm32, 0, %v78
  %80 = vst [vmem:[#allocation2 + $0xb4] sm:$0x1] %v79
  %v81 = vld [vmem:[#allocation2 + $0xc0] sm:$0x1]
  %v82 = vsel %vm32, 0, %v81
  %83 = vst [vmem:[#allocation2 + $0xc0] sm:$0x1] %v82
  %v84 = vld [vmem:[#allocation2 + $0xcc] sm:$0x1]
  %v85 = vsel %vm32, 0, %v84
  %86 = vst [vmem:[#allocation2 + $0xcc] sm:$0x1] %v85
  %v87 = vld [vmem:[#allocation2 + $0xd8] sm:$0x1]
  %v88 = vsel %vm32, 0, %v87
  %89 = vst [vmem:[#allocation2 + $0xd8] sm:$0x1] %v88
  %v90 = vld [vmem:[#allocation2 + $0xe4] sm:$0x1]
  %v91 = vsel %vm32, 0, %v90
  %92 = vst [vmem:[#allocation2 + $0xe4] sm:$0x1] %v91
  %v93 = vld [vmem:[#allocation2 + $0xf0] sm:$0x1]
  %v94 = vsel %vm32, 0, %v93
  %95 = vst [vmem:[#allocation2 + $0xf0] sm:$0x1] %v94
  %v96 = vld [vmem:[#allocation2 + $0xfc] sm:$0x1]
  %v97 = vsel %vm32, 0, %v96
  %98 = vst [vmem:[#allocation2 + $0xfc] sm:$0x1] %v97
  %v99 = vld [vmem:[#allocation2 + $0x108] sm:$0x1]
  %v100 = vsel %vm32, 0, %v99
  %101 = vst [vmem:[#allocation2 + $0x108] sm:$0x1] %v100
  %v102 = vld [vmem:[#allocation2 + $0x114] sm:$0x1]
  %v103 = vsel %vm32, 0, %v102
  %104 = vst [vmem:[#allocation2 + $0x114] sm:$0x1] %v103
  %v105 = vld [vmem:[#allocation2 + $0x120] sm:$0x1]
  %v106 = vsel %vm32, 0, %v105
  %107 = vst [vmem:[#allocation2 + $0x120] sm:$0x1] %v106
  %v108 = vld [vmem:[#allocation2 + $0x12c] sm:$0x1]
  %v109 = vsel %vm32, 0, %v108
  %110 = vst [vmem:[#allocation2 + $0x12c] sm:$0x1] %v109
  %v111 = vld [vmem:[#allocation2 + $0x138] sm:$0x1]
  %v112 = vsel %vm32, 0, %v111
  %113 = vst [vmem:[#allocation2 + $0x138] sm:$0x1] %v112
  %v114 = vld [vmem:[#allocation2 + $0x144] sm:$0x1]
  %v115 = vsel %vm32, 0, %v114
  %116 = vst [vmem:[#allocation2 + $0x144] sm:$0x1] %v115
  %v117 = vld [vmem:[#allocation2 + $0x150] sm:$0x1]
  %v118 = vsel %vm32, 0, %v117
  %119 = vst [vmem:[#allocation2 + $0x150] sm:$0x1] %v118
  %v120 = vld [vmem:[#allocation2 + $0x15c] sm:$0x1]
  %v121 = vsel %vm32, 0, %v120
  %122 = vst [vmem:[#allocation2 + $0x15c] sm:$0x1] %v121
  %v123 = vld [vmem:[#allocation2 + $0x168] sm:$0x1]
  %v124 = vsel %vm32, 0, %v123
  %125 = vst [vmem:[#allocation2 + $0x168] sm:$0x1] %v124
  %v126 = vld [vmem:[#allocation2 + $0x174] sm:$0x1]
  %v127 = vsel %vm32, 0, %v126
  %128 = vst [vmem:[#allocation2 + $0x174] sm:$0x1] %v127
  %v129 = vld [vmem:[#allocation2 + $0x180] sm:$0x1]
  %v130 = vsel %vm32, 0, %v129
  %131 = vst [vmem:[#allocation2 + $0x180] sm:$0x1] %v130
  %v132 = vld [vmem:[#allocation2 + $0x18c] sm:$0x1]
  %v133 = vsel %vm32, 0, %v132
  %134 = vst [vmem:[#allocation2 + $0x18c] sm:$0x1] %v133
  %v135 = vld [vmem:[#allocation2 + $0x198] sm:$0x1]
  %v136 = vsel %vm32, 0, %v135
  %137 = vst [vmem:[#allocation2 + $0x198] sm:$0x1] %v136
  %v138 = vld [vmem:[#allocation2 + $0x1a4] sm:$0x1]
  %v139 = vsel %vm32, 0, %v138
  %140 = vst [vmem:[#allocation2 + $0x1a4] sm:$0x1] %v139
  %vm141 = vsmask.f32 7938
  %vm142 = vmand %vm30, %vm141
  %v143 = vld [vmem:[#allocation2 + $0x8] sm:$0x1]
  %v144 = vsel %vm142, 0, %v143
  %145 = vst [vmem:[#allocation2 + $0x8] sm:$0x1] %v144
  %v146 = vld [vmem:[#allocation2 + $0x14] sm:$0x1]
  %v147 = vsel %vm142, 0, %v146
  %148 = vst [vmem:[#allocation2 + $0x14] sm:$0x1] %v147
  %v149 = vld [vmem:[#allocation2 + $0x20] sm:$0x1]
  %v150 = vsel %vm142, 0, %v149
  %151 = vst [vmem:[#allocation2 + $0x20] sm:$0x1] %v150
  %v152 = vld [vmem:[#allocation2 + $0x2c] sm:$0x1]
  %v153 = vsel %vm142, 0, %v152
  %154 = vst [vmem:[#allocation2 + $0x2c] sm:$0x1] %v153
  %v155 = vld [vmem:[#allocation2 + $0x38] sm:$0x1]
  %v156 = vsel %vm142, 0, %v155
  %157 = vst [vmem:[#allocation2 + $0x38] sm:$0x1] %v156
  %v158 = vld [vmem:[#allocation2 + $0x44] sm:$0x1]
  %v159 = vsel %vm142, 0, %v158
  %160 = vst [vmem:[#allocation2 + $0x44] sm:$0x1] %v159
  %v161 = vld [vmem:[#allocation2 + $0x50] sm:$0x1]
  %v162 = vsel %vm142, 0, %v161
  %163 = vst [vmem:[#allocation2 + $0x50] sm:$0x1] %v162
  %v164 = vld [vmem:[#allocation2 + $0x5c] sm:$0x1]
  %v165 = vsel %vm142, 0, %v164
  %166 = vst [vmem:[#allocation2 + $0x5c] sm:$0x1] %v165
  %v167 = vld [vmem:[#allocation2 + $0x68] sm:$0x1]
  %v168 = vsel %vm142, 0, %v167
  %169 = vst [vmem:[#allocation2 + $0x68] sm:$0x1] %v168
  %v170 = vld [vmem:[#allocation2 + $0x74] sm:$0x1]
  %v171 = vsel %vm142, 0, %v170
  %172 = vst [vmem:[#allocation2 + $0x74] sm:$0x1] %v171
  %v173 = vld [vmem:[#allocation2 + $0x80] sm:$0x1]
  %v174 = vsel %vm142, 0, %v173
  %175 = vst [vmem:[#allocation2 + $0x80] sm:$0x1] %v174
  %v176 = vld [vmem:[#allocation2 + $0x8c] sm:$0x1]
  %v177 = vsel %vm142, 0, %v176
  %178 = vst [vmem:[#allocation2 + $0x8c] sm:$0x1] %v177
  %v179 = vld [vmem:[#allocation2 + $0x98] sm:$0x1]
  %v180 = vsel %vm142, 0, %v179
  %181 = vst [vmem:[#allocation2 + $0x98] sm:$0x1] %v180
  %v182 = vld [vmem:[#allocation2 + $0xa4] sm:$0x1]
  %v183 = vsel %vm142, 0, %v182
  %184 = vst [vmem:[#allocation2 + $0xa4] sm:$0x1] %v183
  %v185 = vld [vmem:[#allocation2 + $0xb0] sm:$0x1]
  %v186 = vsel %vm142, 0, %v185
  %187 = vst [vmem:[#allocation2 + $0xb0] sm:$0x1] %v186
  %v188 = vld [vmem:[#allocation2 + $0xbc] sm:$0x1]
  %v189 = vsel %vm142, 0, %v188
  %190 = vst [vmem:[#allocation2 + $0xbc] sm:$0x1] %v189
  %v191 = vld [vmem:[#allocation2 + $0xc8] sm:$0x1]
  %v192 = vsel %vm142, 0, %v191
  %193 = vst [vmem:[#allocation2 + $0xc8] sm:$0x1] %v192
  %v194 = vld [vmem:[#allocation2 + $0xd4] sm:$0x1]
  %v195 = vsel %vm142, 0, %v194
  %196 = vst [vmem:[#allocation2 + $0xd4] sm:$0x1] %v195
  %v197 = vld [vmem:[#allocation2 + $0xe0] sm:$0x1]
  %v198 = vsel %vm142, 0, %v197
  %199 = vst [vmem:[#allocation2 + $0xe0] sm:$0x1] %v198
  %v200 = vld [vmem:[#allocation2 + $0xec] sm:$0x1]
  %v201 = vsel %vm142, 0, %v200
  %202 = vst [vmem:[#allocation2 + $0xec] sm:$0x1] %v201
  %v203 = vld [vmem:[#allocation2 + $0xf8] sm:$0x1]
  %v204 = vsel %vm142, 0, %v203
  %205 = vst [vmem:[#allocation2 + $0xf8] sm:$0x1] %v204
  %v206 = vld [vmem:[#allocation2 + $0x104] sm:$0x1]
  %v207 = vsel %vm142, 0, %v206
  %208 = vst [vmem:[#allocation2 + $0x104] sm:$0x1] %v207
  %v209 = vld [vmem:[#allocation2 + $0x110] sm:$0x1]
  %v210 = vsel %vm142, 0, %v209
  %211 = vst [vmem:[#allocation2 + $0x110] sm:$0x1] %v210
  %v212 = vld [vmem:[#allocation2 + $0x11c] sm:$0x1]
  %v213 = vsel %vm142, 0, %v212
  %214 = vst [vmem:[#allocation2 + $0x11c] sm:$0x1] %v213
  %v215 = vld [vmem:[#allocation2 + $0x128] sm:$0x1]
  %v216 = vsel %vm142, 0, %v215
  %217 = vst [vmem:[#allocation2 + $0x128] sm:$0x1] %v216
  %v218 = vld [vmem:[#allocation2 + $0x134] sm:$0x1]
  %v219 = vsel %vm142, 0, %v218
  %220 = vst [vmem:[#allocation2 + $0x134] sm:$0x1] %v219
  %v221 = vld [vmem:[#allocation2 + $0x140] sm:$0x1]
  %v222 = vsel %vm142, 0, %v221
  %223 = vst [vmem:[#allocation2 + $0x140] sm:$0x1] %v222
  %v224 = vld [vmem:[#allocation2 + $0x14c] sm:$0x1]
  %v225 = vsel %vm142, 0, %v224
  %226 = vst [vmem:[#allocation2 + $0x14c] sm:$0x1] %v225
  %v227 = vld [vmem:[#allocation2 + $0x158] sm:$0x1]
  %v228 = vsel %vm142, 0, %v227
  %229 = vst [vmem:[#allocation2 + $0x158] sm:$0x1] %v228
  %v230 = vld [vmem:[#allocation2 + $0x164] sm:$0x1]
  %v231 = vsel %vm142, 0, %v230
  %232 = vst [vmem:[#allocation2 + $0x164] sm:$0x1] %v231
  %v233 = vld [vmem:[#allocation2 + $0x170] sm:$0x1]
  %v234 = vsel %vm142, 0, %v233
  %235 = vst [vmem:[#allocation2 + $0x170] sm:$0x1] %v234
  %v236 = vld [vmem:[#allocation2 + $0x17c] sm:$0x1]
  %v237 = vsel %vm142, 0, %v236
  %238 = vst [vmem:[#allocation2 + $0x17c] sm:$0x1] %v237
  %v239 = vld [vmem:[#allocation2 + $0x188] sm:$0x1]
  %v240 = vsel %vm142, 0, %v239
  %241 = vst [vmem:[#allocation2 + $0x188] sm:$0x1] %v240
  %v242 = vld [vmem:[#allocation2 + $0x194] sm:$0x1]
  %v243 = vsel %vm142, 0, %v242
  %244 = vst [vmem:[#allocation2 + $0x194] sm:$0x1] %v243
  %v245 = vld [vmem:[#allocation2 + $0x1a0] sm:$0x1]
  %v246 = vsel %vm142, 0, %v245
  %247 = vst [vmem:[#allocation2 + $0x1a0] sm:$0x1] %v246
  %v248 = vld [vmem:[#allocation2 + $0x1ac] sm:$0x1]
  %v249 = vsel %vm142, 0, %v248
  %250 = vst [vmem:[#allocation2 + $0x1ac] sm:$0x1] %v249
  %v251 = vld [vmem:[%s0] sm:$0xff]
  %v252 = vld [vmem:[%s0 + $0x8] sm:$0xff]
  %v253 = vld [vmem:[%s0 + $0x10] sm:$0xff]
  %v254 = vld [vmem:[%s0 + $0x18] sm:$0xff]
  %v255 = vld [vmem:[%s0 + $0x20] sm:$0xff]
  %v256 = vld [vmem:[%s0 + $0x28] sm:$0xff]
  %v257 = vld [vmem:[%s0 + $0x30] sm:$0xff]
  %v258 = vld [vmem:[%s0 + $0x38] sm:$0xff]
  %v259 = vld [vmem:[%s0 + $0x40] sm:$0xff]
  %v260 = vld [vmem:[%s0 + $0x48] sm:$0xff]
  %v261 = vld [vmem:[%s0 + $0x50] sm:$0xff]
  %v262 = vld [vmem:[%s0 + $0x58] sm:$0xff]
  %v263 = vld [vmem:[%s0 + $0x60] sm:$0xff]
  %v264 = vld [vmem:[%s0 + $0x68] sm:$0xff]
  %v265 = vld [vmem:[%s0 + $0x70] sm:$0xff]
  %v266 = vld [vmem:[%s0 + $0x78] sm:$0xff]
  %v267 = vld [vmem:[%s0 + $0x80] sm:$0xff]
  %v268 = vld [vmem:[%s0 + $0x88] sm:$0xff]
  %v269 = vld [vmem:[%s0 + $0x90] sm:$0xff]
  %v270 = vld [vmem:[%s0 + $0x98] sm:$0xff]
  %v271 = vld [vmem:[%s0 + $0xa0] sm:$0xff]
  %v272 = vld [vmem:[%s0 + $0xa8] sm:$0xff]
  %v273 = vld [vmem:[%s0 + $0xb0] sm:$0xff]
  %v274 = vld [vmem:[%s0 + $0xb8] sm:$0xff]
  %v275 = vld [vmem:[%s0 + $0xc0] sm:$0xff]
  %v276 = vld [vmem:[%s0 + $0xc8] sm:$0xff]
  %v277 = vld [vmem:[%s0 + $0xd0] sm:$0xff]
  %v278 = vld [vmem:[%s0 + $0xd8] sm:$0xff]
  %v279 = vld [vmem:[%s0 + $0xe0] sm:$0xff]
  %v280 = vld [vmem:[%s0 + $0xe8] sm:$0xff]
  %v281 = vld [vmem:[%s0 + $0xf0] sm:$0xff]
  %v282 = vld [vmem:[%s0 + $0xf8] sm:$0xff]
  %v283 = vld [vmem:[%s0 + $0x100] sm:$0xff]
  %v284 = vld [vmem:[%s0 + $0x108] sm:$0xff]
  %v285 = vld [vmem:[%s0 + $0x110] sm:$0xff]
  %v286 = vld [vmem:[%s0 + $0x118] sm:$0xff]
  %v287 = vld [vmem:[%s0 + $0x120] sm:$0xff]
  %v288 = vld [vmem:[%s0 + $0x128] sm:$0xff]
  %v289 = vld [vmem:[%s0 + $0x130] sm:$0xff]
  %v290 = vld [vmem:[%s0 + $0x138] sm:$0xff]
  %v291 = vld [vmem:[%s0 + $0x140] sm:$0xff]
  %v292 = vld [vmem:[%s0 + $0x148] sm:$0xff]
  %v293 = vld [vmem:[%s0 + $0x150] sm:$0xff]
  %v294 = vld [vmem:[%s0 + $0x158] sm:$0xff]
  %v295 = vld [vmem:[%s0 + $0x160] sm:$0xff]
  %v296 = vld [vmem:[%s0 + $0x168] sm:$0xff]
  %v297 = vld [vmem:[%s0 + $0x170] sm:$0xff]
  %v298 = vld [vmem:[%s0 + $0x178] sm:$0xff]
  %v299 = vld [vmem:[%s0 + $0x180] sm:$0xff]
  %v300 = vld [vmem:[%s0 + $0x188] sm:$0xff]
  %v301 = vld [vmem:[%s0 + $0x190] sm:$0xff]
  %v302 = vld [vmem:[%s0 + $0x198] sm:$0xff]
  %v303 = vld [vmem:[%s0 + $0x1a0] sm:$0xff]
  %v304 = vld [vmem:[%s0 + $0x1a8] sm:$0xff]
  %v305 = vld [vmem:[%s0 + $0x1b0] sm:$0xff]
  %v306 = vld [vmem:[%s0 + $0x1b8] sm:$0xff]
  %v307 = vld [vmem:[%s0 + $0x1c0] sm:$0xff]
  %v308 = vld [vmem:[%s0 + $0x1c8] sm:$0xff]
  %v309 = vld [vmem:[%s0 + $0x1d0] sm:$0xff]
  %v310 = vld [vmem:[%s0 + $0x1d8] sm:$0xff]
  %v311 = vld [vmem:[%s0 + $0x1e0] sm:$0xff]
  %v312 = vld [vmem:[%s0 + $0x1e8] sm:$0xff]
  %v313 = vld [vmem:[%s0 + $0x1f0] sm:$0xff]
  %v314 = vld [vmem:[%s0 + $0x1f8] sm:$0xff]
  %v315 = vpack.c.bf16 %v252, %v251
  %v316 = vpack.c.bf16 %v254, %v253
  %v317 = vpack.c.bf16 %v256, %v255
  %v318 = vpack.c.bf16 %v258, %v257
  %v319 = vpack.c.bf16 %v260, %v259
  %v320 = vpack.c.bf16 %v262, %v261
  %v321 = vpack.c.bf16 %v264, %v263
  %v322 = vpack.c.bf16 %v266, %v265
  %v323 = vpack.c.bf16 %v268, %v267
  %v324 = vpack.c.bf16 %v270, %v269
  %v325 = vpack.c.bf16 %v272, %v271
  %v326 = vpack.c.bf16 %v274, %v273
  %v327 = vpack.c.bf16 %v276, %v275
  %v328 = vpack.c.bf16 %v278, %v277
  %v329 = vpack.c.bf16 %v280, %v279
  %v330 = vpack.c.bf16 %v282, %v281
  %v331 = vpack.c.bf16 %v284, %v283
  %v332 = vpack.c.bf16 %v286, %v285
  %v333 = vpack.c.bf16 %v288, %v287
  %v334 = vpack.c.bf16 %v290, %v289
  %v335 = vpack.c.bf16 %v292, %v291
  %v336 = vpack.c.bf16 %v294, %v293
  %v337 = vpack.c.bf16 %v296, %v295
  %v338 = vpack.c.bf16 %v298, %v297
  %v339 = vpack.c.bf16 %v300, %v299
  %v340 = vpack.c.bf16 %v302, %v301
  %v341 = vpack.c.bf16 %v304, %v303
  %v342 = vpack.c.bf16 %v306, %v305
  %v343 = vpack.c.bf16 %v308, %v307
  %v344 = vpack.c.bf16 %v310, %v309
  %v345 = vpack.c.bf16 %v312, %v311
  %v346 = vpack.c.bf16 %v314, %v313
  %v379 = vunpack.c.l.b16 %v315
  %v380 = vunpack.c.h.b16 %v315
  %v381 = vunpack.c.l.b16 %v316
  %v382 = vunpack.c.h.b16 %v316
  %v383 = vunpack.c.l.b16 %v317
  %v384 = vunpack.c.h.b16 %v317
  %v385 = vunpack.c.l.b16 %v318
  %v386 = vunpack.c.h.b16 %v318
  %v387 = vunpack.c.l.b16 %v319
  %v388 = vunpack.c.h.b16 %v319
  %v389 = vunpack.c.l.b16 %v320
  %v390 = vunpack.c.h.b16 %v320
  %v391 = vunpack.c.l.b16 %v321
  %v392 = vunpack.c.h.b16 %v321
  %v393 = vunpack.c.l.b16 %v322
  %v394 = vunpack.c.h.b16 %v322
  %v395 = vunpack.c.l.b16 %v323
  %v396 = vunpack.c.h.b16 %v323
  %v397 = vunpack.c.l.b16 %v324
  %v398 = vunpack.c.h.b16 %v324
  %v399 = vunpack.c.l.b16 %v325
  %v400 = vunpack.c.h.b16 %v325
  %v401 = vunpack.c.l.b16 %v326
  %v402 = vunpack.c.h.b16 %v326
  %v403 = vunpack.c.l.b16 %v327
  %v404 = vunpack.c.h.b16 %v327
  %v405 = vunpack.c.l.b16 %v328
  %v406 = vunpack.c.h.b16 %v328
  %v407 = vunpack.c.l.b16 %v329
  %v408 = vunpack.c.h.b16 %v329
  %v409 = vunpack.c.l.b16 %v330
  %v410 = vunpack.c.h.b16 %v330
  %v411 = vunpack.c.l.b16 %v331
  %v412 = vunpack.c.h.b16 %v331
  %v413 = vunpack.c.l.b16 %v332
  %v414 = vunpack.c.h.b16 %v332
  %v415 = vunpack.c.l.b16 %v333
  %v416 = vunpack.c.h.b16 %v333
  %v417 = vunpack.c.l.b16 %v334
  %v418 = vunpack.c.h.b16 %v334
  %v419 = vunpack.c.l.b16 %v335
  %v420 = vunpack.c.h.b16 %v335
  %v421 = vunpack.c.l.b16 %v336
  %v422 = vunpack.c.h.b16 %v336
  %v423 = vunpack.c.l.b16 %v337
  %v424 = vunpack.c.h.b16 %v337
  %v425 = vunpack.c.l.b16 %v338
  %v426 = vunpack.c.h.b16 %v338
  %v427 = vunpack.c.l.b16 %v339
  %v428 = vunpack.c.h.b16 %v339
  %v429 = vunpack.c.l.b16 %v340
  %v430 = vunpack.c.h.b16 %v340
  %v431 = vunpack.c.l.b16 %v341
  %v432 = vunpack.c.h.b16 %v341
  %v433 = vunpack.c.l.b16 %v342
  %v434 = vunpack.c.h.b16 %v342
  %v435 = vunpack.c.l.b16 %v343
  %v436 = vunpack.c.h.b16 %v343
  %v437 = vunpack.c.l.b16 %v344
  %v438 = vunpack.c.h.b16 %v344
  %v439 = vunpack.c.l.b16 %v345
  %v440 = vunpack.c.h.b16 %v345
  %v441 = vunpack.c.l.b16 %v346
  %v442 = vunpack.c.h.b16 %v346
  %v443 = vpack.c.b16 %v379, %v379
  %v444 = vpack.c.b16 %v380, %v380
  %v445 = vpack.c.b16 %v381, %v381
  %v446 = vpack.c.b16 %v382, %v382
  %v447 = vpack.c.b16 %v383, %v383
  %v448 = vpack.c.b16 %v384, %v384
  %v449 = vpack.c.b16 %v385, %v385
  %v450 = vpack.c.b16 %v386, %v386
  %v451 = vpack.c.b16 %v387, %v387
  %v452 = vpack.c.b16 %v388, %v388
  %v453 = vpack.c.b16 %v389, %v389
  %v454 = vpack.c.b16 %v390, %v390
  %v455 = vpack.c.b16 %v391, %v391
  %v456 = vpack.c.b16 %v392, %v392
  %v457 = vpack.c.b16 %v393, %v393
  %v458 = vpack.c.b16 %v394, %v394
  %v459 = vpack.c.b16 %v395, %v395
  %v460 = vpack.c.b16 %v396, %v396
  %v461 = vpack.c.b16 %v397, %v397
  %v462 = vpack.c.b16 %v398, %v398
  %v463 = vpack.c.b16 %v399, %v399
  %v464 = vpack.c.b16 %v400, %v400
  %v465 = vpack.c.b16 %v401, %v401
  %v466 = vpack.c.b16 %v402, %v402
  %v467 = vpack.c.b16 %v403, %v403
  %v468 = vpack.c.b16 %v404, %v404
  %v469 = vpack.c.b16 %v405, %v405
  %v470 = vpack.c.b16 %v406, %v406
  %v471 = vpack.c.b16 %v407, %v407
  %v472 = vpack.c.b16 %v408, %v408
  %v473 = vpack.c.b16 %v409, %v409
  %v474 = vpack.c.b16 %v410, %v410
  %v475 = vpack.c.b16 %v411, %v411
  %v476 = vpack.c.b16 %v412, %v412
  %v477 = vpack.c.b16 %v413, %v413
  %v478 = vpack.c.b16 %v414, %v414
  %v479 = vpack.c.b16 %v415, %v415
  %v480 = vpack.c.b16 %v416, %v416
  %v481 = vpack.c.b16 %v417, %v417
  %v482 = vpack.c.b16 %v418, %v418
  %v483 = vpack.c.b16 %v419, %v419
  %v484 = vpack.c.b16 %v420, %v420
  %v485 = vpack.c.b16 %v421, %v421
  %v486 = vpack.c.b16 %v422, %v422
  %v487 = vpack.c.b16 %v423, %v423
  %v488 = vpack.c.b16 %v424, %v424
  %v489 = vpack.c.b16 %v425, %v425
  %v490 = vpack.c.b16 %v426, %v426
  %v491 = vpack.c.b16 %v427, %v427
  %v492 = vpack.c.b16 %v428, %v428
  %v493 = vpack.c.b16 %v429, %v429
  %v494 = vpack.c.b16 %v430, %v430
  %v495 = vpack.c.b16 %v431, %v431
  %v496 = vpack.c.b16 %v432, %v432
  %v497 = vpack.c.b16 %v433, %v433
  %v498 = vpack.c.b16 %v434, %v434
  %v499 = vpack.c.b16 %v435, %v435
  %v500 = vpack.c.b16 %v436, %v436
  %v501 = vpack.c.b16 %v437, %v437
  %v502 = vpack.c.b16 %v438, %v438
  %v503 = vpack.c.b16 %v439, %v439
  %v504 = vpack.c.b16 %v440, %v440
  %v505 = vpack.c.b16 %v441, %v441
  %v506 = vpack.c.b16 %v442, %v442
  %vm507 = vsmask.f32 4368
  %vm508 = vmor %vm31, %vm507
  %v510 = vshrl.u32 %v443, 16
  %v512 = vrot.slane %v510, 7
  %v513 = vshll.u32 %v443, 16
  %v515 = vor.u32 %v512, %v513
  %v516 = vrot.slane %v512, 4
  %v518 = vshrl.u32 %v444, 16
  %v520 = vrot.slane %v518, 7
  %v521 = vshll.u32 %v444, 16
  %v523 = vor.u32 %v520, %v521
  %v524 = vsel %vm508, %v516, %v523
  %v525 = vrot.slane %v520, 4
  %v527 = vshrl.u32 %v445, 16
  %v529 = vrot.slane %v527, 7
  %v530 = vshll.u32 %v445, 16
  %v532 = vor.u32 %v529, %v530
  %v533 = vrot.slane %v529, 4
  %v535 = vshrl.u32 %v446, 16
  %v537 = vrot.slane %v535, 7
  %v538 = vshll.u32 %v446, 16
  %v540 = vor.u32 %v537, %v538
  %v541 = vsel %vm508, %v533, %v540
  %v542 = vrot.slane %v537, 4
  %v544 = vshrl.u32 %v447, 16
  %v546 = vrot.slane %v544, 7
  %v547 = vshll.u32 %v447, 16
  %v549 = vor.u32 %v546, %v547
  %v550 = vrot.slane %v546, 4
  %v552 = vshrl.u32 %v448, 16
  %v554 = vrot.slane %v552, 7
  %v555 = vshll.u32 %v448, 16
  %v557 = vor.u32 %v554, %v555
  %v558 = vsel %vm508, %v550, %v557
  %v559 = vrot.slane %v554, 4
  %v561 = vshrl.u32 %v449, 16
  %v563 = vrot.slane %v561, 7
  %v564 = vshll.u32 %v449, 16
  %v566 = vor.u32 %v563, %v564
  %v567 = vrot.slane %v563, 4
  %v569 = vshrl.u32 %v450, 16
  %v571 = vrot.slane %v569, 7
  %v572 = vshll.u32 %v450, 16
  %v574 = vor.u32 %v571, %v572
  %v575 = vsel %vm508, %v567, %v574
  %v576 = vrot.slane %v571, 4
  %v578 = vshrl.u32 %v451, 16
  %v580 = vrot.slane %v578, 7
  %v581 = vshll.u32 %v451, 16
  %v583 = vor.u32 %v580, %v581
  %v584 = vrot.slane %v580, 4
  %v586 = vshrl.u32 %v452, 16
  %v588 = vrot.slane %v586, 7
  %v589 = vshll.u32 %v452, 16
  %v591 = vor.u32 %v588, %v589
  %v592 = vsel %vm508, %v584, %v591
  %v593 = vrot.slane %v588, 4
  %v595 = vshrl.u32 %v453, 16
  %v597 = vrot.slane %v595, 7
  %v598 = vshll.u32 %v453, 16
  %v600 = vor.u32 %v597, %v598
  %v601 = vrot.slane %v597, 4
  %v603 = vshrl.u32 %v454, 16
  %v605 = vrot.slane %v603, 7
  %v606 = vshll.u32 %v454, 16
  %v608 = vor.u32 %v605, %v606
  %v609 = vsel %vm508, %v601, %v608
  %v610 = vrot.slane %v605, 4
  %v612 = vshrl.u32 %v455, 16
  %v614 = vrot.slane %v612, 7
  %v615 = vshll.u32 %v455, 16
  %v617 = vor.u32 %v614, %v615
  %v618 = vrot.slane %v614, 4
  %v620 = vshrl.u32 %v456, 16
  %v622 = vrot.slane %v620, 7
  %v623 = vshll.u32 %v456, 16
  %v625 = vor.u32 %v622, %v623
  %v626 = vsel %vm508, %v618, %v625
  %v627 = vrot.slane %v622, 4
  %v629 = vshrl.u32 %v457, 16
  %v631 = vrot.slane %v629, 7
  %v632 = vshll.u32 %v457, 16
  %v634 = vor.u32 %v631, %v632
  %v635 = vrot.slane %v631, 4
  %v637 = vshrl.u32 %v458, 16
  %v639 = vrot.slane %v637, 7
  %v640 = vshll.u32 %v458, 16
  %v642 = vor.u32 %v639, %v640
  %v643 = vsel %vm508, %v635, %v642
  %v644 = vrot.slane %v639, 4
  %v646 = vshrl.u32 %v459, 16
  %v648 = vrot.slane %v646, 7
  %v649 = vshll.u32 %v459, 16
  %v651 = vor.u32 %v648, %v649
  %v652 = vrot.slane %v648, 4
  %v654 = vshrl.u32 %v460, 16
  %v656 = vrot.slane %v654, 7
  %v657 = vshll.u32 %v460, 16
  %v659 = vor.u32 %v656, %v657
  %v660 = vsel %vm508, %v652, %v659
  %v661 = vrot.slane %v656, 4
  %v663 = vshrl.u32 %v461, 16
  %v665 = vrot.slane %v663, 7
  %v666 = vshll.u32 %v461, 16
  %v668 = vor.u32 %v665, %v666
  %v669 = vrot.slane %v665, 4
  %v671 = vshrl.u32 %v462, 16
  %v673 = vrot.slane %v671, 7
  %v674 = vshll.u32 %v462, 16
  %v676 = vor.u32 %v673, %v674
  %v677 = vsel %vm508, %v669, %v676
  %v678 = vrot.slane %v673, 4
  %v680 = vshrl.u32 %v463, 16
  %v682 = vrot.slane %v680, 7
  %v683 = vshll.u32 %v463, 16
  %v685 = vor.u32 %v682, %v683
  %v686 = vrot.slane %v682, 4
  %v688 = vshrl.u32 %v464, 16
  %v690 = vrot.slane %v688, 7
  %v691 = vshll.u32 %v464, 16
  %v693 = vor.u32 %v690, %v691
  %v694 = vsel %vm508, %v686, %v693
  %v695 = vrot.slane %v690, 4
  %v697 = vshrl.u32 %v465, 16
  %v699 = vrot.slane %v697, 7
  %v700 = vshll.u32 %v465, 16
  %v702 = vor.u32 %v699, %v700
  %v703 = vrot.slane %v699, 4
  %v705 = vshrl.u32 %v466, 16
  %v707 = vrot.slane %v705, 7
  %v708 = vshll.u32 %v466, 16
  %v710 = vor.u32 %v707, %v708
  %v711 = vsel %vm508, %v703, %v710
  %v712 = vrot.slane %v707, 4
  %v714 = vshrl.u32 %v467, 16
  %v716 = vrot.slane %v714, 7
  %v717 = vshll.u32 %v467, 16
  %v719 = vor.u32 %v716, %v717
  %v720 = vrot.slane %v716, 4
  %v722 = vshrl.u32 %v468, 16
  %v724 = vrot.slane %v722, 7
  %v725 = vshll.u32 %v468, 16
  %v727 = vor.u32 %v724, %v725
  %v728 = vsel %vm508, %v720, %v727
  %v729 = vrot.slane %v724, 4
  %v731 = vshrl.u32 %v469, 16
  %v733 = vrot.slane %v731, 7
  %v734 = vshll.u32 %v469, 16
  %v736 = vor.u32 %v733, %v734
  %v737 = vrot.slane %v733, 4
  %v739 = vshrl.u32 %v470, 16
  %v741 = vrot.slane %v739, 7
  %v742 = vshll.u32 %v470, 16
  %v744 = vor.u32 %v741, %v742
  %v745 = vsel %vm508, %v737, %v744
  %v746 = vrot.slane %v741, 4
  %v748 = vshrl.u32 %v471, 16
  %v750 = vrot.slane %v748, 7
  %v751 = vshll.u32 %v471, 16
  %v753 = vor.u32 %v750, %v751
  %v754 = vrot.slane %v750, 4
  %v756 = vshrl.u32 %v472, 16
  %v758 = vrot.slane %v756, 7
  %v759 = vshll.u32 %v472, 16
  %v761 = vor.u32 %v758, %v759
  %v762 = vsel %vm508, %v754, %v761
  %v763 = vrot.slane %v758, 4
  %v765 = vshrl.u32 %v473, 16
  %v767 = vrot.slane %v765, 7
  %v768 = vshll.u32 %v473, 16
  %v770 = vor.u32 %v767, %v768
  %v771 = vrot.slane %v767, 4
  %v773 = vshrl.u32 %v474, 16
  %v775 = vrot.slane %v773, 7
  %v776 = vshll.u32 %v474, 16
  %v778 = vor.u32 %v775, %v776
  %v779 = vsel %vm508, %v771, %v778
  %v780 = vrot.slane %v775, 4
  %v782 = vshrl.u32 %v475, 16
  %v784 = vrot.slane %v782, 7
  %v785 = vshll.u32 %v475, 16
  %v787 = vor.u32 %v784, %v785
  %v788 = vrot.slane %v784, 4
  %v790 = vshrl.u32 %v476, 16
  %v792 = vrot.slane %v790, 7
  %v793 = vshll.u32 %v476, 16
  %v795 = vor.u32 %v792, %v793
  %v796 = vsel %vm508, %v788, %v795
  %v797 = vrot.slane %v792, 4
  %v799 = vshrl.u32 %v477, 16
  %v801 = vrot.slane %v799, 7
  %v802 = vshll.u32 %v477, 16
  %v804 = vor.u32 %v801, %v802
  %v805 = vrot.slane %v801, 4
  %v807 = vshrl.u32 %v478, 16
  %v809 = vrot.slane %v807, 7
  %v810 = vshll.u32 %v478, 16
  %v812 = vor.u32 %v809, %v810
  %v813 = vsel %vm508, %v805, %v812
  %v814 = vrot.slane %v809, 4
  %v816 = vshrl.u32 %v479, 16
  %v818 = vrot.slane %v816, 7
  %v819 = vshll.u32 %v479, 16
  %v821 = vor.u32 %v818, %v819
  %v822 = vrot.slane %v818, 4
  %v824 = vshrl.u32 %v480, 16
  %v826 = vrot.slane %v824, 7
  %v827 = vshll.u32 %v480, 16
  %v829 = vor.u32 %v826, %v827
  %v830 = vsel %vm508, %v822, %v829
  %v831 = vrot.slane %v826, 4
  %v833 = vshrl.u32 %v481, 16
  %v835 = vrot.slane %v833, 7
  %v836 = vshll.u32 %v481, 16
  %v838 = vor.u32 %v835, %v836
  %v839 = vrot.slane %v835, 4
  %v841 = vshrl.u32 %v482, 16
  %v843 = vrot.slane %v841, 7
  %v844 = vshll.u32 %v482, 16
  %v846 = vor.u32 %v843, %v844
  %v847 = vsel %vm508, %v839, %v846
  %v848 = vrot.slane %v843, 4
  %v850 = vshrl.u32 %v483, 16
  %v852 = vrot.slane %v850, 7
  %v853 = vshll.u32 %v483, 16
  %v855 = vor.u32 %v852, %v853
  %v856 = vrot.slane %v852, 4
  %v858 = vshrl.u32 %v484, 16
  %v860 = vrot.slane %v858, 7
  %v861 = vshll.u32 %v484, 16
  %v863 = vor.u32 %v860, %v861
  %v864 = vsel %vm508, %v856, %v863
  %v865 = vrot.slane %v860, 4
  %v867 = vshrl.u32 %v485, 16
  %v869 = vrot.slane %v867, 7
  %v870 = vshll.u32 %v485, 16
  %v872 = vor.u32 %v869, %v870
  %v873 = vrot.slane %v869, 4
  %v875 = vshrl.u32 %v486, 16
  %v877 = vrot.slane %v875, 7
  %v878 = vshll.u32 %v486, 16
  %v880 = vor.u32 %v877, %v878
  %v881 = vsel %vm508, %v873, %v880
  %v882 = vrot.slane %v877, 4
  %v884 = vshrl.u32 %v487, 16
  %v886 = vrot.slane %v884, 7
  %v887 = vshll.u32 %v487, 16
  %v889 = vor.u32 %v886, %v887
  %v890 = vrot.slane %v886, 4
  %v892 = vshrl.u32 %v488, 16
  %v894 = vrot.slane %v892, 7
  %v895 = vshll.u32 %v488, 16
  %v897 = vor.u32 %v894, %v895
  %v898 = vsel %vm508, %v890, %v897
  %v899 = vrot.slane %v894, 4
  %v901 = vshrl.u32 %v489, 16
  %v903 = vrot.slane %v901, 7
  %v904 = vshll.u32 %v489, 16
  %v906 = vor.u32 %v903, %v904
  %v907 = vrot.slane %v903, 4
  %v909 = vshrl.u32 %v490, 16
  %v911 = vrot.slane %v909, 7
  %v912 = vshll.u32 %v490, 16
  %v914 = vor.u32 %v911, %v912
  %v915 = vsel %vm508, %v907, %v914
  %v916 = vrot.slane %v911, 4
  %v918 = vshrl.u32 %v491, 16
  %v920 = vrot.slane %v918, 7
  %v921 = vshll.u32 %v491, 16
  %v923 = vor.u32 %v920, %v921
  %v924 = vrot.slane %v920, 4
  %v926 = vshrl.u32 %v492, 16
  %v928 = vrot.slane %v926, 7
  %v929 = vshll.u32 %v492, 16
  %v931 = vor.u32 %v928, %v929
  %v932 = vsel %vm508, %v924, %v931
  %v933 = vrot.slane %v928, 4
  %v935 = vshrl.u32 %v493, 16
  %v937 = vrot.slane %v935, 7
  %v938 = vshll.u32 %v493, 16
  %v940 = vor.u32 %v937, %v938
  %v941 = vrot.slane %v937, 4
  %v943 = vshrl.u32 %v494, 16
  %v945 = vrot.slane %v943, 7
  %v946 = vshll.u32 %v494, 16
  %v948 = vor.u32 %v945, %v946
  %v949 = vsel %vm508, %v941, %v948
  %v950 = vrot.slane %v945, 4
  %v952 = vshrl.u32 %v495, 16
  %v954 = vrot.slane %v952, 7
  %v955 = vshll.u32 %v495, 16
  %v957 = vor.u32 %v954, %v955
  %v958 = vrot.slane %v954, 4
  %v960 = vshrl.u32 %v496, 16
  %v962 = vrot.slane %v960, 7
  %v963 = vshll.u32 %v496, 16
  %v965 = vor.u32 %v962, %v963
  %v966 = vsel %vm508, %v958, %v965
  %v967 = vrot.slane %v962, 4
  %v969 = vshrl.u32 %v497, 16
  %v971 = vrot.slane %v969, 7
  %v972 = vshll.u32 %v497, 16
  %v974 = vor.u32 %v971, %v972
  %v975 = vrot.slane %v971, 4
  %v977 = vshrl.u32 %v498, 16
  %v979 = vrot.slane %v977, 7
  %v980 = vshll.u32 %v498, 16
  %v982 = vor.u32 %v979, %v980
  %v983 = vsel %vm508, %v975, %v982
  %v984 = vrot.slane %v979, 4
  %v986 = vshrl.u32 %v499, 16
  %v988 = vrot.slane %v986, 7
  %v989 = vshll.u32 %v499, 16
  %v991 = vor.u32 %v988, %v989
  %v992 = vrot.slane %v988, 4
  %v994 = vshrl.u32 %v500, 16
  %v996 = vrot.slane %v994, 7
  %v997 = vshll.u32 %v500, 16
  %v999 = vor.u32 %v996, %v997
  %v1000 = vsel %vm508, %v992, %v999
  %v1001 = vrot.slane %v996, 4
  %v1003 = vshrl.u32 %v501, 16
  %v1005 = vrot.slane %v1003, 7
  %v1006 = vshll.u32 %v501, 16
  %v1008 = vor.u32 %v1005, %v1006
  %v1009 = vrot.slane %v1005, 4
  %v1011 = vshrl.u32 %v502, 16
  %v1013 = vrot.slane %v1011, 7
  %v1014 = vshll.u32 %v502, 16
  %v1016 = vor.u32 %v1013, %v1014
  %v1017 = vsel %vm508, %v1009, %v1016
  %v1018 = vrot.slane %v1013, 4
  %v1020 = vshrl.u32 %v503, 16
  %v1022 = vrot.slane %v1020, 7
  %v1023 = vshll.u32 %v503, 16
  %v1025 = vor.u32 %v1022, %v1023
  %v1026 = vrot.slane %v1022, 4
  %v1028 = vshrl.u32 %v504, 16
  %v1030 = vrot.slane %v1028, 7
  %v1031 = vshll.u32 %v504, 16
  %v1033 = vor.u32 %v1030, %v1031
  %v1034 = vsel %vm508, %v1026, %v1033
  %v1035 = vrot.slane %v1030, 4
  %v1037 = vshrl.u32 %v505, 16
  %v1039 = vrot.slane %v1037, 7
  %v1040 = vshll.u32 %v505, 16
  %v1042 = vor.u32 %v1039, %v1040
  %v1043 = vrot.slane %v1039, 4
  %v1045 = vshrl.u32 %v506, 16
  %v1047 = vrot.slane %v1045, 7
  %v1048 = vshll.u32 %v506, 16
  %v1050 = vor.u32 %v1047, %v1048
  %v1051 = vsel %vm508, %v1043, %v1050
  %v1052 = vrot.slane %v1047, 4
  %s1149 = scalar_lea.vmem [#allocation2], 12
  %vm1150 = vcmask 27648
  %vm1151 = vmand %vm1150, %vm141
  %v1152 = vld [vmem:[%s1149] sm:$0xf]
  %v1153 = vsel %vm1151, %v515, %v1152
  %1154 = vst [vmem:[%s1149] sm:$0xf] %v1153
  %1155 = vst.msk [vmem:[%s1149 + $0x4] sm:$0xf] %vm15, %v524
  %v1156 = vld [vmem:[%s1149 + $0x8] sm:$0x1]
  %v1157 = vsel %vm32, %v525, %v1156
  %1158 = vst [vmem:[%s1149 + $0x8] sm:$0x1] %v1157
  %v1159 = vld [vmem:[%s1149 + $0xc] sm:$0xf]
  %v1160 = vsel %vm1151, %v532, %v1159
  %1161 = vst [vmem:[%s1149 + $0xc] sm:$0xf] %v1160
  %1162 = vst.msk [vmem:[%s1149 + $0x10] sm:$0xf] %vm15, %v541
  %v1163 = vld [vmem:[%s1149 + $0x14] sm:$0x1]
  %v1164 = vsel %vm32, %v542, %v1163
  %1165 = vst [vmem:[%s1149 + $0x14] sm:$0x1] %v1164
  %v1166 = vld [vmem:[%s1149 + $0x18] sm:$0xf]
  %v1167 = vsel %vm1151, %v549, %v1166
  %1168 = vst [vmem:[%s1149 + $0x18] sm:$0xf] %v1167
  %1169 = vst.msk [vmem:[%s1149 + $0x1c] sm:$0xf] %vm15, %v558
  %v1170 = vld [vmem:[%s1149 + $0x20] sm:$0x1]
  %v1171 = vsel %vm32, %v559, %v1170
  %1172 = vst [vmem:[%s1149 + $0x20] sm:$0x1] %v1171
  %v1173 = vld [vmem:[%s1149 + $0x24] sm:$0xf]
  %v1174 = vsel %vm1151, %v566, %v1173
  %1175 = vst [vmem:[%s1149 + $0x24] sm:$0xf] %v1174
  %1176 = vst.msk [vmem:[%s1149 + $0x28] sm:$0xf] %vm15, %v575
  %v1177 = vld [vmem:[%s1149 + $0x2c] sm:$0x1]
  %v1178 = vsel %vm32, %v576, %v1177
  %1179 = vst [vmem:[%s1149 + $0x2c] sm:$0x1] %v1178
  %v1180 = vld [vmem:[%s1149 + $0x30] sm:$0xf]
  %v1181 = vsel %vm1151, %v583, %v1180
  %1182 = vst [vmem:[%s1149 + $0x30] sm:$0xf] %v1181
  %1183 = vst.msk [vmem:[%s1149 + $0x34] sm:$0xf] %vm15, %v592
  %v1184 = vld [vmem:[%s1149 + $0x38] sm:$0x1]
  %v1185 = vsel %vm32, %v593, %v1184
  %1186 = vst [vmem:[%s1149 + $0x38] sm:$0x1] %v1185
  %v1187 = vld [vmem:[%s1149 + $0x3c] sm:$0xf]
  %v1188 = vsel %vm1151, %v600, %v1187
  %1189 = vst [vmem:[%s1149 + $0x3c] sm:$0xf] %v1188
  %1190 = vst.msk [vmem:[%s1149 + $0x40] sm:$0xf] %vm15, %v609
  %v1191 = vld [vmem:[%s1149 + $0x44] sm:$0x1]
  %v1192 = vsel %vm32, %v610, %v1191
  %1193 = vst [vmem:[%s1149 + $0x44] sm:$0x1] %v1192
  %v1194 = vld [vmem:[%s1149 + $0x48] sm:$0xf]
  %v1195 = vsel %vm1151, %v617, %v1194
  %1196 = vst [vmem:[%s1149 + $0x48] sm:$0xf] %v1195
  %1197 = vst.msk [vmem:[%s1149 + $0x4c] sm:$0xf] %vm15, %v626
  %v1198 = vld [vmem:[%s1149 + $0x50] sm:$0x1]
  %v1199 = vsel %vm32, %v627, %v1198
  %1200 = vst [vmem:[%s1149 + $0x50] sm:$0x1] %v1199
  %v1201 = vld [vmem:[%s1149 + $0x54] sm:$0xf]
  %v1202 = vsel %vm1151, %v634, %v1201
  %1203 = vst [vmem:[%s1149 + $0x54] sm:$0xf] %v1202
  %1204 = vst.msk [vmem:[%s1149 + $0x58] sm:$0xf] %vm15, %v643
  %v1205 = vld [vmem:[%s1149 + $0x5c] sm:$0x1]
  %v1206 = vsel %vm32, %v644, %v1205
  %1207 = vst [vmem:[%s1149 + $0x5c] sm:$0x1] %v1206
  %v1208 = vld [vmem:[%s1149 + $0x60] sm:$0xf]
  %v1209 = vsel %vm1151, %v651, %v1208
  %1210 = vst [vmem:[%s1149 + $0x60] sm:$0xf] %v1209
  %1211 = vst.msk [vmem:[%s1149 + $0x64] sm:$0xf] %vm15, %v660
  %v1212 = vld [vmem:[%s1149 + $0x68] sm:$0x1]
  %v1213 = vsel %vm32, %v661, %v1212
  %1214 = vst [vmem:[%s1149 + $0x68] sm:$0x1] %v1213
  %v1215 = vld [vmem:[%s1149 + $0x6c] sm:$0xf]
  %v1216 = vsel %vm1151, %v668, %v1215
  %1217 = vst [vmem:[%s1149 + $0x6c] sm:$0xf] %v1216
  %1218 = vst.msk [vmem:[%s1149 + $0x70] sm:$0xf] %vm15, %v677
  %v1219 = vld [vmem:[%s1149 + $0x74] sm:$0x1]
  %v1220 = vsel %vm32, %v678, %v1219
  %1221 = vst [vmem:[%s1149 + $0x74] sm:$0x1] %v1220
  %v1222 = vld [vmem:[%s1149 + $0x78] sm:$0xf]
  %v1223 = vsel %vm1151, %v685, %v1222
  %1224 = vst [vmem:[%s1149 + $0x78] sm:$0xf] %v1223
  %1225 = vst.msk [vmem:[%s1149 + $0x7c] sm:$0xf] %vm15, %v694
  %v1226 = vld [vmem:[%s1149 + $0x80] sm:$0x1]
  %v1227 = vsel %vm32, %v695, %v1226
  %1228 = vst [vmem:[%s1149 + $0x80] sm:$0x1] %v1227
  %v1229 = vld [vmem:[%s1149 + $0x84] sm:$0xf]
  %v1230 = vsel %vm1151, %v702, %v1229
  %1231 = vst [vmem:[%s1149 + $0x84] sm:$0xf] %v1230
  %1232 = vst.msk [vmem:[%s1149 + $0x88] sm:$0xf] %vm15, %v711
  %v1233 = vld [vmem:[%s1149 + $0x8c] sm:$0x1]
  %v1234 = vsel %vm32, %v712, %v1233
  %1235 = vst [vmem:[%s1149 + $0x8c] sm:$0x1] %v1234
  %v1236 = vld [vmem:[%s1149 + $0x90] sm:$0xf]
  %v1237 = vsel %vm1151, %v719, %v1236
  %1238 = vst [vmem:[%s1149 + $0x90] sm:$0xf] %v1237
  %1239 = vst.msk [vmem:[%s1149 + $0x94] sm:$0xf] %vm15, %v728
  %v1240 = vld [vmem:[%s1149 + $0x98] sm:$0x1]
  %v1241 = vsel %vm32, %v729, %v1240
  %1242 = vst [vmem:[%s1149 + $0x98] sm:$0x1] %v1241
  %v1243 = vld [vmem:[%s1149 + $0x9c] sm:$0xf]
  %v1244 = vsel %vm1151, %v736, %v1243
  %1245 = vst [vmem:[%s1149 + $0x9c] sm:$0xf] %v1244
  %1246 = vst.msk [vmem:[%s1149 + $0xa0] sm:$0xf] %vm15, %v745
  %v1247 = vld [vmem:[%s1149 + $0xa4] sm:$0x1]
  %v1248 = vsel %vm32, %v746, %v1247
  %1249 = vst [vmem:[%s1149 + $0xa4] sm:$0x1] %v1248
  %v1250 = vld [vmem:[%s1149 + $0xa8] sm:$0xf]
  %v1251 = vsel %vm1151, %v753, %v1250
  %1252 = vst [vmem:[%s1149 + $0xa8] sm:$0xf] %v1251
  %1253 = vst.msk [vmem:[%s1149 + $0xac] sm:$0xf] %vm15, %v762
  %v1254 = vld [vmem:[%s1149 + $0xb0] sm:$0x1]
  %v1255 = vsel %vm32, %v763, %v1254
  %1256 = vst [vmem:[%s1149 + $0xb0] sm:$0x1] %v1255
  %v1257 = vld [vmem:[%s1149 + $0xb4] sm:$0xf]
  %v1258 = vsel %vm1151, %v770, %v1257
  %1259 = vst [vmem:[%s1149 + $0xb4] sm:$0xf] %v1258
  %1260 = vst.msk [vmem:[%s1149 + $0xb8] sm:$0xf] %vm15, %v779
  %v1261 = vld [vmem:[%s1149 + $0xbc] sm:$0x1]
  %v1262 = vsel %vm32, %v780, %v1261
  %1263 = vst [vmem:[%s1149 + $0xbc] sm:$0x1] %v1262
  %v1264 = vld [vmem:[%s1149 + $0xd8] sm:$0xf]
  %v1265 = vsel %vm1151, %v787, %v1264
  %1266 = vst [vmem:[%s1149 + $0xd8] sm:$0xf] %v1265
  %1267 = vst.msk [vmem:[%s1149 + $0xdc] sm:$0xf] %vm15, %v796
  %v1268 = vld [vmem:[%s1149 + $0xe0] sm:$0x1]
  %v1269 = vsel %vm32, %v797, %v1268
  %1270 = vst [vmem:[%s1149 + $0xe0] sm:$0x1] %v1269
  %v1271 = vld [vmem:[%s1149 + $0xe4] sm:$0xf]
  %v1272 = vsel %vm1151, %v804, %v1271
  %1273 = vst [vmem:[%s1149 + $0xe4] sm:$0xf] %v1272
  %1274 = vst.msk [vmem:[%s1149 + $0xe8] sm:$0xf] %vm15, %v813
  %v1275 = vld [vmem:[%s1149 + $0xec] sm:$0x1]
  %v1276 = vsel %vm32, %v814, %v1275
  %1277 = vst [vmem:[%s1149 + $0xec] sm:$0x1] %v1276
  %v1278 = vld [vmem:[%s1149 + $0xf0] sm:$0xf]
  %v1279 = vsel %vm1151, %v821, %v1278
  %1280 = vst [vmem:[%s1149 + $0xf0] sm:$0xf] %v1279
  %1281 = vst.msk [vmem:[%s1149 + $0xf4] sm:$0xf] %vm15, %v830
  %v1282 = vld [vmem:[%s1149 + $0xf8] sm:$0x1]
  %v1283 = vsel %vm32, %v831, %v1282
  %1284 = vst [vmem:[%s1149 + $0xf8] sm:$0x1] %v1283
  %v1285 = vld [vmem:[%s1149 + $0xfc] sm:$0xf]
  %v1286 = vsel %vm1151, %v838, %v1285
  %1287 = vst [vmem:[%s1149 + $0xfc] sm:$0xf] %v1286
  %1288 = vst.msk [vmem:[%s1149 + $0x100] sm:$0xf] %vm15, %v847
  %v1289 = vld [vmem:[%s1149 + $0x104] sm:$0x1]
  %v1290 = vsel %vm32, %v848, %v1289
  %1291 = vst [vmem:[%s1149 + $0x104] sm:$0x1] %v1290
  %v1292 = vld [vmem:[%s1149 + $0x108] sm:$0xf]
  %v1293 = vsel %vm1151, %v855, %v1292
  %1294 = vst [vmem:[%s1149 + $0x108] sm:$0xf] %v1293
  %1295 = vst.msk [vmem:[%s1149 + $0x10c] sm:$0xf] %vm15, %v864
  %v1296 = vld [vmem:[%s1149 + $0x110] sm:$0x1]
  %v1297 = vsel %vm32, %v865, %v1296
  %1298 = vst [vmem:[%s1149 + $0x110] sm:$0x1] %v1297
  %v1299 = vld [vmem:[%s1149 + $0x114] sm:$0xf]
  %v1300 = vsel %vm1151, %v872, %v1299
  %1301 = vst [vmem:[%s1149 + $0x114] sm:$0xf] %v1300
  %1302 = vst.msk [vmem:[%s1149 + $0x118] sm:$0xf] %vm15, %v881
  %v1303 = vld [vmem:[%s1149 + $0x11c] sm:$0x1]
  %v1304 = vsel %vm32, %v882, %v1303
  %1305 = vst [vmem:[%s1149 + $0x11c] sm:$0x1] %v1304
  %v1306 = vld [vmem:[%s1149 + $0x120] sm:$0xf]
  %v1307 = vsel %vm1151, %v889, %v1306
  %1308 = vst [vmem:[%s1149 + $0x120] sm:$0xf] %v1307
  %1309 = vst.msk [vmem:[%s1149 + $0x124] sm:$0xf] %vm15, %v898
  %v1310 = vld [vmem:[%s1149 + $0x128] sm:$0x1]
  %v1311 = vsel %vm32, %v899, %v1310
  %1312 = vst [vmem:[%s1149 + $0x128] sm:$0x1] %v1311
  %v1313 = vld [vmem:[%s1149 + $0x12c] sm:$0xf]
  %v1314 = vsel %vm1151, %v906, %v1313
  %1315 = vst [vmem:[%s1149 + $0x12c] sm:$0xf] %v1314
  %1316 = vst.msk [vmem:[%s1149 + $0x130] sm:$0xf] %vm15, %v915
  %v1317 = vld [vmem:[%s1149 + $0x134] sm:$0x1]
  %v1318 = vsel %vm32, %v916, %v1317
  %1319 = vst [vmem:[%s1149 + $0x134] sm:$0x1] %v1318
  %v1320 = vld [vmem:[%s1149 + $0x138] sm:$0xf]
  %v1321 = vsel %vm1151, %v923, %v1320
  %1322 = vst [vmem:[%s1149 + $0x138] sm:$0xf] %v1321
  %1323 = vst.msk [vmem:[%s1149 + $0x13c] sm:$0xf] %vm15, %v932
  %v1324 = vld [vmem:[%s1149 + $0x140] sm:$0x1]
  %v1325 = vsel %vm32, %v933, %v1324
  %1326 = vst [vmem:[%s1149 + $0x140] sm:$0x1] %v1325
  %v1327 = vld [vmem:[%s1149 + $0x144] sm:$0xf]
  %v1328 = vsel %vm1151, %v940, %v1327
  %1329 = vst [vmem:[%s1149 + $0x144] sm:$0xf] %v1328
  %1330 = vst.msk [vmem:[%s1149 + $0x148] sm:$0xf] %vm15, %v949
  %v1331 = vld [vmem:[%s1149 + $0x14c] sm:$0x1]
  %v1332 = vsel %vm32, %v950, %v1331
  %1333 = vst [vmem:[%s1149 + $0x14c] sm:$0x1] %v1332
  %v1334 = vld [vmem:[%s1149 + $0x150] sm:$0xf]
  %v1335 = vsel %vm1151, %v957, %v1334
  %1336 = vst [vmem:[%s1149 + $0x150] sm:$0xf] %v1335
  %1337 = vst.msk [vmem:[%s1149 + $0x154] sm:$0xf] %vm15, %v966
  %v1338 = vld [vmem:[%s1149 + $0x158] sm:$0x1]
  %v1339 = vsel %vm32, %v967, %v1338
  %1340 = vst [vmem:[%s1149 + $0x158] sm:$0x1] %v1339
  %v1341 = vld [vmem:[%s1149 + $0x15c] sm:$0xf]
  %v1342 = vsel %vm1151, %v974, %v1341
  %1343 = vst [vmem:[%s1149 + $0x15c] sm:$0xf] %v1342
  %1344 = vst.msk [vmem:[%s1149 + $0x160] sm:$0xf] %vm15, %v983
  %v1345 = vld [vmem:[%s1149 + $0x164] sm:$0x1]
  %v1346 = vsel %vm32, %v984, %v1345
  %1347 = vst [vmem:[%s1149 + $0x164] sm:$0x1] %v1346
  %v1348 = vld [vmem:[%s1149 + $0x168] sm:$0xf]
  %v1349 = vsel %vm1151, %v991, %v1348
  %1350 = vst [vmem:[%s1149 + $0x168] sm:$0xf] %v1349
  %1351 = vst.msk [vmem:[%s1149 + $0x16c] sm:$0xf] %vm15, %v1000
  %v1352 = vld [vmem:[%s1149 + $0x170] sm:$0x1]
  %v1353 = vsel %vm32, %v1001, %v1352
  %1354 = vst [vmem:[%s1149 + $0x170] sm:$0x1] %v1353
  %v1355 = vld [vmem:[%s1149 + $0x174] sm:$0xf]
  %v1356 = vsel %vm1151, %v1008, %v1355
  %1357 = vst [vmem:[%s1149 + $0x174] sm:$0xf] %v1356
  %1358 = vst.msk [vmem:[%s1149 + $0x178] sm:$0xf] %vm15, %v1017
  %v1359 = vld [vmem:[%s1149 + $0x17c] sm:$0x1]
  %v1360 = vsel %vm32, %v1018, %v1359
  %1361 = vst [vmem:[%s1149 + $0x17c] sm:$0x1] %v1360
  %v1362 = vld [vmem:[%s1149 + $0x180] sm:$0xf]
  %v1363 = vsel %vm1151, %v1025, %v1362
  %1364 = vst [vmem:[%s1149 + $0x180] sm:$0xf] %v1363
  %1365 = vst.msk [vmem:[%s1149 + $0x184] sm:$0xf] %vm15, %v1034
  %v1366 = vld [vmem:[%s1149 + $0x188] sm:$0x1]
  %v1367 = vsel %vm32, %v1035, %v1366
  %1368 = vst [vmem:[%s1149 + $0x188] sm:$0x1] %v1367
  %v1369 = vld [vmem:[%s1149 + $0x18c] sm:$0xf]
  %v1370 = vsel %vm1151, %v1042, %v1369
  %1371 = vst [vmem:[%s1149 + $0x18c] sm:$0xf] %v1370
  %1372 = vst.msk [vmem:[%s1149 + $0x190] sm:$0xf] %vm15, %v1051
  %v1373 = vld [vmem:[%s1149 + $0x194] sm:$0x1]
  %v1374 = vsel %vm32, %v1052, %v1373
  %1375 = vst [vmem:[%s1149 + $0x194] sm:$0x1] %v1374
  %v1376 = vld [vmem:[%s2] sm:$0x1]
  %v1377 = vld [vmem:[#allocation2] sm:$0xf]
  %v1378 = vld [vmem:[#allocation2 + $0x4] sm:$0xf]
  %v1379 = vld [vmem:[#allocation2 + $0xc] sm:$0xf]
  %v1380 = vld [vmem:[#allocation2 + $0x10] sm:$0xf]
  %v1381 = vld [vmem:[#allocation2 + $0x18] sm:$0xf]
  %v1382 = vld [vmem:[#allocation2 + $0x1c] sm:$0xf]
  %v1383 = vld [vmem:[#allocation2 + $0x24] sm:$0xf]
  %v1384 = vld [vmem:[#allocation2 + $0x28] sm:$0xf]
  %v1385 = vld [vmem:[#allocation2 + $0x30] sm:$0xf]
  %v1386 = vld [vmem:[#allocation2 + $0x34] sm:$0xf]
  %v1387 = vld [vmem:[#allocation2 + $0x3c] sm:$0xf]
  %v1388 = vld [vmem:[#allocation2 + $0x40] sm:$0xf]
  %v1389 = vld [vmem:[#allocation2 + $0x48] sm:$0xf]
  %v1390 = vld [vmem:[#allocation2 + $0x4c] sm:$0xf]
  %v1391 = vld [vmem:[#allocation2 + $0x54] sm:$0xf]
  %v1392 = vld [vmem:[#allocation2 + $0x58] sm:$0xf]
  %v1393 = vld [vmem:[#allocation2 + $0x60] sm:$0xf]
  %v1394 = vld [vmem:[#allocation2 + $0x64] sm:$0xf]
  %v1395 = vld [vmem:[#allocation2 + $0x6c] sm:$0xf]
  %v1396 = vld [vmem:[#allocation2 + $0x70] sm:$0xf]
  %v1397 = vld [vmem:[#allocation2 + $0x78] sm:$0xf]
  %v1398 = vld [vmem:[#allocation2 + $0x7c] sm:$0xf]
  %v1399 = vld [vmem:[#allocation2 + $0x84] sm:$0xf]
  %v1400 = vld [vmem:[#allocation2 + $0x88] sm:$0xf]
  %v1401 = vld [vmem:[#allocation2 + $0x90] sm:$0xf]
  %v1402 = vld [vmem:[#allocation2 + $0x94] sm:$0xf]
  %v1403 = vld [vmem:[#allocation2 + $0x9c] sm:$0xf]
  %v1404 = vld [vmem:[#allocation2 + $0xa0] sm:$0xf]
  %v1405 = vld [vmem:[#allocation2 + $0xa8] sm:$0xf]
  %v1406 = vld [vmem:[#allocation2 + $0xac] sm:$0xf]
  %v1407 = vld [vmem:[#allocation2 + $0xb4] sm:$0xf]
  %v1408 = vld [vmem:[#allocation2 + $0xb8] sm:$0xf]
  %v1409 = vld [vmem:[#allocation2 + $0xd8] sm:$0xf]
  %v1410 = vld [vmem:[#allocation2 + $0xdc] sm:$0xf]
  %v1411 = vld [vmem:[#allocation2 + $0xe4] sm:$0xf]
  %v1412 = vld [vmem:[#allocation2 + $0xe8] sm:$0xf]
  %v1413 = vld [vmem:[#allocation2 + $0xf0] sm:$0xf]
  %v1414 = vld [vmem:[#allocation2 + $0xf4] sm:$0xf]
  %v1415 = vld [vmem:[#allocation2 + $0xfc] sm:$0xf]
  %v1416 = vld [vmem:[#allocation2 + $0x100] sm:$0xf]
  %v1417 = vld [vmem:[#allocation2 + $0x108] sm:$0xf]
  %v1418 = vld [vmem:[#allocation2 + $0x10c] sm:$0xf]
  %v1419 = vld [vmem:[#allocation2 + $0x114] sm:$0xf]
  %v1420 = vld [vmem:[#allocation2 + $0x118] sm:$0xf]
  %v1421 = vld [vmem:[#allocation2 + $0x120] sm:$0xf]
  %v1422 = vld [vmem:[#allocation2 + $0x124] sm:$0xf]
  %v1423 = vld [vmem:[#allocation2 + $0x12c] sm:$0xf]
  %v1424 = vld [vmem:[#allocation2 + $0x130] sm:$0xf]
  %v1425 = vld [vmem:[#allocation2 + $0x138] sm:$0xf]
  %v1426 = vld [vmem:[#allocation2 + $0x13c] sm:$0xf]
  %v1427 = vld [vmem:[#allocation2 + $0x144] sm:$0xf]
  %v1428 = vld [vmem:[#allocation2 + $0x148] sm:$0xf]
  %v1429 = vld [vmem:[#allocation2 + $0x150] sm:$0xf]
  %v1430 = vld [vmem:[#allocation2 + $0x154] sm:$0xf]
  %v1431 = vld [vmem:[#allocation2 + $0x15c] sm:$0xf]
  %v1432 = vld [vmem:[#allocation2 + $0x160] sm:$0xf]
  %v1433 = vld [vmem:[#allocation2 + $0x168] sm:$0xf]
  %v1434 = vld [vmem:[#allocation2 + $0x16c] sm:$0xf]
  %v1435 = vld [vmem:[#allocation2 + $0x174] sm:$0xf]
  %v1436 = vld [vmem:[#allocation2 + $0x178] sm:$0xf]
  %v1437 = vld [vmem:[#allocation2 + $0x180] sm:$0xf]
  %v1438 = vld [vmem:[#allocation2 + $0x184] sm:$0xf]
  %v1439 = vld [vmem:[#allocation2 + $0x18c] sm:$0xf]
  %v1440 = vld [vmem:[#allocation2 + $0x190] sm:$0xf]
  %v1441 = vld [vmem:[#allocation2 + $0x8] sm:$0x1]
  %v1442 = vld [vmem:[#allocation2 + $0x14] sm:$0x1]
  %v1443 = vld [vmem:[#allocation2 + $0x20] sm:$0x1]
  %v1444 = vld [vmem:[#allocation2 + $0x2c] sm:$0x1]
  %v1445 = vld [vmem:[#allocation2 + $0x38] sm:$0x1]
  %v1446 = vld [vmem:[#allocation2 + $0x44] sm:$0x1]
  %v1447 = vld [vmem:[#allocation2 + $0x50] sm:$0x1]
  %v1448 = vld [vmem:[#allocation2 + $0x5c] sm:$0x1]
  %v1449 = vld [vmem:[#allocation2 + $0x68] sm:$0x1]
  %v1450 = vld [vmem:[#allocation2 + $0x74] sm:$0x1]
  %v1451 = vld [vmem:[#allocation2 + $0x80] sm:$0x1]
  %v1452 = vld [vmem:[#allocation2 + $0x8c] sm:$0x1]
  %v1453 = vld [vmem:[#allocation2 + $0x98] sm:$0x1]
  %v1454 = vld [vmem:[#allocation2 + $0xa4] sm:$0x1]
  %v1455 = vld [vmem:[#allocation2 + $0xb0] sm:$0x1]
  %v1456 = vld [vmem:[#allocation2 + $0xbc] sm:$0x1]
  %v1457 = vld [vmem:[#allocation2 + $0xe0] sm:$0x1]
  %v1458 = vld [vmem:[#allocation2 + $0xec] sm:$0x1]
  %v1459 = vld [vmem:[#allocation2 + $0xf8] sm:$0x1]
  %v1460 = vld [vmem:[#allocation2 + $0x104] sm:$0x1]
  %v1461 = vld [vmem:[#allocation2 + $0x110] sm:$0x1]
  %v1462 = vld [vmem:[#allocation2 + $0x11c] sm:$0x1]
  %v1463 = vld [vmem:[#allocation2 + $0x128] sm:$0x1]
  %v1464 = vld [vmem:[#allocation2 + $0x134] sm:$0x1]
  %v1465 = vld [vmem:[#allocation2 + $0x140] sm:$0x1]
  %v1466 = vld [vmem:[#allocation2 + $0x14c] sm:$0x1]
  %v1467 = vld [vmem:[#allocation2 + $0x158] sm:$0x1]
  %v1468 = vld [vmem:[#allocation2 + $0x164] sm:$0x1]
  %v1469 = vld [vmem:[#allocation2 + $0x170] sm:$0x1]
  %v1470 = vld [vmem:[#allocation2 + $0x17c] sm:$0x1]
  %v1471 = vld [vmem:[#allocation2 + $0x188] sm:$0x1]
  %v1472 = vld [vmem:[#allocation2 + $0x194] sm:$0x1]
  %vm1473 = vsmask.f32 3328
  %vm1474 = vsmask.f32 7440
  %vm1475 = vmor %vm1473, %vm1474
  %v1477 = vshrl.u32 %v1377, 16
  %v1479 = vrot.slane %v1477, 4
  %v1480 = vshll.u32 %v1377, 16
  %v1482 = vrot.slane %v1480, 5
  %v1483 = vor.u32 %v1479, %v1482
  %v1484 = vrot.slane %v1483, 4
  %v1486 = vshll.u32 %v1378, 16
  %v1488 = vrot.slane %v1486, 5
  %v1489 = vsel %vm1475, %v1484, %v1488
  %v1490 = vshrl.u32 %v1378, 16
  %v1492 = vrot.slane %v1490, 4
  %v1493 = vor.u32 %v1492, %v1488
  %v1494 = vrot.slane %v1493, 4
  %v1496 = vshll.u32 %v1441, 16
  %v1498 = vrot.slane %v1496, 5
  %v1499 = vsel %vm1475, %v1494, %v1498
  %v1501 = vshrl.u32 %v1379, 16
  %v1503 = vrot.slane %v1501, 4
  %v1504 = vshll.u32 %v1379, 16
  %v1506 = vrot.slane %v1504, 5
  %v1507 = vor.u32 %v1503, %v1506
  %v1508 = vrot.slane %v1507, 4
  %v1510 = vshll.u32 %v1380, 16
  %v1512 = vrot.slane %v1510, 5
  %v1513 = vsel %vm1475, %v1508, %v1512
  %v1514 = vshrl.u32 %v1380, 16
  %v1516 = vrot.slane %v1514, 4
  %v1517 = vor.u32 %v1516, %v1512
  %v1518 = vrot.slane %v1517, 4
  %v1520 = vshll.u32 %v1442, 16
  %v1522 = vrot.slane %v1520, 5
  %v1523 = vsel %vm1475, %v1518, %v1522
  %v1525 = vshrl.u32 %v1381, 16
  %v1527 = vrot.slane %v1525, 4
  %v1528 = vshll.u32 %v1381, 16
  %v1530 = vrot.slane %v1528, 5
  %v1531 = vor.u32 %v1527, %v1530
  %v1532 = vrot.slane %v1531, 4
  %v1534 = vshll.u32 %v1382, 16
  %v1536 = vrot.slane %v1534, 5
  %v1537 = vsel %vm1475, %v1532, %v1536
  %v1538 = vshrl.u32 %v1382, 16
  %v1540 = vrot.slane %v1538, 4
  %v1541 = vor.u32 %v1540, %v1536
  %v1542 = vrot.slane %v1541, 4
  %v1544 = vshll.u32 %v1443, 16
  %v1546 = vrot.slane %v1544, 5
  %v1547 = vsel %vm1475, %v1542, %v1546
  %v1549 = vshrl.u32 %v1383, 16
  %v1551 = vrot.slane %v1549, 4
  %v1552 = vshll.u32 %v1383, 16
  %v1554 = vrot.slane %v1552, 5
  %v1555 = vor.u32 %v1551, %v1554
  %v1556 = vrot.slane %v1555, 4
  %v1558 = vshll.u32 %v1384, 16
  %v1560 = vrot.slane %v1558, 5
  %v1561 = vsel %vm1475, %v1556, %v1560
  %v1562 = vshrl.u32 %v1384, 16
  %v1564 = vrot.slane %v1562, 4
  %v1565 = vor.u32 %v1564, %v1560
  %v1566 = vrot.slane %v1565, 4
  %v1568 = vshll.u32 %v1444, 16
  %v1570 = vrot.slane %v1568, 5
  %v1571 = vsel %vm1475, %v1566, %v1570
  %v1573 = vshrl.u32 %v1385, 16
  %v1575 = vrot.slane %v1573, 4
  %v1576 = vshll.u32 %v1385, 16
  %v1578 = vrot.slane %v1576, 5
  %v1579 = vor.u32 %v1575, %v1578
  %v1580 = vrot.slane %v1579, 4
  %v1582 = vshll.u32 %v1386, 16
  %v1584 = vrot.slane %v1582, 5
  %v1585 = vsel %vm1475, %v1580, %v1584
  %v1586 = vshrl.u32 %v1386, 16
  %v1588 = vrot.slane %v1586, 4
  %v1589 = vor.u32 %v1588, %v1584
  %v1590 = vrot.slane %v1589, 4
  %v1592 = vshll.u32 %v1445, 16
  %v1594 = vrot.slane %v1592, 5
  %v1595 = vsel %vm1475, %v1590, %v1594
  %v1597 = vshrl.u32 %v1387, 16
  %v1599 = vrot.slane %v1597, 4
  %v1600 = vshll.u32 %v1387, 16
  %v1602 = vrot.slane %v1600, 5
  %v1603 = vor.u32 %v1599, %v1602
  %v1604 = vrot.slane %v1603, 4
  %v1606 = vshll.u32 %v1388, 16
  %v1608 = vrot.slane %v1606, 5
  %v1609 = vsel %vm1475, %v1604, %v1608
  %v1610 = vshrl.u32 %v1388, 16
  %v1612 = vrot.slane %v1610, 4
  %v1613 = vor.u32 %v1612, %v1608
  %v1614 = vrot.slane %v1613, 4
  %v1616 = vshll.u32 %v1446, 16
  %v1618 = vrot.slane %v1616, 5
  %v1619 = vsel %vm1475, %v1614, %v1618
  %v1621 = vshrl.u32 %v1389, 16
  %v1623 = vrot.slane %v1621, 4
  %v1624 = vshll.u32 %v1389, 16
  %v1626 = vrot.slane %v1624, 5
  %v1627 = vor.u32 %v1623, %v1626
  %v1628 = vrot.slane %v1627, 4
  %v1630 = vshll.u32 %v1390, 16
  %v1632 = vrot.slane %v1630, 5
  %v1633 = vsel %vm1475, %v1628, %v1632
  %v1634 = vshrl.u32 %v1390, 16
  %v1636 = vrot.slane %v1634, 4
  %v1637 = vor.u32 %v1636, %v1632
  %v1638 = vrot.slane %v1637, 4
  %v1640 = vshll.u32 %v1447, 16
  %v1642 = vrot.slane %v1640, 5
  %v1643 = vsel %vm1475, %v1638, %v1642
  %v1645 = vshrl.u32 %v1391, 16
  %v1647 = vrot.slane %v1645, 4
  %v1648 = vshll.u32 %v1391, 16
  %v1650 = vrot.slane %v1648, 5
  %v1651 = vor.u32 %v1647, %v1650
  %v1652 = vrot.slane %v1651, 4
  %v1654 = vshll.u32 %v1392, 16
  %v1656 = vrot.slane %v1654, 5
  %v1657 = vsel %vm1475, %v1652, %v1656
  %v1658 = vshrl.u32 %v1392, 16
  %v1660 = vrot.slane %v1658, 4
  %v1661 = vor.u32 %v1660, %v1656
  %v1662 = vrot.slane %v1661, 4
  %v1664 = vshll.u32 %v1448, 16
  %v1666 = vrot.slane %v1664, 5
  %v1667 = vsel %vm1475, %v1662, %v1666
  %v1669 = vshrl.u32 %v1393, 16
  %v1671 = vrot.slane %v1669, 4
  %v1672 = vshll.u32 %v1393, 16
  %v1674 = vrot.slane %v1672, 5
  %v1675 = vor.u32 %v1671, %v1674
  %v1676 = vrot.slane %v1675, 4
  %v1678 = vshll.u32 %v1394, 16
  %v1680 = vrot.slane %v1678, 5
  %v1681 = vsel %vm1475, %v1676, %v1680
  %v1682 = vshrl.u32 %v1394, 16
  %v1684 = vrot.slane %v1682, 4
  %v1685 = vor.u32 %v1684, %v1680
  %v1686 = vrot.slane %v1685, 4
  %v1688 = vshll.u32 %v1449, 16
  %v1690 = vrot.slane %v1688, 5
  %v1691 = vsel %vm1475, %v1686, %v1690
  %v1693 = vshrl.u32 %v1395, 16
  %v1695 = vrot.slane %v1693, 4
  %v1696 = vshll.u32 %v1395, 16
  %v1698 = vrot.slane %v1696, 5
  %v1699 = vor.u32 %v1695, %v1698
  %v1700 = vrot.slane %v1699, 4
  %v1702 = vshll.u32 %v1396, 16
  %v1704 = vrot.slane %v1702, 5
  %v1705 = vsel %vm1475, %v1700, %v1704
  %v1706 = vshrl.u32 %v1396, 16
  %v1708 = vrot.slane %v1706, 4
  %v1709 = vor.u32 %v1708, %v1704
  %v1710 = vrot.slane %v1709, 4
  %v1712 = vshll.u32 %v1450, 16
  %v1714 = vrot.slane %v1712, 5
  %v1715 = vsel %vm1475, %v1710, %v1714
  %v1717 = vshrl.u32 %v1397, 16
  %v1719 = vrot.slane %v1717, 4
  %v1720 = vshll.u32 %v1397, 16
  %v1722 = vrot.slane %v1720, 5
  %v1723 = vor.u32 %v1719, %v1722
  %v1724 = vrot.slane %v1723, 4
  %v1726 = vshll.u32 %v1398, 16
  %v1728 = vrot.slane %v1726, 5
  %v1729 = vsel %vm1475, %v1724, %v1728
  %v1730 = vshrl.u32 %v1398, 16
  %v1732 = vrot.slane %v1730, 4
  %v1733 = vor.u32 %v1732, %v1728
  %v1734 = vrot.slane %v1733, 4
  %v1736 = vshll.u32 %v1451, 16
  %v1738 = vrot.slane %v1736, 5
  %v1739 = vsel %vm1475, %v1734, %v1738
  %v1741 = vshrl.u32 %v1399, 16
  %v1743 = vrot.slane %v1741, 4
  %v1744 = vshll.u32 %v1399, 16
  %v1746 = vrot.slane %v1744, 5
  %v1747 = vor.u32 %v1743, %v1746
  %v1748 = vrot.slane %v1747, 4
  %v1750 = vshll.u32 %v1400, 16
  %v1752 = vrot.slane %v1750, 5
  %v1753 = vsel %vm1475, %v1748, %v1752
  %v1754 = vshrl.u32 %v1400, 16
  %v1756 = vrot.slane %v1754, 4
  %v1757 = vor.u32 %v1756, %v1752
  %v1758 = vrot.slane %v1757, 4
  %v1760 = vshll.u32 %v1452, 16
  %v1762 = vrot.slane %v1760, 5
  %v1763 = vsel %vm1475, %v1758, %v1762
  %v1765 = vshrl.u32 %v1401, 16
  %v1767 = vrot.slane %v1765, 4
  %v1768 = vshll.u32 %v1401, 16
  %v1770 = vrot.slane %v1768, 5
  %v1771 = vor.u32 %v1767, %v1770
  %v1772 = vrot.slane %v1771, 4
  %v1774 = vshll.u32 %v1402, 16
  %v1776 = vrot.slane %v1774, 5
  %v1777 = vsel %vm1475, %v1772, %v1776
  %v1778 = vshrl.u32 %v1402, 16
  %v1780 = vrot.slane %v1778, 4
  %v1781 = vor.u32 %v1780, %v1776
  %v1782 = vrot.slane %v1781, 4
  %v1784 = vshll.u32 %v1453, 16
  %v1786 = vrot.slane %v1784, 5
  %v1787 = vsel %vm1475, %v1782, %v1786
  %v1789 = vshrl.u32 %v1403, 16
  %v1791 = vrot.slane %v1789, 4
  %v1792 = vshll.u32 %v1403, 16
  %v1794 = vrot.slane %v1792, 5
  %v1795 = vor.u32 %v1791, %v1794
  %v1796 = vrot.slane %v1795, 4
  %v1798 = vshll.u32 %v1404, 16
  %v1800 = vrot.slane %v1798, 5
  %v1801 = vsel %vm1475, %v1796, %v1800
  %v1802 = vshrl.u32 %v1404, 16
  %v1804 = vrot.slane %v1802, 4
  %v1805 = vor.u32 %v1804, %v1800
  %v1806 = vrot.slane %v1805, 4
  %v1808 = vshll.u32 %v1454, 16
  %v1810 = vrot.slane %v1808, 5
  %v1811 = vsel %vm1475, %v1806, %v1810
  %v1813 = vshrl.u32 %v1405, 16
  %v1815 = vrot.slane %v1813, 4
  %v1816 = vshll.u32 %v1405, 16
  %v1818 = vrot.slane %v1816, 5
  %v1819 = vor.u32 %v1815, %v1818
  %v1820 = vrot.slane %v1819, 4
  %v1822 = vshll.u32 %v1406, 16
  %v1824 = vrot.slane %v1822, 5
  %v1825 = vsel %vm1475, %v1820, %v1824
  %v1826 = vshrl.u32 %v1406, 16
  %v1828 = vrot.slane %v1826, 4
  %v1829 = vor.u32 %v1828, %v1824
  %v1830 = vrot.slane %v1829, 4
  %v1832 = vshll.u32 %v1455, 16
  %v1834 = vrot.slane %v1832, 5
  %v1835 = vsel %vm1475, %v1830, %v1834
  %v1837 = vshrl.u32 %v1407, 16
  %v1839 = vrot.slane %v1837, 4
  %v1840 = vshll.u32 %v1407, 16
  %v1842 = vrot.slane %v1840, 5
  %v1843 = vor.u32 %v1839, %v1842
  %v1844 = vrot.slane %v1843, 4
  %v1846 = vshll.u32 %v1408, 16
  %v1848 = vrot.slane %v1846, 5
  %v1849 = vsel %vm1475, %v1844, %v1848
  %v1850 = vshrl.u32 %v1408, 16
  %v1852 = vrot.slane %v1850, 4
  %v1853 = vor.u32 %v1852, %v1848
  %v1854 = vrot.slane %v1853, 4
  %v1856 = vshll.u32 %v1456, 16
  %v1858 = vrot.slane %v1856, 5
  %v1859 = vsel %vm1475, %v1854, %v1858
  %v1861 = vshrl.u32 %v1409, 16
  %v1863 = vrot.slane %v1861, 4
  %v1864 = vshll.u32 %v1409, 16
  %v1866 = vrot.slane %v1864, 5
  %v1867 = vor.u32 %v1863, %v1866
  %v1868 = vrot.slane %v1867, 4
  %v1870 = vshll.u32 %v1410, 16
  %v1872 = vrot.slane %v1870, 5
  %v1873 = vsel %vm1475, %v1868, %v1872
  %v1874 = vshrl.u32 %v1410, 16
  %v1876 = vrot.slane %v1874, 4
  %v1877 = vor.u32 %v1876, %v1872
  %v1878 = vrot.slane %v1877, 4
  %v1880 = vshll.u32 %v1457, 16
  %v1882 = vrot.slane %v1880, 5
  %v1883 = vsel %vm1475, %v1878, %v1882
  %v1885 = vshrl.u32 %v1411, 16
  %v1887 = vrot.slane %v1885, 4
  %v1888 = vshll.u32 %v1411, 16
  %v1890 = vrot.slane %v1888, 5
  %v1891 = vor.u32 %v1887, %v1890
  %v1892 = vrot.slane %v1891, 4
  %v1894 = vshll.u32 %v1412, 16
  %v1896 = vrot.slane %v1894, 5
  %v1897 = vsel %vm1475, %v1892, %v1896
  %v1898 = vshrl.u32 %v1412, 16
  %v1900 = vrot.slane %v1898, 4
  %v1901 = vor.u32 %v1900, %v1896
  %v1902 = vrot.slane %v1901, 4
  %v1904 = vshll.u32 %v1458, 16
  %v1906 = vrot.slane %v1904, 5
  %v1907 = vsel %vm1475, %v1902, %v1906
  %v1909 = vshrl.u32 %v1413, 16
  %v1911 = vrot.slane %v1909, 4
  %v1912 = vshll.u32 %v1413, 16
  %v1914 = vrot.slane %v1912, 5
  %v1915 = vor.u32 %v1911, %v1914
  %v1916 = vrot.slane %v1915, 4
  %v1918 = vshll.u32 %v1414, 16
  %v1920 = vrot.slane %v1918, 5
  %v1921 = vsel %vm1475, %v1916, %v1920
  %v1922 = vshrl.u32 %v1414, 16
  %v1924 = vrot.slane %v1922, 4
  %v1925 = vor.u32 %v1924, %v1920
  %v1926 = vrot.slane %v1925, 4
  %v1928 = vshll.u32 %v1459, 16
  %v1930 = vrot.slane %v1928, 5
  %v1931 = vsel %vm1475, %v1926, %v1930
  %v1933 = vshrl.u32 %v1415, 16
  %v1935 = vrot.slane %v1933, 4
  %v1936 = vshll.u32 %v1415, 16
  %v1938 = vrot.slane %v1936, 5
  %v1939 = vor.u32 %v1935, %v1938
  %v1940 = vrot.slane %v1939, 4
  %v1942 = vshll.u32 %v1416, 16
  %v1944 = vrot.slane %v1942, 5
  %v1945 = vsel %vm1475, %v1940, %v1944
  %v1946 = vshrl.u32 %v1416, 16
  %v1948 = vrot.slane %v1946, 4
  %v1949 = vor.u32 %v1948, %v1944
  %v1950 = vrot.slane %v1949, 4
  %v1952 = vshll.u32 %v1460, 16
  %v1954 = vrot.slane %v1952, 5
  %v1955 = vsel %vm1475, %v1950, %v1954
  %v1957 = vshrl.u32 %v1417, 16
  %v1959 = vrot.slane %v1957, 4
  %v1960 = vshll.u32 %v1417, 16
  %v1962 = vrot.slane %v1960, 5
  %v1963 = vor.u32 %v1959, %v1962
  %v1964 = vrot.slane %v1963, 4
  %v1966 = vshll.u32 %v1418, 16
  %v1968 = vrot.slane %v1966, 5
  %v1969 = vsel %vm1475, %v1964, %v1968
  %v1970 = vshrl.u32 %v1418, 16
  %v1972 = vrot.slane %v1970, 4
  %v1973 = vor.u32 %v1972, %v1968
  %v1974 = vrot.slane %v1973, 4
  %v1976 = vshll.u32 %v1461, 16
  %v1978 = vrot.slane %v1976, 5
  %v1979 = vsel %vm1475, %v1974, %v1978
  %v1981 = vshrl.u32 %v1419, 16
  %v1983 = vrot.slane %v1981, 4
  %v1984 = vshll.u32 %v1419, 16
  %v1986 = vrot.slane %v1984, 5
  %v1987 = vor.u32 %v1983, %v1986
  %v1988 = vrot.slane %v1987, 4
  %v1990 = vshll.u32 %v1420, 16
  %v1992 = vrot.slane %v1990, 5
  %v1993 = vsel %vm1475, %v1988, %v1992
  %v1994 = vshrl.u32 %v1420, 16
  %v1996 = vrot.slane %v1994, 4
  %v1997 = vor.u32 %v1996, %v1992
  %v1998 = vrot.slane %v1997, 4
  %v2000 = vshll.u32 %v1462, 16
  %v2002 = vrot.slane %v2000, 5
  %v2003 = vsel %vm1475, %v1998, %v2002
  %v2005 = vshrl.u32 %v1421, 16
  %v2007 = vrot.slane %v2005, 4
  %v2008 = vshll.u32 %v1421, 16
  %v2010 = vrot.slane %v2008, 5
  %v2011 = vor.u32 %v2007, %v2010
  %v2012 = vrot.slane %v2011, 4
  %v2014 = vshll.u32 %v1422, 16
  %v2016 = vrot.slane %v2014, 5
  %v2017 = vsel %vm1475, %v2012, %v2016
  %v2018 = vshrl.u32 %v1422, 16
  %v2020 = vrot.slane %v2018, 4
  %v2021 = vor.u32 %v2020, %v2016
  %v2022 = vrot.slane %v2021, 4
  %v2024 = vshll.u32 %v1463, 16
  %v2026 = vrot.slane %v2024, 5
  %v2027 = vsel %vm1475, %v2022, %v2026
  %v2029 = vshrl.u32 %v1423, 16
  %v2031 = vrot.slane %v2029, 4
  %v2032 = vshll.u32 %v1423, 16
  %v2034 = vrot.slane %v2032, 5
  %v2035 = vor.u32 %v2031, %v2034
  %v2036 = vrot.slane %v2035, 4
  %v2038 = vshll.u32 %v1424, 16
  %v2040 = vrot.slane %v2038, 5
  %v2041 = vsel %vm1475, %v2036, %v2040
  %v2042 = vshrl.u32 %v1424, 16
  %v2044 = vrot.slane %v2042, 4
  %v2045 = vor.u32 %v2044, %v2040
  %v2046 = vrot.slane %v2045, 4
  %v2048 = vshll.u32 %v1464, 16
  %v2050 = vrot.slane %v2048, 5
  %v2051 = vsel %vm1475, %v2046, %v2050
  %v2053 = vshrl.u32 %v1425, 16
  %v2055 = vrot.slane %v2053, 4
  %v2056 = vshll.u32 %v1425, 16
  %v2058 = vrot.slane %v2056, 5
  %v2059 = vor.u32 %v2055, %v2058
  %v2060 = vrot.slane %v2059, 4
  %v2062 = vshll.u32 %v1426, 16
  %v2064 = vrot.slane %v2062, 5
  %v2065 = vsel %vm1475, %v2060, %v2064
  %v2066 = vshrl.u32 %v1426, 16
  %v2068 = vrot.slane %v2066, 4
  %v2069 = vor.u32 %v2068, %v2064
  %v2070 = vrot.slane %v2069, 4
  %v2072 = vshll.u32 %v1465, 16
  %v2074 = vrot.slane %v2072, 5
  %v2075 = vsel %vm1475, %v2070, %v2074
  %v2077 = vshrl.u32 %v1427, 16
  %v2079 = vrot.slane %v2077, 4
  %v2080 = vshll.u32 %v1427, 16
  %v2082 = vrot.slane %v2080, 5
  %v2083 = vor.u32 %v2079, %v2082
  %v2084 = vrot.slane %v2083, 4
  %v2086 = vshll.u32 %v1428, 16
  %v2088 = vrot.slane %v2086, 5
  %v2089 = vsel %vm1475, %v2084, %v2088
  %v2090 = vshrl.u32 %v1428, 16
  %v2092 = vrot.slane %v2090, 4
  %v2093 = vor.u32 %v2092, %v2088
  %v2094 = vrot.slane %v2093, 4
  %v2096 = vshll.u32 %v1466, 16
  %v2098 = vrot.slane %v2096, 5
  %v2099 = vsel %vm1475, %v2094, %v2098
  %v2101 = vshrl.u32 %v1429, 16
  %v2103 = vrot.slane %v2101, 4
  %v2104 = vshll.u32 %v1429, 16
  %v2106 = vrot.slane %v2104, 5
  %v2107 = vor.u32 %v2103, %v2106
  %v2108 = vrot.slane %v2107, 4
  %v2110 = vshll.u32 %v1430, 16
  %v2112 = vrot.slane %v2110, 5
  %v2113 = vsel %vm1475, %v2108, %v2112
  %v2114 = vshrl.u32 %v1430, 16
  %v2116 = vrot.slane %v2114, 4
  %v2117 = vor.u32 %v2116, %v2112
  %v2118 = vrot.slane %v2117, 4
  %v2120 = vshll.u32 %v1467, 16
  %v2122 = vrot.slane %v2120, 5
  %v2123 = vsel %vm1475, %v2118, %v2122
  %v2125 = vshrl.u32 %v1431, 16
  %v2127 = vrot.slane %v2125, 4
  %v2128 = vshll.u32 %v1431, 16
  %v2130 = vrot.slane %v2128, 5
  %v2131 = vor.u32 %v2127, %v2130
  %v2132 = vrot.slane %v2131, 4
  %v2134 = vshll.u32 %v1432, 16
  %v2136 = vrot.slane %v2134, 5
  %v2137 = vsel %vm1475, %v2132, %v2136
  %v2138 = vshrl.u32 %v1432, 16
  %v2140 = vrot.slane %v2138, 4
  %v2141 = vor.u32 %v2140, %v2136
  %v2142 = vrot.slane %v2141, 4
  %v2144 = vshll.u32 %v1468, 16
  %v2146 = vrot.slane %v2144, 5
  %v2147 = vsel %vm1475, %v2142, %v2146
  %v2149 = vshrl.u32 %v1433, 16
  %v2151 = vrot.slane %v2149, 4
  %v2152 = vshll.u32 %v1433, 16
  %v2154 = vrot.slane %v2152, 5
  %v2155 = vor.u32 %v2151, %v2154
  %v2156 = vrot.slane %v2155, 4
  %v2158 = vshll.u32 %v1434, 16
  %v2160 = vrot.slane %v2158, 5
  %v2161 = vsel %vm1475, %v2156, %v2160
  %v2162 = vshrl.u32 %v1434, 16
  %v2164 = vrot.slane %v2162, 4
  %v2165 = vor.u32 %v2164, %v2160
  %v2166 = vrot.slane %v2165, 4
  %v2168 = vshll.u32 %v1469, 16
  %v2170 = vrot.slane %v2168, 5
  %v2171 = vsel %vm1475, %v2166, %v2170
  %v2173 = vshrl.u32 %v1435, 16
  %v2175 = vrot.slane %v2173, 4
  %v2176 = vshll.u32 %v1435, 16
  %v2178 = vrot.slane %v2176, 5
  %v2179 = vor.u32 %v2175, %v2178
  %v2180 = vrot.slane %v2179, 4
  %v2182 = vshll.u32 %v1436, 16
  %v2184 = vrot.slane %v2182, 5
  %v2185 = vsel %vm1475, %v2180, %v2184
  %v2186 = vshrl.u32 %v1436, 16
  %v2188 = vrot.slane %v2186, 4
  %v2189 = vor.u32 %v2188, %v2184
  %v2190 = vrot.slane %v2189, 4
  %v2192 = vshll.u32 %v1470, 16
  %v2194 = vrot.slane %v2192, 5
  %v2195 = vsel %vm1475, %v2190, %v2194
  %v2197 = vshrl.u32 %v1437, 16
  %v2199 = vrot.slane %v2197, 4
  %v2200 = vshll.u32 %v1437, 16
  %v2202 = vrot.slane %v2200, 5
  %v2203 = vor.u32 %v2199, %v2202
  %v2204 = vrot.slane %v2203, 4
  %v2206 = vshll.u32 %v1438, 16
  %v2208 = vrot.slane %v2206, 5
  %v2209 = vsel %vm1475, %v2204, %v2208
  %v2210 = vshrl.u32 %v1438, 16
  %v2212 = vrot.slane %v2210, 4
  %v2213 = vor.u32 %v2212, %v2208
  %v2214 = vrot.slane %v2213, 4
  %v2216 = vshll.u32 %v1471, 16
  %v2218 = vrot.slane %v2216, 5
  %v2219 = vsel %vm1475, %v2214, %v2218
  %v2221 = vshrl.u32 %v1439, 16
  %v2223 = vrot.slane %v2221, 4
  %v2224 = vshll.u32 %v1439, 16
  %v2226 = vrot.slane %v2224, 5
  %v2227 = vor.u32 %v2223, %v2226
  %v2228 = vrot.slane %v2227, 4
  %v2230 = vshll.u32 %v1440, 16
  %v2232 = vrot.slane %v2230, 5
  %v2233 = vsel %vm1475, %v2228, %v2232
  %v2234 = vshrl.u32 %v1440, 16
  %v2236 = vrot.slane %v2234, 4
  %v2237 = vor.u32 %v2236, %v2232
  %v2238 = vrot.slane %v2237, 4
  %v2240 = vshll.u32 %v1472, 16
  %v2242 = vrot.slane %v2240, 5
  %v2243 = vsel %vm1475, %v2238, %v2242
  %v2244 = vld [vmem:[%s1149] sm:$0xf]
  %v2245 = vld [vmem:[%s1149 + $0x4] sm:$0xf]
  %v2246 = vld [vmem:[%s1149 + $0xc] sm:$0xf]
  %v2247 = vld [vmem:[%s1149 + $0x10] sm:$0xf]
  %v2248 = vld [vmem:[%s1149 + $0x18] sm:$0xf]
  %v2249 = vld [vmem:[%s1149 + $0x1c] sm:$0xf]
  %v2250 = vld [vmem:[%s1149 + $0x24] sm:$0xf]
  %v2251 = vld [vmem:[%s1149 + $0x28] sm:$0xf]
  %v2252 = vld [vmem:[%s1149 + $0x30] sm:$0xf]
  %v2253 = vld [vmem:[%s1149 + $0x34] sm:$0xf]
  %v2254 = vld [vmem:[%s1149 + $0x3c] sm:$0xf]
  %v2255 = vld [vmem:[%s1149 + $0x40] sm:$0xf]
  %v2256 = vld [vmem:[%s1149 + $0x48] sm:$0xf]
  %v2257 = vld [vmem:[%s1149 + $0x4c] sm:$0xf]
  %v2258 = vld [vmem:[%s1149 + $0x54] sm:$0xf]
  %v2259 = vld [vmem:[%s1149 + $0x58] sm:$0xf]
  %v2260 = vld [vmem:[%s1149 + $0x60] sm:$0xf]
  %v2261 = vld [vmem:[%s1149 + $0x64] sm:$0xf]
  %v2262 = vld [vmem:[%s1149 + $0x6c] sm:$0xf]
  %v2263 = vld [vmem:[%s1149 + $0x70] sm:$0xf]
  %v2264 = vld [vmem:[%s1149 + $0x78] sm:$0xf]
  %v2265 = vld [vmem:[%s1149 + $0x7c] sm:$0xf]
  %v2266 = vld [vmem:[%s1149 + $0x84] sm:$0xf]
  %v2267 = vld [vmem:[%s1149 + $0x88] sm:$0xf]
  %v2268 = vld [vmem:[%s1149 + $0x90] sm:$0xf]
  %v2269 = vld [vmem:[%s1149 + $0x94] sm:$0xf]
  %v2270 = vld [vmem:[%s1149 + $0x9c] sm:$0xf]
  %v2271 = vld [vmem:[%s1149 + $0xa0] sm:$0xf]
  %v2272 = vld [vmem:[%s1149 + $0xa8] sm:$0xf]
  %v2273 = vld [vmem:[%s1149 + $0xac] sm:$0xf]
  %v2274 = vld [vmem:[%s1149 + $0xb4] sm:$0xf]
  %v2275 = vld [vmem:[%s1149 + $0xb8] sm:$0xf]
  %v2276 = vld [vmem:[%s1149 + $0xd8] sm:$0xf]
  %v2277 = vld [vmem:[%s1149 + $0xdc] sm:$0xf]
  %v2278 = vld [vmem:[%s1149 + $0xe4] sm:$0xf]
  %v2279 = vld [vmem:[%s1149 + $0xe8] sm:$0xf]
  %v2280 = vld [vmem:[%s1149 + $0xf0] sm:$0xf]
  %v2281 = vld [vmem:[%s1149 + $0xf4] sm:$0xf]
  %v2282 = vld [vmem:[%s1149 + $0xfc] sm:$0xf]
  %v2283 = vld [vmem:[%s1149 + $0x100] sm:$0xf]
  %v2284 = vld [vmem:[%s1149 + $0x108] sm:$0xf]
  %v2285 = vld [vmem:[%s1149 + $0x10c] sm:$0xf]
  %v2286 = vld [vmem:[%s1149 + $0x114] sm:$0xf]
  %v2287 = vld [vmem:[%s1149 + $0x118] sm:$0xf]
  %v2288 = vld [vmem:[%s1149 + $0x120] sm:$0xf]
  %v2289 = vld [vmem:[%s1149 + $0x124] sm:$0xf]
  %v2290 = vld [vmem:[%s1149 + $0x12c] sm:$0xf]
  %v2291 = vld [vmem:[%s1149 + $0x130] sm:$0xf]
  %v2292 = vld [vmem:[%s1149 + $0x138] sm:$0xf]
  %v2293 = vld [vmem:[%s1149 + $0x13c] sm:$0xf]
  %v2294 = vld [vmem:[%s1149 + $0x144] sm:$0xf]
  %v2295 = vld [vmem:[%s1149 + $0x148] sm:$0xf]
  %v2296 = vld [vmem:[%s1149 + $0x150] sm:$0xf]
  %v2297 = vld [vmem:[%s1149 + $0x154] sm:$0xf]
  %v2298 = vld [vmem:[%s1149 + $0x15c] sm:$0xf]
  %v2299 = vld [vmem:[%s1149 + $0x160] sm:$0xf]
  %v2300 = vld [vmem:[%s1149 + $0x168] sm:$0xf]
  %v2301 = vld [vmem:[%s1149 + $0x16c] sm:$0xf]
  %v2302 = vld [vmem:[%s1149 + $0x174] sm:$0xf]
  %v2303 = vld [vmem:[%s1149 + $0x178] sm:$0xf]
  %v2304 = vld [vmem:[%s1149 + $0x180] sm:$0xf]
  %v2305 = vld [vmem:[%s1149 + $0x184] sm:$0xf]
  %v2306 = vld [vmem:[%s1149 + $0x18c] sm:$0xf]
  %v2307 = vld [vmem:[%s1149 + $0x190] sm:$0xf]
  %v2308 = vld [vmem:[%s1149 + $0x8] sm:$0x1]
  %v2309 = vld [vmem:[%s1149 + $0x14] sm:$0x1]
  %v2310 = vld [vmem:[%s1149 + $0x20] sm:$0x1]
  %v2311 = vld [vmem:[%s1149 + $0x2c] sm:$0x1]
  %v2312 = vld [vmem:[%s1149 + $0x38] sm:$0x1]
  %v2313 = vld [vmem:[%s1149 + $0x44] sm:$0x1]
  %v2314 = vld [vmem:[%s1149 + $0x50] sm:$0x1]
  %v2315 = vld [vmem:[%s1149 + $0x5c] sm:$0x1]
  %v2316 = vld [vmem:[%s1149 + $0x68] sm:$0x1]
  %v2317 = vld [vmem:[%s1149 + $0x74] sm:$0x1]
  %v2318 = vld [vmem:[%s1149 + $0x80] sm:$0x1]
  %v2319 = vld [vmem:[%s1149 + $0x8c] sm:$0x1]
  %v2320 = vld [vmem:[%s1149 + $0x98] sm:$0x1]
  %v2321 = vld [vmem:[%s1149 + $0xa4] sm:$0x1]
  %v2322 = vld [vmem:[%s1149 + $0xb0] sm:$0x1]
  %v2323 = vld [vmem:[%s1149 + $0xbc] sm:$0x1]
  %v2324 = vld [vmem:[%s1149 + $0xe0] sm:$0x1]
  %v2325 = vld [vmem:[%s1149 + $0xec] sm:$0x1]
  %v2326 = vld [vmem:[%s1149 + $0xf8] sm:$0x1]
  %v2327 = vld [vmem:[%s1149 + $0x104] sm:$0x1]
  %v2328 = vld [vmem:[%s1149 + $0x110] sm:$0x1]
  %v2329 = vld [vmem:[%s1149 + $0x11c] sm:$0x1]
  %v2330 = vld [vmem:[%s1149 + $0x128] sm:$0x1]
  %v2331 = vld [vmem:[%s1149 + $0x134] sm:$0x1]
  %v2332 = vld [vmem:[%s1149 + $0x140] sm:$0x1]
  %v2333 = vld [vmem:[%s1149 + $0x14c] sm:$0x1]
  %v2334 = vld [vmem:[%s1149 + $0x158] sm:$0x1]
  %v2335 = vld [vmem:[%s1149 + $0x164] sm:$0x1]
  %v2336 = vld [vmem:[%s1149 + $0x170] sm:$0x1]
  %v2337 = vld [vmem:[%s1149 + $0x17c] sm:$0x1]
  %v2338 = vld [vmem:[%s1149 + $0x188] sm:$0x1]
  %v2339 = vld [vmem:[%s1149 + $0x194] sm:$0x1]
  %v2341 = vshrl.u32 %v2244, 16
  %v2343 = vrot.slane %v2341, 4
  %v2344 = vshll.u32 %v2244, 16
  %v2346 = vrot.slane %v2344, 5
  %v2347 = vor.u32 %v2343, %v2346
  %v2348 = vrot.slane %v2347, 4
  %v2350 = vshll.u32 %v2245, 16
  %v2352 = vrot.slane %v2350, 5
  %v2353 = vsel %vm1475, %v2348, %v2352
  %v2354 = vshrl.u32 %v2245, 16
  %v2356 = vrot.slane %v2354, 4
  %v2357 = vor.u32 %v2356, %v2352
  %v2358 = vrot.slane %v2357, 4
  %v2360 = vshll.u32 %v2308, 16
  %v2362 = vrot.slane %v2360, 5
  %v2363 = vsel %vm1475, %v2358, %v2362
  %v2365 = vshrl.u32 %v2246, 16
  %v2367 = vrot.slane %v2365, 4
  %v2368 = vshll.u32 %v2246, 16
  %v2370 = vrot.slane %v2368, 5
  %v2371 = vor.u32 %v2367, %v2370
  %v2372 = vrot.slane %v2371, 4
  %v2374 = vshll.u32 %v2247, 16
  %v2376 = vrot.slane %v2374, 5
  %v2377 = vsel %vm1475, %v2372, %v2376
  %v2378 = vshrl.u32 %v2247, 16
  %v2380 = vrot.slane %v2378, 4
  %v2381 = vor.u32 %v2380, %v2376
  %v2382 = vrot.slane %v2381, 4
  %v2384 = vshll.u32 %v2309, 16
  %v2386 = vrot.slane %v2384, 5
  %v2387 = vsel %vm1475, %v2382, %v2386
  %v2389 = vshrl.u32 %v2248, 16
  %v2391 = vrot.slane %v2389, 4
  %v2392 = vshll.u32 %v2248, 16
  %v2394 = vrot.slane %v2392, 5
  %v2395 = vor.u32 %v2391, %v2394
  %v2396 = vrot.slane %v2395, 4
  %v2398 = vshll.u32 %v2249, 16
  %v2400 = vrot.slane %v2398, 5
  %v2401 = vsel %vm1475, %v2396, %v2400
  %v2402 = vshrl.u32 %v2249, 16
  %v2404 = vrot.slane %v2402, 4
  %v2405 = vor.u32 %v2404, %v2400
  %v2406 = vrot.slane %v2405, 4
  %v2408 = vshll.u32 %v2310, 16
  %v2410 = vrot.slane %v2408, 5
  %v2411 = vsel %vm1475, %v2406, %v2410
  %v2413 = vshrl.u32 %v2250, 16
  %v2415 = vrot.slane %v2413, 4
  %v2416 = vshll.u32 %v2250, 16
  %v2418 = vrot.slane %v2416, 5
  %v2419 = vor.u32 %v2415, %v2418
  %v2420 = vrot.slane %v2419, 4
  %v2422 = vshll.u32 %v2251, 16
  %v2424 = vrot.slane %v2422, 5
  %v2425 = vsel %vm1475, %v2420, %v2424
  %v2426 = vshrl.u32 %v2251, 16
  %v2428 = vrot.slane %v2426, 4
  %v2429 = vor.u32 %v2428, %v2424
  %v2430 = vrot.slane %v2429, 4
  %v2432 = vshll.u32 %v2311, 16
  %v2434 = vrot.slane %v2432, 5
  %v2435 = vsel %vm1475, %v2430, %v2434
  %v2437 = vshrl.u32 %v2252, 16
  %v2439 = vrot.slane %v2437, 4
  %v2440 = vshll.u32 %v2252, 16
  %v2442 = vrot.slane %v2440, 5
  %v2443 = vor.u32 %v2439, %v2442
  %v2444 = vrot.slane %v2443, 4
  %v2446 = vshll.u32 %v2253, 16
  %v2448 = vrot.slane %v2446, 5
  %v2449 = vsel %vm1475, %v2444, %v2448
  %v2450 = vshrl.u32 %v2253, 16
  %v2452 = vrot.slane %v2450, 4
  %v2453 = vor.u32 %v2452, %v2448
  %v2454 = vrot.slane %v2453, 4
  %v2456 = vshll.u32 %v2312, 16
  %v2458 = vrot.slane %v2456, 5
  %v2459 = vsel %vm1475, %v2454, %v2458
  %v2461 = vshrl.u32 %v2254, 16
  %v2463 = vrot.slane %v2461, 4
  %v2464 = vshll.u32 %v2254, 16
  %v2466 = vrot.slane %v2464, 5
  %v2467 = vor.u32 %v2463, %v2466
  %v2468 = vrot.slane %v2467, 4
  %v2470 = vshll.u32 %v2255, 16
  %v2472 = vrot.slane %v2470, 5
  %v2473 = vsel %vm1475, %v2468, %v2472
  %v2474 = vshrl.u32 %v2255, 16
  %v2476 = vrot.slane %v2474, 4
  %v2477 = vor.u32 %v2476, %v2472
  %v2478 = vrot.slane %v2477, 4
  %v2480 = vshll.u32 %v2313, 16
  %v2482 = vrot.slane %v2480, 5
  %v2483 = vsel %vm1475, %v2478, %v2482
  %v2485 = vshrl.u32 %v2256, 16
  %v2487 = vrot.slane %v2485, 4
  %v2488 = vshll.u32 %v2256, 16
  %v2490 = vrot.slane %v2488, 5
  %v2491 = vor.u32 %v2487, %v2490
  %v2492 = vrot.slane %v2491, 4
  %v2494 = vshll.u32 %v2257, 16
  %v2496 = vrot.slane %v2494, 5
  %v2497 = vsel %vm1475, %v2492, %v2496
  %v2498 = vshrl.u32 %v2257, 16
  %v2500 = vrot.slane %v2498, 4
  %v2501 = vor.u32 %v2500, %v2496
  %v2502 = vrot.slane %v2501, 4
  %v2504 = vshll.u32 %v2314, 16
  %v2506 = vrot.slane %v2504, 5
  %v2507 = vsel %vm1475, %v2502, %v2506
  %v2509 = vshrl.u32 %v2258, 16
  %v2511 = vrot.slane %v2509, 4
  %v2512 = vshll.u32 %v2258, 16
  %v2514 = vrot.slane %v2512, 5
  %v2515 = vor.u32 %v2511, %v2514
  %v2516 = vrot.slane %v2515, 4
  %v2518 = vshll.u32 %v2259, 16
  %v2520 = vrot.slane %v2518, 5
  %v2521 = vsel %vm1475, %v2516, %v2520
  %v2522 = vshrl.u32 %v2259, 16
  %v2524 = vrot.slane %v2522, 4
  %v2525 = vor.u32 %v2524, %v2520
  %v2526 = vrot.slane %v2525, 4
  %v2528 = vshll.u32 %v2315, 16
  %v2530 = vrot.slane %v2528, 5
  %v2531 = vsel %vm1475, %v2526, %v2530
  %v2533 = vshrl.u32 %v2260, 16
  %v2535 = vrot.slane %v2533, 4
  %v2536 = vshll.u32 %v2260, 16
  %v2538 = vrot.slane %v2536, 5
  %v2539 = vor.u32 %v2535, %v2538
  %v2540 = vrot.slane %v2539, 4
  %v2542 = vshll.u32 %v2261, 16
  %v2544 = vrot.slane %v2542, 5
  %v2545 = vsel %vm1475, %v2540, %v2544
  %v2546 = vshrl.u32 %v2261, 16
  %v2548 = vrot.slane %v2546, 4
  %v2549 = vor.u32 %v2548, %v2544
  %v2550 = vrot.slane %v2549, 4
  %v2552 = vshll.u32 %v2316, 16
  %v2554 = vrot.slane %v2552, 5
  %v2555 = vsel %vm1475, %v2550, %v2554
  %v2557 = vshrl.u32 %v2262, 16
  %v2559 = vrot.slane %v2557, 4
  %v2560 = vshll.u32 %v2262, 16
  %v2562 = vrot.slane %v2560, 5
  %v2563 = vor.u32 %v2559, %v2562
  %v2564 = vrot.slane %v2563, 4
  %v2566 = vshll.u32 %v2263, 16
  %v2568 = vrot.slane %v2566, 5
  %v2569 = vsel %vm1475, %v2564, %v2568
  %v2570 = vshrl.u32 %v2263, 16
  %v2572 = vrot.slane %v2570, 4
  %v2573 = vor.u32 %v2572, %v2568
  %v2574 = vrot.slane %v2573, 4
  %v2576 = vshll.u32 %v2317, 16
  %v2578 = vrot.slane %v2576, 5
  %v2579 = vsel %vm1475, %v2574, %v2578
  %v2581 = vshrl.u32 %v2264, 16
  %v2583 = vrot.slane %v2581, 4
  %v2584 = vshll.u32 %v2264, 16
  %v2586 = vrot.slane %v2584, 5
  %v2587 = vor.u32 %v2583, %v2586
  %v2588 = vrot.slane %v2587, 4
  %v2590 = vshll.u32 %v2265, 16
  %v2592 = vrot.slane %v2590, 5
  %v2593 = vsel %vm1475, %v2588, %v2592
  %v2594 = vshrl.u32 %v2265, 16
  %v2596 = vrot.slane %v2594, 4
  %v2597 = vor.u32 %v2596, %v2592
  %v2598 = vrot.slane %v2597, 4
  %v2600 = vshll.u32 %v2318, 16
  %v2602 = vrot.slane %v2600, 5
  %v2603 = vsel %vm1475, %v2598, %v2602
  %v2605 = vshrl.u32 %v2266, 16
  %v2607 = vrot.slane %v2605, 4
  %v2608 = vshll.u32 %v2266, 16
  %v2610 = vrot.slane %v2608, 5
  %v2611 = vor.u32 %v2607, %v2610
  %v2612 = vrot.slane %v2611, 4
  %v2614 = vshll.u32 %v2267, 16
  %v2616 = vrot.slane %v2614, 5
  %v2617 = vsel %vm1475, %v2612, %v2616
  %v2618 = vshrl.u32 %v2267, 16
  %v2620 = vrot.slane %v2618, 4
  %v2621 = vor.u32 %v2620, %v2616
  %v2622 = vrot.slane %v2621, 4
  %v2624 = vshll.u32 %v2319, 16
  %v2626 = vrot.slane %v2624, 5
  %v2627 = vsel %vm1475, %v2622, %v2626
  %v2629 = vshrl.u32 %v2268, 16
  %v2631 = vrot.slane %v2629, 4
  %v2632 = vshll.u32 %v2268, 16
  %v2634 = vrot.slane %v2632, 5
  %v2635 = vor.u32 %v2631, %v2634
  %v2636 = vrot.slane %v2635, 4
  %v2638 = vshll.u32 %v2269, 16
  %v2640 = vrot.slane %v2638, 5
  %v2641 = vsel %vm1475, %v2636, %v2640
  %v2642 = vshrl.u32 %v2269, 16
  %v2644 = vrot.slane %v2642, 4
  %v2645 = vor.u32 %v2644, %v2640
  %v2646 = vrot.slane %v2645, 4
  %v2648 = vshll.u32 %v2320, 16
  %v2650 = vrot.slane %v2648, 5
  %v2651 = vsel %vm1475, %v2646, %v2650
  %v2653 = vshrl.u32 %v2270, 16
  %v2655 = vrot.slane %v2653, 4
  %v2656 = vshll.u32 %v2270, 16
  %v2658 = vrot.slane %v2656, 5
  %v2659 = vor.u32 %v2655, %v2658
  %v2660 = vrot.slane %v2659, 4
  %v2662 = vshll.u32 %v2271, 16
  %v2664 = vrot.slane %v2662, 5
  %v2665 = vsel %vm1475, %v2660, %v2664
  %v2666 = vshrl.u32 %v2271, 16
  %v2668 = vrot.slane %v2666, 4
  %v2669 = vor.u32 %v2668, %v2664
  %v2670 = vrot.slane %v2669, 4
  %v2672 = vshll.u32 %v2321, 16
  %v2674 = vrot.slane %v2672, 5
  %v2675 = vsel %vm1475, %v2670, %v2674
  %v2677 = vshrl.u32 %v2272, 16
  %v2679 = vrot.slane %v2677, 4
  %v2680 = vshll.u32 %v2272, 16
  %v2682 = vrot.slane %v2680, 5
  %v2683 = vor.u32 %v2679, %v2682
  %v2684 = vrot.slane %v2683, 4
  %v2686 = vshll.u32 %v2273, 16
  %v2688 = vrot.slane %v2686, 5
  %v2689 = vsel %vm1475, %v2684, %v2688
  %v2690 = vshrl.u32 %v2273, 16
  %v2692 = vrot.slane %v2690, 4
  %v2693 = vor.u32 %v2692, %v2688
  %v2694 = vrot.slane %v2693, 4
  %v2696 = vshll.u32 %v2322, 16
  %v2698 = vrot.slane %v2696, 5
  %v2699 = vsel %vm1475, %v2694, %v2698
  %v2701 = vshrl.u32 %v2274, 16
  %v2703 = vrot.slane %v2701, 4
  %v2704 = vshll.u32 %v2274, 16
  %v2706 = vrot.slane %v2704, 5
  %v2707 = vor.u32 %v2703, %v2706
  %v2708 = vrot.slane %v2707, 4
  %v2710 = vshll.u32 %v2275, 16
  %v2712 = vrot.slane %v2710, 5
  %v2713 = vsel %vm1475, %v2708, %v2712
  %v2714 = vshrl.u32 %v2275, 16
  %v2716 = vrot.slane %v2714, 4
  %v2717 = vor.u32 %v2716, %v2712
  %v2718 = vrot.slane %v2717, 4
  %v2720 = vshll.u32 %v2323, 16
  %v2722 = vrot.slane %v2720, 5
  %v2723 = vsel %vm1475, %v2718, %v2722
  %v2725 = vshrl.u32 %v2276, 16
  %v2727 = vrot.slane %v2725, 4
  %v2728 = vshll.u32 %v2276, 16
  %v2730 = vrot.slane %v2728, 5
  %v2731 = vor.u32 %v2727, %v2730
  %v2732 = vrot.slane %v2731, 4
  %v2734 = vshll.u32 %v2277, 16
  %v2736 = vrot.slane %v2734, 5
  %v2737 = vsel %vm1475, %v2732, %v2736
  %v2738 = vshrl.u32 %v2277, 16
  %v2740 = vrot.slane %v2738, 4
  %v2741 = vor.u32 %v2740, %v2736
  %v2742 = vrot.slane %v2741, 4
  %v2744 = vshll.u32 %v2324, 16
  %v2746 = vrot.slane %v2744, 5
  %v2747 = vsel %vm1475, %v2742, %v2746
  %v2749 = vshrl.u32 %v2278, 16
  %v2751 = vrot.slane %v2749, 4
  %v2752 = vshll.u32 %v2278, 16
  %v2754 = vrot.slane %v2752, 5
  %v2755 = vor.u32 %v2751, %v2754
  %v2756 = vrot.slane %v2755, 4
  %v2758 = vshll.u32 %v2279, 16
  %v2760 = vrot.slane %v2758, 5
  %v2761 = vsel %vm1475, %v2756, %v2760
  %v2762 = vshrl.u32 %v2279, 16
  %v2764 = vrot.slane %v2762, 4
  %v2765 = vor.u32 %v2764, %v2760
  %v2766 = vrot.slane %v2765, 4
  %v2768 = vshll.u32 %v2325, 16
  %v2770 = vrot.slane %v2768, 5
  %v2771 = vsel %vm1475, %v2766, %v2770
  %v2773 = vshrl.u32 %v2280, 16
  %v2775 = vrot.slane %v2773, 4
  %v2776 = vshll.u32 %v2280, 16
  %v2778 = vrot.slane %v2776, 5
  %v2779 = vor.u32 %v2775, %v2778
  %v2780 = vrot.slane %v2779, 4
  %v2782 = vshll.u32 %v2281, 16
  %v2784 = vrot.slane %v2782, 5
  %v2785 = vsel %vm1475, %v2780, %v2784
  %v2786 = vshrl.u32 %v2281, 16
  %v2788 = vrot.slane %v2786, 4
  %v2789 = vor.u32 %v2788, %v2784
  %v2790 = vrot.slane %v2789, 4
  %v2792 = vshll.u32 %v2326, 16
  %v2794 = vrot.slane %v2792, 5
  %v2795 = vsel %vm1475, %v2790, %v2794
  %v2797 = vshrl.u32 %v2282, 16
  %v2799 = vrot.slane %v2797, 4
  %v2800 = vshll.u32 %v2282, 16
  %v2802 = vrot.slane %v2800, 5
  %v2803 = vor.u32 %v2799, %v2802
  %v2804 = vrot.slane %v2803, 4
  %v2806 = vshll.u32 %v2283, 16
  %v2808 = vrot.slane %v2806, 5
  %v2809 = vsel %vm1475, %v2804, %v2808
  %v2810 = vshrl.u32 %v2283, 16
  %v2812 = vrot.slane %v2810, 4
  %v2813 = vor.u32 %v2812, %v2808
  %v2814 = vrot.slane %v2813, 4
  %v2816 = vshll.u32 %v2327, 16
  %v2818 = vrot.slane %v2816, 5
  %v2819 = vsel %vm1475, %v2814, %v2818
  %v2821 = vshrl.u32 %v2284, 16
  %v2823 = vrot.slane %v2821, 4
  %v2824 = vshll.u32 %v2284, 16
  %v2826 = vrot.slane %v2824, 5
  %v2827 = vor.u32 %v2823, %v2826
  %v2828 = vrot.slane %v2827, 4
  %v2830 = vshll.u32 %v2285, 16
  %v2832 = vrot.slane %v2830, 5
  %v2833 = vsel %vm1475, %v2828, %v2832
  %v2834 = vshrl.u32 %v2285, 16
  %v2836 = vrot.slane %v2834, 4
  %v2837 = vor.u32 %v2836, %v2832
  %v2838 = vrot.slane %v2837, 4
  %v2840 = vshll.u32 %v2328, 16
  %v2842 = vrot.slane %v2840, 5
  %v2843 = vsel %vm1475, %v2838, %v2842
  %v2845 = vshrl.u32 %v2286, 16
  %v2847 = vrot.slane %v2845, 4
  %v2848 = vshll.u32 %v2286, 16
  %v2850 = vrot.slane %v2848, 5
  %v2851 = vor.u32 %v2847, %v2850
  %v2852 = vrot.slane %v2851, 4
  %v2854 = vshll.u32 %v2287, 16
  %v2856 = vrot.slane %v2854, 5
  %v2857 = vsel %vm1475, %v2852, %v2856
  %v2858 = vshrl.u32 %v2287, 16
  %v2860 = vrot.slane %v2858, 4
  %v2861 = vor.u32 %v2860, %v2856
  %v2862 = vrot.slane %v2861, 4
  %v2864 = vshll.u32 %v2329, 16
  %v2866 = vrot.slane %v2864, 5
  %v2867 = vsel %vm1475, %v2862, %v2866
  %v2869 = vshrl.u32 %v2288, 16
  %v2871 = vrot.slane %v2869, 4
  %v2872 = vshll.u32 %v2288, 16
  %v2874 = vrot.slane %v2872, 5
  %v2875 = vor.u32 %v2871, %v2874
  %v2876 = vrot.slane %v2875, 4
  %v2878 = vshll.u32 %v2289, 16
  %v2880 = vrot.slane %v2878, 5
  %v2881 = vsel %vm1475, %v2876, %v2880
  %v2882 = vshrl.u32 %v2289, 16
  %v2884 = vrot.slane %v2882, 4
  %v2885 = vor.u32 %v2884, %v2880
  %v2886 = vrot.slane %v2885, 4
  %v2888 = vshll.u32 %v2330, 16
  %v2890 = vrot.slane %v2888, 5
  %v2891 = vsel %vm1475, %v2886, %v2890
  %v2893 = vshrl.u32 %v2290, 16
  %v2895 = vrot.slane %v2893, 4
  %v2896 = vshll.u32 %v2290, 16
  %v2898 = vrot.slane %v2896, 5
  %v2899 = vor.u32 %v2895, %v2898
  %v2900 = vrot.slane %v2899, 4
  %v2902 = vshll.u32 %v2291, 16
  %v2904 = vrot.slane %v2902, 5
  %v2905 = vsel %vm1475, %v2900, %v2904
  %v2906 = vshrl.u32 %v2291, 16
  %v2908 = vrot.slane %v2906, 4
  %v2909 = vor.u32 %v2908, %v2904
  %v2910 = vrot.slane %v2909, 4
  %v2912 = vshll.u32 %v2331, 16
  %v2914 = vrot.slane %v2912, 5
  %v2915 = vsel %vm1475, %v2910, %v2914
  %v2917 = vshrl.u32 %v2292, 16
  %v2919 = vrot.slane %v2917, 4
  %v2920 = vshll.u32 %v2292, 16
  %v2922 = vrot.slane %v2920, 5
  %v2923 = vor.u32 %v2919, %v2922
  %v2924 = vrot.slane %v2923, 4
  %v2926 = vshll.u32 %v2293, 16
  %v2928 = vrot.slane %v2926, 5
  %v2929 = vsel %vm1475, %v2924, %v2928
  %v2930 = vshrl.u32 %v2293, 16
  %v2932 = vrot.slane %v2930, 4
  %v2933 = vor.u32 %v2932, %v2928
  %v2934 = vrot.slane %v2933, 4
  %v2936 = vshll.u32 %v2332, 16
  %v2938 = vrot.slane %v2936, 5
  %v2939 = vsel %vm1475, %v2934, %v2938
  %v2941 = vshrl.u32 %v2294, 16
  %v2943 = vrot.slane %v2941, 4
  %v2944 = vshll.u32 %v2294, 16
  %v2946 = vrot.slane %v2944, 5
  %v2947 = vor.u32 %v2943, %v2946
  %v2948 = vrot.slane %v2947, 4
  %v2950 = vshll.u32 %v2295, 16
  %v2952 = vrot.slane %v2950, 5
  %v2953 = vsel %vm1475, %v2948, %v2952
  %v2954 = vshrl.u32 %v2295, 16
  %v2956 = vrot.slane %v2954, 4
  %v2957 = vor.u32 %v2956, %v2952
  %v2958 = vrot.slane %v2957, 4
  %v2960 = vshll.u32 %v2333, 16
  %v2962 = vrot.slane %v2960, 5
  %v2963 = vsel %vm1475, %v2958, %v2962
  %v2965 = vshrl.u32 %v2296, 16
  %v2967 = vrot.slane %v2965, 4
  %v2968 = vshll.u32 %v2296, 16
  %v2970 = vrot.slane %v2968, 5
  %v2971 = vor.u32 %v2967, %v2970
  %v2972 = vrot.slane %v2971, 4
  %v2974 = vshll.u32 %v2297, 16
  %v2976 = vrot.slane %v2974, 5
  %v2977 = vsel %vm1475, %v2972, %v2976
  %v2978 = vshrl.u32 %v2297, 16
  %v2980 = vrot.slane %v2978, 4
  %v2981 = vor.u32 %v2980, %v2976
  %v2982 = vrot.slane %v2981, 4
  %v2984 = vshll.u32 %v2334, 16
  %v2986 = vrot.slane %v2984, 5
  %v2987 = vsel %vm1475, %v2982, %v2986
  %v2989 = vshrl.u32 %v2298, 16
  %v2991 = vrot.slane %v2989, 4
  %v2992 = vshll.u32 %v2298, 16
  %v2994 = vrot.slane %v2992, 5
  %v2995 = vor.u32 %v2991, %v2994
  %v2996 = vrot.slane %v2995, 4
  %v2998 = vshll.u32 %v2299, 16
  %v3000 = vrot.slane %v2998, 5
  %v3001 = vsel %vm1475, %v2996, %v3000
  %v3002 = vshrl.u32 %v2299, 16
  %v3004 = vrot.slane %v3002, 4
  %v3005 = vor.u32 %v3004, %v3000
  %v3006 = vrot.slane %v3005, 4
  %v3008 = vshll.u32 %v2335, 16
  %v3010 = vrot.slane %v3008, 5
  %v3011 = vsel %vm1475, %v3006, %v3010
  %v3013 = vshrl.u32 %v2300, 16
  %v3015 = vrot.slane %v3013, 4
  %v3016 = vshll.u32 %v2300, 16
  %v3018 = vrot.slane %v3016, 5
  %v3019 = vor.u32 %v3015, %v3018
  %v3020 = vrot.slane %v3019, 4
  %v3022 = vshll.u32 %v2301, 16
  %v3024 = vrot.slane %v3022, 5
  %v3025 = vsel %vm1475, %v3020, %v3024
  %v3026 = vshrl.u32 %v2301, 16
  %v3028 = vrot.slane %v3026, 4
  %v3029 = vor.u32 %v3028, %v3024
  %v3030 = vrot.slane %v3029, 4
  %v3032 = vshll.u32 %v2336, 16
  %v3034 = vrot.slane %v3032, 5
  %v3035 = vsel %vm1475, %v3030, %v3034
  %v3037 = vshrl.u32 %v2302, 16
  %v3039 = vrot.slane %v3037, 4
  %v3040 = vshll.u32 %v2302, 16
  %v3042 = vrot.slane %v3040, 5
  %v3043 = vor.u32 %v3039, %v3042
  %v3044 = vrot.slane %v3043, 4
  %v3046 = vshll.u32 %v2303, 16
  %v3048 = vrot.slane %v3046, 5
  %v3049 = vsel %vm1475, %v3044, %v3048
  %v3050 = vshrl.u32 %v2303, 16
  %v3052 = vrot.slane %v3050, 4
  %v3053 = vor.u32 %v3052, %v3048
  %v3054 = vrot.slane %v3053, 4
  %v3056 = vshll.u32 %v2337, 16
  %v3058 = vrot.slane %v3056, 5
  %v3059 = vsel %vm1475, %v3054, %v3058
  %v3061 = vshrl.u32 %v2304, 16
  %v3063 = vrot.slane %v3061, 4
  %v3064 = vshll.u32 %v2304, 16
  %v3066 = vrot.slane %v3064, 5
  %v3067 = vor.u32 %v3063, %v3066
  %v3068 = vrot.slane %v3067, 4
  %v3070 = vshll.u32 %v2305, 16
  %v3072 = vrot.slane %v3070, 5
  %v3073 = vsel %vm1475, %v3068, %v3072
  %v3074 = vshrl.u32 %v2305, 16
  %v3076 = vrot.slane %v3074, 4
  %v3077 = vor.u32 %v3076, %v3072
  %v3078 = vrot.slane %v3077, 4
  %v3080 = vshll.u32 %v2338, 16
  %v3082 = vrot.slane %v3080, 5
  %v3083 = vsel %vm1475, %v3078, %v3082
  %v3085 = vshrl.u32 %v2306, 16
  %v3087 = vrot.slane %v3085, 4
  %v3088 = vshll.u32 %v2306, 16
  %v3090 = vrot.slane %v3088, 5
  %v3091 = vor.u32 %v3087, %v3090
  %v3092 = vrot.slane %v3091, 4
  %v3094 = vshll.u32 %v2307, 16
  %v3096 = vrot.slane %v3094, 5
  %v3097 = vsel %vm1475, %v3092, %v3096
  %v3098 = vshrl.u32 %v2307, 16
  %v3100 = vrot.slane %v3098, 4
  %v3101 = vor.u32 %v3100, %v3096
  %v3102 = vrot.slane %v3101, 4
  %v3104 = vshll.u32 %v2339, 16
  %v3106 = vrot.slane %v3104, 5
  %v3107 = vsel %vm1475, %v3102, %v3106
  %v3172 = vunpack.c.l.b16 %v1377
  %v3173 = vunpack.c.l.b16 %v1378
  %v3174 = vunpack.c.l.b16 %v1379
  %v3175 = vunpack.c.l.b16 %v1380
  %v3176 = vunpack.c.l.b16 %v1381
  %v3177 = vunpack.c.l.b16 %v1382
  %v3178 = vunpack.c.l.b16 %v1383
  %v3179 = vunpack.c.l.b16 %v1384
  %v3180 = vunpack.c.l.b16 %v1385
  %v3181 = vunpack.c.l.b16 %v1386
  %v3182 = vunpack.c.l.b16 %v1387
  %v3183 = vunpack.c.l.b16 %v1388
  %v3184 = vunpack.c.l.b16 %v1389
  %v3185 = vunpack.c.l.b16 %v1390
  %v3186 = vunpack.c.l.b16 %v1391
  %v3187 = vunpack.c.l.b16 %v1392
  %v3188 = vunpack.c.l.b16 %v1393
  %v3189 = vunpack.c.l.b16 %v1394
  %v3190 = vunpack.c.l.b16 %v1395
  %v3191 = vunpack.c.l.b16 %v1396
  %v3192 = vunpack.c.l.b16 %v1397
  %v3193 = vunpack.c.l.b16 %v1398
  %v3194 = vunpack.c.l.b16 %v1399
  %v3195 = vunpack.c.l.b16 %v1400
  %v3196 = vunpack.c.l.b16 %v1401
  %v3197 = vunpack.c.l.b16 %v1402
  %v3198 = vunpack.c.l.b16 %v1403
  %v3199 = vunpack.c.l.b16 %v1404
  %v3200 = vunpack.c.l.b16 %v1405
  %v3201 = vunpack.c.l.b16 %v1406
  %v3202 = vunpack.c.l.b16 %v1407
  %v3203 = vunpack.c.l.b16 %v1408
  %v3204 = vunpack.c.l.b16 %v1409
  %v3205 = vunpack.c.l.b16 %v1410
  %v3206 = vunpack.c.l.b16 %v1411
  %v3207 = vunpack.c.l.b16 %v1412
  %v3208 = vunpack.c.l.b16 %v1413
  %v3209 = vunpack.c.l.b16 %v1414
  %v3210 = vunpack.c.l.b16 %v1415
  %v3211 = vunpack.c.l.b16 %v1416
  %v3212 = vunpack.c.l.b16 %v1417
  %v3213 = vunpack.c.l.b16 %v1418
  %v3214 = vunpack.c.l.b16 %v1419
  %v3215 = vunpack.c.l.b16 %v1420
  %v3216 = vunpack.c.l.b16 %v1421
  %v3217 = vunpack.c.l.b16 %v1422
  %v3218 = vunpack.c.l.b16 %v1423
  %v3219 = vunpack.c.l.b16 %v1424
  %v3220 = vunpack.c.l.b16 %v1425
  %v3221 = vunpack.c.l.b16 %v1426
  %v3222 = vunpack.c.l.b16 %v1427
  %v3223 = vunpack.c.l.b16 %v1428
  %v3224 = vunpack.c.l.b16 %v1429
  %v3225 = vunpack.c.l.b16 %v1430
  %v3226 = vunpack.c.l.b16 %v1431
  %v3227 = vunpack.c.l.b16 %v1432
  %v3228 = vunpack.c.l.b16 %v1433
  %v3229 = vunpack.c.l.b16 %v1434
  %v3230 = vunpack.c.l.b16 %v1435
  %v3231 = vunpack.c.l.b16 %v1436
  %v3232 = vunpack.c.l.b16 %v1437
  %v3233 = vunpack.c.l.b16 %v1438
  %v3234 = vunpack.c.l.b16 %v1439
  %v3235 = vunpack.c.l.b16 %v1440
  %v3236 = vpack.c.b16 %v3173, %v3172
  %v3237 = vpack.c.b16 %v3175, %v3174
  %v3238 = vpack.c.b16 %v3177, %v3176
  %v3239 = vpack.c.b16 %v3179, %v3178
  %v3240 = vpack.c.b16 %v3181, %v3180
  %v3241 = vpack.c.b16 %v3183, %v3182
  %v3242 = vpack.c.b16 %v3185, %v3184
  %v3243 = vpack.c.b16 %v3187, %v3186
  %v3244 = vpack.c.b16 %v3189, %v3188
  %v3245 = vpack.c.b16 %v3191, %v3190
  %v3246 = vpack.c.b16 %v3193, %v3192
  %v3247 = vpack.c.b16 %v3195, %v3194
  %v3248 = vpack.c.b16 %v3197, %v3196
  %v3249 = vpack.c.b16 %v3199, %v3198
  %v3250 = vpack.c.b16 %v3201, %v3200
  %v3251 = vpack.c.b16 %v3203, %v3202
  %v3252 = vpack.c.b16 %v3205, %v3204
  %v3253 = vpack.c.b16 %v3207, %v3206
  %v3254 = vpack.c.b16 %v3209, %v3208
  %v3255 = vpack.c.b16 %v3211, %v3210
  %v3256 = vpack.c.b16 %v3213, %v3212
  %v3257 = vpack.c.b16 %v3215, %v3214
  %v3258 = vpack.c.b16 %v3217, %v3216
  %v3259 = vpack.c.b16 %v3219, %v3218
  %v3260 = vpack.c.b16 %v3221, %v3220
  %v3261 = vpack.c.b16 %v3223, %v3222
  %v3262 = vpack.c.b16 %v3225, %v3224
  %v3263 = vpack.c.b16 %v3227, %v3226
  %v3264 = vpack.c.b16 %v3229, %v3228
  %v3265 = vpack.c.b16 %v3231, %v3230
  %v3266 = vpack.c.b16 %v3233, %v3232
  %v3267 = vpack.c.b16 %v3235, %v3234
  %v3268 = vunpack.c.l.b16 %v1489
  %v3269 = vunpack.c.l.b16 %v1499
  %v3270 = vunpack.c.l.b16 %v1513
  %v3271 = vunpack.c.l.b16 %v1523
  %v3272 = vunpack.c.l.b16 %v1537
  %v3273 = vunpack.c.l.b16 %v1547
  %v3274 = vunpack.c.l.b16 %v1561
  %v3275 = vunpack.c.l.b16 %v1571
  %v3276 = vunpack.c.l.b16 %v1585
  %v3277 = vunpack.c.l.b16 %v1595
  %v3278 = vunpack.c.l.b16 %v1609
  %v3279 = vunpack.c.l.b16 %v1619
  %v3280 = vunpack.c.l.b16 %v1633
  %v3281 = vunpack.c.l.b16 %v1643
  %v3282 = vunpack.c.l.b16 %v1657
  %v3283 = vunpack.c.l.b16 %v1667
  %v3284 = vunpack.c.l.b16 %v1681
  %v3285 = vunpack.c.l.b16 %v1691
  %v3286 = vunpack.c.l.b16 %v1705
  %v3287 = vunpack.c.l.b16 %v1715
  %v3288 = vunpack.c.l.b16 %v1729
  %v3289 = vunpack.c.l.b16 %v1739
  %v3290 = vunpack.c.l.b16 %v1753
  %v3291 = vunpack.c.l.b16 %v1763
  %v3292 = vunpack.c.l.b16 %v1777
  %v3293 = vunpack.c.l.b16 %v1787
  %v3294 = vunpack.c.l.b16 %v1801
  %v3295 = vunpack.c.l.b16 %v1811
  %v3296 = vunpack.c.l.b16 %v1825
  %v3297 = vunpack.c.l.b16 %v1835
  %v3298 = vunpack.c.l.b16 %v1849
  %v3299 = vunpack.c.l.b16 %v1859
  %v3300 = vunpack.c.l.b16 %v1873
  %v3301 = vunpack.c.l.b16 %v1883
  %v3302 = vunpack.c.l.b16 %v1897
  %v3303 = vunpack.c.l.b16 %v1907
  %v3304 = vunpack.c.l.b16 %v1921
  %v3305 = vunpack.c.l.b16 %v1931
  %v3306 = vunpack.c.l.b16 %v1945
  %v3307 = vunpack.c.l.b16 %v1955
  %v3308 = vunpack.c.l.b16 %v1969
  %v3309 = vunpack.c.l.b16 %v1979
  %v3310 = vunpack.c.l.b16 %v1993
  %v3311 = vunpack.c.l.b16 %v2003
  %v3312 = vunpack.c.l.b16 %v2017
  %v3313 = vunpack.c.l.b16 %v2027
  %v3314 = vunpack.c.l.b16 %v2041
  %v3315 = vunpack.c.l.b16 %v2051
  %v3316 = vunpack.c.l.b16 %v2065
  %v3317 = vunpack.c.l.b16 %v2075
  %v3318 = vunpack.c.l.b16 %v2089
  %v3319 = vunpack.c.l.b16 %v2099
  %v3320 = vunpack.c.l.b16 %v2113
  %v3321 = vunpack.c.l.b16 %v2123
  %v3322 = vunpack.c.l.b16 %v2137
  %v3323 = vunpack.c.l.b16 %v2147
  %v3324 = vunpack.c.l.b16 %v2161
  %v3325 = vunpack.c.l.b16 %v2171
  %v3326 = vunpack.c.l.b16 %v2185
  %v3327 = vunpack.c.l.b16 %v2195
  %v3328 = vunpack.c.l.b16 %v2209
  %v3329 = vunpack.c.l.b16 %v2219
  %v3330 = vunpack.c.l.b16 %v2233
  %v3331 = vunpack.c.l.b16 %v2243
  %v3332 = vpack.c.b16 %v3269, %v3268
  %v3333 = vpack.c.b16 %v3271, %v3270
  %v3334 = vpack.c.b16 %v3273, %v3272
  %v3335 = vpack.c.b16 %v3275, %v3274
  %v3336 = vpack.c.b16 %v3277, %v3276
  %v3337 = vpack.c.b16 %v3279, %v3278
  %v3338 = vpack.c.b16 %v3281, %v3280
  %v3339 = vpack.c.b16 %v3283, %v3282
  %v3340 = vpack.c.b16 %v3285, %v3284
  %v3341 = vpack.c.b16 %v3287, %v3286
  %v3342 = vpack.c.b16 %v3289, %v3288
  %v3343 = vpack.c.b16 %v3291, %v3290
  %v3344 = vpack.c.b16 %v3293, %v3292
  %v3345 = vpack.c.b16 %v3295, %v3294
  %v3346 = vpack.c.b16 %v3297, %v3296
  %v3347 = vpack.c.b16 %v3299, %v3298
  %v3348 = vpack.c.b16 %v3301, %v3300
  %v3349 = vpack.c.b16 %v3303, %v3302
  %v3350 = vpack.c.b16 %v3305, %v3304
  %v3351 = vpack.c.b16 %v3307, %v3306
  %v3352 = vpack.c.b16 %v3309, %v3308
  %v3353 = vpack.c.b16 %v3311, %v3310
  %v3354 = vpack.c.b16 %v3313, %v3312
  %v3355 = vpack.c.b16 %v3315, %v3314
  %v3356 = vpack.c.b16 %v3317, %v3316
  %v3357 = vpack.c.b16 %v3319, %v3318
  %v3358 = vpack.c.b16 %v3321, %v3320
  %v3359 = vpack.c.b16 %v3323, %v3322
  %v3360 = vpack.c.b16 %v3325, %v3324
  %v3361 = vpack.c.b16 %v3327, %v3326
  %v3362 = vpack.c.b16 %v3329, %v3328
  %v3363 = vpack.c.b16 %v3331, %v3330
  %3364 = vrot.lane.b32.xlu0 %v3332, 4
  %v3365 = vpop.permute.xlu0 %3364
  %3366 = vrot.lane.b32.xlu0 %v3333, 4
  %v3367 = vpop.permute.xlu0 %3366
  %3368 = vrot.lane.b32.xlu0 %v3334, 4
  %v3369 = vpop.permute.xlu0 %3368
  %3370 = vrot.lane.b32.xlu0 %v3335, 4
  %v3371 = vpop.permute.xlu0 %3370
  %3372 = vrot.lane.b32.xlu0 %v3336, 4
  %v3373 = vpop.permute.xlu0 %3372
  %3374 = vrot.lane.b32.xlu0 %v3337, 4
  %v3375 = vpop.permute.xlu0 %3374
  %3376 = vrot.lane.b32.xlu0 %v3338, 4
  %v3377 = vpop.permute.xlu0 %3376
  %3378 = vrot.lane.b32.xlu0 %v3339, 4
  %v3379 = vpop.permute.xlu0 %3378
  %3380 = vrot.lane.b32.xlu0 %v3340, 4
  %v3381 = vpop.permute.xlu0 %3380
  %3382 = vrot.lane.b32.xlu0 %v3341, 4
  %v3383 = vpop.permute.xlu0 %3382
  %3384 = vrot.lane.b32.xlu0 %v3342, 4
  %v3385 = vpop.permute.xlu0 %3384
  %3386 = vrot.lane.b32.xlu0 %v3343, 4
  %v3387 = vpop.permute.xlu0 %3386
  %3388 = vrot.lane.b32.xlu0 %v3344, 4
  %v3389 = vpop.permute.xlu0 %3388
  %3390 = vrot.lane.b32.xlu0 %v3345, 4
  %v3391 = vpop.permute.xlu0 %3390
  %3392 = vrot.lane.b32.xlu0 %v3346, 4
  %v3393 = vpop.permute.xlu0 %3392
  %3394 = vrot.lane.b32.xlu0 %v3347, 4
  %v3395 = vpop.permute.xlu0 %3394
  %3396 = vrot.lane.b32.xlu0 %v3348, 4
  %v3397 = vpop.permute.xlu0 %3396
  %3398 = vrot.lane.b32.xlu0 %v3349, 4
  %v3399 = vpop.permute.xlu0 %3398
  %3400 = vrot.lane.b32.xlu0 %v3350, 4
  %v3401 = vpop.permute.xlu0 %3400
  %3402 = vrot.lane.b32.xlu0 %v3351, 4
  %v3403 = vpop.permute.xlu0 %3402
  %3404 = vrot.lane.b32.xlu0 %v3352, 4
  %v3405 = vpop.permute.xlu0 %3404
  %3406 = vrot.lane.b32.xlu0 %v3353, 4
  %v3407 = vpop.permute.xlu0 %3406
  %3408 = vrot.lane.b32.xlu0 %v3354, 4
  %v3409 = vpop.permute.xlu0 %3408
  %3410 = vrot.lane.b32.xlu0 %v3355, 4
  %v3411 = vpop.permute.xlu0 %3410
  %3412 = vrot.lane.b32.xlu0 %v3356, 4
  %v3413 = vpop.permute.xlu0 %3412
  %3414 = vrot.lane.b32.xlu0 %v3357, 4
  %v3415 = vpop.permute.xlu0 %3414
  %3416 = vrot.lane.b32.xlu0 %v3358, 4
  %v3417 = vpop.permute.xlu0 %3416
  %3418 = vrot.lane.b32.xlu0 %v3359, 4
  %v3419 = vpop.permute.xlu0 %3418
  %3420 = vrot.lane.b32.xlu0 %v3360, 4
  %v3421 = vpop.permute.xlu0 %3420
  %3422 = vrot.lane.b32.xlu0 %v3361, 4
  %v3423 = vpop.permute.xlu0 %3422
  %3424 = vrot.lane.b32.xlu0 %v3362, 4
  %v3425 = vpop.permute.xlu0 %3424
  %3426 = vrot.lane.b32.xlu0 %v3363, 4
  %v3427 = vpop.permute.xlu0 %3426
  %v3492 = vunpack.c.l.b16 %v2244
  %v3493 = vunpack.c.l.b16 %v2245
  %v3494 = vunpack.c.l.b16 %v2246
  %v3495 = vunpack.c.l.b16 %v2247
  %v3496 = vunpack.c.l.b16 %v2248
  %v3497 = vunpack.c.l.b16 %v2249
  %v3498 = vunpack.c.l.b16 %v2250
  %v3499 = vunpack.c.l.b16 %v2251
  %v3500 = vunpack.c.l.b16 %v2252
  %v3501 = vunpack.c.l.b16 %v2253
  %v3502 = vunpack.c.l.b16 %v2254
  %v3503 = vunpack.c.l.b16 %v2255
  %v3504 = vunpack.c.l.b16 %v2256
  %v3505 = vunpack.c.l.b16 %v2257
  %v3506 = vunpack.c.l.b16 %v2258
  %v3507 = vunpack.c.l.b16 %v2259
  %v3508 = vunpack.c.l.b16 %v2260
  %v3509 = vunpack.c.l.b16 %v2261
  %v3510 = vunpack.c.l.b16 %v2262
  %v3511 = vunpack.c.l.b16 %v2263
  %v3512 = vunpack.c.l.b16 %v2264
  %v3513 = vunpack.c.l.b16 %v2265
  %v3514 = vunpack.c.l.b16 %v2266
  %v3515 = vunpack.c.l.b16 %v2267
  %v3516 = vunpack.c.l.b16 %v2268
  %v3517 = vunpack.c.l.b16 %v2269
  %v3518 = vunpack.c.l.b16 %v2270
  %v3519 = vunpack.c.l.b16 %v2271
  %v3520 = vunpack.c.l.b16 %v2272
  %v3521 = vunpack.c.l.b16 %v2273
  %v3522 = vunpack.c.l.b16 %v2274
  %v3523 = vunpack.c.l.b16 %v2275
  %v3524 = vunpack.c.l.b16 %v2276
  %v3525 = vunpack.c.l.b16 %v2277
  %v3526 = vunpack.c.l.b16 %v2278
  %v3527 = vunpack.c.l.b16 %v2279
  %v3528 = vunpack.c.l.b16 %v2280
  %v3529 = vunpack.c.l.b16 %v2281
  %v3530 = vunpack.c.l.b16 %v2282
  %v3531 = vunpack.c.l.b16 %v2283
  %v3532 = vunpack.c.l.b16 %v2284
  %v3533 = vunpack.c.l.b16 %v2285
  %v3534 = vunpack.c.l.b16 %v2286
  %v3535 = vunpack.c.l.b16 %v2287
  %v3536 = vunpack.c.l.b16 %v2288
  %v3537 = vunpack.c.l.b16 %v2289
  %v3538 = vunpack.c.l.b16 %v2290
  %v3539 = vunpack.c.l.b16 %v2291
  %v3540 = vunpack.c.l.b16 %v2292
  %v3541 = vunpack.c.l.b16 %v2293
  %v3542 = vunpack.c.l.b16 %v2294
  %v3543 = vunpack.c.l.b16 %v2295
  %v3544 = vunpack.c.l.b16 %v2296
  %v3545 = vunpack.c.l.b16 %v2297
  %v3546 = vunpack.c.l.b16 %v2298
  %v3547 = vunpack.c.l.b16 %v2299
  %v3548 = vunpack.c.l.b16 %v2300
  %v3549 = vunpack.c.l.b16 %v2301
  %v3550 = vunpack.c.l.b16 %v2302
  %v3551 = vunpack.c.l.b16 %v2303
  %v3552 = vunpack.c.l.b16 %v2304
  %v3553 = vunpack.c.l.b16 %v2305
  %v3554 = vunpack.c.l.b16 %v2306
  %v3555 = vunpack.c.l.b16 %v2307
  %v3556 = vpack.c.b16 %v3493, %v3492
  %v3557 = vpack.c.b16 %v3495, %v3494
  %v3558 = vpack.c.b16 %v3497, %v3496
  %v3559 = vpack.c.b16 %v3499, %v3498
  %v3560 = vpack.c.b16 %v3501, %v3500
  %v3561 = vpack.c.b16 %v3503, %v3502
  %v3562 = vpack.c.b16 %v3505, %v3504
  %v3563 = vpack.c.b16 %v3507, %v3506
  %v3564 = vpack.c.b16 %v3509, %v3508
  %v3565 = vpack.c.b16 %v3511, %v3510
  %v3566 = vpack.c.b16 %v3513, %v3512
  %v3567 = vpack.c.b16 %v3515, %v3514
  %v3568 = vpack.c.b16 %v3517, %v3516
  %v3569 = vpack.c.b16 %v3519, %v3518
  %v3570 = vpack.c.b16 %v3521, %v3520
  %v3571 = vpack.c.b16 %v3523, %v3522
  %v3572 = vpack.c.b16 %v3525, %v3524
  %v3573 = vpack.c.b16 %v3527, %v3526
  %v3574 = vpack.c.b16 %v3529, %v3528
  %v3575 = vpack.c.b16 %v3531, %v3530
  %v3576 = vpack.c.b16 %v3533, %v3532
  %v3577 = vpack.c.b16 %v3535, %v3534
  %v3578 = vpack.c.b16 %v3537, %v3536
  %v3579 = vpack.c.b16 %v3539, %v3538
  %v3580 = vpack.c.b16 %v3541, %v3540
  %v3581 = vpack.c.b16 %v3543, %v3542
  %v3582 = vpack.c.b16 %v3545, %v3544
  %v3583 = vpack.c.b16 %v3547, %v3546
  %v3584 = vpack.c.b16 %v3549, %v3548
  %v3585 = vpack.c.b16 %v3551, %v3550
  %v3586 = vpack.c.b16 %v3553, %v3552
  %v3587 = vpack.c.b16 %v3555, %v3554
  %3588 = vrot.lane.b32.xlu0 %v3556, 8
  %v3589 = vpop.permute.xlu0 %3588
  %3590 = vrot.lane.b32.xlu0 %v3557, 8
  %v3591 = vpop.permute.xlu0 %3590
  %3592 = vrot.lane.b32.xlu0 %v3558, 8
  %v3593 = vpop.permute.xlu0 %3592
  %3594 = vrot.lane.b32.xlu0 %v3559, 8
  %v3595 = vpop.permute.xlu0 %3594
  %3596 = vrot.lane.b32.xlu0 %v3560, 8
  %v3597 = vpop.permute.xlu0 %3596
  %3598 = vrot.lane.b32.xlu0 %v3561, 8
  %v3599 = vpop.permute.xlu0 %3598
  %3600 = vrot.lane.b32.xlu0 %v3562, 8
  %v3601 = vpop.permute.xlu0 %3600
  %3602 = vrot.lane.b32.xlu0 %v3563, 8
  %v3603 = vpop.permute.xlu0 %3602
  %3604 = vrot.lane.b32.xlu0 %v3564, 8
  %v3605 = vpop.permute.xlu0 %3604
  %3606 = vrot.lane.b32.xlu0 %v3565, 8
  %v3607 = vpop.permute.xlu0 %3606
  %3608 = vrot.lane.b32.xlu0 %v3566, 8
  %v3609 = vpop.permute.xlu0 %3608
  %3610 = vrot.lane.b32.xlu0 %v3567, 8
  %v3611 = vpop.permute.xlu0 %3610
  %3612 = vrot.lane.b32.xlu0 %v3568, 8
  %v3613 = vpop.permute.xlu0 %3612
  %3614 = vrot.lane.b32.xlu0 %v3569, 8
  %v3615 = vpop.permute.xlu0 %3614
  %3616 = vrot.lane.b32.xlu0 %v3570, 8
  %v3617 = vpop.permute.xlu0 %3616
  %3618 = vrot.lane.b32.xlu0 %v3571, 8
  %v3619 = vpop.permute.xlu0 %3618
  %3620 = vrot.lane.b32.xlu0 %v3572, 8
  %v3621 = vpop.permute.xlu0 %3620
  %3622 = vrot.lane.b32.xlu0 %v3573, 8
  %v3623 = vpop.permute.xlu0 %3622
  %3624 = vrot.lane.b32.xlu0 %v3574, 8
  %v3625 = vpop.permute.xlu0 %3624
  %3626 = vrot.lane.b32.xlu0 %v3575, 8
  %v3627 = vpop.permute.xlu0 %3626
  %3628 = vrot.lane.b32.xlu0 %v3576, 8
  %v3629 = vpop.permute.xlu0 %3628
  %3630 = vrot.lane.b32.xlu0 %v3577, 8
  %v3631 = vpop.permute.xlu0 %3630
  %3632 = vrot.lane.b32.xlu0 %v3578, 8
  %v3633 = vpop.permute.xlu0 %3632
  %3634 = vrot.lane.b32.xlu0 %v3579, 8
  %v3635 = vpop.permute.xlu0 %3634
  %3636 = vrot.lane.b32.xlu0 %v3580, 8
  %v3637 = vpop.permute.xlu0 %3636
  %3638 = vrot.lane.b32.xlu0 %v3581, 8
  %v3639 = vpop.permute.xlu0 %3638
  %3640 = vrot.lane.b32.xlu0 %v3582, 8
  %v3641 = vpop.permute.xlu0 %3640
  %3642 = vrot.lane.b32.xlu0 %v3583, 8
  %v3643 = vpop.permute.xlu0 %3642
  %3644 = vrot.lane.b32.xlu0 %v3584, 8
  %v3645 = vpop.permute.xlu0 %3644
  %3646 = vrot.lane.b32.xlu0 %v3585, 8
  %v3647 = vpop.permute.xlu0 %3646
  %3648 = vrot.lane.b32.xlu0 %v3586, 8
  %v3649 = vpop.permute.xlu0 %3648
  %3650 = vrot.lane.b32.xlu0 %v3587, 8
  %v3651 = vpop.permute.xlu0 %3650
  %v3652 = vunpack.c.l.b16 %v2353
  %v3653 = vunpack.c.l.b16 %v2363
  %v3654 = vunpack.c.l.b16 %v2377
  %v3655 = vunpack.c.l.b16 %v2387
  %v3656 = vunpack.c.l.b16 %v2401
  %v3657 = vunpack.c.l.b16 %v2411
  %v3658 = vunpack.c.l.b16 %v2425
  %v3659 = vunpack.c.l.b16 %v2435
  %v3660 = vunpack.c.l.b16 %v2449
  %v3661 = vunpack.c.l.b16 %v2459
  %v3662 = vunpack.c.l.b16 %v2473
  %v3663 = vunpack.c.l.b16 %v2483
  %v3664 = vunpack.c.l.b16 %v2497
  %v3665 = vunpack.c.l.b16 %v2507
  %v3666 = vunpack.c.l.b16 %v2521
  %v3667 = vunpack.c.l.b16 %v2531
  %v3668 = vunpack.c.l.b16 %v2545
  %v3669 = vunpack.c.l.b16 %v2555
  %v3670 = vunpack.c.l.b16 %v2569
  %v3671 = vunpack.c.l.b16 %v2579
  %v3672 = vunpack.c.l.b16 %v2593
  %v3673 = vunpack.c.l.b16 %v2603
  %v3674 = vunpack.c.l.b16 %v2617
  %v3675 = vunpack.c.l.b16 %v2627
  %v3676 = vunpack.c.l.b16 %v2641
  %v3677 = vunpack.c.l.b16 %v2651
  %v3678 = vunpack.c.l.b16 %v2665
  %v3679 = vunpack.c.l.b16 %v2675
  %v3680 = vunpack.c.l.b16 %v2689
  %v3681 = vunpack.c.l.b16 %v2699
  %v3682 = vunpack.c.l.b16 %v2713
  %v3683 = vunpack.c.l.b16 %v2723
  %v3684 = vunpack.c.l.b16 %v2737
  %v3685 = vunpack.c.l.b16 %v2747
  %v3686 = vunpack.c.l.b16 %v2761
  %v3687 = vunpack.c.l.b16 %v2771
  %v3688 = vunpack.c.l.b16 %v2785
  %v3689 = vunpack.c.l.b16 %v2795
  %v3690 = vunpack.c.l.b16 %v2809
  %v3691 = vunpack.c.l.b16 %v2819
  %v3692 = vunpack.c.l.b16 %v2833
  %v3693 = vunpack.c.l.b16 %v2843
  %v3694 = vunpack.c.l.b16 %v2857
  %v3695 = vunpack.c.l.b16 %v2867
  %v3696 = vunpack.c.l.b16 %v2881
  %v3697 = vunpack.c.l.b16 %v2891
  %v3698 = vunpack.c.l.b16 %v2905
  %v3699 = vunpack.c.l.b16 %v2915
  %v3700 = vunpack.c.l.b16 %v2929
  %v3701 = vunpack.c.l.b16 %v2939
  %v3702 = vunpack.c.l.b16 %v2953
  %v3703 = vunpack.c.l.b16 %v2963
  %v3704 = vunpack.c.l.b16 %v2977
  %v3705 = vunpack.c.l.b16 %v2987
  %v3706 = vunpack.c.l.b16 %v3001
  %v3707 = vunpack.c.l.b16 %v3011
  %v3708 = vunpack.c.l.b16 %v3025
  %v3709 = vunpack.c.l.b16 %v3035
  %v3710 = vunpack.c.l.b16 %v3049
  %v3711 = vunpack.c.l.b16 %v3059
  %v3712 = vunpack.c.l.b16 %v3073
  %v3713 = vunpack.c.l.b16 %v3083
  %v3714 = vunpack.c.l.b16 %v3097
  %v3715 = vunpack.c.l.b16 %v3107
  %v3716 = vpack.c.b16 %v3653, %v3652
  %v3717 = vpack.c.b16 %v3655, %v3654
  %v3718 = vpack.c.b16 %v3657, %v3656
  %v3719 = vpack.c.b16 %v3659, %v3658
  %v3720 = vpack.c.b16 %v3661, %v3660
  %v3721 = vpack.c.b16 %v3663, %v3662
  %v3722 = vpack.c.b16 %v3665, %v3664
  %v3723 = vpack.c.b16 %v3667, %v3666
  %v3724 = vpack.c.b16 %v3669, %v3668
  %v3725 = vpack.c.b16 %v3671, %v3670
  %v3726 = vpack.c.b16 %v3673, %v3672
  %v3727 = vpack.c.b16 %v3675, %v3674
  %v3728 = vpack.c.b16 %v3677, %v3676
  %v3729 = vpack.c.b16 %v3679, %v3678
  %v3730 = vpack.c.b16 %v3681, %v3680
  %v3731 = vpack.c.b16 %v3683, %v3682
  %v3732 = vpack.c.b16 %v3685, %v3684
  %v3733 = vpack.c.b16 %v3687, %v3686
  %v3734 = vpack.c.b16 %v3689, %v3688
  %v3735 = vpack.c.b16 %v3691, %v3690
  %v3736 = vpack.c.b16 %v3693, %v3692
  %v3737 = vpack.c.b16 %v3695, %v3694
  %v3738 = vpack.c.b16 %v3697, %v3696
  %v3739 = vpack.c.b16 %v3699, %v3698
  %v3740 = vpack.c.b16 %v3701, %v3700
  %v3741 = vpack.c.b16 %v3703, %v3702
  %v3742 = vpack.c.b16 %v3705, %v3704
  %v3743 = vpack.c.b16 %v3707, %v3706
  %v3744 = vpack.c.b16 %v3709, %v3708
  %v3745 = vpack.c.b16 %v3711, %v3710
  %v3746 = vpack.c.b16 %v3713, %v3712
  %v3747 = vpack.c.b16 %v3715, %v3714
  %3748 = vrot.lane.b32.xlu0 %v3716, 12
  %v3749 = vpop.permute.xlu0 %3748
  %3750 = vrot.lane.b32.xlu0 %v3717, 12
  %v3751 = vpop.permute.xlu0 %3750
  %3752 = vrot.lane.b32.xlu0 %v3718, 12
  %v3753 = vpop.permute.xlu0 %3752
  %3754 = vrot.lane.b32.xlu0 %v3719, 12
  %v3755 = vpop.permute.xlu0 %3754
  %3756 = vrot.lane.b32.xlu0 %v3720, 12
  %v3757 = vpop.permute.xlu0 %3756
  %3758 = vrot.lane.b32.xlu0 %v3721, 12
  %v3759 = vpop.permute.xlu0 %3758
  %3760 = vrot.lane.b32.xlu0 %v3722, 12
  %v3761 = vpop.permute.xlu0 %3760
  %3762 = vrot.lane.b32.xlu0 %v3723, 12
  %v3763 = vpop.permute.xlu0 %3762
  %3764 = vrot.lane.b32.xlu0 %v3724, 12
  %v3765 = vpop.permute.xlu0 %3764
  %3766 = vrot.lane.b32.xlu0 %v3725, 12
  %v3767 = vpop.permute.xlu0 %3766
  %3768 = vrot.lane.b32.xlu0 %v3726, 12
  %v3769 = vpop.permute.xlu0 %3768
  %3770 = vrot.lane.b32.xlu0 %v3727, 12
  %v3771 = vpop.permute.xlu0 %3770
  %3772 = vrot.lane.b32.xlu0 %v3728, 12
  %v3773 = vpop.permute.xlu0 %3772
  %3774 = vrot.lane.b32.xlu0 %v3729, 12
  %v3775 = vpop.permute.xlu0 %3774
  %3776 = vrot.lane.b32.xlu0 %v3730, 12
  %v3777 = vpop.permute.xlu0 %3776
  %3778 = vrot.lane.b32.xlu0 %v3731, 12
  %v3779 = vpop.permute.xlu0 %3778
  %3780 = vrot.lane.b32.xlu0 %v3732, 12
  %v3781 = vpop.permute.xlu0 %3780
  %3782 = vrot.lane.b32.xlu0 %v3733, 12
  %v3783 = vpop.permute.xlu0 %3782
  %3784 = vrot.lane.b32.xlu0 %v3734, 12
  %v3785 = vpop.permute.xlu0 %3784
  %3786 = vrot.lane.b32.xlu0 %v3735, 12
  %v3787 = vpop.permute.xlu0 %3786
  %3788 = vrot.lane.b32.xlu0 %v3736, 12
  %v3789 = vpop.permute.xlu0 %3788
  %3790 = vrot.lane.b32.xlu0 %v3737, 12
  %v3791 = vpop.permute.xlu0 %3790
  %3792 = vrot.lane.b32.xlu0 %v3738, 12
  %v3793 = vpop.permute.xlu0 %3792
  %3794 = vrot.lane.b32.xlu0 %v3739, 12
  %v3795 = vpop.permute.xlu0 %3794
  %3796 = vrot.lane.b32.xlu0 %v3740, 12
  %v3797 = vpop.permute.xlu0 %3796
  %3798 = vrot.lane.b32.xlu0 %v3741, 12
  %v3799 = vpop.permute.xlu0 %3798
  %3800 = vrot.lane.b32.xlu0 %v3742, 12
  %v3801 = vpop.permute.xlu0 %3800
  %3802 = vrot.lane.b32.xlu0 %v3743, 12
  %v3803 = vpop.permute.xlu0 %3802
  %3804 = vrot.lane.b32.xlu0 %v3744, 12
  %v3805 = vpop.permute.xlu0 %3804
  %3806 = vrot.lane.b32.xlu0 %v3745, 12
  %v3807 = vpop.permute.xlu0 %3806
  %3808 = vrot.lane.b32.xlu0 %v3746, 12
  %v3809 = vpop.permute.xlu0 %3808
  %3810 = vrot.lane.b32.xlu0 %v3747, 12
  %v3811 = vpop.permute.xlu0 %3810
  %vm3812 = vcmask 31744
  %v3815 = vsel %vm3812, %v3236, %v3365
  %v3818 = vsel %vm3812, %v3237, %v3367
  %v3821 = vsel %vm3812, %v3238, %v3369
  %v3824 = vsel %vm3812, %v3239, %v3371
  %v3827 = vsel %vm3812, %v3240, %v3373
  %v3830 = vsel %vm3812, %v3241, %v3375
  %v3833 = vsel %vm3812, %v3242, %v3377
  %v3836 = vsel %vm3812, %v3243, %v3379
  %v3839 = vsel %vm3812, %v3244, %v3381
  %v3842 = vsel %vm3812, %v3245, %v3383
  %v3845 = vsel %vm3812, %v3246, %v3385
  %v3848 = vsel %vm3812, %v3247, %v3387
  %v3851 = vsel %vm3812, %v3248, %v3389
  %v3854 = vsel %vm3812, %v3249, %v3391
  %v3857 = vsel %vm3812, %v3250, %v3393
  %v3860 = vsel %vm3812, %v3251, %v3395
  %v3863 = vsel %vm3812, %v3252, %v3397
  %v3866 = vsel %vm3812, %v3253, %v3399
  %v3869 = vsel %vm3812, %v3254, %v3401
  %v3872 = vsel %vm3812, %v3255, %v3403
  %v3875 = vsel %vm3812, %v3256, %v3405
  %v3878 = vsel %vm3812, %v3257, %v3407
  %v3881 = vsel %vm3812, %v3258, %v3409
  %v3884 = vsel %vm3812, %v3259, %v3411
  %v3887 = vsel %vm3812, %v3260, %v3413
  %v3890 = vsel %vm3812, %v3261, %v3415
  %v3893 = vsel %vm3812, %v3262, %v3417
  %v3896 = vsel %vm3812, %v3263, %v3419
  %v3899 = vsel %vm3812, %v3264, %v3421
  %v3902 = vsel %vm3812, %v3265, %v3423
  %v3905 = vsel %vm3812, %v3266, %v3425
  %v3908 = vsel %vm3812, %v3267, %v3427
  %vm3909 = vcmask 64512
  %v3911 = vsel %vm3909, %v3815, %v3589
  %v3913 = vsel %vm3909, %v3818, %v3591
  %v3915 = vsel %vm3909, %v3821, %v3593
  %v3917 = vsel %vm3909, %v3824, %v3595
  %v3919 = vsel %vm3909, %v3827, %v3597
  %v3921 = vsel %vm3909, %v3830, %v3599
  %v3923 = vsel %vm3909, %v3833, %v3601
  %v3925 = vsel %vm3909, %v3836, %v3603
  %v3927 = vsel %vm3909, %v3839, %v3605
  %v3929 = vsel %vm3909, %v3842, %v3607
  %v3931 = vsel %vm3909, %v3845, %v3609
  %v3933 = vsel %vm3909, %v3848, %v3611
  %v3935 = vsel %vm3909, %v3851, %v3613
  %v3937 = vsel %vm3909, %v3854, %v3615
  %v3939 = vsel %vm3909, %v3857, %v3617
  %v3941 = vsel %vm3909, %v3860, %v3619
  %v3943 = vsel %vm3909, %v3863, %v3621
  %v3945 = vsel %vm3909, %v3866, %v3623
  %v3947 = vsel %vm3909, %v3869, %v3625
  %v3949 = vsel %vm3909, %v3872, %v3627
  %v3951 = vsel %vm3909, %v3875, %v3629
  %v3953 = vsel %vm3909, %v3878, %v3631
  %v3955 = vsel %vm3909, %v3881, %v3633
  %v3957 = vsel %vm3909, %v3884, %v3635
  %v3959 = vsel %vm3909, %v3887, %v3637
  %v3961 = vsel %vm3909, %v3890, %v3639
  %v3963 = vsel %vm3909, %v3893, %v3641
  %v3965 = vsel %vm3909, %v3896, %v3643
  %v3967 = vsel %vm3909, %v3899, %v3645
  %v3969 = vsel %vm3909, %v3902, %v3647
  %v3971 = vsel %vm3909, %v3905, %v3649
  %v3973 = vsel %vm3909, %v3908, %v3651
  %vm3974 = vcmask 97280
  %v3976 = vsel %vm3974, %v3911, %v3749
  %v3978 = vsel %vm3974, %v3913, %v3751
  %v3980 = vsel %vm3974, %v3915, %v3753
  %v3982 = vsel %vm3974, %v3917, %v3755
  %v3984 = vsel %vm3974, %v3919, %v3757
  %v3986 = vsel %vm3974, %v3921, %v3759
  %v3988 = vsel %vm3974, %v3923, %v3761
  %v3990 = vsel %vm3974, %v3925, %v3763
  %v3992 = vsel %vm3974, %v3927, %v3765
  %v3994 = vsel %vm3974, %v3929, %v3767
  %v3996 = vsel %vm3974, %v3931, %v3769
  %v3998 = vsel %vm3974, %v3933, %v3771
  %v4000 = vsel %vm3974, %v3935, %v3773
  %v4002 = vsel %vm3974, %v3937, %v3775
  %v4004 = vsel %vm3974, %v3939, %v3777
  %v4006 = vsel %vm3974, %v3941, %v3779
  %v4008 = vsel %vm3974, %v3943, %v3781
  %v4010 = vsel %vm3974, %v3945, %v3783
  %v4012 = vsel %vm3974, %v3947, %v3785
  %v4014 = vsel %vm3974, %v3949, %v3787
  %v4016 = vsel %vm3974, %v3951, %v3789
  %v4018 = vsel %vm3974, %v3953, %v3791
  %v4020 = vsel %vm3974, %v3955, %v3793
  %v4022 = vsel %vm3974, %v3957, %v3795
  %v4024 = vsel %vm3974, %v3959, %v3797
  %v4026 = vsel %vm3974, %v3961, %v3799
  %v4028 = vsel %vm3974, %v3963, %v3801
  %v4030 = vsel %vm3974, %v3965, %v3803
  %v4032 = vsel %vm3974, %v3967, %v3805
  %v4034 = vsel %vm3974, %v3969, %v3807
  %v4036 = vsel %vm3974, %v3971, %v3809
  %v4038 = vsel %vm3974, %v3973, %v3811
  %v4039 = vld [vmem:[%s1] sm:$0xf]
  %v4040 = vld [vmem:[%s1 + $0x4] sm:$0xf]
  %v4042 = vlaneseq
  %v4043 = vshrl.u32 %v4042, 7
  %v4044 = vsub.s32 0, %v4043
  %v4045 = vrot.slane %v1376, %v4044
  %v4049 = vunpack.c.l.b16 %v4039
  %v4050 = vunpack.c.l.b16 %v4040
  %v4051 = vpack.c.b16 %v4050, %v4049
  %vm4053 = vcmask 130048
  %v4054 = vsel %vm4053, %v3976, 0
  %v4056 = vsel %vm4053, %v3978, 0
  %v4058 = vsel %vm4053, %v3980, 0
  %v4060 = vsel %vm4053, %v3982, 0
  %v4062 = vsel %vm4053, %v3984, 0
  %v4064 = vsel %vm4053, %v3986, 0
  %v4066 = vsel %vm4053, %v3988, 0
  %v4068 = vsel %vm4053, %v3990, 0
  %v4070 = vsel %vm4053, %v3992, 0
  %v4072 = vsel %vm4053, %v3994, 0
  %v4074 = vsel %vm4053, %v3996, 0
  %v4076 = vsel %vm4053, %v3998, 0
  %v4078 = vsel %vm4053, %v4000, 0
  %v4080 = vsel %vm4053, %v4002, 0
  %v4082 = vsel %vm4053, %v4004, 0
  %v4084 = vsel %vm4053, %v4006, 0
  %v4086 = vsel %vm4053, %v4008, 0
  %v4088 = vsel %vm4053, %v4010, 0
  %v4090 = vsel %vm4053, %v4012, 0
  %v4092 = vsel %vm4053, %v4014, 0
  %v4094 = vsel %vm4053, %v4016, 0
  %v4096 = vsel %vm4053, %v4018, 0
  %v4098 = vsel %vm4053, %v4020, 0
  %v4100 = vsel %vm4053, %v4022, 0
  %v4102 = vsel %vm4053, %v4024, 0
  %v4104 = vsel %vm4053, %v4026, 0
  %v4106 = vsel %vm4053, %v4028, 0
  %v4108 = vsel %vm4053, %v4030, 0
  %v4110 = vsel %vm4053, %v4032, 0
  %v4112 = vsel %vm4053, %v4034, 0
  %v4114 = vsel %vm4053, %v4036, 0
  %v4116 = vsel %vm4053, %v4038, 0
  %4118 = vmatprep.subr.bf16.mxu0 0
  %4119 = vmatpush1.bf16.msra.mxu0 %v4051
  %4120 = vmatprep.subr.bf16.mxu0 0
  %4121 = vmatpush1.bf16.msra.mxu0 0
  %4122 = vmatprep.subr.bf16.mxu0 0
  %4123 = vmatpush1.bf16.msra.mxu0 0
  %4124 = vmatprep.subr.bf16.mxu0 0
  %4125 = vmatpush1.bf16.msra.mxu0 0
  %4126 = vmatprep.subr.bf16.mxu0 0
  %4127 = vmatpush1.bf16.msra.mxu0 0
  %4128 = vmatprep.subr.bf16.mxu0 0
  %4129 = vmatpush1.bf16.msra.mxu0 0
  %4130 = vmatprep.subr.bf16.mxu0 0
  %4131 = vmatpush1.bf16.msra.mxu0 0
  %4132 = vmatprep.subr.bf16.mxu0 0
  %4133 = vmatpush1.bf16.msra.mxu0 0
  %4134 = vmatprep.subr.bf16.mxu0 0
  %4135 = vmatpush1.bf16.msra.mxu0 0
  %4136 = vmatprep.subr.bf16.mxu0 0
  %4137 = vmatpush1.bf16.msra.mxu0 0
  %4138 = vmatprep.subr.bf16.mxu0 0
  %4139 = vmatpush1.bf16.msra.mxu0 0
  %4140 = vmatprep.subr.bf16.mxu0 0
  %4141 = vmatpush1.bf16.msra.mxu0 0
  %4142 = vmatprep.subr.bf16.mxu0 0
  %4143 = vmatpush1.bf16.msra.mxu0 0
  %4144 = vmatprep.subr.bf16.mxu0 0
  %4145 = vmatpush1.bf16.msra.mxu0 0
  %4146 = vmatprep.subr.bf16.mxu0 0
  %4147 = vmatpush1.bf16.msra.mxu0 0
  %4148 = vmatprep.subr.bf16.mxu0 0
  %4149 = vmatpush1.bf16.msra.mxu0 0
  %4150 = vmatprep.mubr.bf16.mxu0 0
  %4151 = vmatmul.mubr.bf16.gmra.mrb[0].mxu0 %v4054
  %v4152 = vpop.f32.mrb[0].mxu0
  %v4153 = vadd.f32 %v4045, %v4152
  %v4154 = vpop.f32.mrb[0].mxu0
  %v4155 = vpop.f32.mrb[0].mxu0
  %v4156 = vadd.f32 %v4045, %v4155
  %v4157 = vpop.f32.mrb[0].mxu0
  %4158 = vmatprep.mubr.bf16.mxu0 0
  %4159 = vmatmul.mubr.bf16.gmra.mrb[0].mxu0 %v4056
  %v4160 = vpop.f32.mrb[0].mxu0
  %v4161 = vadd.f32 %v4045, %v4160
  %v4162 = vpop.f32.mrb[0].mxu0
  %v4163 = vpop.f32.mrb[0].mxu0
  %v4164 = vadd.f32 %v4045, %v4163
  %v4165 = vpop.f32.mrb[0].mxu0
  %4166 = vmatprep.mubr.bf16.mxu0 0
  %4167 = vmatmul.mubr.bf16.gmra.mrb[0].mxu0 %v4058
  %v4168 = vpop.f32.mrb[0].mxu0
  %v4169 = vadd.f32 %v4045, %v4168
  %v4170 = vpop.f32.mrb[0].mxu0
  %v4171 = vpop.f32.mrb[0].mxu0
  %v4172 = vadd.f32 %v4045, %v4171
  %v4173 = vpop.f32.mrb[0].mxu0
  %4174 = vmatprep.mubr.bf16.mxu0 0
  %4175 = vmatmul.mubr.bf16.gmra.mrb[0].mxu0 %v4060
  %v4176 = vpop.f32.mrb[0].mxu0
  %v4177 = vadd.f32 %v4045, %v4176
  %v4178 = vpop.f32.mrb[0].mxu0
  %v4179 = vpop.f32.mrb[0].mxu0
  %v4180 = vadd.f32 %v4045, %v4179
  %v4181 = vpop.f32.mrb[0].mxu0
  %4182 = vmatprep.mubr.bf16.mxu0 0
  %4183 = vmatmul.mubr.bf16.gmra.mrb[0].mxu0 %v4062
  %v4184 = vpop.f32.mrb[0].mxu0
  %v4185 = vadd.f32 %v4045, %v4184
  %v4186 = vpop.f32.mrb[0].mxu0
  %v4187 = vpop.f32.mrb[0].mxu0
  %v4188 = vadd.f32 %v4045, %v4187
  %v4189 = vpop.f32.mrb[0].mxu0
  %4190 = vmatprep.mubr.bf16.mxu0 0
  %4191 = vmatmul.mubr.bf16.gmra.mrb[0].mxu0 %v4064
  %v4192 = vpop.f32.mrb[0].mxu0
  %v4193 = vadd.f32 %v4045, %v4192
  %v4194 = vpop.f32.mrb[0].mxu0
  %v4195 = vpop.f32.mrb[0].mxu0
  %v4196 = vadd.f32 %v4045, %v4195
  %v4197 = vpop.f32.mrb[0].mxu0
  %4198 = vmatprep.mubr.bf16.mxu0 0
  %4199 = vmatmul.mubr.bf16.gmra.mrb[0].mxu0 %v4066
  %v4200 = vpop.f32.mrb[0].mxu0
  %v4201 = vadd.f32 %v4045, %v4200
  %v4202 = vpop.f32.mrb[0].mxu0
  %v4203 = vpop.f32.mrb[0].mxu0
  %v4204 = vadd.f32 %v4045, %v4203
  %v4205 = vpop.f32.mrb[0].mxu0
  %4206 = vmatprep.mubr.bf16.mxu0 0
  %4207 = vmatmul.mubr.bf16.gmra.mrb[0].mxu0 %v4068
  %v4208 = vpop.f32.mrb[0].mxu0
  %v4209 = vadd.f32 %v4045, %v4208
  %v4210 = vpop.f32.mrb[0].mxu0
  %v4211 = vpop.f32.mrb[0].mxu0
  %v4212 = vadd.f32 %v4045, %v4211
  %v4213 = vpop.f32.mrb[0].mxu0
  %4214 = vmatprep.mubr.bf16.mxu0 0
  %4215 = vmatmul.mubr.bf16.gmra.mrb[0].mxu0 %v4070
  %v4216 = vpop.f32.mrb[0].mxu0
  %v4217 = vadd.f32 %v4045, %v4216
  %v4218 = vpop.f32.mrb[0].mxu0
  %v4219 = vpop.f32.mrb[0].mxu0
  %v4220 = vadd.f32 %v4045, %v4219
  %v4221 = vpop.f32.mrb[0].mxu0
  %4222 = vmatprep.mubr.bf16.mxu0 0
  %4223 = vmatmul.mubr.bf16.gmra.mrb[0].mxu0 %v4072
  %v4224 = vpop.f32.mrb[0].mxu0
  %v4225 = vadd.f32 %v4045, %v4224
  %v4226 = vpop.f32.mrb[0].mxu0
  %v4227 = vpop.f32.mrb[0].mxu0
  %v4228 = vadd.f32 %v4045, %v4227
  %v4229 = vpop.f32.mrb[0].mxu0
  %4230 = vmatprep.mubr.bf16.mxu0 0
  %4231 = vmatmul.mubr.bf16.gmra.mrb[0].mxu0 %v4074
  %v4232 = vpop.f32.mrb[0].mxu0
  %v4233 = vadd.f32 %v4045, %v4232
  %v4234 = vpop.f32.mrb[0].mxu0
  %v4235 = vpop.f32.mrb[0].mxu0
  %v4236 = vadd.f32 %v4045, %v4235
  %v4237 = vpop.f32.mrb[0].mxu0
  %4238 = vmatprep.mubr.bf16.mxu0 0
  %4239 = vmatmul.mubr.bf16.gmra.mrb[0].mxu0 %v4076
  %v4240 = vpop.f32.mrb[0].mxu0
  %v4241 = vadd.f32 %v4045, %v4240
  %v4242 = vpop.f32.mrb[0].mxu0
  %v4243 = vpop.f32.mrb[0].mxu0
  %v4244 = vadd.f32 %v4045, %v4243
  %v4245 = vpop.f32.mrb[0].mxu0
  %4246 = vmatprep.mubr.bf16.mxu0 0
  %4247 = vmatmul.mubr.bf16.gmra.mrb[0].mxu0 %v4078
  %v4248 = vpop.f32.mrb[0].mxu0
  %v4249 = vadd.f32 %v4045, %v4248
  %v4250 = vpop.f32.mrb[0].mxu0
  %v4251 = vpop.f32.mrb[0].mxu0
  %v4252 = vadd.f32 %v4045, %v4251
  %v4253 = vpop.f32.mrb[0].mxu0
  %4254 = vmatprep.mubr.bf16.mxu0 0
  %4255 = vmatmul.mubr.bf16.gmra.mrb[0].mxu0 %v4080
  %v4256 = vpop.f32.mrb[0].mxu0
  %v4257 = vadd.f32 %v4045, %v4256
  %v4258 = vpop.f32.mrb[0].mxu0
  %v4259 = vpop.f32.mrb[0].mxu0
  %v4260 = vadd.f32 %v4045, %v4259
  %v4261 = vpop.f32.mrb[0].mxu0
  %4262 = vmatprep.mubr.bf16.mxu0 0
  %4263 = vmatmul.mubr.bf16.gmra.mrb[0].mxu0 %v4082
  %v4264 = vpop.f32.mrb[0].mxu0
  %v4265 = vadd.f32 %v4045, %v4264
  %v4266 = vpop.f32.mrb[0].mxu0
  %v4267 = vpop.f32.mrb[0].mxu0
  %v4268 = vadd.f32 %v4045, %v4267
  %v4269 = vpop.f32.mrb[0].mxu0
  %4270 = vmatprep.mubr.bf16.mxu0 0
  %4271 = vmatmul.mubr.bf16.gmra.mrb[0].mxu0 %v4084
  %v4272 = vpop.f32.mrb[0].mxu0
  %v4273 = vadd.f32 %v4045, %v4272
  %v4274 = vpop.f32.mrb[0].mxu0
  %v4275 = vpop.f32.mrb[0].mxu0
  %v4276 = vadd.f32 %v4045, %v4275
  %v4277 = vpop.f32.mrb[0].mxu0
  %4278 = vmatprep.mubr.bf16.mxu0 0
  %4279 = vmatmul.mubr.bf16.gmra.mrb[0].mxu0 %v4086
  %v4280 = vpop.f32.mrb[0].mxu0
  %v4281 = vadd.f32 %v4045, %v4280
  %v4282 = vpop.f32.mrb[0].mxu0
  %v4283 = vpop.f32.mrb[0].mxu0
  %v4284 = vadd.f32 %v4045, %v4283
  %v4285 = vpop.f32.mrb[0].mxu0
  %4286 = vmatprep.mubr.bf16.mxu0 0
  %4287 = vmatmul.mubr.bf16.gmra.mrb[0].mxu0 %v4088
  %v4288 = vpop.f32.mrb[0].mxu0
  %v4289 = vadd.f32 %v4045, %v4288
  %v4290 = vpop.f32.mrb[0].mxu0
  %v4291 = vpop.f32.mrb[0].mxu0
  %v4292 = vadd.f32 %v4045, %v4291
  %v4293 = vpop.f32.mrb[0].mxu0
  %4294 = vmatprep.mubr.bf16.mxu0 0
  %4295 = vmatmul.mubr.bf16.gmra.mrb[0].mxu0 %v4090
  %v4296 = vpop.f32.mrb[0].mxu0
  %v4297 = vadd.f32 %v4045, %v4296
  %v4298 = vpop.f32.mrb[0].mxu0
  %v4299 = vpop.f32.mrb[0].mxu0
  %v4300 = vadd.f32 %v4045, %v4299
  %v4301 = vpop.f32.mrb[0].mxu0
  %4302 = vmatprep.mubr.bf16.mxu0 0
  %4303 = vmatmul.mubr.bf16.gmra.mrb[0].mxu0 %v4092
  %v4304 = vpop.f32.mrb[0].mxu0
  %v4305 = vadd.f32 %v4045, %v4304
  %v4306 = vpop.f32.mrb[0].mxu0
  %v4307 = vpop.f32.mrb[0].mxu0
  %v4308 = vadd.f32 %v4045, %v4307
  %v4309 = vpop.f32.mrb[0].mxu0
  %4310 = vmatprep.mubr.bf16.mxu0 0
  %4311 = vmatmul.mubr.bf16.gmra.mrb[0].mxu0 %v4094
  %v4312 = vpop.f32.mrb[0].mxu0
  %v4313 = vadd.f32 %v4045, %v4312
  %v4314 = vpop.f32.mrb[0].mxu0
  %v4315 = vpop.f32.mrb[0].mxu0
  %v4316 = vadd.f32 %v4045, %v4315
  %v4317 = vpop.f32.mrb[0].mxu0
  %4318 = vmatprep.mubr.bf16.mxu0 0
  %4319 = vmatmul.mubr.bf16.gmra.mrb[0].mxu0 %v4096
  %v4320 = vpop.f32.mrb[0].mxu0
  %v4321 = vadd.f32 %v4045, %v4320
  %v4322 = vpop.f32.mrb[0].mxu0
  %v4323 = vpop.f32.mrb[0].mxu0
  %v4324 = vadd.f32 %v4045, %v4323
  %v4325 = vpop.f32.mrb[0].mxu0
  %4326 = vmatprep.mubr.bf16.mxu0 0
  %4327 = vmatmul.mubr.bf16.gmra.mrb[0].mxu0 %v4098
  %v4328 = vpop.f32.mrb[0].mxu0
  %v4329 = vadd.f32 %v4045, %v4328
  %v4330 = vpop.f32.mrb[0].mxu0
  %v4331 = vpop.f32.mrb[0].mxu0
  %v4332 = vadd.f32 %v4045, %v4331
  %v4333 = vpop.f32.mrb[0].mxu0
  %4334 = vmatprep.mubr.bf16.mxu0 0
  %4335 = vmatmul.mubr.bf16.gmra.mrb[0].mxu0 %v4100
  %v4336 = vpop.f32.mrb[0].mxu0
  %v4337 = vadd.f32 %v4045, %v4336
  %v4338 = vpop.f32.mrb[0].mxu0
  %v4339 = vpop.f32.mrb[0].mxu0
  %v4340 = vadd.f32 %v4045, %v4339
  %v4341 = vpop.f32.mrb[0].mxu0
  %4342 = vmatprep.mubr.bf16.mxu0 0
  %4343 = vmatmul.mubr.bf16.gmra.mrb[0].mxu0 %v4102
  %v4344 = vpop.f32.mrb[0].mxu0
  %v4345 = vadd.f32 %v4045, %v4344
  %v4346 = vpop.f32.mrb[0].mxu0
  %v4347 = vpop.f32.mrb[0].mxu0
  %v4348 = vadd.f32 %v4045, %v4347
  %v4349 = vpop.f32.mrb[0].mxu0
  %4350 = vmatprep.mubr.bf16.mxu0 0
  %4351 = vmatmul.mubr.bf16.gmra.mrb[0].mxu0 %v4104
  %v4352 = vpop.f32.mrb[0].mxu0
  %v4353 = vadd.f32 %v4045, %v4352
  %v4354 = vpop.f32.mrb[0].mxu0
  %v4355 = vpop.f32.mrb[0].mxu0
  %v4356 = vadd.f32 %v4045, %v4355
  %v4357 = vpop.f32.mrb[0].mxu0
  %4358 = vmatprep.mubr.bf16.mxu0 0
  %4359 = vmatmul.mubr.bf16.gmra.mrb[0].mxu0 %v4106
  %v4360 = vpop.f32.mrb[0].mxu0
  %v4361 = vadd.f32 %v4045, %v4360
  %v4362 = vpop.f32.mrb[0].mxu0
  %v4363 = vpop.f32.mrb[0].mxu0
  %v4364 = vadd.f32 %v4045, %v4363
  %v4365 = vpop.f32.mrb[0].mxu0
  %4366 = vmatprep.mubr.bf16.mxu0 0
  %4367 = vmatmul.mubr.bf16.gmra.mrb[0].mxu0 %v4108
  %v4368 = vpop.f32.mrb[0].mxu0
  %v4369 = vadd.f32 %v4045, %v4368
  %v4370 = vpop.f32.mrb[0].mxu0
  %v4371 = vpop.f32.mrb[0].mxu0
  %v4372 = vadd.f32 %v4045, %v4371
  %v4373 = vpop.f32.mrb[0].mxu0
  %4374 = vmatprep.mubr.bf16.mxu0 0
  %4375 = vmatmul.mubr.bf16.gmra.mrb[0].mxu0 %v4110
  %v4376 = vpop.f32.mrb[0].mxu0
  %v4377 = vadd.f32 %v4045, %v4376
  %v4378 = vpop.f32.mrb[0].mxu0
  %v4379 = vpop.f32.mrb[0].mxu0
  %v4380 = vadd.f32 %v4045, %v4379
  %v4381 = vpop.f32.mrb[0].mxu0
  %4382 = vmatprep.mubr.bf16.mxu0 0
  %4383 = vmatmul.mubr.bf16.gmra.mrb[0].mxu0 %v4112
  %v4384 = vpop.f32.mrb[0].mxu0
  %v4385 = vadd.f32 %v4045, %v4384
  %v4386 = vpop.f32.mrb[0].mxu0
  %v4387 = vpop.f32.mrb[0].mxu0
  %v4388 = vadd.f32 %v4045, %v4387
  %v4389 = vpop.f32.mrb[0].mxu0
  %4390 = vmatprep.mubr.bf16.mxu0 0
  %4391 = vmatmul.mubr.bf16.gmra.mrb[0].mxu0 %v4114
  %v4392 = vpop.f32.mrb[0].mxu0
  %v4393 = vadd.f32 %v4045, %v4392
  %v4394 = vpop.f32.mrb[0].mxu0
  %v4395 = vpop.f32.mrb[0].mxu0
  %v4396 = vadd.f32 %v4045, %v4395
  %v4397 = vpop.f32.mrb[0].mxu0
  %4398 = vmatprep.mubr.bf16.mxu0 0
  %4399 = vmatmul.mubr.bf16.gmra.mrb[0].mxu0 %v4116
  %v4400 = vpop.f32.mrb[0].mxu0
  %v4401 = vadd.f32 %v4045, %v4400
  %v4402 = vpop.f32.mrb[0].mxu0
  %v4403 = vpop.f32.mrb[0].mxu0
  %v4404 = vadd.f32 %v4045, %v4403
  %v4405 = vpop.f32.mrb[0].mxu0
  %4406 = vdwg.mxu0
  %4407 = vst.msk [vmem:[%s3] sm:$0xff] %vm3812, %v4153
  %4408 = vst.msk [vmem:[%s3 + $0x8] sm:$0xff] %vm3812, %v4156
  %4409 = vst.msk [vmem:[%s3 + $0x20] sm:$0xff] %vm3812, %v4161
  %4410 = vst.msk [vmem:[%s3 + $0x28] sm:$0xff] %vm3812, %v4164
  %4411 = vst.msk [vmem:[%s3 + $0x40] sm:$0xff] %vm3812, %v4169
  %4412 = vst.msk [vmem:[%s3 + $0x48] sm:$0xff] %vm3812, %v4172
  %4413 = vst.msk [vmem:[%s3 + $0x60] sm:$0xff] %vm3812, %v4177
  %4414 = vst.msk [vmem:[%s3 + $0x68] sm:$0xff] %vm3812, %v4180
  %4415 = vst.msk [vmem:[%s3 + $0x80] sm:$0xff] %vm3812, %v4185
  %4416 = vst.msk [vmem:[%s3 + $0x88] sm:$0xff] %vm3812, %v4188
  %4417 = vst.msk [vmem:[%s3 + $0xa0] sm:$0xff] %vm3812, %v4193
  %4418 = vst.msk [vmem:[%s3 + $0xa8] sm:$0xff] %vm3812, %v4196
  %4419 = vst.msk [vmem:[%s3 + $0xc0] sm:$0xff] %vm3812, %v4201
  %4420 = vst.msk [vmem:[%s3 + $0xc8] sm:$0xff] %vm3812, %v4204
  %4421 = vst.msk [vmem:[%s3 + $0xe0] sm:$0xff] %vm3812, %v4209
  %4422 = vst.msk [vmem:[%s3 + $0xe8] sm:$0xff] %vm3812, %v4212
  %4423 = vst.msk [vmem:[%s3 + $0x100] sm:$0xff] %vm3812, %v4217
  %4424 = vst.msk [vmem:[%s3 + $0x108] sm:$0xff] %vm3812, %v4220
  %4425 = vst.msk [vmem:[%s3 + $0x120] sm:$0xff] %vm3812, %v4225
  %4426 = vst.msk [vmem:[%s3 + $0x128] sm:$0xff] %vm3812, %v4228
  %4427 = vst.msk [vmem:[%s3 + $0x140] sm:$0xff] %vm3812, %v4233
  %4428 = vst.msk [vmem:[%s3 + $0x148] sm:$0xff] %vm3812, %v4236
  %4429 = vst.msk [vmem:[%s3 + $0x160] sm:$0xff] %vm3812, %v4241
  %4430 = vst.msk [vmem:[%s3 + $0x168] sm:$0xff] %vm3812, %v4244
  %4431 = vst.msk [vmem:[%s3 + $0x180] sm:$0xff] %vm3812, %v4249
  %4432 = vst.msk [vmem:[%s3 + $0x188] sm:$0xff] %vm3812, %v4252
  %4433 = vst.msk [vmem:[%s3 + $0x1a0] sm:$0xff] %vm3812, %v4257
  %4434 = vst.msk [vmem:[%s3 + $0x1a8] sm:$0xff] %vm3812, %v4260
  %4435 = vst.msk [vmem:[%s3 + $0x1c0] sm:$0xff] %vm3812, %v4265
  %4436 = vst.msk [vmem:[%s3 + $0x1c8] sm:$0xff] %vm3812, %v4268
  %4437 = vst.msk [vmem:[%s3 + $0x1e0] sm:$0xff] %vm3812, %v4273
  %4438 = vst.msk [vmem:[%s3 + $0x1e8] sm:$0xff] %vm3812, %v4276
  %4439 = vst.msk [vmem:[%s3 + $0x200] sm:$0xff] %vm3812, %v4281
  %4440 = vst.msk [vmem:[%s3 + $0x208] sm:$0xff] %vm3812, %v4284
  %4441 = vst.msk [vmem:[%s3 + $0x220] sm:$0xff] %vm3812, %v4289
  %4442 = vst.msk [vmem:[%s3 + $0x228] sm:$0xff] %vm3812, %v4292
  %4443 = vst.msk [vmem:[%s3 + $0x240] sm:$0xff] %vm3812, %v4297
  %4444 = vst.msk [vmem:[%s3 + $0x248] sm:$0xff] %vm3812, %v4300
  %4445 = vst.msk [vmem:[%s3 + $0x260] sm:$0xff] %vm3812, %v4305
  %4446 = vst.msk [vmem:[%s3 + $0x268] sm:$0xff] %vm3812, %v4308
  %4447 = vst.msk [vmem:[%s3 + $0x280] sm:$0xff] %vm3812, %v4313
  %4448 = vst.msk [vmem:[%s3 + $0x288] sm:$0xff] %vm3812, %v4316
  %4449 = vst.msk [vmem:[%s3 + $0x2a0] sm:$0xff] %vm3812, %v4321
  %4450 = vst.msk [vmem:[%s3 + $0x2a8] sm:$0xff] %vm3812, %v4324
  %4451 = vst.msk [vmem:[%s3 + $0x2c0] sm:$0xff] %vm3812, %v4329
  %4452 = vst.msk [vmem:[%s3 + $0x2c8] sm:$0xff] %vm3812, %v4332
  %4453 = vst.msk [vmem:[%s3 + $0x2e0] sm:$0xff] %vm3812, %v4337
  %4454 = vst.msk [vmem:[%s3 + $0x2e8] sm:$0xff] %vm3812, %v4340
  %4455 = vst.msk [vmem:[%s3 + $0x300] sm:$0xff] %vm3812, %v4345
  %4456 = vst.msk [vmem:[%s3 + $0x308] sm:$0xff] %vm3812, %v4348
  %4457 = vst.msk [vmem:[%s3 + $0x320] sm:$0xff] %vm3812, %v4353
  %4458 = vst.msk [vmem:[%s3 + $0x328] sm:$0xff] %vm3812, %v4356
  %4459 = vst.msk [vmem:[%s3 + $0x340] sm:$0xff] %vm3812, %v4361
  %4460 = vst.msk [vmem:[%s3 + $0x348] sm:$0xff] %vm3812, %v4364
  %4461 = vst.msk [vmem:[%s3 + $0x360] sm:$0xff] %vm3812, %v4369
  %4462 = vst.msk [vmem:[%s3 + $0x368] sm:$0xff] %vm3812, %v4372
  %4463 = vst.msk [vmem:[%s3 + $0x380] sm:$0xff] %vm3812, %v4377
  %4464 = vst.msk [vmem:[%s3 + $0x388] sm:$0xff] %vm3812, %v4380
  %4465 = vst.msk [vmem:[%s3 + $0x3a0] sm:$0xff] %vm3812, %v4385
  %4466 = vst.msk [vmem:[%s3 + $0x3a8] sm:$0xff] %vm3812, %v4388
  %4467 = vst.msk [vmem:[%s3 + $0x3c0] sm:$0xff] %vm3812, %v4393
  %4468 = vst.msk [vmem:[%s3 + $0x3c8] sm:$0xff] %vm3812, %v4396
  %4469 = vst.msk [vmem:[%s3 + $0x3e0] sm:$0xff] %vm3812, %v4401
  %4470 = vst.msk [vmem:[%s3 + $0x3e8] sm:$0xff] %vm3812, %v4404
  %v4471 = vld [vmem:[#allocation2] sm:$0xf]
  %v4472 = vld [vmem:[#allocation2 + $0x4] sm:$0xf]
  %v4473 = vld [vmem:[#allocation2 + $0x8] sm:$0x1]
  %v4474 = vld [vmem:[#allocation2 + $0xc] sm:$0xf]
  %v4475 = vld [vmem:[#allocation2 + $0x10] sm:$0xf]
  %v4476 = vld [vmem:[#allocation2 + $0x14] sm:$0x1]
  %v4477 = vld [vmem:[#allocation2 + $0x18] sm:$0xf]
  %v4478 = vld [vmem:[#allocation2 + $0x1c] sm:$0xf]
  %v4479 = vld [vmem:[#allocation2 + $0x20] sm:$0x1]
  %v4480 = vld [vmem:[#allocation2 + $0x24] sm:$0xf]
  %v4481 = vld [vmem:[#allocation2 + $0x28] sm:$0xf]
  %v4482 = vld [vmem:[#allocation2 + $0x2c] sm:$0x1]
  %v4483 = vld [vmem:[#allocation2 + $0x30] sm:$0xf]
  %v4484 = vld [vmem:[#allocation2 + $0x34] sm:$0xf]
  %v4485 = vld [vmem:[#allocation2 + $0x38] sm:$0x1]
  %v4486 = vld [vmem:[#allocation2 + $0x3c] sm:$0xf]
  %v4487 = vld [vmem:[#allocation2 + $0x40] sm:$0xf]
  %v4488 = vld [vmem:[#allocation2 + $0x44] sm:$0x1]
  %v4489 = vld [vmem:[#allocation2 + $0x48] sm:$0xf]
  %v4490 = vld [vmem:[#allocation2 + $0x4c] sm:$0xf]
  %v4491 = vld [vmem:[#allocation2 + $0x50] sm:$0x1]
  %v4492 = vld [vmem:[#allocation2 + $0x54] sm:$0xf]
  %v4493 = vld [vmem:[#allocation2 + $0x58] sm:$0xf]
  %v4494 = vld [vmem:[#allocation2 + $0x5c] sm:$0x1]
  %v4495 = vld [vmem:[#allocation2 + $0x60] sm:$0xf]
  %v4496 = vld [vmem:[#allocation2 + $0x64] sm:$0xf]
  %v4497 = vld [vmem:[#allocation2 + $0x68] sm:$0x1]
  %v4498 = vld [vmem:[#allocation2 + $0x6c] sm:$0xf]
  %v4499 = vld [vmem:[#allocation2 + $0x70] sm:$0xf]
  %v4500 = vld [vmem:[#allocation2 + $0x74] sm:$0x1]
  %v4501 = vld [vmem:[#allocation2 + $0x78] sm:$0xf]
  %v4502 = vld [vmem:[#allocation2 + $0x7c] sm:$0xf]
  %v4503 = vld [vmem:[#allocation2 + $0x80] sm:$0x1]
  %v4504 = vld [vmem:[#allocation2 + $0x84] sm:$0xf]
  %v4505 = vld [vmem:[#allocation2 + $0x88] sm:$0xf]
  %v4506 = vld [vmem:[#allocation2 + $0x8c] sm:$0x1]
  %v4507 = vld [vmem:[#allocation2 + $0x90] sm:$0xf]
  %v4508 = vld [vmem:[#allocation2 + $0x94] sm:$0xf]
  %v4509 = vld [vmem:[#allocation2 + $0x98] sm:$0x1]
  %v4510 = vld [vmem:[#allocation2 + $0x9c] sm:$0xf]
  %v4511 = vld [vmem:[#allocation2 + $0xa0] sm:$0xf]
  %v4512 = vld [vmem:[#allocation2 + $0xa4] sm:$0x1]
  %v4513 = vld [vmem:[#allocation2 + $0xa8] sm:$0xf]
  %v4514 = vld [vmem:[#allocation2 + $0xac] sm:$0xf]
  %v4515 = vld [vmem:[#allocation2 + $0xb0] sm:$0x1]
  %v4516 = vld [vmem:[#allocation2 + $0xb4] sm:$0xf]
  %v4517 = vld [vmem:[#allocation2 + $0xb8] sm:$0xf]
  %v4518 = vld [vmem:[#allocation2 + $0xbc] sm:$0x1]
  %v4519 = vld [vmem:[#allocation2 + $0xd8] sm:$0xf]
  %v4520 = vld [vmem:[#allocation2 + $0xdc] sm:$0xf]
  %v4521 = vld [vmem:[#allocation2 + $0xe0] sm:$0x1]
  %v4522 = vld [vmem:[#allocation2 + $0xe4] sm:$0xf]
  %v4523 = vld [vmem:[#allocation2 + $0xe8] sm:$0xf]
  %v4524 = vld [vmem:[#allocation2 + $0xec] sm:$0x1]
  %v4525 = vld [vmem:[#allocation2 + $0xf0] sm:$0xf]
  %v4526 = vld [vmem:[#allocation2 + $0xf4] sm:$0xf]
  %v4527 = vld [vmem:[#allocation2 + $0xf8] sm:$0x1]
  %v4528 = vld [vmem:[#allocation2 + $0xfc] sm:$0xf]
  %v4529 = vld [vmem:[#allocation2 + $0x100] sm:$0xf]
  %v4530 = vld [vmem:[#allocation2 + $0x104] sm:$0x1]
  %v4531 = vld [vmem:[#allocation2 + $0x108] sm:$0xf]
  %v4532 = vld [vmem:[#allocation2 + $0x10c] sm:$0xf]
  %v4533 = vld [vmem:[#allocation2 + $0x110] sm:$0x1]
  %v4534 = vld [vmem:[#allocation2 + $0x114] sm:$0xf]
  %v4535 = vld [vmem:[#allocation2 + $0x118] sm:$0xf]
  %v4536 = vld [vmem:[#allocation2 + $0x11c] sm:$0x1]
  %v4537 = vld [vmem:[#allocation2 + $0x120] sm:$0xf]
  %v4538 = vld [vmem:[#allocation2 + $0x124] sm:$0xf]
  %v4539 = vld [vmem:[#allocation2 + $0x128] sm:$0x1]
  %v4540 = vld [vmem:[#allocation2 + $0x12c] sm:$0xf]
  %v4541 = vld [vmem:[#allocation2 + $0x130] sm:$0xf]
  %v4542 = vld [vmem:[#allocation2 + $0x134] sm:$0x1]
  %v4543 = vld [vmem:[#allocation2 + $0x138] sm:$0xf]
  %v4544 = vld [vmem:[#allocation2 + $0x13c] sm:$0xf]
  %v4545 = vld [vmem:[#allocation2 + $0x140] sm:$0x1]
  %v4546 = vld [vmem:[#allocation2 + $0x144] sm:$0xf]
  %v4547 = vld [vmem:[#allocation2 + $0x148] sm:$0xf]
  %v4548 = vld [vmem:[#allocation2 + $0x14c] sm:$0x1]
  %v4549 = vld [vmem:[#allocation2 + $0x150] sm:$0xf]
  %v4550 = vld [vmem:[#allocation2 + $0x154] sm:$0xf]
  %v4551 = vld [vmem:[#allocation2 + $0x158] sm:$0x1]
  %v4552 = vld [vmem:[#allocation2 + $0x15c] sm:$0xf]
  %v4553 = vld [vmem:[#allocation2 + $0x160] sm:$0xf]
  %v4554 = vld [vmem:[#allocation2 + $0x164] sm:$0x1]
  %v4555 = vld [vmem:[#allocation2 + $0x168] sm:$0xf]
  %v4556 = vld [vmem:[#allocation2 + $0x16c] sm:$0xf]
  %v4557 = vld [vmem:[#allocation2 + $0x170] sm:$0x1]
  %v4558 = vld [vmem:[#allocation2 + $0x174] sm:$0xf]
  %v4559 = vld [vmem:[#allocation2 + $0x178] sm:$0xf]
  %v4560 = vld [vmem:[#allocation2 + $0x17c] sm:$0x1]
  %v4561 = vld [vmem:[#allocation2 + $0x180] sm:$0xf]
  %v4562 = vld [vmem:[#allocation2 + $0x184] sm:$0xf]
  %v4563 = vld [vmem:[#allocation2 + $0x188] sm:$0x1]
  %v4564 = vld [vmem:[#allocation2 + $0x18c] sm:$0xf]
  %v4565 = vld [vmem:[#allocation2 + $0x190] sm:$0xf]
  %v4566 = vld [vmem:[#allocation2 + $0x194] sm:$0x1]
  %v4568 = vshrl.u32 %v4471, 16
  %v4570 = vrot.slane %v4568, 4
  %v4571 = vshll.u32 %v4471, 16
  %v4573 = vrot.slane %v4571, 5
  %v4574 = vor.u32 %v4570, %v4573
  %v4575 = vrot.slane %v4574, 4
  %v4577 = vshll.u32 %v4472, 16
  %v4579 = vrot.slane %v4577, 5
  %v4580 = vsel %vm1475, %v4575, %v4579
  %v4581 = vshrl.u32 %v4472, 16
  %v4583 = vrot.slane %v4581, 4
  %v4584 = vor.u32 %v4583, %v4579
  %v4585 = vrot.slane %v4584, 4
  %v4587 = vshll.u32 %v4473, 16
  %v4589 = vrot.slane %v4587, 5
  %v4590 = vsel %vm1475, %v4585, %v4589
  %v4592 = vshrl.u32 %v4474, 16
  %v4594 = vrot.slane %v4592, 4
  %v4595 = vshll.u32 %v4474, 16
  %v4597 = vrot.slane %v4595, 5
  %v4598 = vor.u32 %v4594, %v4597
  %v4599 = vrot.slane %v4598, 4
  %v4601 = vshll.u32 %v4475, 16
  %v4603 = vrot.slane %v4601, 5
  %v4604 = vsel %vm1475, %v4599, %v4603
  %v4605 = vshrl.u32 %v4475, 16
  %v4607 = vrot.slane %v4605, 4
  %v4608 = vor.u32 %v4607, %v4603
  %v4609 = vrot.slane %v4608, 4
  %v4611 = vshll.u32 %v4476, 16
  %v4613 = vrot.slane %v4611, 5
  %v4614 = vsel %vm1475, %v4609, %v4613
  %v4616 = vshrl.u32 %v4477, 16
  %v4618 = vrot.slane %v4616, 4
  %v4619 = vshll.u32 %v4477, 16
  %v4621 = vrot.slane %v4619, 5
  %v4622 = vor.u32 %v4618, %v4621
  %v4623 = vrot.slane %v4622, 4
  %v4625 = vshll.u32 %v4478, 16
  %v4627 = vrot.slane %v4625, 5
  %v4628 = vsel %vm1475, %v4623, %v4627
  %v4629 = vshrl.u32 %v4478, 16
  %v4631 = vrot.slane %v4629, 4
  %v4632 = vor.u32 %v4631, %v4627
  %v4633 = vrot.slane %v4632, 4
  %v4635 = vshll.u32 %v4479, 16
  %v4637 = vrot.slane %v4635, 5
  %v4638 = vsel %vm1475, %v4633, %v4637
  %v4640 = vshrl.u32 %v4480, 16
  %v4642 = vrot.slane %v4640, 4
  %v4643 = vshll.u32 %v4480, 16
  %v4645 = vrot.slane %v4643, 5
  %v4646 = vor.u32 %v4642, %v4645
  %v4647 = vrot.slane %v4646, 4
  %v4649 = vshll.u32 %v4481, 16
  %v4651 = vrot.slane %v4649, 5
  %v4652 = vsel %vm1475, %v4647, %v4651
  %v4653 = vshrl.u32 %v4481, 16
  %v4655 = vrot.slane %v4653, 4
  %v4656 = vor.u32 %v4655, %v4651
  %v4657 = vrot.slane %v4656, 4
  %v4659 = vshll.u32 %v4482, 16
  %v4661 = vrot.slane %v4659, 5
  %v4662 = vsel %vm1475, %v4657, %v4661
  %v4664 = vshrl.u32 %v4483, 16
  %v4666 = vrot.slane %v4664, 4
  %v4667 = vshll.u32 %v4483, 16
  %v4669 = vrot.slane %v4667, 5
  %v4670 = vor.u32 %v4666, %v4669
  %v4671 = vrot.slane %v4670, 4
  %v4673 = vshll.u32 %v4484, 16
  %v4675 = vrot.slane %v4673, 5
  %v4676 = vsel %vm1475, %v4671, %v4675
  %v4677 = vshrl.u32 %v4484, 16
  %v4679 = vrot.slane %v4677, 4
  %v4680 = vor.u32 %v4679, %v4675
  %v4681 = vrot.slane %v4680, 4
  %v4683 = vshll.u32 %v4485, 16
  %v4685 = vrot.slane %v4683, 5
  %v4686 = vsel %vm1475, %v4681, %v4685
  %v4688 = vshrl.u32 %v4486, 16
  %v4690 = vrot.slane %v4688, 4
  %v4691 = vshll.u32 %v4486, 16
  %v4693 = vrot.slane %v4691, 5
  %v4694 = vor.u32 %v4690, %v4693
  %v4695 = vrot.slane %v4694, 4
  %v4697 = vshll.u32 %v4487, 16
  %v4699 = vrot.slane %v4697, 5
  %v4700 = vsel %vm1475, %v4695, %v4699
  %v4701 = vshrl.u32 %v4487, 16
  %v4703 = vrot.slane %v4701, 4
  %v4704 = vor.u32 %v4703, %v4699
  %v4705 = vrot.slane %v4704, 4
  %v4707 = vshll.u32 %v4488, 16
  %v4709 = vrot.slane %v4707, 5
  %v4710 = vsel %vm1475, %v4705, %v4709
  %v4712 = vshrl.u32 %v4489, 16
  %v4714 = vrot.slane %v4712, 4
  %v4715 = vshll.u32 %v4489, 16
  %v4717 = vrot.slane %v4715, 5
  %v4718 = vor.u32 %v4714, %v4717
  %v4719 = vrot.slane %v4718, 4
  %v4721 = vshll.u32 %v4490, 16
  %v4723 = vrot.slane %v4721, 5
  %v4724 = vsel %vm1475, %v4719, %v4723
  %v4725 = vshrl.u32 %v4490, 16
  %v4727 = vrot.slane %v4725, 4
  %v4728 = vor.u32 %v4727, %v4723
  %v4729 = vrot.slane %v4728, 4
  %v4731 = vshll.u32 %v4491, 16
  %v4733 = vrot.slane %v4731, 5
  %v4734 = vsel %vm1475, %v4729, %v4733
  %v4736 = vshrl.u32 %v4492, 16
  %v4738 = vrot.slane %v4736, 4
  %v4739 = vshll.u32 %v4492, 16
  %v4741 = vrot.slane %v4739, 5
  %v4742 = vor.u32 %v4738, %v4741
  %v4743 = vrot.slane %v4742, 4
  %v4745 = vshll.u32 %v4493, 16
  %v4747 = vrot.slane %v4745, 5
  %v4748 = vsel %vm1475, %v4743, %v4747
  %v4749 = vshrl.u32 %v4493, 16
  %v4751 = vrot.slane %v4749, 4
  %v4752 = vor.u32 %v4751, %v4747
  %v4753 = vrot.slane %v4752, 4
  %v4755 = vshll.u32 %v4494, 16
  %v4757 = vrot.slane %v4755, 5
  %v4758 = vsel %vm1475, %v4753, %v4757
  %v4760 = vshrl.u32 %v4495, 16
  %v4762 = vrot.slane %v4760, 4
  %v4763 = vshll.u32 %v4495, 16
  %v4765 = vrot.slane %v4763, 5
  %v4766 = vor.u32 %v4762, %v4765
  %v4767 = vrot.slane %v4766, 4
  %v4769 = vshll.u32 %v4496, 16
  %v4771 = vrot.slane %v4769, 5
  %v4772 = vsel %vm1475, %v4767, %v4771
  %v4773 = vshrl.u32 %v4496, 16
  %v4775 = vrot.slane %v4773, 4
  %v4776 = vor.u32 %v4775, %v4771
  %v4777 = vrot.slane %v4776, 4
  %v4779 = vshll.u32 %v4497, 16
  %v4781 = vrot.slane %v4779, 5
  %v4782 = vsel %vm1475, %v4777, %v4781
  %v4784 = vshrl.u32 %v4498, 16
  %v4786 = vrot.slane %v4784, 4
  %v4787 = vshll.u32 %v4498, 16
  %v4789 = vrot.slane %v4787, 5
  %v4790 = vor.u32 %v4786, %v4789
  %v4791 = vrot.slane %v4790, 4
  %v4793 = vshll.u32 %v4499, 16
  %v4795 = vrot.slane %v4793, 5
  %v4796 = vsel %vm1475, %v4791, %v4795
  %v4797 = vshrl.u32 %v4499, 16
  %v4799 = vrot.slane %v4797, 4
  %v4800 = vor.u32 %v4799, %v4795
  %v4801 = vrot.slane %v4800, 4
  %v4803 = vshll.u32 %v4500, 16
  %v4805 = vrot.slane %v4803, 5
  %v4806 = vsel %vm1475, %v4801, %v4805
  %v4808 = vshrl.u32 %v4501, 16
  %v4810 = vrot.slane %v4808, 4
  %v4811 = vshll.u32 %v4501, 16
  %v4813 = vrot.slane %v4811, 5
  %v4814 = vor.u32 %v4810, %v4813
  %v4815 = vrot.slane %v4814, 4
  %v4817 = vshll.u32 %v4502, 16
  %v4819 = vrot.slane %v4817, 5
  %v4820 = vsel %vm1475, %v4815, %v4819
  %v4821 = vshrl.u32 %v4502, 16
  %v4823 = vrot.slane %v4821, 4
  %v4824 = vor.u32 %v4823, %v4819
  %v4825 = vrot.slane %v4824, 4
  %v4827 = vshll.u32 %v4503, 16
  %v4829 = vrot.slane %v4827, 5
  %v4830 = vsel %vm1475, %v4825, %v4829
  %v4832 = vshrl.u32 %v4504, 16
  %v4834 = vrot.slane %v4832, 4
  %v4835 = vshll.u32 %v4504, 16
  %v4837 = vrot.slane %v4835, 5
  %v4838 = vor.u32 %v4834, %v4837
  %v4839 = vrot.slane %v4838, 4
  %v4841 = vshll.u32 %v4505, 16
  %v4843 = vrot.slane %v4841, 5
  %v4844 = vsel %vm1475, %v4839, %v4843
  %v4845 = vshrl.u32 %v4505, 16
  %v4847 = vrot.slane %v4845, 4
  %v4848 = vor.u32 %v4847, %v4843
  %v4849 = vrot.slane %v4848, 4
  %v4851 = vshll.u32 %v4506, 16
  %v4853 = vrot.slane %v4851, 5
  %v4854 = vsel %vm1475, %v4849, %v4853
  %v4856 = vshrl.u32 %v4507, 16
  %v4858 = vrot.slane %v4856, 4
  %v4859 = vshll.u32 %v4507, 16
  %v4861 = vrot.slane %v4859, 5
  %v4862 = vor.u32 %v4858, %v4861
  %v4863 = vrot.slane %v4862, 4
  %v4865 = vshll.u32 %v4508, 16
  %v4867 = vrot.slane %v4865, 5
  %v4868 = vsel %vm1475, %v4863, %v4867
  %v4869 = vshrl.u32 %v4508, 16
  %v4871 = vrot.slane %v4869, 4
  %v4872 = vor.u32 %v4871, %v4867
  %v4873 = vrot.slane %v4872, 4
  %v4875 = vshll.u32 %v4509, 16
  %v4877 = vrot.slane %v4875, 5
  %v4878 = vsel %vm1475, %v4873, %v4877
  %v4880 = vshrl.u32 %v4510, 16
  %v4882 = vrot.slane %v4880, 4
  %v4883 = vshll.u32 %v4510, 16
  %v4885 = vrot.slane %v4883, 5
  %v4886 = vor.u32 %v4882, %v4885
  %v4887 = vrot.slane %v4886, 4
  %v4889 = vshll.u32 %v4511, 16
  %v4891 = vrot.slane %v4889, 5
  %v4892 = vsel %vm1475, %v4887, %v4891
  %v4893 = vshrl.u32 %v4511, 16
  %v4895 = vrot.slane %v4893, 4
  %v4896 = vor.u32 %v4895, %v4891
  %v4897 = vrot.slane %v4896, 4
  %v4899 = vshll.u32 %v4512, 16
  %v4901 = vrot.slane %v4899, 5
  %v4902 = vsel %vm1475, %v4897, %v4901
  %v4904 = vshrl.u32 %v4513, 16
  %v4906 = vrot.slane %v4904, 4
  %v4907 = vshll.u32 %v4513, 16
  %v4909 = vrot.slane %v4907, 5
  %v4910 = vor.u32 %v4906, %v4909
  %v4911 = vrot.slane %v4910, 4
  %v4913 = vshll.u32 %v4514, 16
  %v4915 = vrot.slane %v4913, 5
  %v4916 = vsel %vm1475, %v4911, %v4915
  %v4917 = vshrl.u32 %v4514, 16
  %v4919 = vrot.slane %v4917, 4
  %v4920 = vor.u32 %v4919, %v4915
  %v4921 = vrot.slane %v4920, 4
  %v4923 = vshll.u32 %v4515, 16
  %v4925 = vrot.slane %v4923, 5
  %v4926 = vsel %vm1475, %v4921, %v4925
  %v4928 = vshrl.u32 %v4516, 16
  %v4930 = vrot.slane %v4928, 4
  %v4931 = vshll.u32 %v4516, 16
  %v4933 = vrot.slane %v4931, 5
  %v4934 = vor.u32 %v4930, %v4933
  %v4935 = vrot.slane %v4934, 4
  %v4937 = vshll.u32 %v4517, 16
  %v4939 = vrot.slane %v4937, 5
  %v4940 = vsel %vm1475, %v4935, %v4939
  %v4941 = vshrl.u32 %v4517, 16
  %v4943 = vrot.slane %v4941, 4
  %v4944 = vor.u32 %v4943, %v4939
  %v4945 = vrot.slane %v4944, 4
  %v4947 = vshll.u32 %v4518, 16
  %v4949 = vrot.slane %v4947, 5
  %v4950 = vsel %vm1475, %v4945, %v4949
  %v4952 = vshrl.u32 %v4519, 16
  %v4954 = vrot.slane %v4952, 4
  %v4955 = vshll.u32 %v4519, 16
  %v4957 = vrot.slane %v4955, 5
  %v4958 = vor.u32 %v4954, %v4957
  %v4959 = vrot.slane %v4958, 4
  %v4961 = vshll.u32 %v4520, 16
  %v4963 = vrot.slane %v4961, 5
  %v4964 = vsel %vm1475, %v4959, %v4963
  %v4965 = vshrl.u32 %v4520, 16
  %v4967 = vrot.slane %v4965, 4
  %v4968 = vor.u32 %v4967, %v4963
  %v4969 = vrot.slane %v4968, 4
  %v4971 = vshll.u32 %v4521, 16
  %v4973 = vrot.slane %v4971, 5
  %v4974 = vsel %vm1475, %v4969, %v4973
  %v4976 = vshrl.u32 %v4522, 16
  %v4978 = vrot.slane %v4976, 4
  %v4979 = vshll.u32 %v4522, 16
  %v4981 = vrot.slane %v4979, 5
  %v4982 = vor.u32 %v4978, %v4981
  %v4983 = vrot.slane %v4982, 4
  %v4985 = vshll.u32 %v4523, 16
  %v4987 = vrot.slane %v4985, 5
  %v4988 = vsel %vm1475, %v4983, %v4987
  %v4989 = vshrl.u32 %v4523, 16
  %v4991 = vrot.slane %v4989, 4
  %v4992 = vor.u32 %v4991, %v4987
  %v4993 = vrot.slane %v4992, 4
  %v4995 = vshll.u32 %v4524, 16
  %v4997 = vrot.slane %v4995, 5
  %v4998 = vsel %vm1475, %v4993, %v4997
  %v5000 = vshrl.u32 %v4525, 16
  %v5002 = vrot.slane %v5000, 4
  %v5003 = vshll.u32 %v4525, 16
  %v5005 = vrot.slane %v5003, 5
  %v5006 = vor.u32 %v5002, %v5005
  %v5007 = vrot.slane %v5006, 4
  %v5009 = vshll.u32 %v4526, 16
  %v5011 = vrot.slane %v5009, 5
  %v5012 = vsel %vm1475, %v5007, %v5011
  %v5013 = vshrl.u32 %v4526, 16
  %v5015 = vrot.slane %v5013, 4
  %v5016 = vor.u32 %v5015, %v5011
  %v5017 = vrot.slane %v5016, 4
  %v5019 = vshll.u32 %v4527, 16
  %v5021 = vrot.slane %v5019, 5
  %v5022 = vsel %vm1475, %v5017, %v5021
  %v5024 = vshrl.u32 %v4528, 16
  %v5026 = vrot.slane %v5024, 4
  %v5027 = vshll.u32 %v4528, 16
  %v5029 = vrot.slane %v5027, 5
  %v5030 = vor.u32 %v5026, %v5029
  %v5031 = vrot.slane %v5030, 4
  %v5033 = vshll.u32 %v4529, 16
  %v5035 = vrot.slane %v5033, 5
  %v5036 = vsel %vm1475, %v5031, %v5035
  %v5037 = vshrl.u32 %v4529, 16
  %v5039 = vrot.slane %v5037, 4
  %v5040 = vor.u32 %v5039, %v5035
  %v5041 = vrot.slane %v5040, 4
  %v5043 = vshll.u32 %v4530, 16
  %v5045 = vrot.slane %v5043, 5
  %v5046 = vsel %vm1475, %v5041, %v5045
  %v5048 = vshrl.u32 %v4531, 16
  %v5050 = vrot.slane %v5048, 4
  %v5051 = vshll.u32 %v4531, 16
  %v5053 = vrot.slane %v5051, 5
  %v5054 = vor.u32 %v5050, %v5053
  %v5055 = vrot.slane %v5054, 4
  %v5057 = vshll.u32 %v4532, 16
  %v5059 = vrot.slane %v5057, 5
  %v5060 = vsel %vm1475, %v5055, %v5059
  %v5061 = vshrl.u32 %v4532, 16
  %v5063 = vrot.slane %v5061, 4
  %v5064 = vor.u32 %v5063, %v5059
  %v5065 = vrot.slane %v5064, 4
  %v5067 = vshll.u32 %v4533, 16
  %v5069 = vrot.slane %v5067, 5
  %v5070 = vsel %vm1475, %v5065, %v5069
  %v5072 = vshrl.u32 %v4534, 16
  %v5074 = vrot.slane %v5072, 4
  %v5075 = vshll.u32 %v4534, 16
  %v5077 = vrot.slane %v5075, 5
  %v5078 = vor.u32 %v5074, %v5077
  %v5079 = vrot.slane %v5078, 4
  %v5081 = vshll.u32 %v4535, 16
  %v5083 = vrot.slane %v5081, 5
  %v5084 = vsel %vm1475, %v5079, %v5083
  %v5085 = vshrl.u32 %v4535, 16
  %v5087 = vrot.slane %v5085, 4
  %v5088 = vor.u32 %v5087, %v5083
  %v5089 = vrot.slane %v5088, 4
  %v5091 = vshll.u32 %v4536, 16
  %v5093 = vrot.slane %v5091, 5
  %v5094 = vsel %vm1475, %v5089, %v5093
  %v5096 = vshrl.u32 %v4537, 16
  %v5098 = vrot.slane %v5096, 4
  %v5099 = vshll.u32 %v4537, 16
  %v5101 = vrot.slane %v5099, 5
  %v5102 = vor.u32 %v5098, %v5101
  %v5103 = vrot.slane %v5102, 4
  %v5105 = vshll.u32 %v4538, 16
  %v5107 = vrot.slane %v5105, 5
  %v5108 = vsel %vm1475, %v5103, %v5107
  %v5109 = vshrl.u32 %v4538, 16
  %v5111 = vrot.slane %v5109, 4
  %v5112 = vor.u32 %v5111, %v5107
  %v5113 = vrot.slane %v5112, 4
  %v5115 = vshll.u32 %v4539, 16
  %v5117 = vrot.slane %v5115, 5
  %v5118 = vsel %vm1475, %v5113, %v5117
  %v5120 = vshrl.u32 %v4540, 16
  %v5122 = vrot.slane %v5120, 4
  %v5123 = vshll.u32 %v4540, 16
  %v5125 = vrot.slane %v5123, 5
  %v5126 = vor.u32 %v5122, %v5125
  %v5127 = vrot.slane %v5126, 4
  %v5129 = vshll.u32 %v4541, 16
  %v5131 = vrot.slane %v5129, 5
  %v5132 = vsel %vm1475, %v5127, %v5131
  %v5133 = vshrl.u32 %v4541, 16
  %v5135 = vrot.slane %v5133, 4
  %v5136 = vor.u32 %v5135, %v5131
  %v5137 = vrot.slane %v5136, 4
  %v5139 = vshll.u32 %v4542, 16
  %v5141 = vrot.slane %v5139, 5
  %v5142 = vsel %vm1475, %v5137, %v5141
  %v5144 = vshrl.u32 %v4543, 16
  %v5146 = vrot.slane %v5144, 4
  %v5147 = vshll.u32 %v4543, 16
  %v5149 = vrot.slane %v5147, 5
  %v5150 = vor.u32 %v5146, %v5149
  %v5151 = vrot.slane %v5150, 4
  %v5153 = vshll.u32 %v4544, 16
  %v5155 = vrot.slane %v5153, 5
  %v5156 = vsel %vm1475, %v5151, %v5155
  %v5157 = vshrl.u32 %v4544, 16
  %v5159 = vrot.slane %v5157, 4
  %v5160 = vor.u32 %v5159, %v5155
  %v5161 = vrot.slane %v5160, 4
  %v5163 = vshll.u32 %v4545, 16
  %v5165 = vrot.slane %v5163, 5
  %v5166 = vsel %vm1475, %v5161, %v5165
  %v5168 = vshrl.u32 %v4546, 16
  %v5170 = vrot.slane %v5168, 4
  %v5171 = vshll.u32 %v4546, 16
  %v5173 = vrot.slane %v5171, 5
  %v5174 = vor.u32 %v5170, %v5173
  %v5175 = vrot.slane %v5174, 4
  %v5177 = vshll.u32 %v4547, 16
  %v5179 = vrot.slane %v5177, 5
  %v5180 = vsel %vm1475, %v5175, %v5179
  %v5181 = vshrl.u32 %v4547, 16
  %v5183 = vrot.slane %v5181, 4
  %v5184 = vor.u32 %v5183, %v5179
  %v5185 = vrot.slane %v5184, 4
  %v5187 = vshll.u32 %v4548, 16
  %v5189 = vrot.slane %v5187, 5
  %v5190 = vsel %vm1475, %v5185, %v5189
  %v5192 = vshrl.u32 %v4549, 16
  %v5194 = vrot.slane %v5192, 4
  %v5195 = vshll.u32 %v4549, 16
  %v5197 = vrot.slane %v5195, 5
  %v5198 = vor.u32 %v5194, %v5197
  %v5199 = vrot.slane %v5198, 4
  %v5201 = vshll.u32 %v4550, 16
  %v5203 = vrot.slane %v5201, 5
  %v5204 = vsel %vm1475, %v5199, %v5203
  %v5205 = vshrl.u32 %v4550, 16
  %v5207 = vrot.slane %v5205, 4
  %v5208 = vor.u32 %v5207, %v5203
  %v5209 = vrot.slane %v5208, 4
  %v5211 = vshll.u32 %v4551, 16
  %v5213 = vrot.slane %v5211, 5
  %v5214 = vsel %vm1475, %v5209, %v5213
  %v5216 = vshrl.u32 %v4552, 16
  %v5218 = vrot.slane %v5216, 4
  %v5219 = vshll.u32 %v4552, 16
  %v5221 = vrot.slane %v5219, 5
  %v5222 = vor.u32 %v5218, %v5221
  %v5223 = vrot.slane %v5222, 4
  %v5225 = vshll.u32 %v4553, 16
  %v5227 = vrot.slane %v5225, 5
  %v5228 = vsel %vm1475, %v5223, %v5227
  %v5229 = vshrl.u32 %v4553, 16
  %v5231 = vrot.slane %v5229, 4
  %v5232 = vor.u32 %v5231, %v5227
  %v5233 = vrot.slane %v5232, 4
  %v5235 = vshll.u32 %v4554, 16
  %v5237 = vrot.slane %v5235, 5
  %v5238 = vsel %vm1475, %v5233, %v5237
  %v5240 = vshrl.u32 %v4555, 16
  %v5242 = vrot.slane %v5240, 4
  %v5243 = vshll.u32 %v4555, 16
  %v5245 = vrot.slane %v5243, 5
  %v5246 = vor.u32 %v5242, %v5245
  %v5247 = vrot.slane %v5246, 4
  %v5249 = vshll.u32 %v4556, 16
  %v5251 = vrot.slane %v5249, 5
  %v5252 = vsel %vm1475, %v5247, %v5251
  %v5253 = vshrl.u32 %v4556, 16
  %v5255 = vrot.slane %v5253, 4
  %v5256 = vor.u32 %v5255, %v5251
  %v5257 = vrot.slane %v5256, 4
  %v5259 = vshll.u32 %v4557, 16
  %v5261 = vrot.slane %v5259, 5
  %v5262 = vsel %vm1475, %v5257, %v5261
  %v5264 = vshrl.u32 %v4558, 16
  %v5266 = vrot.slane %v5264, 4
  %v5267 = vshll.u32 %v4558, 16
  %v5269 = vrot.slane %v5267, 5
  %v5270 = vor.u32 %v5266, %v5269
  %v5271 = vrot.slane %v5270, 4
  %v5273 = vshll.u32 %v4559, 16
  %v5275 = vrot.slane %v5273, 5
  %v5276 = vsel %vm1475, %v5271, %v5275
  %v5277 = vshrl.u32 %v4559, 16
  %v5279 = vrot.slane %v5277, 4
  %v5280 = vor.u32 %v5279, %v5275
  %v5281 = vrot.slane %v5280, 4
  %v5283 = vshll.u32 %v4560, 16
  %v5285 = vrot.slane %v5283, 5
  %v5286 = vsel %vm1475, %v5281, %v5285
  %v5288 = vshrl.u32 %v4561, 16
  %v5290 = vrot.slane %v5288, 4
  %v5291 = vshll.u32 %v4561, 16
  %v5293 = vrot.slane %v5291, 5
  %v5294 = vor.u32 %v5290, %v5293
  %v5295 = vrot.slane %v5294, 4
  %v5297 = vshll.u32 %v4562, 16
  %v5299 = vrot.slane %v5297, 5
  %v5300 = vsel %vm1475, %v5295, %v5299
  %v5301 = vshrl.u32 %v4562, 16
  %v5303 = vrot.slane %v5301, 4
  %v5304 = vor.u32 %v5303, %v5299
  %v5305 = vrot.slane %v5304, 4
  %v5307 = vshll.u32 %v4563, 16
  %v5309 = vrot.slane %v5307, 5
  %v5310 = vsel %vm1475, %v5305, %v5309
  %v5312 = vshrl.u32 %v4564, 16
  %v5314 = vrot.slane %v5312, 4
  %v5315 = vshll.u32 %v4564, 16
  %v5317 = vrot.slane %v5315, 5
  %v5318 = vor.u32 %v5314, %v5317
  %v5319 = vrot.slane %v5318, 4
  %v5321 = vshll.u32 %v4565, 16
  %v5323 = vrot.slane %v5321, 5
  %v5324 = vsel %vm1475, %v5319, %v5323
  %v5325 = vshrl.u32 %v4565, 16
  %v5327 = vrot.slane %v5325, 4
  %v5328 = vor.u32 %v5327, %v5323
  %v5329 = vrot.slane %v5328, 4
  %v5331 = vshll.u32 %v4566, 16
  %v5333 = vrot.slane %v5331, 5
  %v5334 = vsel %vm1475, %v5329, %v5333
  %v5335 = vld [vmem:[#allocation2] sm:$0xe]
  %v5336 = vld [vmem:[#allocation2 + $0xc] sm:$0xe]
  %v5337 = vld [vmem:[#allocation2 + $0x18] sm:$0xe]
  %v5338 = vld [vmem:[#allocation2 + $0x24] sm:$0xe]
  %v5339 = vld [vmem:[#allocation2 + $0x30] sm:$0xe]
  %v5340 = vld [vmem:[#allocation2 + $0x3c] sm:$0xe]
  %v5341 = vld [vmem:[#allocation2 + $0x48] sm:$0xe]
  %v5342 = vld [vmem:[#allocation2 + $0x54] sm:$0xe]
  %v5343 = vld [vmem:[#allocation2 + $0x60] sm:$0xe]
  %v5344 = vld [vmem:[#allocation2 + $0x6c] sm:$0xe]
  %v5345 = vld [vmem:[#allocation2 + $0x78] sm:$0xe]
  %v5346 = vld [vmem:[#allocation2 + $0x84] sm:$0xe]
  %v5347 = vld [vmem:[#allocation2 + $0x90] sm:$0xe]
  %v5348 = vld [vmem:[#allocation2 + $0x9c] sm:$0xe]
  %v5349 = vld [vmem:[#allocation2 + $0xa8] sm:$0xe]
  %v5350 = vld [vmem:[#allocation2 + $0xb4] sm:$0xe]
  %v5351 = vld [vmem:[#allocation2 + $0xd8] sm:$0xe]
  %v5352 = vld [vmem:[#allocation2 + $0xe4] sm:$0xe]
  %v5353 = vld [vmem:[#allocation2 + $0xf0] sm:$0xe]
  %v5354 = vld [vmem:[#allocation2 + $0xfc] sm:$0xe]
  %v5355 = vld [vmem:[#allocation2 + $0x108] sm:$0xe]
  %v5356 = vld [vmem:[#allocation2 + $0x114] sm:$0xe]
  %v5357 = vld [vmem:[#allocation2 + $0x120] sm:$0xe]
  %v5358 = vld [vmem:[#allocation2 + $0x12c] sm:$0xe]
  %v5359 = vld [vmem:[#allocation2 + $0x138] sm:$0xe]
  %v5360 = vld [vmem:[#allocation2 + $0x144] sm:$0xe]
  %v5361 = vld [vmem:[#allocation2 + $0x150] sm:$0xe]
  %v5362 = vld [vmem:[#allocation2 + $0x15c] sm:$0xe]
  %v5363 = vld [vmem:[#allocation2 + $0x168] sm:$0xe]
  %v5364 = vld [vmem:[#allocation2 + $0x174] sm:$0xe]
  %v5365 = vld [vmem:[#allocation2 + $0x180] sm:$0xe]
  %v5366 = vld [vmem:[#allocation2 + $0x18c] sm:$0xe]
  %vm5463 = vcmask 1042432
  %vm5464 = vcmask 1046532
  %vm5465 = vmor %vm5463, %vm5464
  %v5466 = vrot.slane %v5335, 5
  %v5467 = vrot.slane %v5466, 4
  %v5468 = vrot.slane %v4472, 5
  %v5469 = vsel %vm5465, %v5467, %v5468
  %v5470 = vrot.slane %v5468, 4
  %v5471 = vrot.slane %v4473, 5
  %v5472 = vsel %vm5465, %v5470, %v5471
  %v5473 = vrot.slane %v5336, 5
  %v5474 = vrot.slane %v5473, 4
  %v5475 = vrot.slane %v4475, 5
  %v5476 = vsel %vm5465, %v5474, %v5475
  %v5477 = vrot.slane %v5475, 4
  %v5478 = vrot.slane %v4476, 5
  %v5479 = vsel %vm5465, %v5477, %v5478
  %v5480 = vrot.slane %v5337, 5
  %v5481 = vrot.slane %v5480, 4
  %v5482 = vrot.slane %v4478, 5
  %v5483 = vsel %vm5465, %v5481, %v5482
  %v5484 = vrot.slane %v5482, 4
  %v5485 = vrot.slane %v4479, 5
  %v5486 = vsel %vm5465, %v5484, %v5485
  %v5487 = vrot.slane %v5338, 5
  %v5488 = vrot.slane %v5487, 4
  %v5489 = vrot.slane %v4481, 5
  %v5490 = vsel %vm5465, %v5488, %v5489
  %v5491 = vrot.slane %v5489, 4
  %v5492 = vrot.slane %v4482, 5
  %v5493 = vsel %vm5465, %v5491, %v5492
  %v5494 = vrot.slane %v5339, 5
  %v5495 = vrot.slane %v5494, 4
  %v5496 = vrot.slane %v4484, 5
  %v5497 = vsel %vm5465, %v5495, %v5496
  %v5498 = vrot.slane %v5496, 4
  %v5499 = vrot.slane %v4485, 5
  %v5500 = vsel %vm5465, %v5498, %v5499
  %v5501 = vrot.slane %v5340, 5
  %v5502 = vrot.slane %v5501, 4
  %v5503 = vrot.slane %v4487, 5
  %v5504 = vsel %vm5465, %v5502, %v5503
  %v5505 = vrot.slane %v5503, 4
  %v5506 = vrot.slane %v4488, 5
  %v5507 = vsel %vm5465, %v5505, %v5506
  %v5508 = vrot.slane %v5341, 5
  %v5509 = vrot.slane %v5508, 4
  %v5510 = vrot.slane %v4490, 5
  %v5511 = vsel %vm5465, %v5509, %v5510
  %v5512 = vrot.slane %v5510, 4
  %v5513 = vrot.slane %v4491, 5
  %v5514 = vsel %vm5465, %v5512, %v5513
  %v5515 = vrot.slane %v5342, 5
  %v5516 = vrot.slane %v5515, 4
  %v5517 = vrot.slane %v4493, 5
  %v5518 = vsel %vm5465, %v5516, %v5517
  %v5519 = vrot.slane %v5517, 4
  %v5520 = vrot.slane %v4494, 5
  %v5521 = vsel %vm5465, %v5519, %v5520
  %v5522 = vrot.slane %v5343, 5
  %v5523 = vrot.slane %v5522, 4
  %v5524 = vrot.slane %v4496, 5
  %v5525 = vsel %vm5465, %v5523, %v5524
  %v5526 = vrot.slane %v5524, 4
  %v5527 = vrot.slane %v4497, 5
  %v5528 = vsel %vm5465, %v5526, %v5527
  %v5529 = vrot.slane %v5344, 5
  %v5530 = vrot.slane %v5529, 4
  %v5531 = vrot.slane %v4499, 5
  %v5532 = vsel %vm5465, %v5530, %v5531
  %v5533 = vrot.slane %v5531, 4
  %v5534 = vrot.slane %v4500, 5
  %v5535 = vsel %vm5465, %v5533, %v5534
  %v5536 = vrot.slane %v5345, 5
  %v5537 = vrot.slane %v5536, 4
  %v5538 = vrot.slane %v4502, 5
  %v5539 = vsel %vm5465, %v5537, %v5538
  %v5540 = vrot.slane %v5538, 4
  %v5541 = vrot.slane %v4503, 5
  %v5542 = vsel %vm5465, %v5540, %v5541
  %v5543 = vrot.slane %v5346, 5
  %v5544 = vrot.slane %v5543, 4
  %v5545 = vrot.slane %v4505, 5
  %v5546 = vsel %vm5465, %v5544, %v5545
  %v5547 = vrot.slane %v5545, 4
  %v5548 = vrot.slane %v4506, 5
  %v5549 = vsel %vm5465, %v5547, %v5548
  %v5550 = vrot.slane %v5347, 5
  %v5551 = vrot.slane %v5550, 4
  %v5552 = vrot.slane %v4508, 5
  %v5553 = vsel %vm5465, %v5551, %v5552
  %v5554 = vrot.slane %v5552, 4
  %v5555 = vrot.slane %v4509, 5
  %v5556 = vsel %vm5465, %v5554, %v5555
  %v5557 = vrot.slane %v5348, 5
  %v5558 = vrot.slane %v5557, 4
  %v5559 = vrot.slane %v4511, 5
  %v5560 = vsel %vm5465, %v5558, %v5559
  %v5561 = vrot.slane %v5559, 4
  %v5562 = vrot.slane %v4512, 5
  %v5563 = vsel %vm5465, %v5561, %v5562
  %v5564 = vrot.slane %v5349, 5
  %v5565 = vrot.slane %v5564, 4
  %v5566 = vrot.slane %v4514, 5
  %v5567 = vsel %vm5465, %v5565, %v5566
  %v5568 = vrot.slane %v5566, 4
  %v5569 = vrot.slane %v4515, 5
  %v5570 = vsel %vm5465, %v5568, %v5569
  %v5571 = vrot.slane %v5350, 5
  %v5572 = vrot.slane %v5571, 4
  %v5573 = vrot.slane %v4517, 5
  %v5574 = vsel %vm5465, %v5572, %v5573
  %v5575 = vrot.slane %v5573, 4
  %v5576 = vrot.slane %v4518, 5
  %v5577 = vsel %vm5465, %v5575, %v5576
  %v5578 = vrot.slane %v5351, 5
  %v5579 = vrot.slane %v5578, 4
  %v5580 = vrot.slane %v4520, 5
  %v5581 = vsel %vm5465, %v5579, %v5580
  %v5582 = vrot.slane %v5580, 4
  %v5583 = vrot.slane %v4521, 5
  %v5584 = vsel %vm5465, %v5582, %v5583
  %v5585 = vrot.slane %v5352, 5
  %v5586 = vrot.slane %v5585, 4
  %v5587 = vrot.slane %v4523, 5
  %v5588 = vsel %vm5465, %v5586, %v5587
  %v5589 = vrot.slane %v5587, 4
  %v5590 = vrot.slane %v4524, 5
  %v5591 = vsel %vm5465, %v5589, %v5590
  %v5592 = vrot.slane %v5353, 5
  %v5593 = vrot.slane %v5592, 4
  %v5594 = vrot.slane %v4526, 5
  %v5595 = vsel %vm5465, %v5593, %v5594
  %v5596 = vrot.slane %v5594, 4
  %v5597 = vrot.slane %v4527, 5
  %v5598 = vsel %vm5465, %v5596, %v5597
  %v5599 = vrot.slane %v5354, 5
  %v5600 = vrot.slane %v5599, 4
  %v5601 = vrot.slane %v4529, 5
  %v5602 = vsel %vm5465, %v5600, %v5601
  %v5603 = vrot.slane %v5601, 4
  %v5604 = vrot.slane %v4530, 5
  %v5605 = vsel %vm5465, %v5603, %v5604
  %v5606 = vrot.slane %v5355, 5
  %v5607 = vrot.slane %v5606, 4
  %v5608 = vrot.slane %v4532, 5
  %v5609 = vsel %vm5465, %v5607, %v5608
  %v5610 = vrot.slane %v5608, 4
  %v5611 = vrot.slane %v4533, 5
  %v5612 = vsel %vm5465, %v5610, %v5611
  %v5613 = vrot.slane %v5356, 5
  %v5614 = vrot.slane %v5613, 4
  %v5615 = vrot.slane %v4535, 5
  %v5616 = vsel %vm5465, %v5614, %v5615
  %v5617 = vrot.slane %v5615, 4
  %v5618 = vrot.slane %v4536, 5
  %v5619 = vsel %vm5465, %v5617, %v5618
  %v5620 = vrot.slane %v5357, 5
  %v5621 = vrot.slane %v5620, 4
  %v5622 = vrot.slane %v4538, 5
  %v5623 = vsel %vm5465, %v5621, %v5622
  %v5624 = vrot.slane %v5622, 4
  %v5625 = vrot.slane %v4539, 5
  %v5626 = vsel %vm5465, %v5624, %v5625
  %v5627 = vrot.slane %v5358, 5
  %v5628 = vrot.slane %v5627, 4
  %v5629 = vrot.slane %v4541, 5
  %v5630 = vsel %vm5465, %v5628, %v5629
  %v5631 = vrot.slane %v5629, 4
  %v5632 = vrot.slane %v4542, 5
  %v5633 = vsel %vm5465, %v5631, %v5632
  %v5634 = vrot.slane %v5359, 5
  %v5635 = vrot.slane %v5634, 4
  %v5636 = vrot.slane %v4544, 5
  %v5637 = vsel %vm5465, %v5635, %v5636
  %v5638 = vrot.slane %v5636, 4
  %v5639 = vrot.slane %v4545, 5
  %v5640 = vsel %vm5465, %v5638, %v5639
  %v5641 = vrot.slane %v5360, 5
  %v5642 = vrot.slane %v5641, 4
  %v5643 = vrot.slane %v4547, 5
  %v5644 = vsel %vm5465, %v5642, %v5643
  %v5645 = vrot.slane %v5643, 4
  %v5646 = vrot.slane %v4548, 5
  %v5647 = vsel %vm5465, %v5645, %v5646
  %v5648 = vrot.slane %v5361, 5
  %v5649 = vrot.slane %v5648, 4
  %v5650 = vrot.slane %v4550, 5
  %v5651 = vsel %vm5465, %v5649, %v5650
  %v5652 = vrot.slane %v5650, 4
  %v5653 = vrot.slane %v4551, 5
  %v5654 = vsel %vm5465, %v5652, %v5653
  %v5655 = vrot.slane %v5362, 5
  %v5656 = vrot.slane %v5655, 4
  %v5657 = vrot.slane %v4553, 5
  %v5658 = vsel %vm5465, %v5656, %v5657
  %v5659 = vrot.slane %v5657, 4
  %v5660 = vrot.slane %v4554, 5
  %v5661 = vsel %vm5465, %v5659, %v5660
  %v5662 = vrot.slane %v5363, 5
  %v5663 = vrot.slane %v5662, 4
  %v5664 = vrot.slane %v4556, 5
  %v5665 = vsel %vm5465, %v5663, %v5664
  %v5666 = vrot.slane %v5664, 4
  %v5667 = vrot.slane %v4557, 5
  %v5668 = vsel %vm5465, %v5666, %v5667
  %v5669 = vrot.slane %v5364, 5
  %v5670 = vrot.slane %v5669, 4
  %v5671 = vrot.slane %v4559, 5
  %v5672 = vsel %vm5465, %v5670, %v5671
  %v5673 = vrot.slane %v5671, 4
  %v5674 = vrot.slane %v4560, 5
  %v5675 = vsel %vm5465, %v5673, %v5674
  %v5676 = vrot.slane %v5365, 5
  %v5677 = vrot.slane %v5676, 4
  %v5678 = vrot.slane %v4562, 5
  %v5679 = vsel %vm5465, %v5677, %v5678
  %v5680 = vrot.slane %v5678, 4
  %v5681 = vrot.slane %v4563, 5
  %v5682 = vsel %vm5465, %v5680, %v5681
  %v5683 = vrot.slane %v5366, 5
  %v5684 = vrot.slane %v5683, 4
  %v5685 = vrot.slane %v4565, 5
  %v5686 = vsel %vm5465, %v5684, %v5685
  %v5687 = vrot.slane %v5685, 4
  %v5688 = vrot.slane %v4566, 5
  %v5689 = vsel %vm5465, %v5687, %v5688
  %v5690 = vld [vmem:[%s1149] sm:$0xf]
  %v5691 = vld [vmem:[%s1149 + $0x4] sm:$0xf]
  %v5692 = vld [vmem:[%s1149 + $0x8] sm:$0x1]
  %v5693 = vld [vmem:[%s1149 + $0xc] sm:$0xf]
  %v5694 = vld [vmem:[%s1149 + $0x10] sm:$0xf]
  %v5695 = vld [vmem:[%s1149 + $0x14] sm:$0x1]
  %v5696 = vld [vmem:[%s1149 + $0x18] sm:$0xf]
  %v5697 = vld [vmem:[%s1149 + $0x1c] sm:$0xf]
  %v5698 = vld [vmem:[%s1149 + $0x20] sm:$0x1]
  %v5699 = vld [vmem:[%s1149 + $0x24] sm:$0xf]
  %v5700 = vld [vmem:[%s1149 + $0x28] sm:$0xf]
  %v5701 = vld [vmem:[%s1149 + $0x2c] sm:$0x1]
  %v5702 = vld [vmem:[%s1149 + $0x30] sm:$0xf]
  %v5703 = vld [vmem:[%s1149 + $0x34] sm:$0xf]
  %v5704 = vld [vmem:[%s1149 + $0x38] sm:$0x1]
  %v5705 = vld [vmem:[%s1149 + $0x3c] sm:$0xf]
  %v5706 = vld [vmem:[%s1149 + $0x40] sm:$0xf]
  %v5707 = vld [vmem:[%s1149 + $0x44] sm:$0x1]
  %v5708 = vld [vmem:[%s1149 + $0x48] sm:$0xf]
  %v5709 = vld [vmem:[%s1149 + $0x4c] sm:$0xf]
  %v5710 = vld [vmem:[%s1149 + $0x50] sm:$0x1]
  %v5711 = vld [vmem:[%s1149 + $0x54] sm:$0xf]
  %v5712 = vld [vmem:[%s1149 + $0x58] sm:$0xf]
  %v5713 = vld [vmem:[%s1149 + $0x5c] sm:$0x1]
  %v5714 = vld [vmem:[%s1149 + $0x60] sm:$0xf]
  %v5715 = vld [vmem:[%s1149 + $0x64] sm:$0xf]
  %v5716 = vld [vmem:[%s1149 + $0x68] sm:$0x1]
  %v5717 = vld [vmem:[%s1149 + $0x6c] sm:$0xf]
  %v5718 = vld [vmem:[%s1149 + $0x70] sm:$0xf]
  %v5719 = vld [vmem:[%s1149 + $0x74] sm:$0x1]
  %v5720 = vld [vmem:[%s1149 + $0x78] sm:$0xf]
  %v5721 = vld [vmem:[%s1149 + $0x7c] sm:$0xf]
  %v5722 = vld [vmem:[%s1149 + $0x80] sm:$0x1]
  %v5723 = vld [vmem:[%s1149 + $0x84] sm:$0xf]
  %v5724 = vld [vmem:[%s1149 + $0x88] sm:$0xf]
  %v5725 = vld [vmem:[%s1149 + $0x8c] sm:$0x1]
  %v5726 = vld [vmem:[%s1149 + $0x90] sm:$0xf]
  %v5727 = vld [vmem:[%s1149 + $0x94] sm:$0xf]
  %v5728 = vld [vmem:[%s1149 + $0x98] sm:$0x1]
  %v5729 = vld [vmem:[%s1149 + $0x9c] sm:$0xf]
  %v5730 = vld [vmem:[%s1149 + $0xa0] sm:$0xf]
  %v5731 = vld [vmem:[%s1149 + $0xa4] sm:$0x1]
  %v5732 = vld [vmem:[%s1149 + $0xa8] sm:$0xf]
  %v5733 = vld [vmem:[%s1149 + $0xac] sm:$0xf]
  %v5734 = vld [vmem:[%s1149 + $0xb0] sm:$0x1]
  %v5735 = vld [vmem:[%s1149 + $0xb4] sm:$0xf]
  %v5736 = vld [vmem:[%s1149 + $0xb8] sm:$0xf]
  %v5737 = vld [vmem:[%s1149 + $0xbc] sm:$0x1]
  %v5738 = vld [vmem:[%s1149 + $0xd8] sm:$0xf]
  %v5739 = vld [vmem:[%s1149 + $0xdc] sm:$0xf]
  %v5740 = vld [vmem:[%s1149 + $0xe0] sm:$0x1]
  %v5741 = vld [vmem:[%s1149 + $0xe4] sm:$0xf]
  %v5742 = vld [vmem:[%s1149 + $0xe8] sm:$0xf]
  %v5743 = vld [vmem:[%s1149 + $0xec] sm:$0x1]
  %v5744 = vld [vmem:[%s1149 + $0xf0] sm:$0xf]
  %v5745 = vld [vmem:[%s1149 + $0xf4] sm:$0xf]
  %v5746 = vld [vmem:[%s1149 + $0xf8] sm:$0x1]
  %v5747 = vld [vmem:[%s1149 + $0xfc] sm:$0xf]
  %v5748 = vld [vmem:[%s1149 + $0x100] sm:$0xf]
  %v5749 = vld [vmem:[%s1149 + $0x104] sm:$0x1]
  %v5750 = vld [vmem:[%s1149 + $0x108] sm:$0xf]
  %v5751 = vld [vmem:[%s1149 + $0x10c] sm:$0xf]
  %v5752 = vld [vmem:[%s1149 + $0x110] sm:$0x1]
  %v5753 = vld [vmem:[%s1149 + $0x114] sm:$0xf]
  %v5754 = vld [vmem:[%s1149 + $0x118] sm:$0xf]
  %v5755 = vld [vmem:[%s1149 + $0x11c] sm:$0x1]
  %v5756 = vld [vmem:[%s1149 + $0x120] sm:$0xf]
  %v5757 = vld [vmem:[%s1149 + $0x124] sm:$0xf]
  %v5758 = vld [vmem:[%s1149 + $0x128] sm:$0x1]
  %v5759 = vld [vmem:[%s1149 + $0x12c] sm:$0xf]
  %v5760 = vld [vmem:[%s1149 + $0x130] sm:$0xf]
  %v5761 = vld [vmem:[%s1149 + $0x134] sm:$0x1]
  %v5762 = vld [vmem:[%s1149 + $0x138] sm:$0xf]
  %v5763 = vld [vmem:[%s1149 + $0x13c] sm:$0xf]
  %v5764 = vld [vmem:[%s1149 + $0x140] sm:$0x1]
  %v5765 = vld [vmem:[%s1149 + $0x144] sm:$0xf]
  %v5766 = vld [vmem:[%s1149 + $0x148] sm:$0xf]
  %v5767 = vld [vmem:[%s1149 + $0x14c] sm:$0x1]
  %v5768 = vld [vmem:[%s1149 + $0x150] sm:$0xf]
  %v5769 = vld [vmem:[%s1149 + $0x154] sm:$0xf]
  %v5770 = vld [vmem:[%s1149 + $0x158] sm:$0x1]
  %v5771 = vld [vmem:[%s1149 + $0x15c] sm:$0xf]
  %v5772 = vld [vmem:[%s1149 + $0x160] sm:$0xf]
  %v5773 = vld [vmem:[%s1149 + $0x164] sm:$0x1]
  %v5774 = vld [vmem:[%s1149 + $0x168] sm:$0xf]
  %v5775 = vld [vmem:[%s1149 + $0x16c] sm:$0xf]
  %v5776 = vld [vmem:[%s1149 + $0x170] sm:$0x1]
  %v5777 = vld [vmem:[%s1149 + $0x174] sm:$0xf]
  %v5778 = vld [vmem:[%s1149 + $0x178] sm:$0xf]
  %v5779 = vld [vmem:[%s1149 + $0x17c] sm:$0x1]
  %v5780 = vld [vmem:[%s1149 + $0x180] sm:$0xf]
  %v5781 = vld [vmem:[%s1149 + $0x184] sm:$0xf]
  %v5782 = vld [vmem:[%s1149 + $0x188] sm:$0x1]
  %v5783 = vld [vmem:[%s1149 + $0x18c] sm:$0xf]
  %v5784 = vld [vmem:[%s1149 + $0x190] sm:$0xf]
  %v5785 = vld [vmem:[%s1149 + $0x194] sm:$0x1]
  %v5787 = vshrl.u32 %v5690, 16
  %v5789 = vrot.slane %v5787, 4
  %v5790 = vshll.u32 %v5690, 16
  %v5792 = vrot.slane %v5790, 5
  %v5793 = vor.u32 %v5789, %v5792
  %v5794 = vrot.slane %v5793, 4
  %v5796 = vshll.u32 %v5691, 16
  %v5798 = vrot.slane %v5796, 5
  %v5799 = vsel %vm1475, %v5794, %v5798
  %v5800 = vshrl.u32 %v5691, 16
  %v5802 = vrot.slane %v5800, 4
  %v5803 = vor.u32 %v5802, %v5798
  %v5804 = vrot.slane %v5803, 4
  %v5806 = vshll.u32 %v5692, 16
  %v5808 = vrot.slane %v5806, 5
  %v5809 = vsel %vm1475, %v5804, %v5808
  %v5811 = vshrl.u32 %v5693, 16
  %v5813 = vrot.slane %v5811, 4
  %v5814 = vshll.u32 %v5693, 16
  %v5816 = vrot.slane %v5814, 5
  %v5817 = vor.u32 %v5813, %v5816
  %v5818 = vrot.slane %v5817, 4
  %v5820 = vshll.u32 %v5694, 16
  %v5822 = vrot.slane %v5820, 5
  %v5823 = vsel %vm1475, %v5818, %v5822
  %v5824 = vshrl.u32 %v5694, 16
  %v5826 = vrot.slane %v5824, 4
  %v5827 = vor.u32 %v5826, %v5822
  %v5828 = vrot.slane %v5827, 4
  %v5830 = vshll.u32 %v5695, 16
  %v5832 = vrot.slane %v5830, 5
  %v5833 = vsel %vm1475, %v5828, %v5832
  %v5835 = vshrl.u32 %v5696, 16
  %v5837 = vrot.slane %v5835, 4
  %v5838 = vshll.u32 %v5696, 16
  %v5840 = vrot.slane %v5838, 5
  %v5841 = vor.u32 %v5837, %v5840
  %v5842 = vrot.slane %v5841, 4
  %v5844 = vshll.u32 %v5697, 16
  %v5846 = vrot.slane %v5844, 5
  %v5847 = vsel %vm1475, %v5842, %v5846
  %v5848 = vshrl.u32 %v5697, 16
  %v5850 = vrot.slane %v5848, 4
  %v5851 = vor.u32 %v5850, %v5846
  %v5852 = vrot.slane %v5851, 4
  %v5854 = vshll.u32 %v5698, 16
  %v5856 = vrot.slane %v5854, 5
  %v5857 = vsel %vm1475, %v5852, %v5856
  %v5859 = vshrl.u32 %v5699, 16
  %v5861 = vrot.slane %v5859, 4
  %v5862 = vshll.u32 %v5699, 16
  %v5864 = vrot.slane %v5862, 5
  %v5865 = vor.u32 %v5861, %v5864
  %v5866 = vrot.slane %v5865, 4
  %v5868 = vshll.u32 %v5700, 16
  %v5870 = vrot.slane %v5868, 5
  %v5871 = vsel %vm1475, %v5866, %v5870
  %v5872 = vshrl.u32 %v5700, 16
  %v5874 = vrot.slane %v5872, 4
  %v5875 = vor.u32 %v5874, %v5870
  %v5876 = vrot.slane %v5875, 4
  %v5878 = vshll.u32 %v5701, 16
  %v5880 = vrot.slane %v5878, 5
  %v5881 = vsel %vm1475, %v5876, %v5880
  %v5883 = vshrl.u32 %v5702, 16
  %v5885 = vrot.slane %v5883, 4
  %v5886 = vshll.u32 %v5702, 16
  %v5888 = vrot.slane %v5886, 5
  %v5889 = vor.u32 %v5885, %v5888
  %v5890 = vrot.slane %v5889, 4
  %v5892 = vshll.u32 %v5703, 16
  %v5894 = vrot.slane %v5892, 5
  %v5895 = vsel %vm1475, %v5890, %v5894
  %v5896 = vshrl.u32 %v5703, 16
  %v5898 = vrot.slane %v5896, 4
  %v5899 = vor.u32 %v5898, %v5894
  %v5900 = vrot.slane %v5899, 4
  %v5902 = vshll.u32 %v5704, 16
  %v5904 = vrot.slane %v5902, 5
  %v5905 = vsel %vm1475, %v5900, %v5904
  %v5907 = vshrl.u32 %v5705, 16
  %v5909 = vrot.slane %v5907, 4
  %v5910 = vshll.u32 %v5705, 16
  %v5912 = vrot.slane %v5910, 5
  %v5913 = vor.u32 %v5909, %v5912
  %v5914 = vrot.slane %v5913, 4
  %v5916 = vshll.u32 %v5706, 16
  %v5918 = vrot.slane %v5916, 5
  %v5919 = vsel %vm1475, %v5914, %v5918
  %v5920 = vshrl.u32 %v5706, 16
  %v5922 = vrot.slane %v5920, 4
  %v5923 = vor.u32 %v5922, %v5918
  %v5924 = vrot.slane %v5923, 4
  %v5926 = vshll.u32 %v5707, 16
  %v5928 = vrot.slane %v5926, 5
  %v5929 = vsel %vm1475, %v5924, %v5928
  %v5931 = vshrl.u32 %v5708, 16
  %v5933 = vrot.slane %v5931, 4
  %v5934 = vshll.u32 %v5708, 16
  %v5936 = vrot.slane %v5934, 5
  %v5937 = vor.u32 %v5933, %v5936
  %v5938 = vrot.slane %v5937, 4
  %v5940 = vshll.u32 %v5709, 16
  %v5942 = vrot.slane %v5940, 5
  %v5943 = vsel %vm1475, %v5938, %v5942
  %v5944 = vshrl.u32 %v5709, 16
  %v5946 = vrot.slane %v5944, 4
  %v5947 = vor.u32 %v5946, %v5942
  %v5948 = vrot.slane %v5947, 4
  %v5950 = vshll.u32 %v5710, 16
  %v5952 = vrot.slane %v5950, 5
  %v5953 = vsel %vm1475, %v5948, %v5952
  %v5955 = vshrl.u32 %v5711, 16
  %v5957 = vrot.slane %v5955, 4
  %v5958 = vshll.u32 %v5711, 16
  %v5960 = vrot.slane %v5958, 5
  %v5961 = vor.u32 %v5957, %v5960
  %v5962 = vrot.slane %v5961, 4
  %v5964 = vshll.u32 %v5712, 16
  %v5966 = vrot.slane %v5964, 5
  %v5967 = vsel %vm1475, %v5962, %v5966
  %v5968 = vshrl.u32 %v5712, 16
  %v5970 = vrot.slane %v5968, 4
  %v5971 = vor.u32 %v5970, %v5966
  %v5972 = vrot.slane %v5971, 4
  %v5974 = vshll.u32 %v5713, 16
  %v5976 = vrot.slane %v5974, 5
  %v5977 = vsel %vm1475, %v5972, %v5976
  %v5979 = vshrl.u32 %v5714, 16
  %v5981 = vrot.slane %v5979, 4
  %v5982 = vshll.u32 %v5714, 16
  %v5984 = vrot.slane %v5982, 5
  %v5985 = vor.u32 %v5981, %v5984
  %v5986 = vrot.slane %v5985, 4
  %v5988 = vshll.u32 %v5715, 16
  %v5990 = vrot.slane %v5988, 5
  %v5991 = vsel %vm1475, %v5986, %v5990
  %v5992 = vshrl.u32 %v5715, 16
  %v5994 = vrot.slane %v5992, 4
  %v5995 = vor.u32 %v5994, %v5990
  %v5996 = vrot.slane %v5995, 4
  %v5998 = vshll.u32 %v5716, 16
  %v6000 = vrot.slane %v5998, 5
  %v6001 = vsel %vm1475, %v5996, %v6000
  %v6003 = vshrl.u32 %v5717, 16
  %v6005 = vrot.slane %v6003, 4
  %v6006 = vshll.u32 %v5717, 16
  %v6008 = vrot.slane %v6006, 5
  %v6009 = vor.u32 %v6005, %v6008
  %v6010 = vrot.slane %v6009, 4
  %v6012 = vshll.u32 %v5718, 16
  %v6014 = vrot.slane %v6012, 5
  %v6015 = vsel %vm1475, %v6010, %v6014
  %v6016 = vshrl.u32 %v5718, 16
  %v6018 = vrot.slane %v6016, 4
  %v6019 = vor.u32 %v6018, %v6014
  %v6020 = vrot.slane %v6019, 4
  %v6022 = vshll.u32 %v5719, 16
  %v6024 = vrot.slane %v6022, 5
  %v6025 = vsel %vm1475, %v6020, %v6024
  %v6027 = vshrl.u32 %v5720, 16
  %v6029 = vrot.slane %v6027, 4
  %v6030 = vshll.u32 %v5720, 16
  %v6032 = vrot.slane %v6030, 5
  %v6033 = vor.u32 %v6029, %v6032
  %v6034 = vrot.slane %v6033, 4
  %v6036 = vshll.u32 %v5721, 16
  %v6038 = vrot.slane %v6036, 5
  %v6039 = vsel %vm1475, %v6034, %v6038
  %v6040 = vshrl.u32 %v5721, 16
  %v6042 = vrot.slane %v6040, 4
  %v6043 = vor.u32 %v6042, %v6038
  %v6044 = vrot.slane %v6043, 4
  %v6046 = vshll.u32 %v5722, 16
  %v6048 = vrot.slane %v6046, 5
  %v6049 = vsel %vm1475, %v6044, %v6048
  %v6051 = vshrl.u32 %v5723, 16
  %v6053 = vrot.slane %v6051, 4
  %v6054 = vshll.u32 %v5723, 16
  %v6056 = vrot.slane %v6054, 5
  %v6057 = vor.u32 %v6053, %v6056
  %v6058 = vrot.slane %v6057, 4
  %v6060 = vshll.u32 %v5724, 16
  %v6062 = vrot.slane %v6060, 5
  %v6063 = vsel %vm1475, %v6058, %v6062
  %v6064 = vshrl.u32 %v5724, 16
  %v6066 = vrot.slane %v6064, 4
  %v6067 = vor.u32 %v6066, %v6062
  %v6068 = vrot.slane %v6067, 4
  %v6070 = vshll.u32 %v5725, 16
  %v6072 = vrot.slane %v6070, 5
  %v6073 = vsel %vm1475, %v6068, %v6072
  %v6075 = vshrl.u32 %v5726, 16
  %v6077 = vrot.slane %v6075, 4
  %v6078 = vshll.u32 %v5726, 16
  %v6080 = vrot.slane %v6078, 5
  %v6081 = vor.u32 %v6077, %v6080
  %v6082 = vrot.slane %v6081, 4
  %v6084 = vshll.u32 %v5727, 16
  %v6086 = vrot.slane %v6084, 5
  %v6087 = vsel %vm1475, %v6082, %v6086
  %v6088 = vshrl.u32 %v5727, 16
  %v6090 = vrot.slane %v6088, 4
  %v6091 = vor.u32 %v6090, %v6086
  %v6092 = vrot.slane %v6091, 4
  %v6094 = vshll.u32 %v5728, 16
  %v6096 = vrot.slane %v6094, 5
  %v6097 = vsel %vm1475, %v6092, %v6096
  %v6099 = vshrl.u32 %v5729, 16
  %v6101 = vrot.slane %v6099, 4
  %v6102 = vshll.u32 %v5729, 16
  %v6104 = vrot.slane %v6102, 5
  %v6105 = vor.u32 %v6101, %v6104
  %v6106 = vrot.slane %v6105, 4
  %v6108 = vshll.u32 %v5730, 16
  %v6110 = vrot.slane %v6108, 5
  %v6111 = vsel %vm1475, %v6106, %v6110
  %v6112 = vshrl.u32 %v5730, 16
  %v6114 = vrot.slane %v6112, 4
  %v6115 = vor.u32 %v6114, %v6110
  %v6116 = vrot.slane %v6115, 4
  %v6118 = vshll.u32 %v5731, 16
  %v6120 = vrot.slane %v6118, 5
  %v6121 = vsel %vm1475, %v6116, %v6120
  %v6123 = vshrl.u32 %v5732, 16
  %v6125 = vrot.slane %v6123, 4
  %v6126 = vshll.u32 %v5732, 16
  %v6128 = vrot.slane %v6126, 5
  %v6129 = vor.u32 %v6125, %v6128
  %v6130 = vrot.slane %v6129, 4
  %v6132 = vshll.u32 %v5733, 16
  %v6134 = vrot.slane %v6132, 5
  %v6135 = vsel %vm1475, %v6130, %v6134
  %v6136 = vshrl.u32 %v5733, 16
  %v6138 = vrot.slane %v6136, 4
  %v6139 = vor.u32 %v6138, %v6134
  %v6140 = vrot.slane %v6139, 4
  %v6142 = vshll.u32 %v5734, 16
  %v6144 = vrot.slane %v6142, 5
  %v6145 = vsel %vm1475, %v6140, %v6144
  %v6147 = vshrl.u32 %v5735, 16
  %v6149 = vrot.slane %v6147, 4
  %v6150 = vshll.u32 %v5735, 16
  %v6152 = vrot.slane %v6150, 5
  %v6153 = vor.u32 %v6149, %v6152
  %v6154 = vrot.slane %v6153, 4
  %v6156 = vshll.u32 %v5736, 16
  %v6158 = vrot.slane %v6156, 5
  %v6159 = vsel %vm1475, %v6154, %v6158
  %v6160 = vshrl.u32 %v5736, 16
  %v6162 = vrot.slane %v6160, 4
  %v6163 = vor.u32 %v6162, %v6158
  %v6164 = vrot.slane %v6163, 4
  %v6166 = vshll.u32 %v5737, 16
  %v6168 = vrot.slane %v6166, 5
  %v6169 = vsel %vm1475, %v6164, %v6168
  %v6171 = vshrl.u32 %v5738, 16
  %v6173 = vrot.slane %v6171, 4
  %v6174 = vshll.u32 %v5738, 16
  %v6176 = vrot.slane %v6174, 5
  %v6177 = vor.u32 %v6173, %v6176
  %v6178 = vrot.slane %v6177, 4
  %v6180 = vshll.u32 %v5739, 16
  %v6182 = vrot.slane %v6180, 5
  %v6183 = vsel %vm1475, %v6178, %v6182
  %v6184 = vshrl.u32 %v5739, 16
  %v6186 = vrot.slane %v6184, 4
  %v6187 = vor.u32 %v6186, %v6182
  %v6188 = vrot.slane %v6187, 4
  %v6190 = vshll.u32 %v5740, 16
  %v6192 = vrot.slane %v6190, 5
  %v6193 = vsel %vm1475, %v6188, %v6192
  %v6195 = vshrl.u32 %v5741, 16
  %v6197 = vrot.slane %v6195, 4
  %v6198 = vshll.u32 %v5741, 16
  %v6200 = vrot.slane %v6198, 5
  %v6201 = vor.u32 %v6197, %v6200
  %v6202 = vrot.slane %v6201, 4
  %v6204 = vshll.u32 %v5742, 16
  %v6206 = vrot.slane %v6204, 5
  %v6207 = vsel %vm1475, %v6202, %v6206
  %v6208 = vshrl.u32 %v5742, 16
  %v6210 = vrot.slane %v6208, 4
  %v6211 = vor.u32 %v6210, %v6206
  %v6212 = vrot.slane %v6211, 4
  %v6214 = vshll.u32 %v5743, 16
  %v6216 = vrot.slane %v6214, 5
  %v6217 = vsel %vm1475, %v6212, %v6216
  %v6219 = vshrl.u32 %v5744, 16
  %v6221 = vrot.slane %v6219, 4
  %v6222 = vshll.u32 %v5744, 16
  %v6224 = vrot.slane %v6222, 5
  %v6225 = vor.u32 %v6221, %v6224
  %v6226 = vrot.slane %v6225, 4
  %v6228 = vshll.u32 %v5745, 16
  %v6230 = vrot.slane %v6228, 5
  %v6231 = vsel %vm1475, %v6226, %v6230
  %v6232 = vshrl.u32 %v5745, 16
  %v6234 = vrot.slane %v6232, 4
  %v6235 = vor.u32 %v6234, %v6230
  %v6236 = vrot.slane %v6235, 4
  %v6238 = vshll.u32 %v5746, 16
  %v6240 = vrot.slane %v6238, 5
  %v6241 = vsel %vm1475, %v6236, %v6240
  %v6243 = vshrl.u32 %v5747, 16
  %v6245 = vrot.slane %v6243, 4
  %v6246 = vshll.u32 %v5747, 16
  %v6248 = vrot.slane %v6246, 5
  %v6249 = vor.u32 %v6245, %v6248
  %v6250 = vrot.slane %v6249, 4
  %v6252 = vshll.u32 %v5748, 16
  %v6254 = vrot.slane %v6252, 5
  %v6255 = vsel %vm1475, %v6250, %v6254
  %v6256 = vshrl.u32 %v5748, 16
  %v6258 = vrot.slane %v6256, 4
  %v6259 = vor.u32 %v6258, %v6254
  %v6260 = vrot.slane %v6259, 4
  %v6262 = vshll.u32 %v5749, 16
  %v6264 = vrot.slane %v6262, 5
  %v6265 = vsel %vm1475, %v6260, %v6264
  %v6267 = vshrl.u32 %v5750, 16
  %v6269 = vrot.slane %v6267, 4
  %v6270 = vshll.u32 %v5750, 16
  %v6272 = vrot.slane %v6270, 5
  %v6273 = vor.u32 %v6269, %v6272
  %v6274 = vrot.slane %v6273, 4
  %v6276 = vshll.u32 %v5751, 16
  %v6278 = vrot.slane %v6276, 5
  %v6279 = vsel %vm1475, %v6274, %v6278
  %v6280 = vshrl.u32 %v5751, 16
  %v6282 = vrot.slane %v6280, 4
  %v6283 = vor.u32 %v6282, %v6278
  %v6284 = vrot.slane %v6283, 4
  %v6286 = vshll.u32 %v5752, 16
  %v6288 = vrot.slane %v6286, 5
  %v6289 = vsel %vm1475, %v6284, %v6288
  %v6291 = vshrl.u32 %v5753, 16
  %v6293 = vrot.slane %v6291, 4
  %v6294 = vshll.u32 %v5753, 16
  %v6296 = vrot.slane %v6294, 5
  %v6297 = vor.u32 %v6293, %v6296
  %v6298 = vrot.slane %v6297, 4
  %v6300 = vshll.u32 %v5754, 16
  %v6302 = vrot.slane %v6300, 5
  %v6303 = vsel %vm1475, %v6298, %v6302
  %v6304 = vshrl.u32 %v5754, 16
  %v6306 = vrot.slane %v6304, 4
  %v6307 = vor.u32 %v6306, %v6302
  %v6308 = vrot.slane %v6307, 4
  %v6310 = vshll.u32 %v5755, 16
  %v6312 = vrot.slane %v6310, 5
  %v6313 = vsel %vm1475, %v6308, %v6312
  %v6315 = vshrl.u32 %v5756, 16
  %v6317 = vrot.slane %v6315, 4
  %v6318 = vshll.u32 %v5756, 16
  %v6320 = vrot.slane %v6318, 5
  %v6321 = vor.u32 %v6317, %v6320
  %v6322 = vrot.slane %v6321, 4
  %v6324 = vshll.u32 %v5757, 16
  %v6326 = vrot.slane %v6324, 5
  %v6327 = vsel %vm1475, %v6322, %v6326
  %v6328 = vshrl.u32 %v5757, 16
  %v6330 = vrot.slane %v6328, 4
  %v6331 = vor.u32 %v6330, %v6326
  %v6332 = vrot.slane %v6331, 4
  %v6334 = vshll.u32 %v5758, 16
  %v6336 = vrot.slane %v6334, 5
  %v6337 = vsel %vm1475, %v6332, %v6336
  %v6339 = vshrl.u32 %v5759, 16
  %v6341 = vrot.slane %v6339, 4
  %v6342 = vshll.u32 %v5759, 16
  %v6344 = vrot.slane %v6342, 5
  %v6345 = vor.u32 %v6341, %v6344
  %v6346 = vrot.slane %v6345, 4
  %v6348 = vshll.u32 %v5760, 16
  %v6350 = vrot.slane %v6348, 5
  %v6351 = vsel %vm1475, %v6346, %v6350
  %v6352 = vshrl.u32 %v5760, 16
  %v6354 = vrot.slane %v6352, 4
  %v6355 = vor.u32 %v6354, %v6350
  %v6356 = vrot.slane %v6355, 4
  %v6358 = vshll.u32 %v5761, 16
  %v6360 = vrot.slane %v6358, 5
  %v6361 = vsel %vm1475, %v6356, %v6360
  %v6363 = vshrl.u32 %v5762, 16
  %v6365 = vrot.slane %v6363, 4
  %v6366 = vshll.u32 %v5762, 16
  %v6368 = vrot.slane %v6366, 5
  %v6369 = vor.u32 %v6365, %v6368
  %v6370 = vrot.slane %v6369, 4
  %v6372 = vshll.u32 %v5763, 16
  %v6374 = vrot.slane %v6372, 5
  %v6375 = vsel %vm1475, %v6370, %v6374
  %v6376 = vshrl.u32 %v5763, 16
  %v6378 = vrot.slane %v6376, 4
  %v6379 = vor.u32 %v6378, %v6374
  %v6380 = vrot.slane %v6379, 4
  %v6382 = vshll.u32 %v5764, 16
  %v6384 = vrot.slane %v6382, 5
  %v6385 = vsel %vm1475, %v6380, %v6384
  %v6387 = vshrl.u32 %v5765, 16
  %v6389 = vrot.slane %v6387, 4
  %v6390 = vshll.u32 %v5765, 16
  %v6392 = vrot.slane %v6390, 5
  %v6393 = vor.u32 %v6389, %v6392
  %v6394 = vrot.slane %v6393, 4
  %v6396 = vshll.u32 %v5766, 16
  %v6398 = vrot.slane %v6396, 5
  %v6399 = vsel %vm1475, %v6394, %v6398
  %v6400 = vshrl.u32 %v5766, 16
  %v6402 = vrot.slane %v6400, 4
  %v6403 = vor.u32 %v6402, %v6398
  %v6404 = vrot.slane %v6403, 4
  %v6406 = vshll.u32 %v5767, 16
  %v6408 = vrot.slane %v6406, 5
  %v6409 = vsel %vm1475, %v6404, %v6408
  %v6411 = vshrl.u32 %v5768, 16
  %v6413 = vrot.slane %v6411, 4
  %v6414 = vshll.u32 %v5768, 16
  %v6416 = vrot.slane %v6414, 5
  %v6417 = vor.u32 %v6413, %v6416
  %v6418 = vrot.slane %v6417, 4
  %v6420 = vshll.u32 %v5769, 16
  %v6422 = vrot.slane %v6420, 5
  %v6423 = vsel %vm1475, %v6418, %v6422
  %v6424 = vshrl.u32 %v5769, 16
  %v6426 = vrot.slane %v6424, 4
  %v6427 = vor.u32 %v6426, %v6422
  %v6428 = vrot.slane %v6427, 4
  %v6430 = vshll.u32 %v5770, 16
  %v6432 = vrot.slane %v6430, 5
  %v6433 = vsel %vm1475, %v6428, %v6432
  %v6435 = vshrl.u32 %v5771, 16
  %v6437 = vrot.slane %v6435, 4
  %v6438 = vshll.u32 %v5771, 16
  %v6440 = vrot.slane %v6438, 5
  %v6441 = vor.u32 %v6437, %v6440
  %v6442 = vrot.slane %v6441, 4
  %v6444 = vshll.u32 %v5772, 16
  %v6446 = vrot.slane %v6444, 5
  %v6447 = vsel %vm1475, %v6442, %v6446
  %v6448 = vshrl.u32 %v5772, 16
  %v6450 = vrot.slane %v6448, 4
  %v6451 = vor.u32 %v6450, %v6446
  %v6452 = vrot.slane %v6451, 4
  %v6454 = vshll.u32 %v5773, 16
  %v6456 = vrot.slane %v6454, 5
  %v6457 = vsel %vm1475, %v6452, %v6456
  %v6459 = vshrl.u32 %v5774, 16
  %v6461 = vrot.slane %v6459, 4
  %v6462 = vshll.u32 %v5774, 16
  %v6464 = vrot.slane %v6462, 5
  %v6465 = vor.u32 %v6461, %v6464
  %v6466 = vrot.slane %v6465, 4
  %v6468 = vshll.u32 %v5775, 16
  %v6470 = vrot.slane %v6468, 5
  %v6471 = vsel %vm1475, %v6466, %v6470
  %v6472 = vshrl.u32 %v5775, 16
  %v6474 = vrot.slane %v6472, 4
  %v6475 = vor.u32 %v6474, %v6470
  %v6476 = vrot.slane %v6475, 4
  %v6478 = vshll.u32 %v5776, 16
  %v6480 = vrot.slane %v6478, 5
  %v6481 = vsel %vm1475, %v6476, %v6480
  %v6483 = vshrl.u32 %v5777, 16
  %v6485 = vrot.slane %v6483, 4
  %v6486 = vshll.u32 %v5777, 16
  %v6488 = vrot.slane %v6486, 5
  %v6489 = vor.u32 %v6485, %v6488
  %v6490 = vrot.slane %v6489, 4
  %v6492 = vshll.u32 %v5778, 16
  %v6494 = vrot.slane %v6492, 5
  %v6495 = vsel %vm1475, %v6490, %v6494
  %v6496 = vshrl.u32 %v5778, 16
  %v6498 = vrot.slane %v6496, 4
  %v6499 = vor.u32 %v6498, %v6494
  %v6500 = vrot.slane %v6499, 4
  %v6502 = vshll.u32 %v5779, 16
  %v6504 = vrot.slane %v6502, 5
  %v6505 = vsel %vm1475, %v6500, %v6504
  %v6507 = vshrl.u32 %v5780, 16
  %v6509 = vrot.slane %v6507, 4
  %v6510 = vshll.u32 %v5780, 16
  %v6512 = vrot.slane %v6510, 5
  %v6513 = vor.u32 %v6509, %v6512
  %v6514 = vrot.slane %v6513, 4
  %v6516 = vshll.u32 %v5781, 16
  %v6518 = vrot.slane %v6516, 5
  %v6519 = vsel %vm1475, %v6514, %v6518
  %v6520 = vshrl.u32 %v5781, 16
  %v6522 = vrot.slane %v6520, 4
  %v6523 = vor.u32 %v6522, %v6518
  %v6524 = vrot.slane %v6523, 4
  %v6526 = vshll.u32 %v5782, 16
  %v6528 = vrot.slane %v6526, 5
  %v6529 = vsel %vm1475, %v6524, %v6528
  %v6531 = vshrl.u32 %v5783, 16
  %v6533 = vrot.slane %v6531, 4
  %v6534 = vshll.u32 %v5783, 16
  %v6536 = vrot.slane %v6534, 5
  %v6537 = vor.u32 %v6533, %v6536
  %v6538 = vrot.slane %v6537, 4
  %v6540 = vshll.u32 %v5784, 16
  %v6542 = vrot.slane %v6540, 5
  %v6543 = vsel %vm1475, %v6538, %v6542
  %v6544 = vshrl.u32 %v5784, 16
  %v6546 = vrot.slane %v6544, 4
  %v6547 = vor.u32 %v6546, %v6542
  %v6548 = vrot.slane %v6547, 4
  %v6550 = vshll.u32 %v5785, 16
  %v6552 = vrot.slane %v6550, 5
  %v6553 = vsel %vm1475, %v6548, %v6552
  %v6554 = vld [vmem:[%s1149] sm:$0xe]
  %v6555 = vld [vmem:[%s1149 + $0xc] sm:$0xe]
  %v6556 = vld [vmem:[%s1149 + $0x18] sm:$0xe]
  %v6557 = vld [vmem:[%s1149 + $0x24] sm:$0xe]
  %v6558 = vld [vmem:[%s1149 + $0x30] sm:$0xe]
  %v6559 = vld [vmem:[%s1149 + $0x3c] sm:$0xe]
  %v6560 = vld [vmem:[%s1149 + $0x48] sm:$0xe]
  %v6561 = vld [vmem:[%s1149 + $0x54] sm:$0xe]
  %v6562 = vld [vmem:[%s1149 + $0x60] sm:$0xe]
  %v6563 = vld [vmem:[%s1149 + $0x6c] sm:$0xe]
  %v6564 = vld [vmem:[%s1149 + $0x78] sm:$0xe]
  %v6565 = vld [vmem:[%s1149 + $0x84] sm:$0xe]
  %v6566 = vld [vmem:[%s1149 + $0x90] sm:$0xe]
  %v6567 = vld [vmem:[%s1149 + $0x9c] sm:$0xe]
  %v6568 = vld [vmem:[%s1149 + $0xa8] sm:$0xe]
  %v6569 = vld [vmem:[%s1149 + $0xb4] sm:$0xe]
  %v6570 = vld [vmem:[%s1149 + $0xd8] sm:$0xe]
  %v6571 = vld [vmem:[%s1149 + $0xe4] sm:$0xe]
  %v6572 = vld [vmem:[%s1149 + $0xf0] sm:$0xe]
  %v6573 = vld [vmem:[%s1149 + $0xfc] sm:$0xe]
  %v6574 = vld [vmem:[%s1149 + $0x108] sm:$0xe]
  %v6575 = vld [vmem:[%s1149 + $0x114] sm:$0xe]
  %v6576 = vld [vmem:[%s1149 + $0x120] sm:$0xe]
  %v6577 = vld [vmem:[%s1149 + $0x12c] sm:$0xe]
  %v6578 = vld [vmem:[%s1149 + $0x138] sm:$0xe]
  %v6579 = vld [vmem:[%s1149 + $0x144] sm:$0xe]
  %v6580 = vld [vmem:[%s1149 + $0x150] sm:$0xe]
  %v6581 = vld [vmem:[%s1149 + $0x15c] sm:$0xe]
  %v6582 = vld [vmem:[%s1149 + $0x168] sm:$0xe]
  %v6583 = vld [vmem:[%s1149 + $0x174] sm:$0xe]
  %v6584 = vld [vmem:[%s1149 + $0x180] sm:$0xe]
  %v6585 = vld [vmem:[%s1149 + $0x18c] sm:$0xe]
  %v6682 = vrot.slane %v6554, 5
  %v6683 = vrot.slane %v6682, 4
  %v6684 = vrot.slane %v5691, 5
  %v6685 = vsel %vm5465, %v6683, %v6684
  %v6686 = vrot.slane %v6684, 4
  %v6687 = vrot.slane %v5692, 5
  %v6688 = vsel %vm5465, %v6686, %v6687
  %v6689 = vrot.slane %v6555, 5
  %v6690 = vrot.slane %v6689, 4
  %v6691 = vrot.slane %v5694, 5
  %v6692 = vsel %vm5465, %v6690, %v6691
  %v6693 = vrot.slane %v6691, 4
  %v6694 = vrot.slane %v5695, 5
  %v6695 = vsel %vm5465, %v6693, %v6694
  %v6696 = vrot.slane %v6556, 5
  %v6697 = vrot.slane %v6696, 4
  %v6698 = vrot.slane %v5697, 5
  %v6699 = vsel %vm5465, %v6697, %v6698
  %v6700 = vrot.slane %v6698, 4
  %v6701 = vrot.slane %v5698, 5
  %v6702 = vsel %vm5465, %v6700, %v6701
  %v6703 = vrot.slane %v6557, 5
  %v6704 = vrot.slane %v6703, 4
  %v6705 = vrot.slane %v5700, 5
  %v6706 = vsel %vm5465, %v6704, %v6705
  %v6707 = vrot.slane %v6705, 4
  %v6708 = vrot.slane %v5701, 5
  %v6709 = vsel %vm5465, %v6707, %v6708
  %v6710 = vrot.slane %v6558, 5
  %v6711 = vrot.slane %v6710, 4
  %v6712 = vrot.slane %v5703, 5
  %v6713 = vsel %vm5465, %v6711, %v6712
  %v6714 = vrot.slane %v6712, 4
  %v6715 = vrot.slane %v5704, 5
  %v6716 = vsel %vm5465, %v6714, %v6715
  %v6717 = vrot.slane %v6559, 5
  %v6718 = vrot.slane %v6717, 4
  %v6719 = vrot.slane %v5706, 5
  %v6720 = vsel %vm5465, %v6718, %v6719
  %v6721 = vrot.slane %v6719, 4
  %v6722 = vrot.slane %v5707, 5
  %v6723 = vsel %vm5465, %v6721, %v6722
  %v6724 = vrot.slane %v6560, 5
  %v6725 = vrot.slane %v6724, 4
  %v6726 = vrot.slane %v5709, 5
  %v6727 = vsel %vm5465, %v6725, %v6726
  %v6728 = vrot.slane %v6726, 4
  %v6729 = vrot.slane %v5710, 5
  %v6730 = vsel %vm5465, %v6728, %v6729
  %v6731 = vrot.slane %v6561, 5
  %v6732 = vrot.slane %v6731, 4
  %v6733 = vrot.slane %v5712, 5
  %v6734 = vsel %vm5465, %v6732, %v6733
  %v6735 = vrot.slane %v6733, 4
  %v6736 = vrot.slane %v5713, 5
  %v6737 = vsel %vm5465, %v6735, %v6736
  %v6738 = vrot.slane %v6562, 5
  %v6739 = vrot.slane %v6738, 4
  %v6740 = vrot.slane %v5715, 5
  %v6741 = vsel %vm5465, %v6739, %v6740
  %v6742 = vrot.slane %v6740, 4
  %v6743 = vrot.slane %v5716, 5
  %v6744 = vsel %vm5465, %v6742, %v6743
  %v6745 = vrot.slane %v6563, 5
  %v6746 = vrot.slane %v6745, 4
  %v6747 = vrot.slane %v5718, 5
  %v6748 = vsel %vm5465, %v6746, %v6747
  %v6749 = vrot.slane %v6747, 4
  %v6750 = vrot.slane %v5719, 5
  %v6751 = vsel %vm5465, %v6749, %v6750
  %v6752 = vrot.slane %v6564, 5
  %v6753 = vrot.slane %v6752, 4
  %v6754 = vrot.slane %v5721, 5
  %v6755 = vsel %vm5465, %v6753, %v6754
  %v6756 = vrot.slane %v6754, 4
  %v6757 = vrot.slane %v5722, 5
  %v6758 = vsel %vm5465, %v6756, %v6757
  %v6759 = vrot.slane %v6565, 5
  %v6760 = vrot.slane %v6759, 4
  %v6761 = vrot.slane %v5724, 5
  %v6762 = vsel %vm5465, %v6760, %v6761
  %v6763 = vrot.slane %v6761, 4
  %v6764 = vrot.slane %v5725, 5
  %v6765 = vsel %vm5465, %v6763, %v6764
  %v6766 = vrot.slane %v6566, 5
  %v6767 = vrot.slane %v6766, 4
  %v6768 = vrot.slane %v5727, 5
  %v6769 = vsel %vm5465, %v6767, %v6768
  %v6770 = vrot.slane %v6768, 4
  %v6771 = vrot.slane %v5728, 5
  %v6772 = vsel %vm5465, %v6770, %v6771
  %v6773 = vrot.slane %v6567, 5
  %v6774 = vrot.slane %v6773, 4
  %v6775 = vrot.slane %v5730, 5
  %v6776 = vsel %vm5465, %v6774, %v6775
  %v6777 = vrot.slane %v6775, 4
  %v6778 = vrot.slane %v5731, 5
  %v6779 = vsel %vm5465, %v6777, %v6778
  %v6780 = vrot.slane %v6568, 5
  %v6781 = vrot.slane %v6780, 4
  %v6782 = vrot.slane %v5733, 5
  %v6783 = vsel %vm5465, %v6781, %v6782
  %v6784 = vrot.slane %v6782, 4
  %v6785 = vrot.slane %v5734, 5
  %v6786 = vsel %vm5465, %v6784, %v6785
  %v6787 = vrot.slane %v6569, 5
  %v6788 = vrot.slane %v6787, 4
  %v6789 = vrot.slane %v5736, 5
  %v6790 = vsel %vm5465, %v6788, %v6789
  %v6791 = vrot.slane %v6789, 4
  %v6792 = vrot.slane %v5737, 5
  %v6793 = vsel %vm5465, %v6791, %v6792
  %v6794 = vrot.slane %v6570, 5
  %v6795 = vrot.slane %v6794, 4
  %v6796 = vrot.slane %v5739, 5
  %v6797 = vsel %vm5465, %v6795, %v6796
  %v6798 = vrot.slane %v6796, 4
  %v6799 = vrot.slane %v5740, 5
  %v6800 = vsel %vm5465, %v6798, %v6799
  %v6801 = vrot.slane %v6571, 5
  %v6802 = vrot.slane %v6801, 4
  %v6803 = vrot.slane %v5742, 5
  %v6804 = vsel %vm5465, %v6802, %v6803
  %v6805 = vrot.slane %v6803, 4
  %v6806 = vrot.slane %v5743, 5
  %v6807 = vsel %vm5465, %v6805, %v6806
  %v6808 = vrot.slane %v6572, 5
  %v6809 = vrot.slane %v6808, 4
  %v6810 = vrot.slane %v5745, 5
  %v6811 = vsel %vm5465, %v6809, %v6810
  %v6812 = vrot.slane %v6810, 4
  %v6813 = vrot.slane %v5746, 5
  %v6814 = vsel %vm5465, %v6812, %v6813
  %v6815 = vrot.slane %v6573, 5
  %v6816 = vrot.slane %v6815, 4
  %v6817 = vrot.slane %v5748, 5
  %v6818 = vsel %vm5465, %v6816, %v6817
  %v6819 = vrot.slane %v6817, 4
  %v6820 = vrot.slane %v5749, 5
  %v6821 = vsel %vm5465, %v6819, %v6820
  %v6822 = vrot.slane %v6574, 5
  %v6823 = vrot.slane %v6822, 4
  %v6824 = vrot.slane %v5751, 5
  %v6825 = vsel %vm5465, %v6823, %v6824
  %v6826 = vrot.slane %v6824, 4
  %v6827 = vrot.slane %v5752, 5
  %v6828 = vsel %vm5465, %v6826, %v6827
  %v6829 = vrot.slane %v6575, 5
  %v6830 = vrot.slane %v6829, 4
  %v6831 = vrot.slane %v5754, 5
  %v6832 = vsel %vm5465, %v6830, %v6831
  %v6833 = vrot.slane %v6831, 4
  %v6834 = vrot.slane %v5755, 5
  %v6835 = vsel %vm5465, %v6833, %v6834
  %v6836 = vrot.slane %v6576, 5
  %v6837 = vrot.slane %v6836, 4
  %v6838 = vrot.slane %v5757, 5
  %v6839 = vsel %vm5465, %v6837, %v6838
  %v6840 = vrot.slane %v6838, 4
  %v6841 = vrot.slane %v5758, 5
  %v6842 = vsel %vm5465, %v6840, %v6841
  %v6843 = vrot.slane %v6577, 5
  %v6844 = vrot.slane %v6843, 4
  %v6845 = vrot.slane %v5760, 5
  %v6846 = vsel %vm5465, %v6844, %v6845
  %v6847 = vrot.slane %v6845, 4
  %v6848 = vrot.slane %v5761, 5
  %v6849 = vsel %vm5465, %v6847, %v6848
  %v6850 = vrot.slane %v6578, 5
  %v6851 = vrot.slane %v6850, 4
  %v6852 = vrot.slane %v5763, 5
  %v6853 = vsel %vm5465, %v6851, %v6852
  %v6854 = vrot.slane %v6852, 4
  %v6855 = vrot.slane %v5764, 5
  %v6856 = vsel %vm5465, %v6854, %v6855
  %v6857 = vrot.slane %v6579, 5
  %v6858 = vrot.slane %v6857, 4
  %v6859 = vrot.slane %v5766, 5
  %v6860 = vsel %vm5465, %v6858, %v6859
  %v6861 = vrot.slane %v6859, 4
  %v6862 = vrot.slane %v5767, 5
  %v6863 = vsel %vm5465, %v6861, %v6862
  %v6864 = vrot.slane %v6580, 5
  %v6865 = vrot.slane %v6864, 4
  %v6866 = vrot.slane %v5769, 5
  %v6867 = vsel %vm5465, %v6865, %v6866
  %v6868 = vrot.slane %v6866, 4
  %v6869 = vrot.slane %v5770, 5
  %v6870 = vsel %vm5465, %v6868, %v6869
  %v6871 = vrot.slane %v6581, 5
  %v6872 = vrot.slane %v6871, 4
  %v6873 = vrot.slane %v5772, 5
  %v6874 = vsel %vm5465, %v6872, %v6873
  %v6875 = vrot.slane %v6873, 4
  %v6876 = vrot.slane %v5773, 5
  %v6877 = vsel %vm5465, %v6875, %v6876
  %v6878 = vrot.slane %v6582, 5
  %v6879 = vrot.slane %v6878, 4
  %v6880 = vrot.slane %v5775, 5
  %v6881 = vsel %vm5465, %v6879, %v6880
  %v6882 = vrot.slane %v6880, 4
  %v6883 = vrot.slane %v5776, 5
  %v6884 = vsel %vm5465, %v6882, %v6883
  %v6885 = vrot.slane %v6583, 5
  %v6886 = vrot.slane %v6885, 4
  %v6887 = vrot.slane %v5778, 5
  %v6888 = vsel %vm5465, %v6886, %v6887
  %v6889 = vrot.slane %v6887, 4
  %v6890 = vrot.slane %v5779, 5
  %v6891 = vsel %vm5465, %v6889, %v6890
  %v6892 = vrot.slane %v6584, 5
  %v6893 = vrot.slane %v6892, 4
  %v6894 = vrot.slane %v5781, 5
  %v6895 = vsel %vm5465, %v6893, %v6894
  %v6896 = vrot.slane %v6894, 4
  %v6897 = vrot.slane %v5782, 5
  %v6898 = vsel %vm5465, %v6896, %v6897
  %v6899 = vrot.slane %v6585, 5
  %v6900 = vrot.slane %v6899, 4
  %v6901 = vrot.slane %v5784, 5
  %v6902 = vsel %vm5465, %v6900, %v6901
  %v6903 = vrot.slane %v6901, 4
  %v6904 = vrot.slane %v5785, 5
  %v6905 = vsel %vm5465, %v6903, %v6904
  %v6906 = vunpack.c.l.b16 %v4580
  %v6907 = vunpack.c.l.b16 %v4590
  %v6908 = vunpack.c.l.b16 %v4604
  %v6909 = vunpack.c.l.b16 %v4614
  %v6910 = vunpack.c.l.b16 %v4628
  %v6911 = vunpack.c.l.b16 %v4638
  %v6912 = vunpack.c.l.b16 %v4652
  %v6913 = vunpack.c.l.b16 %v4662
  %v6914 = vunpack.c.l.b16 %v4676
  %v6915 = vunpack.c.l.b16 %v4686
  %v6916 = vunpack.c.l.b16 %v4700
  %v6917 = vunpack.c.l.b16 %v4710
  %v6918 = vunpack.c.l.b16 %v4724
  %v6919 = vunpack.c.l.b16 %v4734
  %v6920 = vunpack.c.l.b16 %v4748
  %v6921 = vunpack.c.l.b16 %v4758
  %v6922 = vunpack.c.l.b16 %v4772
  %v6923 = vunpack.c.l.b16 %v4782
  %v6924 = vunpack.c.l.b16 %v4796
  %v6925 = vunpack.c.l.b16 %v4806
  %v6926 = vunpack.c.l.b16 %v4820
  %v6927 = vunpack.c.l.b16 %v4830
  %v6928 = vunpack.c.l.b16 %v4844
  %v6929 = vunpack.c.l.b16 %v4854
  %v6930 = vunpack.c.l.b16 %v4868
  %v6931 = vunpack.c.l.b16 %v4878
  %v6932 = vunpack.c.l.b16 %v4892
  %v6933 = vunpack.c.l.b16 %v4902
  %v6934 = vunpack.c.l.b16 %v4916
  %v6935 = vunpack.c.l.b16 %v4926
  %v6936 = vunpack.c.l.b16 %v4940
  %v6937 = vunpack.c.l.b16 %v4950
  %v6938 = vunpack.c.l.b16 %v4964
  %v6939 = vunpack.c.l.b16 %v4974
  %v6940 = vunpack.c.l.b16 %v4988
  %v6941 = vunpack.c.l.b16 %v4998
  %v6942 = vunpack.c.l.b16 %v5012
  %v6943 = vunpack.c.l.b16 %v5022
  %v6944 = vunpack.c.l.b16 %v5036
  %v6945 = vunpack.c.l.b16 %v5046
  %v6946 = vunpack.c.l.b16 %v5060
  %v6947 = vunpack.c.l.b16 %v5070
  %v6948 = vunpack.c.l.b16 %v5084
  %v6949 = vunpack.c.l.b16 %v5094
  %v6950 = vunpack.c.l.b16 %v5108
  %v6951 = vunpack.c.l.b16 %v5118
  %v6952 = vunpack.c.l.b16 %v5132
  %v6953 = vunpack.c.l.b16 %v5142
  %v6954 = vunpack.c.l.b16 %v5156
  %v6955 = vunpack.c.l.b16 %v5166
  %v6956 = vunpack.c.l.b16 %v5180
  %v6957 = vunpack.c.l.b16 %v5190
  %v6958 = vunpack.c.l.b16 %v5204
  %v6959 = vunpack.c.l.b16 %v5214
  %v6960 = vunpack.c.l.b16 %v5228
  %v6961 = vunpack.c.l.b16 %v5238
  %v6962 = vunpack.c.l.b16 %v5252
  %v6963 = vunpack.c.l.b16 %v5262
  %v6964 = vunpack.c.l.b16 %v5276
  %v6965 = vunpack.c.l.b16 %v5286
  %v6966 = vunpack.c.l.b16 %v5300
  %v6967 = vunpack.c.l.b16 %v5310
  %v6968 = vunpack.c.l.b16 %v5324
  %v6969 = vunpack.c.l.b16 %v5334
  %v6970 = vpack.c.b16 %v6907, %v6906
  %v6971 = vpack.c.b16 %v6909, %v6908
  %v6972 = vpack.c.b16 %v6911, %v6910
  %v6973 = vpack.c.b16 %v6913, %v6912
  %v6974 = vpack.c.b16 %v6915, %v6914
  %v6975 = vpack.c.b16 %v6917, %v6916
  %v6976 = vpack.c.b16 %v6919, %v6918
  %v6977 = vpack.c.b16 %v6921, %v6920
  %v6978 = vpack.c.b16 %v6923, %v6922
  %v6979 = vpack.c.b16 %v6925, %v6924
  %v6980 = vpack.c.b16 %v6927, %v6926
  %v6981 = vpack.c.b16 %v6929, %v6928
  %v6982 = vpack.c.b16 %v6931, %v6930
  %v6983 = vpack.c.b16 %v6933, %v6932
  %v6984 = vpack.c.b16 %v6935, %v6934
  %v6985 = vpack.c.b16 %v6937, %v6936
  %v6986 = vpack.c.b16 %v6939, %v6938
  %v6987 = vpack.c.b16 %v6941, %v6940
  %v6988 = vpack.c.b16 %v6943, %v6942
  %v6989 = vpack.c.b16 %v6945, %v6944
  %v6990 = vpack.c.b16 %v6947, %v6946
  %v6991 = vpack.c.b16 %v6949, %v6948
  %v6992 = vpack.c.b16 %v6951, %v6950
  %v6993 = vpack.c.b16 %v6953, %v6952
  %v6994 = vpack.c.b16 %v6955, %v6954
  %v6995 = vpack.c.b16 %v6957, %v6956
  %v6996 = vpack.c.b16 %v6959, %v6958
  %v6997 = vpack.c.b16 %v6961, %v6960
  %v6998 = vpack.c.b16 %v6963, %v6962
  %v6999 = vpack.c.b16 %v6965, %v6964
  %v7000 = vpack.c.b16 %v6967, %v6966
  %v7001 = vpack.c.b16 %v6969, %v6968
  %v7002 = vunpack.c.l.b16 %v5469
  %v7003 = vunpack.c.l.b16 %v5472
  %v7004 = vunpack.c.l.b16 %v5476
  %v7005 = vunpack.c.l.b16 %v5479
  %v7006 = vunpack.c.l.b16 %v5483
  %v7007 = vunpack.c.l.b16 %v5486
  %v7008 = vunpack.c.l.b16 %v5490
  %v7009 = vunpack.c.l.b16 %v5493
  %v7010 = vunpack.c.l.b16 %v5497
  %v7011 = vunpack.c.l.b16 %v5500
  %v7012 = vunpack.c.l.b16 %v5504
  %v7013 = vunpack.c.l.b16 %v5507
  %v7014 = vunpack.c.l.b16 %v5511
  %v7015 = vunpack.c.l.b16 %v5514
  %v7016 = vunpack.c.l.b16 %v5518
  %v7017 = vunpack.c.l.b16 %v5521
  %v7018 = vunpack.c.l.b16 %v5525
  %v7019 = vunpack.c.l.b16 %v5528
  %v7020 = vunpack.c.l.b16 %v5532
  %v7021 = vunpack.c.l.b16 %v5535
  %v7022 = vunpack.c.l.b16 %v5539
  %v7023 = vunpack.c.l.b16 %v5542
  %v7024 = vunpack.c.l.b16 %v5546
  %v7025 = vunpack.c.l.b16 %v5549
  %v7026 = vunpack.c.l.b16 %v5553
  %v7027 = vunpack.c.l.b16 %v5556
  %v7028 = vunpack.c.l.b16 %v5560
  %v7029 = vunpack.c.l.b16 %v5563
  %v7030 = vunpack.c.l.b16 %v5567
  %v7031 = vunpack.c.l.b16 %v5570
  %v7032 = vunpack.c.l.b16 %v5574
  %v7033 = vunpack.c.l.b16 %v5577
  %v7034 = vunpack.c.l.b16 %v5581
  %v7035 = vunpack.c.l.b16 %v5584
  %v7036 = vunpack.c.l.b16 %v5588
  %v7037 = vunpack.c.l.b16 %v5591
  %v7038 = vunpack.c.l.b16 %v5595
  %v7039 = vunpack.c.l.b16 %v5598
  %v7040 = vunpack.c.l.b16 %v5602
  %v7041 = vunpack.c.l.b16 %v5605
  %v7042 = vunpack.c.l.b16 %v5609
  %v7043 = vunpack.c.l.b16 %v5612
  %v7044 = vunpack.c.l.b16 %v5616
  %v7045 = vunpack.c.l.b16 %v5619
  %v7046 = vunpack.c.l.b16 %v5623
  %v7047 = vunpack.c.l.b16 %v5626
  %v7048 = vunpack.c.l.b16 %v5630
  %v7049 = vunpack.c.l.b16 %v5633
  %v7050 = vunpack.c.l.b16 %v5637
  %v7051 = vunpack.c.l.b16 %v5640
  %v7052 = vunpack.c.l.b16 %v5644
  %v7053 = vunpack.c.l.b16 %v5647
  %v7054 = vunpack.c.l.b16 %v5651
  %v7055 = vunpack.c.l.b16 %v5654
  %v7056 = vunpack.c.l.b16 %v5658
  %v7057 = vunpack.c.l.b16 %v5661
  %v7058 = vunpack.c.l.b16 %v5665
  %v7059 = vunpack.c.l.b16 %v5668
  %v7060 = vunpack.c.l.b16 %v5672
  %v7061 = vunpack.c.l.b16 %v5675
  %v7062 = vunpack.c.l.b16 %v5679
  %v7063 = vunpack.c.l.b16 %v5682
  %v7064 = vunpack.c.l.b16 %v5686
  %v7065 = vunpack.c.l.b16 %v5689
  %v7066 = vpack.c.b16 %v7003, %v7002
  %v7067 = vpack.c.b16 %v7005, %v7004
  %v7068 = vpack.c.b16 %v7007, %v7006
  %v7069 = vpack.c.b16 %v7009, %v7008
  %v7070 = vpack.c.b16 %v7011, %v7010
  %v7071 = vpack.c.b16 %v7013, %v7012
  %v7072 = vpack.c.b16 %v7015, %v7014
  %v7073 = vpack.c.b16 %v7017, %v7016
  %v7074 = vpack.c.b16 %v7019, %v7018
  %v7075 = vpack.c.b16 %v7021, %v7020
  %v7076 = vpack.c.b16 %v7023, %v7022
  %v7077 = vpack.c.b16 %v7025, %v7024
  %v7078 = vpack.c.b16 %v7027, %v7026
  %v7079 = vpack.c.b16 %v7029, %v7028
  %v7080 = vpack.c.b16 %v7031, %v7030
  %v7081 = vpack.c.b16 %v7033, %v7032
  %v7082 = vpack.c.b16 %v7035, %v7034
  %v7083 = vpack.c.b16 %v7037, %v7036
  %v7084 = vpack.c.b16 %v7039, %v7038
  %v7085 = vpack.c.b16 %v7041, %v7040
  %v7086 = vpack.c.b16 %v7043, %v7042
  %v7087 = vpack.c.b16 %v7045, %v7044
  %v7088 = vpack.c.b16 %v7047, %v7046
  %v7089 = vpack.c.b16 %v7049, %v7048
  %v7090 = vpack.c.b16 %v7051, %v7050
  %v7091 = vpack.c.b16 %v7053, %v7052
  %v7092 = vpack.c.b16 %v7055, %v7054
  %v7093 = vpack.c.b16 %v7057, %v7056
  %v7094 = vpack.c.b16 %v7059, %v7058
  %v7095 = vpack.c.b16 %v7061, %v7060
  %v7096 = vpack.c.b16 %v7063, %v7062
  %v7097 = vpack.c.b16 %v7065, %v7064
  %7098 = vrot.lane.b32.xlu0 %v7066, 4
  %v7099 = vpop.permute.xlu0 %7098
  %7100 = vrot.lane.b32.xlu0 %v7067, 4
  %v7101 = vpop.permute.xlu0 %7100
  %7102 = vrot.lane.b32.xlu0 %v7068, 4
  %v7103 = vpop.permute.xlu0 %7102
  %7104 = vrot.lane.b32.xlu0 %v7069, 4
  %v7105 = vpop.permute.xlu0 %7104
  %7106 = vrot.lane.b32.xlu0 %v7070, 4
  %v7107 = vpop.permute.xlu0 %7106
  %7108 = vrot.lane.b32.xlu0 %v7071, 4
  %v7109 = vpop.permute.xlu0 %7108
  %7110 = vrot.lane.b32.xlu0 %v7072, 4
  %v7111 = vpop.permute.xlu0 %7110
  %7112 = vrot.lane.b32.xlu0 %v7073, 4
  %v7113 = vpop.permute.xlu0 %7112
  %7114 = vrot.lane.b32.xlu0 %v7074, 4
  %v7115 = vpop.permute.xlu0 %7114
  %7116 = vrot.lane.b32.xlu0 %v7075, 4
  %v7117 = vpop.permute.xlu0 %7116
  %7118 = vrot.lane.b32.xlu0 %v7076, 4
  %v7119 = vpop.permute.xlu0 %7118
  %7120 = vrot.lane.b32.xlu0 %v7077, 4
  %v7121 = vpop.permute.xlu0 %7120
  %7122 = vrot.lane.b32.xlu0 %v7078, 4
  %v7123 = vpop.permute.xlu0 %7122
  %7124 = vrot.lane.b32.xlu0 %v7079, 4
  %v7125 = vpop.permute.xlu0 %7124
  %7126 = vrot.lane.b32.xlu0 %v7080, 4
  %v7127 = vpop.permute.xlu0 %7126
  %7128 = vrot.lane.b32.xlu0 %v7081, 4
  %v7129 = vpop.permute.xlu0 %7128
  %7130 = vrot.lane.b32.xlu0 %v7082, 4
  %v7131 = vpop.permute.xlu0 %7130
  %7132 = vrot.lane.b32.xlu0 %v7083, 4
  %v7133 = vpop.permute.xlu0 %7132
  %7134 = vrot.lane.b32.xlu0 %v7084, 4
  %v7135 = vpop.permute.xlu0 %7134
  %7136 = vrot.lane.b32.xlu0 %v7085, 4
  %v7137 = vpop.permute.xlu0 %7136
  %7138 = vrot.lane.b32.xlu0 %v7086, 4
  %v7139 = vpop.permute.xlu0 %7138
  %7140 = vrot.lane.b32.xlu0 %v7087, 4
  %v7141 = vpop.permute.xlu0 %7140
  %7142 = vrot.lane.b32.xlu0 %v7088, 4
  %v7143 = vpop.permute.xlu0 %7142
  %7144 = vrot.lane.b32.xlu0 %v7089, 4
  %v7145 = vpop.permute.xlu0 %7144
  %7146 = vrot.lane.b32.xlu0 %v7090, 4
  %v7147 = vpop.permute.xlu0 %7146
  %7148 = vrot.lane.b32.xlu0 %v7091, 4
  %v7149 = vpop.permute.xlu0 %7148
  %7150 = vrot.lane.b32.xlu0 %v7092, 4
  %v7151 = vpop.permute.xlu0 %7150
  %7152 = vrot.lane.b32.xlu0 %v7093, 4
  %v7153 = vpop.permute.xlu0 %7152
  %7154 = vrot.lane.b32.xlu0 %v7094, 4
  %v7155 = vpop.permute.xlu0 %7154
  %7156 = vrot.lane.b32.xlu0 %v7095, 4
  %v7157 = vpop.permute.xlu0 %7156
  %7158 = vrot.lane.b32.xlu0 %v7096, 4
  %v7159 = vpop.permute.xlu0 %7158
  %7160 = vrot.lane.b32.xlu0 %v7097, 4
  %v7161 = vpop.permute.xlu0 %7160
  %v7162 = vunpack.c.l.b16 %v5799
  %v7163 = vunpack.c.l.b16 %v5809
  %v7164 = vunpack.c.l.b16 %v5823
  %v7165 = vunpack.c.l.b16 %v5833
  %v7166 = vunpack.c.l.b16 %v5847
  %v7167 = vunpack.c.l.b16 %v5857
  %v7168 = vunpack.c.l.b16 %v5871
  %v7169 = vunpack.c.l.b16 %v5881
  %v7170 = vunpack.c.l.b16 %v5895
  %v7171 = vunpack.c.l.b16 %v5905
  %v7172 = vunpack.c.l.b16 %v5919
  %v7173 = vunpack.c.l.b16 %v5929
  %v7174 = vunpack.c.l.b16 %v5943
  %v7175 = vunpack.c.l.b16 %v5953
  %v7176 = vunpack.c.l.b16 %v5967
  %v7177 = vunpack.c.l.b16 %v5977
  %v7178 = vunpack.c.l.b16 %v5991
  %v7179 = vunpack.c.l.b16 %v6001
  %v7180 = vunpack.c.l.b16 %v6015
  %v7181 = vunpack.c.l.b16 %v6025
  %v7182 = vunpack.c.l.b16 %v6039
  %v7183 = vunpack.c.l.b16 %v6049
  %v7184 = vunpack.c.l.b16 %v6063
  %v7185 = vunpack.c.l.b16 %v6073
  %v7186 = vunpack.c.l.b16 %v6087
  %v7187 = vunpack.c.l.b16 %v6097
  %v7188 = vunpack.c.l.b16 %v6111
  %v7189 = vunpack.c.l.b16 %v6121
  %v7190 = vunpack.c.l.b16 %v6135
  %v7191 = vunpack.c.l.b16 %v6145
  %v7192 = vunpack.c.l.b16 %v6159
  %v7193 = vunpack.c.l.b16 %v6169
  %v7194 = vunpack.c.l.b16 %v6183
  %v7195 = vunpack.c.l.b16 %v6193
  %v7196 = vunpack.c.l.b16 %v6207
  %v7197 = vunpack.c.l.b16 %v6217
  %v7198 = vunpack.c.l.b16 %v6231
  %v7199 = vunpack.c.l.b16 %v6241
  %v7200 = vunpack.c.l.b16 %v6255
  %v7201 = vunpack.c.l.b16 %v6265
  %v7202 = vunpack.c.l.b16 %v6279
  %v7203 = vunpack.c.l.b16 %v6289
  %v7204 = vunpack.c.l.b16 %v6303
  %v7205 = vunpack.c.l.b16 %v6313
  %v7206 = vunpack.c.l.b16 %v6327
  %v7207 = vunpack.c.l.b16 %v6337
  %v7208 = vunpack.c.l.b16 %v6351
  %v7209 = vunpack.c.l.b16 %v6361
  %v7210 = vunpack.c.l.b16 %v6375
  %v7211 = vunpack.c.l.b16 %v6385
  %v7212 = vunpack.c.l.b16 %v6399
  %v7213 = vunpack.c.l.b16 %v6409
  %v7214 = vunpack.c.l.b16 %v6423
  %v7215 = vunpack.c.l.b16 %v6433
  %v7216 = vunpack.c.l.b16 %v6447
  %v7217 = vunpack.c.l.b16 %v6457
  %v7218 = vunpack.c.l.b16 %v6471
  %v7219 = vunpack.c.l.b16 %v6481
  %v7220 = vunpack.c.l.b16 %v6495
  %v7221 = vunpack.c.l.b16 %v6505
  %v7222 = vunpack.c.l.b16 %v6519
  %v7223 = vunpack.c.l.b16 %v6529
  %v7224 = vunpack.c.l.b16 %v6543
  %v7225 = vunpack.c.l.b16 %v6553
  %v7226 = vpack.c.b16 %v7163, %v7162
  %v7227 = vpack.c.b16 %v7165, %v7164
  %v7228 = vpack.c.b16 %v7167, %v7166
  %v7229 = vpack.c.b16 %v7169, %v7168
  %v7230 = vpack.c.b16 %v7171, %v7170
  %v7231 = vpack.c.b16 %v7173, %v7172
  %v7232 = vpack.c.b16 %v7175, %v7174
  %v7233 = vpack.c.b16 %v7177, %v7176
  %v7234 = vpack.c.b16 %v7179, %v7178
  %v7235 = vpack.c.b16 %v7181, %v7180
  %v7236 = vpack.c.b16 %v7183, %v7182
  %v7237 = vpack.c.b16 %v7185, %v7184
  %v7238 = vpack.c.b16 %v7187, %v7186
  %v7239 = vpack.c.b16 %v7189, %v7188
  %v7240 = vpack.c.b16 %v7191, %v7190
  %v7241 = vpack.c.b16 %v7193, %v7192
  %v7242 = vpack.c.b16 %v7195, %v7194
  %v7243 = vpack.c.b16 %v7197, %v7196
  %v7244 = vpack.c.b16 %v7199, %v7198
  %v7245 = vpack.c.b16 %v7201, %v7200
  %v7246 = vpack.c.b16 %v7203, %v7202
  %v7247 = vpack.c.b16 %v7205, %v7204
  %v7248 = vpack.c.b16 %v7207, %v7206
  %v7249 = vpack.c.b16 %v7209, %v7208
  %v7250 = vpack.c.b16 %v7211, %v7210
  %v7251 = vpack.c.b16 %v7213, %v7212
  %v7252 = vpack.c.b16 %v7215, %v7214
  %v7253 = vpack.c.b16 %v7217, %v7216
  %v7254 = vpack.c.b16 %v7219, %v7218
  %v7255 = vpack.c.b16 %v7221, %v7220
  %v7256 = vpack.c.b16 %v7223, %v7222
  %v7257 = vpack.c.b16 %v7225, %v7224
  %7258 = vrot.lane.b32.xlu0 %v7226, 8
  %v7259 = vpop.permute.xlu0 %7258
  %7260 = vrot.lane.b32.xlu0 %v7227, 8
  %v7261 = vpop.permute.xlu0 %7260
  %7262 = vrot.lane.b32.xlu0 %v7228, 8
  %v7263 = vpop.permute.xlu0 %7262
  %7264 = vrot.lane.b32.xlu0 %v7229, 8
  %v7265 = vpop.permute.xlu0 %7264
  %7266 = vrot.lane.b32.xlu0 %v7230, 8
  %v7267 = vpop.permute.xlu0 %7266
  %7268 = vrot.lane.b32.xlu0 %v7231, 8
  %v7269 = vpop.permute.xlu0 %7268
  %7270 = vrot.lane.b32.xlu0 %v7232, 8
  %v7271 = vpop.permute.xlu0 %7270
  %7272 = vrot.lane.b32.xlu0 %v7233, 8
  %v7273 = vpop.permute.xlu0 %7272
  %7274 = vrot.lane.b32.xlu0 %v7234, 8
  %v7275 = vpop.permute.xlu0 %7274
  %7276 = vrot.lane.b32.xlu0 %v7235, 8
  %v7277 = vpop.permute.xlu0 %7276
  %7278 = vrot.lane.b32.xlu0 %v7236, 8
  %v7279 = vpop.permute.xlu0 %7278
  %7280 = vrot.lane.b32.xlu0 %v7237, 8
  %v7281 = vpop.permute.xlu0 %7280
  %7282 = vrot.lane.b32.xlu0 %v7238, 8
  %v7283 = vpop.permute.xlu0 %7282
  %7284 = vrot.lane.b32.xlu0 %v7239, 8
  %v7285 = vpop.permute.xlu0 %7284
  %7286 = vrot.lane.b32.xlu0 %v7240, 8
  %v7287 = vpop.permute.xlu0 %7286
  %7288 = vrot.lane.b32.xlu0 %v7241, 8
  %v7289 = vpop.permute.xlu0 %7288
  %7290 = vrot.lane.b32.xlu0 %v7242, 8
  %v7291 = vpop.permute.xlu0 %7290
  %7292 = vrot.lane.b32.xlu0 %v7243, 8
  %v7293 = vpop.permute.xlu0 %7292
  %7294 = vrot.lane.b32.xlu0 %v7244, 8
  %v7295 = vpop.permute.xlu0 %7294
  %7296 = vrot.lane.b32.xlu0 %v7245, 8
  %v7297 = vpop.permute.xlu0 %7296
  %7298 = vrot.lane.b32.xlu0 %v7246, 8
  %v7299 = vpop.permute.xlu0 %7298
  %7300 = vrot.lane.b32.xlu0 %v7247, 8
  %v7301 = vpop.permute.xlu0 %7300
  %7302 = vrot.lane.b32.xlu0 %v7248, 8
  %v7303 = vpop.permute.xlu0 %7302
  %7304 = vrot.lane.b32.xlu0 %v7249, 8
  %v7305 = vpop.permute.xlu0 %7304
  %7306 = vrot.lane.b32.xlu0 %v7250, 8
  %v7307 = vpop.permute.xlu0 %7306
  %7308 = vrot.lane.b32.xlu0 %v7251, 8
  %v7309 = vpop.permute.xlu0 %7308
  %7310 = vrot.lane.b32.xlu0 %v7252, 8
  %v7311 = vpop.permute.xlu0 %7310
  %7312 = vrot.lane.b32.xlu0 %v7253, 8
  %v7313 = vpop.permute.xlu0 %7312
  %7314 = vrot.lane.b32.xlu0 %v7254, 8
  %v7315 = vpop.permute.xlu0 %7314
  %7316 = vrot.lane.b32.xlu0 %v7255, 8
  %v7317 = vpop.permute.xlu0 %7316
  %7318 = vrot.lane.b32.xlu0 %v7256, 8
  %v7319 = vpop.permute.xlu0 %7318
  %7320 = vrot.lane.b32.xlu0 %v7257, 8
  %v7321 = vpop.permute.xlu0 %7320
  %v7322 = vunpack.c.l.b16 %v6685
  %v7323 = vunpack.c.l.b16 %v6688
  %v7324 = vunpack.c.l.b16 %v6692
  %v7325 = vunpack.c.l.b16 %v6695
  %v7326 = vunpack.c.l.b16 %v6699
  %v7327 = vunpack.c.l.b16 %v6702
  %v7328 = vunpack.c.l.b16 %v6706
  %v7329 = vunpack.c.l.b16 %v6709
  %v7330 = vunpack.c.l.b16 %v6713
  %v7331 = vunpack.c.l.b16 %v6716
  %v7332 = vunpack.c.l.b16 %v6720
  %v7333 = vunpack.c.l.b16 %v6723
  %v7334 = vunpack.c.l.b16 %v6727
  %v7335 = vunpack.c.l.b16 %v6730
  %v7336 = vunpack.c.l.b16 %v6734
  %v7337 = vunpack.c.l.b16 %v6737
  %v7338 = vunpack.c.l.b16 %v6741
  %v7339 = vunpack.c.l.b16 %v6744
  %v7340 = vunpack.c.l.b16 %v6748
  %v7341 = vunpack.c.l.b16 %v6751
  %v7342 = vunpack.c.l.b16 %v6755
  %v7343 = vunpack.c.l.b16 %v6758
  %v7344 = vunpack.c.l.b16 %v6762
  %v7345 = vunpack.c.l.b16 %v6765
  %v7346 = vunpack.c.l.b16 %v6769
  %v7347 = vunpack.c.l.b16 %v6772
  %v7348 = vunpack.c.l.b16 %v6776
  %v7349 = vunpack.c.l.b16 %v6779
  %v7350 = vunpack.c.l.b16 %v6783
  %v7351 = vunpack.c.l.b16 %v6786
  %v7352 = vunpack.c.l.b16 %v6790
  %v7353 = vunpack.c.l.b16 %v6793
  %v7354 = vunpack.c.l.b16 %v6797
  %v7355 = vunpack.c.l.b16 %v6800
  %v7356 = vunpack.c.l.b16 %v6804
  %v7357 = vunpack.c.l.b16 %v6807
  %v7358 = vunpack.c.l.b16 %v6811
  %v7359 = vunpack.c.l.b16 %v6814
  %v7360 = vunpack.c.l.b16 %v6818
  %v7361 = vunpack.c.l.b16 %v6821
  %v7362 = vunpack.c.l.b16 %v6825
  %v7363 = vunpack.c.l.b16 %v6828
  %v7364 = vunpack.c.l.b16 %v6832
  %v7365 = vunpack.c.l.b16 %v6835
  %v7366 = vunpack.c.l.b16 %v6839
  %v7367 = vunpack.c.l.b16 %v6842
  %v7368 = vunpack.c.l.b16 %v6846
  %v7369 = vunpack.c.l.b16 %v6849
  %v7370 = vunpack.c.l.b16 %v6853
  %v7371 = vunpack.c.l.b16 %v6856
  %v7372 = vunpack.c.l.b16 %v6860
  %v7373 = vunpack.c.l.b16 %v6863
  %v7374 = vunpack.c.l.b16 %v6867
  %v7375 = vunpack.c.l.b16 %v6870
  %v7376 = vunpack.c.l.b16 %v6874
  %v7377 = vunpack.c.l.b16 %v6877
  %v7378 = vunpack.c.l.b16 %v6881
  %v7379 = vunpack.c.l.b16 %v6884
  %v7380 = vunpack.c.l.b16 %v6888
  %v7381 = vunpack.c.l.b16 %v6891
  %v7382 = vunpack.c.l.b16 %v6895
  %v7383 = vunpack.c.l.b16 %v6898
  %v7384 = vunpack.c.l.b16 %v6902
  %v7385 = vunpack.c.l.b16 %v6905
  %v7386 = vpack.c.b16 %v7323, %v7322
  %v7387 = vpack.c.b16 %v7325, %v7324
  %v7388 = vpack.c.b16 %v7327, %v7326
  %v7389 = vpack.c.b16 %v7329, %v7328
  %v7390 = vpack.c.b16 %v7331, %v7330
  %v7391 = vpack.c.b16 %v7333, %v7332
  %v7392 = vpack.c.b16 %v7335, %v7334
  %v7393 = vpack.c.b16 %v7337, %v7336
  %v7394 = vpack.c.b16 %v7339, %v7338
  %v7395 = vpack.c.b16 %v7341, %v7340
  %v7396 = vpack.c.b16 %v7343, %v7342
  %v7397 = vpack.c.b16 %v7345, %v7344
  %v7398 = vpack.c.b16 %v7347, %v7346
  %v7399 = vpack.c.b16 %v7349, %v7348
  %v7400 = vpack.c.b16 %v7351, %v7350
  %v7401 = vpack.c.b16 %v7353, %v7352
  %v7402 = vpack.c.b16 %v7355, %v7354
  %v7403 = vpack.c.b16 %v7357, %v7356
  %v7404 = vpack.c.b16 %v7359, %v7358
  %v7405 = vpack.c.b16 %v7361, %v7360
  %v7406 = vpack.c.b16 %v7363, %v7362
  %v7407 = vpack.c.b16 %v7365, %v7364
  %v7408 = vpack.c.b16 %v7367, %v7366
  %v7409 = vpack.c.b16 %v7369, %v7368
  %v7410 = vpack.c.b16 %v7371, %v7370
  %v7411 = vpack.c.b16 %v7373, %v7372
  %v7412 = vpack.c.b16 %v7375, %v7374
  %v7413 = vpack.c.b16 %v7377, %v7376
  %v7414 = vpack.c.b16 %v7379, %v7378
  %v7415 = vpack.c.b16 %v7381, %v7380
  %v7416 = vpack.c.b16 %v7383, %v7382
  %v7417 = vpack.c.b16 %v7385, %v7384
  %7418 = vrot.lane.b32.xlu0 %v7386, 12
  %v7419 = vpop.permute.xlu0 %7418
  %7420 = vrot.lane.b32.xlu0 %v7387, 12
  %v7421 = vpop.permute.xlu0 %7420
  %7422 = vrot.lane.b32.xlu0 %v7388, 12
  %v7423 = vpop.permute.xlu0 %7422
  %7424 = vrot.lane.b32.xlu0 %v7389, 12
  %v7425 = vpop.permute.xlu0 %7424
  %7426 = vrot.lane.b32.xlu0 %v7390, 12
  %v7427 = vpop.permute.xlu0 %7426
  %7428 = vrot.lane.b32.xlu0 %v7391, 12
  %v7429 = vpop.permute.xlu0 %7428
  %7430 = vrot.lane.b32.xlu0 %v7392, 12
  %v7431 = vpop.permute.xlu0 %7430
  %7432 = vrot.lane.b32.xlu0 %v7393, 12
  %v7433 = vpop.permute.xlu0 %7432
  %7434 = vrot.lane.b32.xlu0 %v7394, 12
  %v7435 = vpop.permute.xlu0 %7434
  %7436 = vrot.lane.b32.xlu0 %v7395, 12
  %v7437 = vpop.permute.xlu0 %7436
  %7438 = vrot.lane.b32.xlu0 %v7396, 12
  %v7439 = vpop.permute.xlu0 %7438
  %7440 = vrot.lane.b32.xlu0 %v7397, 12
  %v7441 = vpop.permute.xlu0 %7440
  %7442 = vrot.lane.b32.xlu0 %v7398, 12
  %v7443 = vpop.permute.xlu0 %7442
  %7444 = vrot.lane.b32.xlu0 %v7399, 12
  %v7445 = vpop.permute.xlu0 %7444
  %7446 = vrot.lane.b32.xlu0 %v7400, 12
  %v7447 = vpop.permute.xlu0 %7446
  %7448 = vrot.lane.b32.xlu0 %v7401, 12
  %v7449 = vpop.permute.xlu0 %7448
  %7450 = vrot.lane.b32.xlu0 %v7402, 12
  %v7451 = vpop.permute.xlu0 %7450
  %7452 = vrot.lane.b32.xlu0 %v7403, 12
  %v7453 = vpop.permute.xlu0 %7452
  %7454 = vrot.lane.b32.xlu0 %v7404, 12
  %v7455 = vpop.permute.xlu0 %7454
  %7456 = vrot.lane.b32.xlu0 %v7405, 12
  %v7457 = vpop.permute.xlu0 %7456
  %7458 = vrot.lane.b32.xlu0 %v7406, 12
  %v7459 = vpop.permute.xlu0 %7458
  %7460 = vrot.lane.b32.xlu0 %v7407, 12
  %v7461 = vpop.permute.xlu0 %7460
  %7462 = vrot.lane.b32.xlu0 %v7408, 12
  %v7463 = vpop.permute.xlu0 %7462
  %7464 = vrot.lane.b32.xlu0 %v7409, 12
  %v7465 = vpop.permute.xlu0 %7464
  %7466 = vrot.lane.b32.xlu0 %v7410, 12
  %v7467 = vpop.permute.xlu0 %7466
  %7468 = vrot.lane.b32.xlu0 %v7411, 12
  %v7469 = vpop.permute.xlu0 %7468
  %7470 = vrot.lane.b32.xlu0 %v7412, 12
  %v7471 = vpop.permute.xlu0 %7470
  %7472 = vrot.lane.b32.xlu0 %v7413, 12
  %v7473 = vpop.permute.xlu0 %7472
  %7474 = vrot.lane.b32.xlu0 %v7414, 12
  %v7475 = vpop.permute.xlu0 %7474
  %7476 = vrot.lane.b32.xlu0 %v7415, 12
  %v7477 = vpop.permute.xlu0 %7476
  %7478 = vrot.lane.b32.xlu0 %v7416, 12
  %v7479 = vpop.permute.xlu0 %7478
  %7480 = vrot.lane.b32.xlu0 %v7417, 12
  %v7481 = vpop.permute.xlu0 %7480
  %v7484 = vsel %vm3812, %v6970, %v7099
  %v7487 = vsel %vm3812, %v6971, %v7101
  %v7490 = vsel %vm3812, %v6972, %v7103
  %v7493 = vsel %vm3812, %v6973, %v7105
  %v7496 = vsel %vm3812, %v6974, %v7107
  %v7499 = vsel %vm3812, %v6975, %v7109
  %v7502 = vsel %vm3812, %v6976, %v7111
  %v7505 = vsel %vm3812, %v6977, %v7113
  %v7508 = vsel %vm3812, %v6978, %v7115
  %v7511 = vsel %vm3812, %v6979, %v7117
  %v7514 = vsel %vm3812, %v6980, %v7119
  %v7517 = vsel %vm3812, %v6981, %v7121
  %v7520 = vsel %vm3812, %v6982, %v7123
  %v7523 = vsel %vm3812, %v6983, %v7125
  %v7526 = vsel %vm3812, %v6984, %v7127
  %v7529 = vsel %vm3812, %v6985, %v7129
  %v7532 = vsel %vm3812, %v6986, %v7131
  %v7535 = vsel %vm3812, %v6987, %v7133
  %v7538 = vsel %vm3812, %v6988, %v7135
  %v7541 = vsel %vm3812, %v6989, %v7137
  %v7544 = vsel %vm3812, %v6990, %v7139
  %v7547 = vsel %vm3812, %v6991, %v7141
  %v7550 = vsel %vm3812, %v6992, %v7143
  %v7553 = vsel %vm3812, %v6993, %v7145
  %v7556 = vsel %vm3812, %v6994, %v7147
  %v7559 = vsel %vm3812, %v6995, %v7149
  %v7562 = vsel %vm3812, %v6996, %v7151
  %v7565 = vsel %vm3812, %v6997, %v7153
  %v7568 = vsel %vm3812, %v6998, %v7155
  %v7571 = vsel %vm3812, %v6999, %v7157
  %v7574 = vsel %vm3812, %v7000, %v7159
  %v7577 = vsel %vm3812, %v7001, %v7161
  %v7579 = vsel %vm3909, %v7484, %v7259
  %v7581 = vsel %vm3909, %v7487, %v7261
  %v7583 = vsel %vm3909, %v7490, %v7263
  %v7585 = vsel %vm3909, %v7493, %v7265
  %v7587 = vsel %vm3909, %v7496, %v7267
  %v7589 = vsel %vm3909, %v7499, %v7269
  %v7591 = vsel %vm3909, %v7502, %v7271
  %v7593 = vsel %vm3909, %v7505, %v7273
  %v7595 = vsel %vm3909, %v7508, %v7275
  %v7597 = vsel %vm3909, %v7511, %v7277
  %v7599 = vsel %vm3909, %v7514, %v7279
  %v7601 = vsel %vm3909, %v7517, %v7281
  %v7603 = vsel %vm3909, %v7520, %v7283
  %v7605 = vsel %vm3909, %v7523, %v7285
  %v7607 = vsel %vm3909, %v7526, %v7287
  %v7609 = vsel %vm3909, %v7529, %v7289
  %v7611 = vsel %vm3909, %v7532, %v7291
  %v7613 = vsel %vm3909, %v7535, %v7293
  %v7615 = vsel %vm3909, %v7538, %v7295
  %v7617 = vsel %vm3909, %v7541, %v7297
  %v7619 = vsel %vm3909, %v7544, %v7299
  %v7621 = vsel %vm3909, %v7547, %v7301
  %v7623 = vsel %vm3909, %v7550, %v7303
  %v7625 = vsel %vm3909, %v7553, %v7305
  %v7627 = vsel %vm3909, %v7556, %v7307
  %v7629 = vsel %vm3909, %v7559, %v7309
  %v7631 = vsel %vm3909, %v7562, %v7311
  %v7633 = vsel %vm3909, %v7565, %v7313
  %v7635 = vsel %vm3909, %v7568, %v7315
  %v7637 = vsel %vm3909, %v7571, %v7317
  %v7639 = vsel %vm3909, %v7574, %v7319
  %v7641 = vsel %vm3909, %v7577, %v7321
  %v7643 = vsel %vm3974, %v7579, %v7419
  %v7645 = vsel %vm3974, %v7581, %v7421
  %v7647 = vsel %vm3974, %v7583, %v7423
  %v7649 = vsel %vm3974, %v7585, %v7425
  %v7651 = vsel %vm3974, %v7587, %v7427
  %v7653 = vsel %vm3974, %v7589, %v7429
  %v7655 = vsel %vm3974, %v7591, %v7431
  %v7657 = vsel %vm3974, %v7593, %v7433
  %v7659 = vsel %vm3974, %v7595, %v7435
  %v7661 = vsel %vm3974, %v7597, %v7437
  %v7663 = vsel %vm3974, %v7599, %v7439
  %v7665 = vsel %vm3974, %v7601, %v7441
  %v7667 = vsel %vm3974, %v7603, %v7443
  %v7669 = vsel %vm3974, %v7605, %v7445
  %v7671 = vsel %vm3974, %v7607, %v7447
  %v7673 = vsel %vm3974, %v7609, %v7449
  %v7675 = vsel %vm3974, %v7611, %v7451
  %v7677 = vsel %vm3974, %v7613, %v7453
  %v7679 = vsel %vm3974, %v7615, %v7455
  %v7681 = vsel %vm3974, %v7617, %v7457
  %v7683 = vsel %vm3974, %v7619, %v7459
  %v7685 = vsel %vm3974, %v7621, %v7461
  %v7687 = vsel %vm3974, %v7623, %v7463
  %v7689 = vsel %vm3974, %v7625, %v7465
  %v7691 = vsel %vm3974, %v7627, %v7467
  %v7693 = vsel %vm3974, %v7629, %v7469
  %v7695 = vsel %vm3974, %v7631, %v7471
  %v7697 = vsel %vm3974, %v7633, %v7473
  %v7699 = vsel %vm3974, %v7635, %v7475
  %v7701 = vsel %vm3974, %v7637, %v7477
  %v7703 = vsel %vm3974, %v7639, %v7479
  %v7705 = vsel %vm3974, %v7641, %v7481
  %s7706 = scalar_lea.vmem %s1, 8
  %v7707 = vld [vmem:[%s7706] sm:$0xf]
  %v7708 = vld [vmem:[%s7706 + $0x4] sm:$0xf]
  %v7711 = vunpack.c.l.b16 %v7707
  %v7712 = vunpack.c.l.b16 %v7708
  %v7713 = vpack.c.b16 %v7712, %v7711
  %v7715 = vsel %vm4053, %v7643, 0
  %v7717 = vsel %vm4053, %v7645, 0
  %v7719 = vsel %vm4053, %v7647, 0
  %v7721 = vsel %vm4053, %v7649, 0
  %v7723 = vsel %vm4053, %v7651, 0
  %v7725 = vsel %vm4053, %v7653, 0
  %v7727 = vsel %vm4053, %v7655, 0
  %v7729 = vsel %vm4053, %v7657, 0
  %v7731 = vsel %vm4053, %v7659, 0
  %v7733 = vsel %vm4053, %v7661, 0
  %v7735 = vsel %vm4053, %v7663, 0
  %v7737 = vsel %vm4053, %v7665, 0
  %v7739 = vsel %vm4053, %v7667, 0
  %v7741 = vsel %vm4053, %v7669, 0
  %v7743 = vsel %vm4053, %v7671, 0
  %v7745 = vsel %vm4053, %v7673, 0
  %v7747 = vsel %vm4053, %v7675, 0
  %v7749 = vsel %vm4053, %v7677, 0
  %v7751 = vsel %vm4053, %v7679, 0
  %v7753 = vsel %vm4053, %v7681, 0
  %v7755 = vsel %vm4053, %v7683, 0
  %v7757 = vsel %vm4053, %v7685, 0
  %v7759 = vsel %vm4053, %v7687, 0
  %v7761 = vsel %vm4053, %v7689, 0
  %v7763 = vsel %vm4053, %v7691, 0
  %v7765 = vsel %vm4053, %v7693, 0
  %v7767 = vsel %vm4053, %v7695, 0
  %v7769 = vsel %vm4053, %v7697, 0
  %v7771 = vsel %vm4053, %v7699, 0
  %v7773 = vsel %vm4053, %v7701, 0
  %v7775 = vsel %vm4053, %v7703, 0
  %v7777 = vsel %vm4053, %v7705, 0
  %7779 = vmatprep.subr.bf16.mxu0 0
  %7780 = vmatpush1.bf16.msra.mxu0 %v7713
  %7781 = vmatprep.subr.bf16.mxu0 0
  %7782 = vmatpush1.bf16.msra.mxu0 0
  %7783 = vmatprep.subr.bf16.mxu0 0
  %7784 = vmatpush1.bf16.msra.mxu0 0
  %7785 = vmatprep.subr.bf16.mxu0 0
  %7786 = vmatpush1.bf16.msra.mxu0 0
  %7787 = vmatprep.subr.bf16.mxu0 0
  %7788 = vmatpush1.bf16.msra.mxu0 0
  %7789 = vmatprep.subr.bf16.mxu0 0
  %7790 = vmatpush1.bf16.msra.mxu0 0
  %7791 = vmatprep.subr.bf16.mxu0 0
  %7792 = vmatpush1.bf16.msra.mxu0 0
  %7793 = vmatprep.subr.bf16.mxu0 0
  %7794 = vmatpush1.bf16.msra.mxu0 0
  %7795 = vmatprep.subr.bf16.mxu0 0
  %7796 = vmatpush1.bf16.msra.mxu0 0
  %7797 = vmatprep.subr.bf16.mxu0 0
  %7798 = vmatpush1.bf16.msra.mxu0 0
  %7799 = vmatprep.subr.bf16.mxu0 0
  %7800 = vmatpush1.bf16.msra.mxu0 0
  %7801 = vmatprep.subr.bf16.mxu0 0
  %7802 = vmatpush1.bf16.msra.mxu0 0
  %7803 = vmatprep.subr.bf16.mxu0 0
  %7804 = vmatpush1.bf16.msra.mxu0 0
  %7805 = vmatprep.subr.bf16.mxu0 0
  %7806 = vmatpush1.bf16.msra.mxu0 0
  %7807 = vmatprep.subr.bf16.mxu0 0
  %7808 = vmatpush1.bf16.msra.mxu0 0
  %7809 = vmatprep.subr.bf16.mxu0 0
  %7810 = vmatpush1.bf16.msra.mxu0 0
  %7811 = vmatprep.mubr.bf16.mxu0 0
  %7812 = vmatmul.mubr.bf16.gmra.mrb[0].mxu0 %v7715
  %v7813 = vpop.f32.mrb[0].mxu0
  %v7814 = vadd.f32 %v4045, %v7813
  %v7815 = vpop.f32.mrb[0].mxu0
  %v7816 = vpop.f32.mrb[0].mxu0
  %v7817 = vadd.f32 %v4045, %v7816
  %v7818 = vpop.f32.mrb[0].mxu0
  %7819 = vmatprep.mubr.bf16.mxu0 0
  %7820 = vmatmul.mubr.bf16.gmra.mrb[0].mxu0 %v7717
  %v7821 = vpop.f32.mrb[0].mxu0
  %v7822 = vadd.f32 %v4045, %v7821
  %v7823 = vpop.f32.mrb[0].mxu0
  %v7824 = vpop.f32.mrb[0].mxu0
  %v7825 = vadd.f32 %v4045, %v7824
  %v7826 = vpop.f32.mrb[0].mxu0
  %7827 = vmatprep.mubr.bf16.mxu0 0
  %7828 = vmatmul.mubr.bf16.gmra.mrb[0].mxu0 %v7719
  %v7829 = vpop.f32.mrb[0].mxu0
  %v7830 = vadd.f32 %v4045, %v7829
  %v7831 = vpop.f32.mrb[0].mxu0
  %v7832 = vpop.f32.mrb[0].mxu0
  %v7833 = vadd.f32 %v4045, %v7832
  %v7834 = vpop.f32.mrb[0].mxu0
  %7835 = vmatprep.mubr.bf16.mxu0 0
  %7836 = vmatmul.mubr.bf16.gmra.mrb[0].mxu0 %v7721
  %v7837 = vpop.f32.mrb[0].mxu0
  %v7838 = vadd.f32 %v4045, %v7837
  %v7839 = vpop.f32.mrb[0].mxu0
  %v7840 = vpop.f32.mrb[0].mxu0
  %v7841 = vadd.f32 %v4045, %v7840
  %v7842 = vpop.f32.mrb[0].mxu0
  %7843 = vmatprep.mubr.bf16.mxu0 0
  %7844 = vmatmul.mubr.bf16.gmra.mrb[0].mxu0 %v7723
  %v7845 = vpop.f32.mrb[0].mxu0
  %v7846 = vadd.f32 %v4045, %v7845
  %v7847 = vpop.f32.mrb[0].mxu0
  %v7848 = vpop.f32.mrb[0].mxu0
  %v7849 = vadd.f32 %v4045, %v7848
  %v7850 = vpop.f32.mrb[0].mxu0
  %7851 = vmatprep.mubr.bf16.mxu0 0
  %7852 = vmatmul.mubr.bf16.gmra.mrb[0].mxu0 %v7725
  %v7853 = vpop.f32.mrb[0].mxu0
  %v7854 = vadd.f32 %v4045, %v7853
  %v7855 = vpop.f32.mrb[0].mxu0
  %v7856 = vpop.f32.mrb[0].mxu0
  %v7857 = vadd.f32 %v4045, %v7856
  %v7858 = vpop.f32.mrb[0].mxu0
  %7859 = vmatprep.mubr.bf16.mxu0 0
  %7860 = vmatmul.mubr.bf16.gmra.mrb[0].mxu0 %v7727
  %v7861 = vpop.f32.mrb[0].mxu0
  %v7862 = vadd.f32 %v4045, %v7861
  %v7863 = vpop.f32.mrb[0].mxu0
  %v7864 = vpop.f32.mrb[0].mxu0
  %v7865 = vadd.f32 %v4045, %v7864
  %v7866 = vpop.f32.mrb[0].mxu0
  %7867 = vmatprep.mubr.bf16.mxu0 0
  %7868 = vmatmul.mubr.bf16.gmra.mrb[0].mxu0 %v7729
  %v7869 = vpop.f32.mrb[0].mxu0
  %v7870 = vadd.f32 %v4045, %v7869
  %v7871 = vpop.f32.mrb[0].mxu0
  %v7872 = vpop.f32.mrb[0].mxu0
  %v7873 = vadd.f32 %v4045, %v7872
  %v7874 = vpop.f32.mrb[0].mxu0
  %7875 = vmatprep.mubr.bf16.mxu0 0
  %7876 = vmatmul.mubr.bf16.gmra.mrb[0].mxu0 %v7731
  %v7877 = vpop.f32.mrb[0].mxu0
  %v7878 = vadd.f32 %v4045, %v7877
  %v7879 = vpop.f32.mrb[0].mxu0
  %v7880 = vpop.f32.mrb[0].mxu0
  %v7881 = vadd.f32 %v4045, %v7880
  %v7882 = vpop.f32.mrb[0].mxu0
  %7883 = vmatprep.mubr.bf16.mxu0 0
  %7884 = vmatmul.mubr.bf16.gmra.mrb[0].mxu0 %v7733
  %v7885 = vpop.f32.mrb[0].mxu0
  %v7886 = vadd.f32 %v4045, %v7885
  %v7887 = vpop.f32.mrb[0].mxu0
  %v7888 = vpop.f32.mrb[0].mxu0
  %v7889 = vadd.f32 %v4045, %v7888
  %v7890 = vpop.f32.mrb[0].mxu0
  %7891 = vmatprep.mubr.bf16.mxu0 0
  %7892 = vmatmul.mubr.bf16.gmra.mrb[0].mxu0 %v7735
  %v7893 = vpop.f32.mrb[0].mxu0
  %v7894 = vadd.f32 %v4045, %v7893
  %v7895 = vpop.f32.mrb[0].mxu0
  %v7896 = vpop.f32.mrb[0].mxu0
  %v7897 = vadd.f32 %v4045, %v7896
  %v7898 = vpop.f32.mrb[0].mxu0
  %7899 = vmatprep.mubr.bf16.mxu0 0
  %7900 = vmatmul.mubr.bf16.gmra.mrb[0].mxu0 %v7737
  %v7901 = vpop.f32.mrb[0].mxu0
  %v7902 = vadd.f32 %v4045, %v7901
  %v7903 = vpop.f32.mrb[0].mxu0
  %v7904 = vpop.f32.mrb[0].mxu0
  %v7905 = vadd.f32 %v4045, %v7904
  %v7906 = vpop.f32.mrb[0].mxu0
  %7907 = vmatprep.mubr.bf16.mxu0 0
  %7908 = vmatmul.mubr.bf16.gmra.mrb[0].mxu0 %v7739
  %v7909 = vpop.f32.mrb[0].mxu0
  %v7910 = vadd.f32 %v4045, %v7909
  %v7911 = vpop.f32.mrb[0].mxu0
  %v7912 = vpop.f32.mrb[0].mxu0
  %v7913 = vadd.f32 %v4045, %v7912
  %v7914 = vpop.f32.mrb[0].mxu0
  %7915 = vmatprep.mubr.bf16.mxu0 0
  %7916 = vmatmul.mubr.bf16.gmra.mrb[0].mxu0 %v7741
  %v7917 = vpop.f32.mrb[0].mxu0
  %v7918 = vadd.f32 %v4045, %v7917
  %v7919 = vpop.f32.mrb[0].mxu0
  %v7920 = vpop.f32.mrb[0].mxu0
  %v7921 = vadd.f32 %v4045, %v7920
  %v7922 = vpop.f32.mrb[0].mxu0
  %7923 = vmatprep.mubr.bf16.mxu0 0
  %7924 = vmatmul.mubr.bf16.gmra.mrb[0].mxu0 %v7743
  %v7925 = vpop.f32.mrb[0].mxu0
  %v7926 = vadd.f32 %v4045, %v7925
  %v7927 = vpop.f32.mrb[0].mxu0
  %v7928 = vpop.f32.mrb[0].mxu0
  %v7929 = vadd.f32 %v4045, %v7928
  %v7930 = vpop.f32.mrb[0].mxu0
  %7931 = vmatprep.mubr.bf16.mxu0 0
  %7932 = vmatmul.mubr.bf16.gmra.mrb[0].mxu0 %v7745
  %v7933 = vpop.f32.mrb[0].mxu0
  %v7934 = vadd.f32 %v4045, %v7933
  %v7935 = vpop.f32.mrb[0].mxu0
  %v7936 = vpop.f32.mrb[0].mxu0
  %v7937 = vadd.f32 %v4045, %v7936
  %v7938 = vpop.f32.mrb[0].mxu0
  %7939 = vmatprep.mubr.bf16.mxu0 0
  %7940 = vmatmul.mubr.bf16.gmra.mrb[0].mxu0 %v7747
  %v7941 = vpop.f32.mrb[0].mxu0
  %v7942 = vadd.f32 %v4045, %v7941
  %v7943 = vpop.f32.mrb[0].mxu0
  %v7944 = vpop.f32.mrb[0].mxu0
  %v7945 = vadd.f32 %v4045, %v7944
  %v7946 = vpop.f32.mrb[0].mxu0
  %7947 = vmatprep.mubr.bf16.mxu0 0
  %7948 = vmatmul.mubr.bf16.gmra.mrb[0].mxu0 %v7749
  %v7949 = vpop.f32.mrb[0].mxu0
  %v7950 = vadd.f32 %v4045, %v7949
  %v7951 = vpop.f32.mrb[0].mxu0
  %v7952 = vpop.f32.mrb[0].mxu0
  %v7953 = vadd.f32 %v4045, %v7952
  %v7954 = vpop.f32.mrb[0].mxu0
  %7955 = vmatprep.mubr.bf16.mxu0 0
  %7956 = vmatmul.mubr.bf16.gmra.mrb[0].mxu0 %v7751
  %v7957 = vpop.f32.mrb[0].mxu0
  %v7958 = vadd.f32 %v4045, %v7957
  %v7959 = vpop.f32.mrb[0].mxu0
  %v7960 = vpop.f32.mrb[0].mxu0
  %v7961 = vadd.f32 %v4045, %v7960
  %v7962 = vpop.f32.mrb[0].mxu0
  %7963 = vmatprep.mubr.bf16.mxu0 0
  %7964 = vmatmul.mubr.bf16.gmra.mrb[0].mxu0 %v7753
  %v7965 = vpop.f32.mrb[0].mxu0
  %v7966 = vadd.f32 %v4045, %v7965
  %v7967 = vpop.f32.mrb[0].mxu0
  %v7968 = vpop.f32.mrb[0].mxu0
  %v7969 = vadd.f32 %v4045, %v7968
  %v7970 = vpop.f32.mrb[0].mxu0
  %7971 = vmatprep.mubr.bf16.mxu0 0
  %7972 = vmatmul.mubr.bf16.gmra.mrb[0].mxu0 %v7755
  %v7973 = vpop.f32.mrb[0].mxu0
  %v7974 = vadd.f32 %v4045, %v7973
  %v7975 = vpop.f32.mrb[0].mxu0
  %v7976 = vpop.f32.mrb[0].mxu0
  %v7977 = vadd.f32 %v4045, %v7976
  %v7978 = vpop.f32.mrb[0].mxu0
  %7979 = vmatprep.mubr.bf16.mxu0 0
  %7980 = vmatmul.mubr.bf16.gmra.mrb[0].mxu0 %v7757
  %v7981 = vpop.f32.mrb[0].mxu0
  %v7982 = vadd.f32 %v4045, %v7981
  %v7983 = vpop.f32.mrb[0].mxu0
  %v7984 = vpop.f32.mrb[0].mxu0
  %v7985 = vadd.f32 %v4045, %v7984
  %v7986 = vpop.f32.mrb[0].mxu0
  %7987 = vmatprep.mubr.bf16.mxu0 0
  %7988 = vmatmul.mubr.bf16.gmra.mrb[0].mxu0 %v7759
  %v7989 = vpop.f32.mrb[0].mxu0
  %v7990 = vadd.f32 %v4045, %v7989
  %v7991 = vpop.f32.mrb[0].mxu0
  %v7992 = vpop.f32.mrb[0].mxu0
  %v7993 = vadd.f32 %v4045, %v7992
  %v7994 = vpop.f32.mrb[0].mxu0
  %7995 = vmatprep.mubr.bf16.mxu0 0
  %7996 = vmatmul.mubr.bf16.gmra.mrb[0].mxu0 %v7761
  %v7997 = vpop.f32.mrb[0].mxu0
  %v7998 = vadd.f32 %v4045, %v7997
  %v7999 = vpop.f32.mrb[0].mxu0
  %v8000 = vpop.f32.mrb[0].mxu0
  %v8001 = vadd.f32 %v4045, %v8000
  %v8002 = vpop.f32.mrb[0].mxu0
  %8003 = vmatprep.mubr.bf16.mxu0 0
  %8004 = vmatmul.mubr.bf16.gmra.mrb[0].mxu0 %v7763
  %v8005 = vpop.f32.mrb[0].mxu0
  %v8006 = vadd.f32 %v4045, %v8005
  %v8007 = vpop.f32.mrb[0].mxu0
  %v8008 = vpop.f32.mrb[0].mxu0
  %v8009 = vadd.f32 %v4045, %v8008
  %v8010 = vpop.f32.mrb[0].mxu0
  %8011 = vmatprep.mubr.bf16.mxu0 0
  %8012 = vmatmul.mubr.bf16.gmra.mrb[0].mxu0 %v7765
  %v8013 = vpop.f32.mrb[0].mxu0
  %v8014 = vadd.f32 %v4045, %v8013
  %v8015 = vpop.f32.mrb[0].mxu0
  %v8016 = vpop.f32.mrb[0].mxu0
  %v8017 = vadd.f32 %v4045, %v8016
  %v8018 = vpop.f32.mrb[0].mxu0
  %8019 = vmatprep.mubr.bf16.mxu0 0
  %8020 = vmatmul.mubr.bf16.gmra.mrb[0].mxu0 %v7767
  %v8021 = vpop.f32.mrb[0].mxu0
  %v8022 = vadd.f32 %v4045, %v8021
  %v8023 = vpop.f32.mrb[0].mxu0
  %v8024 = vpop.f32.mrb[0].mxu0
  %v8025 = vadd.f32 %v4045, %v8024
  %v8026 = vpop.f32.mrb[0].mxu0
  %8027 = vmatprep.mubr.bf16.mxu0 0
  %8028 = vmatmul.mubr.bf16.gmra.mrb[0].mxu0 %v7769
  %v8029 = vpop.f32.mrb[0].mxu0
  %v8030 = vadd.f32 %v4045, %v8029
  %v8031 = vpop.f32.mrb[0].mxu0
  %v8032 = vpop.f32.mrb[0].mxu0
  %v8033 = vadd.f32 %v4045, %v8032
  %v8034 = vpop.f32.mrb[0].mxu0
  %8035 = vmatprep.mubr.bf16.mxu0 0
  %8036 = vmatmul.mubr.bf16.gmra.mrb[0].mxu0 %v7771
  %v8037 = vpop.f32.mrb[0].mxu0
  %v8038 = vadd.f32 %v4045, %v8037
  %v8039 = vpop.f32.mrb[0].mxu0
  %v8040 = vpop.f32.mrb[0].mxu0
  %v8041 = vadd.f32 %v4045, %v8040
  %v8042 = vpop.f32.mrb[0].mxu0
  %8043 = vmatprep.mubr.bf16.mxu0 0
  %8044 = vmatmul.mubr.bf16.gmra.mrb[0].mxu0 %v7773
  %v8045 = vpop.f32.mrb[0].mxu0
  %v8046 = vadd.f32 %v4045, %v8045
  %v8047 = vpop.f32.mrb[0].mxu0
  %v8048 = vpop.f32.mrb[0].mxu0
  %v8049 = vadd.f32 %v4045, %v8048
  %v8050 = vpop.f32.mrb[0].mxu0
  %8051 = vmatprep.mubr.bf16.mxu0 0
  %8052 = vmatmul.mubr.bf16.gmra.mrb[0].mxu0 %v7775
  %v8053 = vpop.f32.mrb[0].mxu0
  %v8054 = vadd.f32 %v4045, %v8053
  %v8055 = vpop.f32.mrb[0].mxu0
  %v8056 = vpop.f32.mrb[0].mxu0
  %v8057 = vadd.f32 %v4045, %v8056
  %v8058 = vpop.f32.mrb[0].mxu0
  %8059 = vmatprep.mubr.bf16.mxu0 0
  %8060 = vmatmul.mubr.bf16.gmra.mrb[0].mxu0 %v7777
  %v8061 = vpop.f32.mrb[0].mxu0
  %v8062 = vadd.f32 %v4045, %v8061
  %v8063 = vpop.f32.mrb[0].mxu0
  %v8064 = vpop.f32.mrb[0].mxu0
  %v8065 = vadd.f32 %v4045, %v8064
  %v8066 = vpop.f32.mrb[0].mxu0
  %8067 = vdwg.mxu0
  %8132 = vrot.lane.b32.xlu0 %v7814, 4
  %v8133 = vpop.permute.xlu0 %8132
  %8134 = vrot.lane.b32.xlu0 %v7817, 4
  %v8135 = vpop.permute.xlu0 %8134
  %8136 = vrot.lane.b32.xlu0 %v7822, 4
  %v8137 = vpop.permute.xlu0 %8136
  %8138 = vrot.lane.b32.xlu0 %v7825, 4
  %v8139 = vpop.permute.xlu0 %8138
  %8140 = vrot.lane.b32.xlu0 %v7830, 4
  %v8141 = vpop.permute.xlu0 %8140
  %8142 = vrot.lane.b32.xlu0 %v7833, 4
  %v8143 = vpop.permute.xlu0 %8142
  %8144 = vrot.lane.b32.xlu0 %v7838, 4
  %v8145 = vpop.permute.xlu0 %8144
  %8146 = vrot.lane.b32.xlu0 %v7841, 4
  %v8147 = vpop.permute.xlu0 %8146
  %8148 = vrot.lane.b32.xlu0 %v7846, 4
  %v8149 = vpop.permute.xlu0 %8148
  %8150 = vrot.lane.b32.xlu0 %v7849, 4
  %v8151 = vpop.permute.xlu0 %8150
  %8152 = vrot.lane.b32.xlu0 %v7854, 4
  %v8153 = vpop.permute.xlu0 %8152
  %8154 = vrot.lane.b32.xlu0 %v7857, 4
  %v8155 = vpop.permute.xlu0 %8154
  %8156 = vrot.lane.b32.xlu0 %v7862, 4
  %v8157 = vpop.permute.xlu0 %8156
  %8158 = vrot.lane.b32.xlu0 %v7865, 4
  %v8159 = vpop.permute.xlu0 %8158
  %8160 = vrot.lane.b32.xlu0 %v7870, 4
  %v8161 = vpop.permute.xlu0 %8160
  %8162 = vrot.lane.b32.xlu0 %v7873, 4
  %v8163 = vpop.permute.xlu0 %8162
  %8164 = vrot.lane.b32.xlu0 %v7878, 4
  %v8165 = vpop.permute.xlu0 %8164
  %8166 = vrot.lane.b32.xlu0 %v7881, 4
  %v8167 = vpop.permute.xlu0 %8166
  %8168 = vrot.lane.b32.xlu0 %v7886, 4
  %v8169 = vpop.permute.xlu0 %8168
  %8170 = vrot.lane.b32.xlu0 %v7889, 4
  %v8171 = vpop.permute.xlu0 %8170
  %8172 = vrot.lane.b32.xlu0 %v7894, 4
  %v8173 = vpop.permute.xlu0 %8172
  %8174 = vrot.lane.b32.xlu0 %v7897, 4
  %v8175 = vpop.permute.xlu0 %8174
  %8176 = vrot.lane.b32.xlu0 %v7902, 4
  %v8177 = vpop.permute.xlu0 %8176
  %8178 = vrot.lane.b32.xlu0 %v7905, 4
  %v8179 = vpop.permute.xlu0 %8178
  %8180 = vrot.lane.b32.xlu0 %v7910, 4
  %v8181 = vpop.permute.xlu0 %8180
  %8182 = vrot.lane.b32.xlu0 %v7913, 4
  %v8183 = vpop.permute.xlu0 %8182
  %8184 = vrot.lane.b32.xlu0 %v7918, 4
  %v8185 = vpop.permute.xlu0 %8184
  %8186 = vrot.lane.b32.xlu0 %v7921, 4
  %v8187 = vpop.permute.xlu0 %8186
  %8188 = vrot.lane.b32.xlu0 %v7926, 4
  %v8189 = vpop.permute.xlu0 %8188
  %8190 = vrot.lane.b32.xlu0 %v7929, 4
  %v8191 = vpop.permute.xlu0 %8190
  %8192 = vrot.lane.b32.xlu0 %v7934, 4
  %v8193 = vpop.permute.xlu0 %8192
  %8194 = vrot.lane.b32.xlu0 %v7937, 4
  %v8195 = vpop.permute.xlu0 %8194
  %8196 = vrot.lane.b32.xlu0 %v7942, 4
  %v8197 = vpop.permute.xlu0 %8196
  %8198 = vrot.lane.b32.xlu0 %v7945, 4
  %v8199 = vpop.permute.xlu0 %8198
  %8200 = vrot.lane.b32.xlu0 %v7950, 4
  %v8201 = vpop.permute.xlu0 %8200
  %8202 = vrot.lane.b32.xlu0 %v7953, 4
  %v8203 = vpop.permute.xlu0 %8202
  %8204 = vrot.lane.b32.xlu0 %v7958, 4
  %v8205 = vpop.permute.xlu0 %8204
  %8206 = vrot.lane.b32.xlu0 %v7961, 4
  %v8207 = vpop.permute.xlu0 %8206
  %8208 = vrot.lane.b32.xlu0 %v7966, 4
  %v8209 = vpop.permute.xlu0 %8208
  %8210 = vrot.lane.b32.xlu0 %v7969, 4
  %v8211 = vpop.permute.xlu0 %8210
  %8212 = vrot.lane.b32.xlu0 %v7974, 4
  %v8213 = vpop.permute.xlu0 %8212
  %8214 = vrot.lane.b32.xlu0 %v7977, 4
  %v8215 = vpop.permute.xlu0 %8214
  %8216 = vrot.lane.b32.xlu0 %v7982, 4
  %v8217 = vpop.permute.xlu0 %8216
  %8218 = vrot.lane.b32.xlu0 %v7985, 4
  %v8219 = vpop.permute.xlu0 %8218
  %8220 = vrot.lane.b32.xlu0 %v7990, 4
  %v8221 = vpop.permute.xlu0 %8220
  %8222 = vrot.lane.b32.xlu0 %v7993, 4
  %v8223 = vpop.permute.xlu0 %8222
  %8224 = vrot.lane.b32.xlu0 %v7998, 4
  %v8225 = vpop.permute.xlu0 %8224
  %8226 = vrot.lane.b32.xlu0 %v8001, 4
  %v8227 = vpop.permute.xlu0 %8226
  %8228 = vrot.lane.b32.xlu0 %v8006, 4
  %v8229 = vpop.permute.xlu0 %8228
  %8230 = vrot.lane.b32.xlu0 %v8009, 4
  %v8231 = vpop.permute.xlu0 %8230
  %8232 = vrot.lane.b32.xlu0 %v8014, 4
  %v8233 = vpop.permute.xlu0 %8232
  %8234 = vrot.lane.b32.xlu0 %v8017, 4
  %v8235 = vpop.permute.xlu0 %8234
  %8236 = vrot.lane.b32.xlu0 %v8022, 4
  %v8237 = vpop.permute.xlu0 %8236
  %8238 = vrot.lane.b32.xlu0 %v8025, 4
  %v8239 = vpop.permute.xlu0 %8238
  %8240 = vrot.lane.b32.xlu0 %v8030, 4
  %v8241 = vpop.permute.xlu0 %8240
  %8242 = vrot.lane.b32.xlu0 %v8033, 4
  %v8243 = vpop.permute.xlu0 %8242
  %8244 = vrot.lane.b32.xlu0 %v8038, 4
  %v8245 = vpop.permute.xlu0 %8244
  %8246 = vrot.lane.b32.xlu0 %v8041, 4
  %v8247 = vpop.permute.xlu0 %8246
  %8248 = vrot.lane.b32.xlu0 %v8046, 4
  %v8249 = vpop.permute.xlu0 %8248
  %8250 = vrot.lane.b32.xlu0 %v8049, 4
  %v8251 = vpop.permute.xlu0 %8250
  %8252 = vrot.lane.b32.xlu0 %v8054, 4
  %v8253 = vpop.permute.xlu0 %8252
  %8254 = vrot.lane.b32.xlu0 %v8057, 4
  %v8255 = vpop.permute.xlu0 %8254
  %8256 = vrot.lane.b32.xlu0 %v8062, 4
  %v8257 = vpop.permute.xlu0 %8256
  %8258 = vrot.lane.b32.xlu0 %v8065, 4
  %v8259 = vpop.permute.xlu0 %8258
  %vm8324 = vcmask 64544
  %8325 = vst.msk [vmem:[%s3] sm:$0xff] %vm8324, %v8133
  %8326 = vst.msk [vmem:[%s3 + $0x8] sm:$0xff] %vm8324, %v8135
  %8327 = vst.msk [vmem:[%s3 + $0x20] sm:$0xff] %vm8324, %v8137
  %8328 = vst.msk [vmem:[%s3 + $0x28] sm:$0xff] %vm8324, %v8139
  %8329 = vst.msk [vmem:[%s3 + $0x40] sm:$0xff] %vm8324, %v8141
  %8330 = vst.msk [vmem:[%s3 + $0x48] sm:$0xff] %vm8324, %v8143
  %8331 = vst.msk [vmem:[%s3 + $0x60] sm:$0xff] %vm8324, %v8145
  %8332 = vst.msk [vmem:[%s3 + $0x68] sm:$0xff] %vm8324, %v8147
  %8333 = vst.msk [vmem:[%s3 + $0x80] sm:$0xff] %vm8324, %v8149
  %8334 = vst.msk [vmem:[%s3 + $0x88] sm:$0xff] %vm8324, %v8151
  %8335 = vst.msk [vmem:[%s3 + $0xa0] sm:$0xff] %vm8324, %v8153
  %8336 = vst.msk [vmem:[%s3 + $0xa8] sm:$0xff] %vm8324, %v8155
  %8337 = vst.msk [vmem:[%s3 + $0xc0] sm:$0xff] %vm8324, %v8157
  %8338 = vst.msk [vmem:[%s3 + $0xc8] sm:$0xff] %vm8324, %v8159
  %8339 = vst.msk [vmem:[%s3 + $0xe0] sm:$0xff] %vm8324, %v8161
  %8340 = vst.msk [vmem:[%s3 + $0xe8] sm:$0xff] %vm8324, %v8163
  %8341 = vst.msk [vmem:[%s3 + $0x100] sm:$0xff] %vm8324, %v8165
  %8342 = vst.msk [vmem:[%s3 + $0x108] sm:$0xff] %vm8324, %v8167
  %8343 = vst.msk [vmem:[%s3 + $0x120] sm:$0xff] %vm8324, %v8169
  %8344 = vst.msk [vmem:[%s3 + $0x128] sm:$0xff] %vm8324, %v8171
  %8345 = vst.msk [vmem:[%s3 + $0x140] sm:$0xff] %vm8324, %v8173
  %8346 = vst.msk [vmem:[%s3 + $0x148] sm:$0xff] %vm8324, %v8175
  %8347 = vst.msk [vmem:[%s3 + $0x160] sm:$0xff] %vm8324, %v8177
  %8348 = vst.msk [vmem:[%s3 + $0x168] sm:$0xff] %vm8324, %v8179
  %8349 = vst.msk [vmem:[%s3 + $0x180] sm:$0xff] %vm8324, %v8181
  %8350 = vst.msk [vmem:[%s3 + $0x188] sm:$0xff] %vm8324, %v8183
  %8351 = vst.msk [vmem:[%s3 + $0x1a0] sm:$0xff] %vm8324, %v8185
  %8352 = vst.msk [vmem:[%s3 + $0x1a8] sm:$0xff] %vm8324, %v8187
  %8353 = vst.msk [vmem:[%s3 + $0x1c0] sm:$0xff] %vm8324, %v8189
  %8354 = vst.msk [vmem:[%s3 + $0x1c8] sm:$0xff] %vm8324, %v8191
  %8355 = vst.msk [vmem:[%s3 + $0x1e0] sm:$0xff] %vm8324, %v8193
  %8356 = vst.msk [vmem:[%s3 + $0x1e8] sm:$0xff] %vm8324, %v8195
  %8357 = vst.msk [vmem:[%s3 + $0x200] sm:$0xff] %vm8324, %v8197
  %8358 = vst.msk [vmem:[%s3 + $0x208] sm:$0xff] %vm8324, %v8199
  %8359 = vst.msk [vmem:[%s3 + $0x220] sm:$0xff] %vm8324, %v8201
  %8360 = vst.msk [vmem:[%s3 + $0x228] sm:$0xff] %vm8324, %v8203
  %8361 = vst.msk [vmem:[%s3 + $0x240] sm:$0xff] %vm8324, %v8205
  %8362 = vst.msk [vmem:[%s3 + $0x248] sm:$0xff] %vm8324, %v8207
  %8363 = vst.msk [vmem:[%s3 + $0x260] sm:$0xff] %vm8324, %v8209
  %8364 = vst.msk [vmem:[%s3 + $0x268] sm:$0xff] %vm8324, %v8211
  %8365 = vst.msk [vmem:[%s3 + $0x280] sm:$0xff] %vm8324, %v8213
  %8366 = vst.msk [vmem:[%s3 + $0x288] sm:$0xff] %vm8324, %v8215
  %8367 = vst.msk [vmem:[%s3 + $0x2a0] sm:$0xff] %vm8324, %v8217
  %8368 = vst.msk [vmem:[%s3 + $0x2a8] sm:$0xff] %vm8324, %v8219
  %8369 = vst.msk [vmem:[%s3 + $0x2c0] sm:$0xff] %vm8324, %v8221
  %8370 = vst.msk [vmem:[%s3 + $0x2c8] sm:$0xff] %vm8324, %v8223
  %8371 = vst.msk [vmem:[%s3 + $0x2e0] sm:$0xff] %vm8324, %v8225
  %8372 = vst.msk [vmem:[%s3 + $0x2e8] sm:$0xff] %vm8324, %v8227
  %8373 = vst.msk [vmem:[%s3 + $0x300] sm:$0xff] %vm8324, %v8229
  %8374 = vst.msk [vmem:[%s3 + $0x308] sm:$0xff] %vm8324, %v8231
  %8375 = vst.msk [vmem:[%s3 + $0x320] sm:$0xff] %vm8324, %v8233
  %8376 = vst.msk [vmem:[%s3 + $0x328] sm:$0xff] %vm8324, %v8235
  %8377 = vst.msk [vmem:[%s3 + $0x340] sm:$0xff] %vm8324, %v8237
  %8378 = vst.msk [vmem:[%s3 + $0x348] sm:$0xff] %vm8324, %v8239
  %8379 = vst.msk [vmem:[%s3 + $0x360] sm:$0xff] %vm8324, %v8241
  %8380 = vst.msk [vmem:[%s3 + $0x368] sm:$0xff] %vm8324, %v8243
  %8381 = vst.msk [vmem:[%s3 + $0x380] sm:$0xff] %vm8324, %v8245
  %8382 = vst.msk [vmem:[%s3 + $0x388] sm:$0xff] %vm8324, %v8247
  %8383 = vst.msk [vmem:[%s3 + $0x3a0] sm:$0xff] %vm8324, %v8249
  %8384 = vst.msk [vmem:[%s3 + $0x3a8] sm:$0xff] %vm8324, %v8251
  %8385 = vst.msk [vmem:[%s3 + $0x3c0] sm:$0xff] %vm8324, %v8253
  %8386 = vst.msk [vmem:[%s3 + $0x3c8] sm:$0xff] %vm8324, %v8255
  %8387 = vst.msk [vmem:[%s3 + $0x3e0] sm:$0xff] %vm8324, %v8257
  %8388 = vst.msk [vmem:[%s3 + $0x3e8] sm:$0xff] %vm8324, %v8259
  %v8389 = vld [vmem:[%s1149] sm:$0xf]
  %v8390 = vld [vmem:[%s1149 + $0x4] sm:$0xf]
  %v8391 = vld [vmem:[%s1149 + $0xc] sm:$0xf]
  %v8392 = vld [vmem:[%s1149 + $0x10] sm:$0xf]
  %v8393 = vld [vmem:[%s1149 + $0x18] sm:$0xf]
  %v8394 = vld [vmem:[%s1149 + $0x1c] sm:$0xf]
  %v8395 = vld [vmem:[%s1149 + $0x24] sm:$0xf]
  %v8396 = vld [vmem:[%s1149 + $0x28] sm:$0xf]
  %v8397 = vld [vmem:[%s1149 + $0x30] sm:$0xf]
  %v8398 = vld [vmem:[%s1149 + $0x34] sm:$0xf]
  %v8399 = vld [vmem:[%s1149 + $0x3c] sm:$0xf]
  %v8400 = vld [vmem:[%s1149 + $0x40] sm:$0xf]
  %v8401 = vld [vmem:[%s1149 + $0x48] sm:$0xf]
  %v8402 = vld [vmem:[%s1149 + $0x4c] sm:$0xf]
  %v8403 = vld [vmem:[%s1149 + $0x54] sm:$0xf]
  %v8404 = vld [vmem:[%s1149 + $0x58] sm:$0xf]
  %v8405 = vld [vmem:[%s1149 + $0x60] sm:$0xf]
  %v8406 = vld [vmem:[%s1149 + $0x64] sm:$0xf]
  %v8407 = vld [vmem:[%s1149 + $0x6c] sm:$0xf]
  %v8408 = vld [vmem:[%s1149 + $0x70] sm:$0xf]
  %v8409 = vld [vmem:[%s1149 + $0x78] sm:$0xf]
  %v8410 = vld [vmem:[%s1149 + $0x7c] sm:$0xf]
  %v8411 = vld [vmem:[%s1149 + $0x84] sm:$0xf]
  %v8412 = vld [vmem:[%s1149 + $0x88] sm:$0xf]
  %v8413 = vld [vmem:[%s1149 + $0x90] sm:$0xf]
  %v8414 = vld [vmem:[%s1149 + $0x94] sm:$0xf]
  %v8415 = vld [vmem:[%s1149 + $0x9c] sm:$0xf]
  %v8416 = vld [vmem:[%s1149 + $0xa0] sm:$0xf]
  %v8417 = vld [vmem:[%s1149 + $0xa8] sm:$0xf]
  %v8418 = vld [vmem:[%s1149 + $0xac] sm:$0xf]
  %v8419 = vld [vmem:[%s1149 + $0xb4] sm:$0xf]
  %v8420 = vld [vmem:[%s1149 + $0xb8] sm:$0xf]
  %v8421 = vld [vmem:[%s1149 + $0xd8] sm:$0xf]
  %v8422 = vld [vmem:[%s1149 + $0xdc] sm:$0xf]
  %v8423 = vld [vmem:[%s1149 + $0xe4] sm:$0xf]
  %v8424 = vld [vmem:[%s1149 + $0xe8] sm:$0xf]
  %v8425 = vld [vmem:[%s1149 + $0xf0] sm:$0xf]
  %v8426 = vld [vmem:[%s1149 + $0xf4] sm:$0xf]
  %v8427 = vld [vmem:[%s1149 + $0xfc] sm:$0xf]
  %v8428 = vld [vmem:[%s1149 + $0x100] sm:$0xf]
  %v8429 = vld [vmem:[%s1149 + $0x108] sm:$0xf]
  %v8430 = vld [vmem:[%s1149 + $0x10c] sm:$0xf]
  %v8431 = vld [vmem:[%s1149 + $0x114] sm:$0xf]
  %v8432 = vld [vmem:[%s1149 + $0x118] sm:$0xf]
  %v8433 = vld [vmem:[%s1149 + $0x120] sm:$0xf]
  %v8434 = vld [vmem:[%s1149 + $0x124] sm:$0xf]
  %v8435 = vld [vmem:[%s1149 + $0x12c] sm:$0xf]
  %v8436 = vld [vmem:[%s1149 + $0x130] sm:$0xf]
  %v8437 = vld [vmem:[%s1149 + $0x138] sm:$0xf]
  %v8438 = vld [vmem:[%s1149 + $0x13c] sm:$0xf]
  %v8439 = vld [vmem:[%s1149 + $0x144] sm:$0xf]
  %v8440 = vld [vmem:[%s1149 + $0x148] sm:$0xf]
  %v8441 = vld [vmem:[%s1149 + $0x150] sm:$0xf]
  %v8442 = vld [vmem:[%s1149 + $0x154] sm:$0xf]
  %v8443 = vld [vmem:[%s1149 + $0x15c] sm:$0xf]
  %v8444 = vld [vmem:[%s1149 + $0x160] sm:$0xf]
  %v8445 = vld [vmem:[%s1149 + $0x168] sm:$0xf]
  %v8446 = vld [vmem:[%s1149 + $0x16c] sm:$0xf]
  %v8447 = vld [vmem:[%s1149 + $0x174] sm:$0xf]
  %v8448 = vld [vmem:[%s1149 + $0x178] sm:$0xf]
  %v8449 = vld [vmem:[%s1149 + $0x180] sm:$0xf]
  %v8450 = vld [vmem:[%s1149 + $0x184] sm:$0xf]
  %v8451 = vld [vmem:[%s1149 + $0x18c] sm:$0xf]
  %v8452 = vld [vmem:[%s1149 + $0x190] sm:$0xf]
  %v8453 = vld [vmem:[%s1149 + $0x8] sm:$0x1]
  %v8454 = vld [vmem:[%s1149 + $0x14] sm:$0x1]
  %v8455 = vld [vmem:[%s1149 + $0x20] sm:$0x1]
  %v8456 = vld [vmem:[%s1149 + $0x2c] sm:$0x1]
  %v8457 = vld [vmem:[%s1149 + $0x38] sm:$0x1]
  %v8458 = vld [vmem:[%s1149 + $0x44] sm:$0x1]
  %v8459 = vld [vmem:[%s1149 + $0x50] sm:$0x1]
  %v8460 = vld [vmem:[%s1149 + $0x5c] sm:$0x1]
  %v8461 = vld [vmem:[%s1149 + $0x68] sm:$0x1]
  %v8462 = vld [vmem:[%s1149 + $0x74] sm:$0x1]
  %v8463 = vld [vmem:[%s1149 + $0x80] sm:$0x1]
  %v8464 = vld [vmem:[%s1149 + $0x8c] sm:$0x1]
  %v8465 = vld [vmem:[%s1149 + $0x98] sm:$0x1]
  %v8466 = vld [vmem:[%s1149 + $0xa4] sm:$0x1]
  %v8467 = vld [vmem:[%s1149 + $0xb0] sm:$0x1]
  %v8468 = vld [vmem:[%s1149 + $0xbc] sm:$0x1]
  %v8469 = vld [vmem:[%s1149 + $0xe0] sm:$0x1]
  %v8470 = vld [vmem:[%s1149 + $0xec] sm:$0x1]
  %v8471 = vld [vmem:[%s1149 + $0xf8] sm:$0x1]
  %v8472 = vld [vmem:[%s1149 + $0x104] sm:$0x1]
  %v8473 = vld [vmem:[%s1149 + $0x110] sm:$0x1]
  %v8474 = vld [vmem:[%s1149 + $0x11c] sm:$0x1]
  %v8475 = vld [vmem:[%s1149 + $0x128] sm:$0x1]
  %v8476 = vld [vmem:[%s1149 + $0x134] sm:$0x1]
  %v8477 = vld [vmem:[%s1149 + $0x140] sm:$0x1]
  %v8478 = vld [vmem:[%s1149 + $0x14c] sm:$0x1]
  %v8479 = vld [vmem:[%s1149 + $0x158] sm:$0x1]
  %v8480 = vld [vmem:[%s1149 + $0x164] sm:$0x1]
  %v8481 = vld [vmem:[%s1149 + $0x170] sm:$0x1]
  %v8482 = vld [vmem:[%s1149 + $0x17c] sm:$0x1]
  %v8483 = vld [vmem:[%s1149 + $0x188] sm:$0x1]
  %v8484 = vld [vmem:[%s1149 + $0x194] sm:$0x1]
  %v8486 = vshrl.u32 %v8389, 16
  %v8488 = vrot.slane %v8486, 4
  %v8489 = vshll.u32 %v8389, 16
  %v8491 = vrot.slane %v8489, 5
  %v8492 = vor.u32 %v8488, %v8491
  %v8493 = vrot.slane %v8492, 4
  %v8495 = vshll.u32 %v8390, 16
  %v8497 = vrot.slane %v8495, 5
  %v8498 = vsel %vm1475, %v8493, %v8497
  %v8499 = vshrl.u32 %v8390, 16
  %v8501 = vrot.slane %v8499, 4
  %v8502 = vor.u32 %v8501, %v8497
  %v8503 = vrot.slane %v8502, 4
  %v8505 = vshll.u32 %v8453, 16
  %v8507 = vrot.slane %v8505, 5
  %v8508 = vsel %vm1475, %v8503, %v8507
  %v8510 = vshrl.u32 %v8391, 16
  %v8512 = vrot.slane %v8510, 4
  %v8513 = vshll.u32 %v8391, 16
  %v8515 = vrot.slane %v8513, 5
  %v8516 = vor.u32 %v8512, %v8515
  %v8517 = vrot.slane %v8516, 4
  %v8519 = vshll.u32 %v8392, 16
  %v8521 = vrot.slane %v8519, 5
  %v8522 = vsel %vm1475, %v8517, %v8521
  %v8523 = vshrl.u32 %v8392, 16
  %v8525 = vrot.slane %v8523, 4
  %v8526 = vor.u32 %v8525, %v8521
  %v8527 = vrot.slane %v8526, 4
  %v8529 = vshll.u32 %v8454, 16
  %v8531 = vrot.slane %v8529, 5
  %v8532 = vsel %vm1475, %v8527, %v8531
  %v8534 = vshrl.u32 %v8393, 16
  %v8536 = vrot.slane %v8534, 4
  %v8537 = vshll.u32 %v8393, 16
  %v8539 = vrot.slane %v8537, 5
  %v8540 = vor.u32 %v8536, %v8539
  %v8541 = vrot.slane %v8540, 4
  %v8543 = vshll.u32 %v8394, 16
  %v8545 = vrot.slane %v8543, 5
  %v8546 = vsel %vm1475, %v8541, %v8545
  %v8547 = vshrl.u32 %v8394, 16
  %v8549 = vrot.slane %v8547, 4
  %v8550 = vor.u32 %v8549, %v8545
  %v8551 = vrot.slane %v8550, 4
  %v8553 = vshll.u32 %v8455, 16
  %v8555 = vrot.slane %v8553, 5
  %v8556 = vsel %vm1475, %v8551, %v8555
  %v8558 = vshrl.u32 %v8395, 16
  %v8560 = vrot.slane %v8558, 4
  %v8561 = vshll.u32 %v8395, 16
  %v8563 = vrot.slane %v8561, 5
  %v8564 = vor.u32 %v8560, %v8563
  %v8565 = vrot.slane %v8564, 4
  %v8567 = vshll.u32 %v8396, 16
  %v8569 = vrot.slane %v8567, 5
  %v8570 = vsel %vm1475, %v8565, %v8569
  %v8571 = vshrl.u32 %v8396, 16
  %v8573 = vrot.slane %v8571, 4
  %v8574 = vor.u32 %v8573, %v8569
  %v8575 = vrot.slane %v8574, 4
  %v8577 = vshll.u32 %v8456, 16
  %v8579 = vrot.slane %v8577, 5
  %v8580 = vsel %vm1475, %v8575, %v8579
  %v8582 = vshrl.u32 %v8397, 16
  %v8584 = vrot.slane %v8582, 4
  %v8585 = vshll.u32 %v8397, 16
  %v8587 = vrot.slane %v8585, 5
  %v8588 = vor.u32 %v8584, %v8587
  %v8589 = vrot.slane %v8588, 4
  %v8591 = vshll.u32 %v8398, 16
  %v8593 = vrot.slane %v8591, 5
  %v8594 = vsel %vm1475, %v8589, %v8593
  %v8595 = vshrl.u32 %v8398, 16
  %v8597 = vrot.slane %v8595, 4
  %v8598 = vor.u32 %v8597, %v8593
  %v8599 = vrot.slane %v8598, 4
  %v8601 = vshll.u32 %v8457, 16
  %v8603 = vrot.slane %v8601, 5
  %v8604 = vsel %vm1475, %v8599, %v8603
  %v8606 = vshrl.u32 %v8399, 16
  %v8608 = vrot.slane %v8606, 4
  %v8609 = vshll.u32 %v8399, 16
  %v8611 = vrot.slane %v8609, 5
  %v8612 = vor.u32 %v8608, %v8611
  %v8613 = vrot.slane %v8612, 4
  %v8615 = vshll.u32 %v8400, 16
  %v8617 = vrot.slane %v8615, 5
  %v8618 = vsel %vm1475, %v8613, %v8617
  %v8619 = vshrl.u32 %v8400, 16
  %v8621 = vrot.slane %v8619, 4
  %v8622 = vor.u32 %v8621, %v8617
  %v8623 = vrot.slane %v8622, 4
  %v8625 = vshll.u32 %v8458, 16
  %v8627 = vrot.slane %v8625, 5
  %v8628 = vsel %vm1475, %v8623, %v8627
  %v8630 = vshrl.u32 %v8401, 16
  %v8632 = vrot.slane %v8630, 4
  %v8633 = vshll.u32 %v8401, 16
  %v8635 = vrot.slane %v8633, 5
  %v8636 = vor.u32 %v8632, %v8635
  %v8637 = vrot.slane %v8636, 4
  %v8639 = vshll.u32 %v8402, 16
  %v8641 = vrot.slane %v8639, 5
  %v8642 = vsel %vm1475, %v8637, %v8641
  %v8643 = vshrl.u32 %v8402, 16
  %v8645 = vrot.slane %v8643, 4
  %v8646 = vor.u32 %v8645, %v8641
  %v8647 = vrot.slane %v8646, 4
  %v8649 = vshll.u32 %v8459, 16
  %v8651 = vrot.slane %v8649, 5
  %v8652 = vsel %vm1475, %v8647, %v8651
  %v8654 = vshrl.u32 %v8403, 16
  %v8656 = vrot.slane %v8654, 4
  %v8657 = vshll.u32 %v8403, 16
  %v8659 = vrot.slane %v8657, 5
  %v8660 = vor.u32 %v8656, %v8659
  %v8661 = vrot.slane %v8660, 4
  %v8663 = vshll.u32 %v8404, 16
  %v8665 = vrot.slane %v8663, 5
  %v8666 = vsel %vm1475, %v8661, %v8665
  %v8667 = vshrl.u32 %v8404, 16
  %v8669 = vrot.slane %v8667, 4
  %v8670 = vor.u32 %v8669, %v8665
  %v8671 = vrot.slane %v8670, 4
  %v8673 = vshll.u32 %v8460, 16
  %v8675 = vrot.slane %v8673, 5
  %v8676 = vsel %vm1475, %v8671, %v8675
  %v8678 = vshrl.u32 %v8405, 16
  %v8680 = vrot.slane %v8678, 4
  %v8681 = vshll.u32 %v8405, 16
  %v8683 = vrot.slane %v8681, 5
  %v8684 = vor.u32 %v8680, %v8683
  %v8685 = vrot.slane %v8684, 4
  %v8687 = vshll.u32 %v8406, 16
  %v8689 = vrot.slane %v8687, 5
  %v8690 = vsel %vm1475, %v8685, %v8689
  %v8691 = vshrl.u32 %v8406, 16
  %v8693 = vrot.slane %v8691, 4
  %v8694 = vor.u32 %v8693, %v8689
  %v8695 = vrot.slane %v8694, 4
  %v8697 = vshll.u32 %v8461, 16
  %v8699 = vrot.slane %v8697, 5
  %v8700 = vsel %vm1475, %v8695, %v8699
  %v8702 = vshrl.u32 %v8407, 16
  %v8704 = vrot.slane %v8702, 4
  %v8705 = vshll.u32 %v8407, 16
  %v8707 = vrot.slane %v8705, 5
  %v8708 = vor.u32 %v8704, %v8707
  %v8709 = vrot.slane %v8708, 4
  %v8711 = vshll.u32 %v8408, 16
  %v8713 = vrot.slane %v8711, 5
  %v8714 = vsel %vm1475, %v8709, %v8713
  %v8715 = vshrl.u32 %v8408, 16
  %v8717 = vrot.slane %v8715, 4
  %v8718 = vor.u32 %v8717, %v8713
  %v8719 = vrot.slane %v8718, 4
  %v8721 = vshll.u32 %v8462, 16
  %v8723 = vrot.slane %v8721, 5
  %v8724 = vsel %vm1475, %v8719, %v8723
  %v8726 = vshrl.u32 %v8409, 16
  %v8728 = vrot.slane %v8726, 4
  %v8729 = vshll.u32 %v8409, 16
  %v8731 = vrot.slane %v8729, 5
  %v8732 = vor.u32 %v8728, %v8731
  %v8733 = vrot.slane %v8732, 4
  %v8735 = vshll.u32 %v8410, 16
  %v8737 = vrot.slane %v8735, 5
  %v8738 = vsel %vm1475, %v8733, %v8737
  %v8739 = vshrl.u32 %v8410, 16
  %v8741 = vrot.slane %v8739, 4
  %v8742 = vor.u32 %v8741, %v8737
  %v8743 = vrot.slane %v8742, 4
  %v8745 = vshll.u32 %v8463, 16
  %v8747 = vrot.slane %v8745, 5
  %v8748 = vsel %vm1475, %v8743, %v8747
  %v8750 = vshrl.u32 %v8411, 16
  %v8752 = vrot.slane %v8750, 4
  %v8753 = vshll.u32 %v8411, 16
  %v8755 = vrot.slane %v8753, 5
  %v8756 = vor.u32 %v8752, %v8755
  %v8757 = vrot.slane %v8756, 4
  %v8759 = vshll.u32 %v8412, 16
  %v8761 = vrot.slane %v8759, 5
  %v8762 = vsel %vm1475, %v8757, %v8761
  %v8763 = vshrl.u32 %v8412, 16
  %v8765 = vrot.slane %v8763, 4
  %v8766 = vor.u32 %v8765, %v8761
  %v8767 = vrot.slane %v8766, 4
  %v8769 = vshll.u32 %v8464, 16
  %v8771 = vrot.slane %v8769, 5
  %v8772 = vsel %vm1475, %v8767, %v8771
  %v8774 = vshrl.u32 %v8413, 16
  %v8776 = vrot.slane %v8774, 4
  %v8777 = vshll.u32 %v8413, 16
  %v8779 = vrot.slane %v8777, 5
  %v8780 = vor.u32 %v8776, %v8779
  %v8781 = vrot.slane %v8780, 4
  %v8783 = vshll.u32 %v8414, 16
  %v8785 = vrot.slane %v8783, 5
  %v8786 = vsel %vm1475, %v8781, %v8785
  %v8787 = vshrl.u32 %v8414, 16
  %v8789 = vrot.slane %v8787, 4
  %v8790 = vor.u32 %v8789, %v8785
  %v8791 = vrot.slane %v8790, 4
  %v8793 = vshll.u32 %v8465, 16
  %v8795 = vrot.slane %v8793, 5
  %v8796 = vsel %vm1475, %v8791, %v8795
  %v8798 = vshrl.u32 %v8415, 16
  %v8800 = vrot.slane %v8798, 4
  %v8801 = vshll.u32 %v8415, 16
  %v8803 = vrot.slane %v8801, 5
  %v8804 = vor.u32 %v8800, %v8803
  %v8805 = vrot.slane %v8804, 4
  %v8807 = vshll.u32 %v8416, 16
  %v8809 = vrot.slane %v8807, 5
  %v8810 = vsel %vm1475, %v8805, %v8809
  %v8811 = vshrl.u32 %v8416, 16
  %v8813 = vrot.slane %v8811, 4
  %v8814 = vor.u32 %v8813, %v8809
  %v8815 = vrot.slane %v8814, 4
  %v8817 = vshll.u32 %v8466, 16
  %v8819 = vrot.slane %v8817, 5
  %v8820 = vsel %vm1475, %v8815, %v8819
  %v8822 = vshrl.u32 %v8417, 16
  %v8824 = vrot.slane %v8822, 4
  %v8825 = vshll.u32 %v8417, 16
  %v8827 = vrot.slane %v8825, 5
  %v8828 = vor.u32 %v8824, %v8827
  %v8829 = vrot.slane %v8828, 4
  %v8831 = vshll.u32 %v8418, 16
  %v8833 = vrot.slane %v8831, 5
  %v8834 = vsel %vm1475, %v8829, %v8833
  %v8835 = vshrl.u32 %v8418, 16
  %v8837 = vrot.slane %v8835, 4
  %v8838 = vor.u32 %v8837, %v8833
  %v8839 = vrot.slane %v8838, 4
  %v8841 = vshll.u32 %v8467, 16
  %v8843 = vrot.slane %v8841, 5
  %v8844 = vsel %vm1475, %v8839, %v8843
  %v8846 = vshrl.u32 %v8419, 16
  %v8848 = vrot.slane %v8846, 4
  %v8849 = vshll.u32 %v8419, 16
  %v8851 = vrot.slane %v8849, 5
  %v8852 = vor.u32 %v8848, %v8851
  %v8853 = vrot.slane %v8852, 4
  %v8855 = vshll.u32 %v8420, 16
  %v8857 = vrot.slane %v8855, 5
  %v8858 = vsel %vm1475, %v8853, %v8857
  %v8859 = vshrl.u32 %v8420, 16
  %v8861 = vrot.slane %v8859, 4
  %v8862 = vor.u32 %v8861, %v8857
  %v8863 = vrot.slane %v8862, 4
  %v8865 = vshll.u32 %v8468, 16
  %v8867 = vrot.slane %v8865, 5
  %v8868 = vsel %vm1475, %v8863, %v8867
  %v8870 = vshrl.u32 %v8421, 16
  %v8872 = vrot.slane %v8870, 4
  %v8873 = vshll.u32 %v8421, 16
  %v8875 = vrot.slane %v8873, 5
  %v8876 = vor.u32 %v8872, %v8875
  %v8877 = vrot.slane %v8876, 4
  %v8879 = vshll.u32 %v8422, 16
  %v8881 = vrot.slane %v8879, 5
  %v8882 = vsel %vm1475, %v8877, %v8881
  %v8883 = vshrl.u32 %v8422, 16
  %v8885 = vrot.slane %v8883, 4
  %v8886 = vor.u32 %v8885, %v8881
  %v8887 = vrot.slane %v8886, 4
  %v8889 = vshll.u32 %v8469, 16
  %v8891 = vrot.slane %v8889, 5
  %v8892 = vsel %vm1475, %v8887, %v8891
  %v8894 = vshrl.u32 %v8423, 16
  %v8896 = vrot.slane %v8894, 4
  %v8897 = vshll.u32 %v8423, 16
  %v8899 = vrot.slane %v8897, 5
  %v8900 = vor.u32 %v8896, %v8899
  %v8901 = vrot.slane %v8900, 4
  %v8903 = vshll.u32 %v8424, 16
  %v8905 = vrot.slane %v8903, 5
  %v8906 = vsel %vm1475, %v8901, %v8905
  %v8907 = vshrl.u32 %v8424, 16
  %v8909 = vrot.slane %v8907, 4
  %v8910 = vor.u32 %v8909, %v8905
  %v8911 = vrot.slane %v8910, 4
  %v8913 = vshll.u32 %v8470, 16
  %v8915 = vrot.slane %v8913, 5
  %v8916 = vsel %vm1475, %v8911, %v8915
  %v8918 = vshrl.u32 %v8425, 16
  %v8920 = vrot.slane %v8918, 4
  %v8921 = vshll.u32 %v8425, 16
  %v8923 = vrot.slane %v8921, 5
  %v8924 = vor.u32 %v8920, %v8923
  %v8925 = vrot.slane %v8924, 4
  %v8927 = vshll.u32 %v8426, 16
  %v8929 = vrot.slane %v8927, 5
  %v8930 = vsel %vm1475, %v8925, %v8929
  %v8931 = vshrl.u32 %v8426, 16
  %v8933 = vrot.slane %v8931, 4
  %v8934 = vor.u32 %v8933, %v8929
  %v8935 = vrot.slane %v8934, 4
  %v8937 = vshll.u32 %v8471, 16
  %v8939 = vrot.slane %v8937, 5
  %v8940 = vsel %vm1475, %v8935, %v8939
  %v8942 = vshrl.u32 %v8427, 16
  %v8944 = vrot.slane %v8942, 4
  %v8945 = vshll.u32 %v8427, 16
  %v8947 = vrot.slane %v8945, 5
  %v8948 = vor.u32 %v8944, %v8947
  %v8949 = vrot.slane %v8948, 4
  %v8951 = vshll.u32 %v8428, 16
  %v8953 = vrot.slane %v8951, 5
  %v8954 = vsel %vm1475, %v8949, %v8953
  %v8955 = vshrl.u32 %v8428, 16
  %v8957 = vrot.slane %v8955, 4
  %v8958 = vor.u32 %v8957, %v8953
  %v8959 = vrot.slane %v8958, 4
  %v8961 = vshll.u32 %v8472, 16
  %v8963 = vrot.slane %v8961, 5
  %v8964 = vsel %vm1475, %v8959, %v8963
  %v8966 = vshrl.u32 %v8429, 16
  %v8968 = vrot.slane %v8966, 4
  %v8969 = vshll.u32 %v8429, 16
  %v8971 = vrot.slane %v8969, 5
  %v8972 = vor.u32 %v8968, %v8971
  %v8973 = vrot.slane %v8972, 4
  %v8975 = vshll.u32 %v8430, 16
  %v8977 = vrot.slane %v8975, 5
  %v8978 = vsel %vm1475, %v8973, %v8977
  %v8979 = vshrl.u32 %v8430, 16
  %v8981 = vrot.slane %v8979, 4
  %v8982 = vor.u32 %v8981, %v8977
  %v8983 = vrot.slane %v8982, 4
  %v8985 = vshll.u32 %v8473, 16
  %v8987 = vrot.slane %v8985, 5
  %v8988 = vsel %vm1475, %v8983, %v8987
  %v8990 = vshrl.u32 %v8431, 16
  %v8992 = vrot.slane %v8990, 4
  %v8993 = vshll.u32 %v8431, 16
  %v8995 = vrot.slane %v8993, 5
  %v8996 = vor.u32 %v8992, %v8995
  %v8997 = vrot.slane %v8996, 4
  %v8999 = vshll.u32 %v8432, 16
  %v9001 = vrot.slane %v8999, 5
  %v9002 = vsel %vm1475, %v8997, %v9001
  %v9003 = vshrl.u32 %v8432, 16
  %v9005 = vrot.slane %v9003, 4
  %v9006 = vor.u32 %v9005, %v9001
  %v9007 = vrot.slane %v9006, 4
  %v9009 = vshll.u32 %v8474, 16
  %v9011 = vrot.slane %v9009, 5
  %v9012 = vsel %vm1475, %v9007, %v9011
  %v9014 = vshrl.u32 %v8433, 16
  %v9016 = vrot.slane %v9014, 4
  %v9017 = vshll.u32 %v8433, 16
  %v9019 = vrot.slane %v9017, 5
  %v9020 = vor.u32 %v9016, %v9019
  %v9021 = vrot.slane %v9020, 4
  %v9023 = vshll.u32 %v8434, 16
  %v9025 = vrot.slane %v9023, 5
  %v9026 = vsel %vm1475, %v9021, %v9025
  %v9027 = vshrl.u32 %v8434, 16
  %v9029 = vrot.slane %v9027, 4
  %v9030 = vor.u32 %v9029, %v9025
  %v9031 = vrot.slane %v9030, 4
  %v9033 = vshll.u32 %v8475, 16
  %v9035 = vrot.slane %v9033, 5
  %v9036 = vsel %vm1475, %v9031, %v9035
  %v9038 = vshrl.u32 %v8435, 16
  %v9040 = vrot.slane %v9038, 4
  %v9041 = vshll.u32 %v8435, 16
  %v9043 = vrot.slane %v9041, 5
  %v9044 = vor.u32 %v9040, %v9043
  %v9045 = vrot.slane %v9044, 4
  %v9047 = vshll.u32 %v8436, 16
  %v9049 = vrot.slane %v9047, 5
  %v9050 = vsel %vm1475, %v9045, %v9049
  %v9051 = vshrl.u32 %v8436, 16
  %v9053 = vrot.slane %v9051, 4
  %v9054 = vor.u32 %v9053, %v9049
  %v9055 = vrot.slane %v9054, 4
  %v9057 = vshll.u32 %v8476, 16
  %v9059 = vrot.slane %v9057, 5
  %v9060 = vsel %vm1475, %v9055, %v9059
  %v9062 = vshrl.u32 %v8437, 16
  %v9064 = vrot.slane %v9062, 4
  %v9065 = vshll.u32 %v8437, 16
  %v9067 = vrot.slane %v9065, 5
  %v9068 = vor.u32 %v9064, %v9067
  %v9069 = vrot.slane %v9068, 4
  %v9071 = vshll.u32 %v8438, 16
  %v9073 = vrot.slane %v9071, 5
  %v9074 = vsel %vm1475, %v9069, %v9073
  %v9075 = vshrl.u32 %v8438, 16
  %v9077 = vrot.slane %v9075, 4
  %v9078 = vor.u32 %v9077, %v9073
  %v9079 = vrot.slane %v9078, 4
  %v9081 = vshll.u32 %v8477, 16
  %v9083 = vrot.slane %v9081, 5
  %v9084 = vsel %vm1475, %v9079, %v9083
  %v9086 = vshrl.u32 %v8439, 16
  %v9088 = vrot.slane %v9086, 4
  %v9089 = vshll.u32 %v8439, 16
  %v9091 = vrot.slane %v9089, 5
  %v9092 = vor.u32 %v9088, %v9091
  %v9093 = vrot.slane %v9092, 4
  %v9095 = vshll.u32 %v8440, 16
  %v9097 = vrot.slane %v9095, 5
  %v9098 = vsel %vm1475, %v9093, %v9097
  %v9099 = vshrl.u32 %v8440, 16
  %v9101 = vrot.slane %v9099, 4
  %v9102 = vor.u32 %v9101, %v9097
  %v9103 = vrot.slane %v9102, 4
  %v9105 = vshll.u32 %v8478, 16
  %v9107 = vrot.slane %v9105, 5
  %v9108 = vsel %vm1475, %v9103, %v9107
  %v9110 = vshrl.u32 %v8441, 16
  %v9112 = vrot.slane %v9110, 4
  %v9113 = vshll.u32 %v8441, 16
  %v9115 = vrot.slane %v9113, 5
  %v9116 = vor.u32 %v9112, %v9115
  %v9117 = vrot.slane %v9116, 4
  %v9119 = vshll.u32 %v8442, 16
  %v9121 = vrot.slane %v9119, 5
  %v9122 = vsel %vm1475, %v9117, %v9121
  %v9123 = vshrl.u32 %v8442, 16
  %v9125 = vrot.slane %v9123, 4
  %v9126 = vor.u32 %v9125, %v9121
  %v9127 = vrot.slane %v9126, 4
  %v9129 = vshll.u32 %v8479, 16
  %v9131 = vrot.slane %v9129, 5
  %v9132 = vsel %vm1475, %v9127, %v9131
  %v9134 = vshrl.u32 %v8443, 16
  %v9136 = vrot.slane %v9134, 4
  %v9137 = vshll.u32 %v8443, 16
  %v9139 = vrot.slane %v9137, 5
  %v9140 = vor.u32 %v9136, %v9139
  %v9141 = vrot.slane %v9140, 4
  %v9143 = vshll.u32 %v8444, 16
  %v9145 = vrot.slane %v9143, 5
  %v9146 = vsel %vm1475, %v9141, %v9145
  %v9147 = vshrl.u32 %v8444, 16
  %v9149 = vrot.slane %v9147, 4
  %v9150 = vor.u32 %v9149, %v9145
  %v9151 = vrot.slane %v9150, 4
  %v9153 = vshll.u32 %v8480, 16
  %v9155 = vrot.slane %v9153, 5
  %v9156 = vsel %vm1475, %v9151, %v9155
  %v9158 = vshrl.u32 %v8445, 16
  %v9160 = vrot.slane %v9158, 4
  %v9161 = vshll.u32 %v8445, 16
  %v9163 = vrot.slane %v9161, 5
  %v9164 = vor.u32 %v9160, %v9163
  %v9165 = vrot.slane %v9164, 4
  %v9167 = vshll.u32 %v8446, 16
  %v9169 = vrot.slane %v9167, 5
  %v9170 = vsel %vm1475, %v9165, %v9169
  %v9171 = vshrl.u32 %v8446, 16
  %v9173 = vrot.slane %v9171, 4
  %v9174 = vor.u32 %v9173, %v9169
  %v9175 = vrot.slane %v9174, 4
  %v9177 = vshll.u32 %v8481, 16
  %v9179 = vrot.slane %v9177, 5
  %v9180 = vsel %vm1475, %v9175, %v9179
  %v9182 = vshrl.u32 %v8447, 16
  %v9184 = vrot.slane %v9182, 4
  %v9185 = vshll.u32 %v8447, 16
  %v9187 = vrot.slane %v9185, 5
  %v9188 = vor.u32 %v9184, %v9187
  %v9189 = vrot.slane %v9188, 4
  %v9191 = vshll.u32 %v8448, 16
  %v9193 = vrot.slane %v9191, 5
  %v9194 = vsel %vm1475, %v9189, %v9193
  %v9195 = vshrl.u32 %v8448, 16
  %v9197 = vrot.slane %v9195, 4
  %v9198 = vor.u32 %v9197, %v9193
  %v9199 = vrot.slane %v9198, 4
  %v9201 = vshll.u32 %v8482, 16
  %v9203 = vrot.slane %v9201, 5
  %v9204 = vsel %vm1475, %v9199, %v9203
  %v9206 = vshrl.u32 %v8449, 16
  %v9208 = vrot.slane %v9206, 4
  %v9209 = vshll.u32 %v8449, 16
  %v9211 = vrot.slane %v9209, 5
  %v9212 = vor.u32 %v9208, %v9211
  %v9213 = vrot.slane %v9212, 4
  %v9215 = vshll.u32 %v8450, 16
  %v9217 = vrot.slane %v9215, 5
  %v9218 = vsel %vm1475, %v9213, %v9217
  %v9219 = vshrl.u32 %v8450, 16
  %v9221 = vrot.slane %v9219, 4
  %v9222 = vor.u32 %v9221, %v9217
  %v9223 = vrot.slane %v9222, 4
  %v9225 = vshll.u32 %v8483, 16
  %v9227 = vrot.slane %v9225, 5
  %v9228 = vsel %vm1475, %v9223, %v9227
  %v9230 = vshrl.u32 %v8451, 16
  %v9232 = vrot.slane %v9230, 4
  %v9233 = vshll.u32 %v8451, 16
  %v9235 = vrot.slane %v9233, 5
  %v9236 = vor.u32 %v9232, %v9235
  %v9237 = vrot.slane %v9236, 4
  %v9239 = vshll.u32 %v8452, 16
  %v9241 = vrot.slane %v9239, 5
  %v9242 = vsel %vm1475, %v9237, %v9241
  %v9243 = vshrl.u32 %v8452, 16
  %v9245 = vrot.slane %v9243, 4
  %v9246 = vor.u32 %v9245, %v9241
  %v9247 = vrot.slane %v9246, 4
  %v9249 = vshll.u32 %v8484, 16
  %v9251 = vrot.slane %v9249, 5
  %v9252 = vsel %vm1475, %v9247, %v9251
  %s9253 = scalar_lea.vmem [#allocation2], 24
  %v9254 = vld [vmem:[%s9253] sm:$0xf]
  %v9255 = vld [vmem:[%s9253 + $0x4] sm:$0xf]
  %v9256 = vld [vmem:[%s9253 + $0xc] sm:$0xf]
  %v9257 = vld [vmem:[%s9253 + $0x10] sm:$0xf]
  %v9258 = vld [vmem:[%s9253 + $0x18] sm:$0xf]
  %v9259 = vld [vmem:[%s9253 + $0x1c] sm:$0xf]
  %v9260 = vld [vmem:[%s9253 + $0x24] sm:$0xf]
  %v9261 = vld [vmem:[%s9253 + $0x28] sm:$0xf]
  %v9262 = vld [vmem:[%s9253 + $0x30] sm:$0xf]
  %v9263 = vld [vmem:[%s9253 + $0x34] sm:$0xf]
  %v9264 = vld [vmem:[%s9253 + $0x3c] sm:$0xf]
  %v9265 = vld [vmem:[%s9253 + $0x40] sm:$0xf]
  %v9266 = vld [vmem:[%s9253 + $0x48] sm:$0xf]
  %v9267 = vld [vmem:[%s9253 + $0x4c] sm:$0xf]
  %v9268 = vld [vmem:[%s9253 + $0x54] sm:$0xf]
  %v9269 = vld [vmem:[%s9253 + $0x58] sm:$0xf]
  %v9270 = vld [vmem:[%s9253 + $0x60] sm:$0xf]
  %v9271 = vld [vmem:[%s9253 + $0x64] sm:$0xf]
  %v9272 = vld [vmem:[%s9253 + $0x6c] sm:$0xf]
  %v9273 = vld [vmem:[%s9253 + $0x70] sm:$0xf]
  %v9274 = vld [vmem:[%s9253 + $0x78] sm:$0xf]
  %v9275 = vld [vmem:[%s9253 + $0x7c] sm:$0xf]
  %v9276 = vld [vmem:[%s9253 + $0x84] sm:$0xf]
  %v9277 = vld [vmem:[%s9253 + $0x88] sm:$0xf]
  %v9278 = vld [vmem:[%s9253 + $0x90] sm:$0xf]
  %v9279 = vld [vmem:[%s9253 + $0x94] sm:$0xf]
  %v9280 = vld [vmem:[%s9253 + $0x9c] sm:$0xf]
  %v9281 = vld [vmem:[%s9253 + $0xa0] sm:$0xf]
  %v9282 = vld [vmem:[%s9253 + $0xa8] sm:$0xf]
  %v9283 = vld [vmem:[%s9253 + $0xac] sm:$0xf]
  %v9284 = vld [vmem:[%s9253 + $0xb4] sm:$0xf]
  %v9285 = vld [vmem:[%s9253 + $0xb8] sm:$0xf]
  %v9286 = vld [vmem:[%s9253 + $0xd8] sm:$0xf]
  %v9287 = vld [vmem:[%s9253 + $0xdc] sm:$0xf]
  %v9288 = vld [vmem:[%s9253 + $0xe4] sm:$0xf]
  %v9289 = vld [vmem:[%s9253 + $0xe8] sm:$0xf]
  %v9290 = vld [vmem:[%s9253 + $0xf0] sm:$0xf]
  %v9291 = vld [vmem:[%s9253 + $0xf4] sm:$0xf]
  %v9292 = vld [vmem:[%s9253 + $0xfc] sm:$0xf]
  %v9293 = vld [vmem:[%s9253 + $0x100] sm:$0xf]
  %v9294 = vld [vmem:[%s9253 + $0x108] sm:$0xf]
  %v9295 = vld [vmem:[%s9253 + $0x10c] sm:$0xf]
  %v9296 = vld [vmem:[%s9253 + $0x114] sm:$0xf]
  %v9297 = vld [vmem:[%s9253 + $0x118] sm:$0xf]
  %v9298 = vld [vmem:[%s9253 + $0x120] sm:$0xf]
  %v9299 = vld [vmem:[%s9253 + $0x124] sm:$0xf]
  %v9300 = vld [vmem:[%s9253 + $0x12c] sm:$0xf]
  %v9301 = vld [vmem:[%s9253 + $0x130] sm:$0xf]
  %v9302 = vld [vmem:[%s9253 + $0x138] sm:$0xf]
  %v9303 = vld [vmem:[%s9253 + $0x13c] sm:$0xf]
  %v9304 = vld [vmem:[%s9253 + $0x144] sm:$0xf]
  %v9305 = vld [vmem:[%s9253 + $0x148] sm:$0xf]
  %v9306 = vld [vmem:[%s9253 + $0x150] sm:$0xf]
  %v9307 = vld [vmem:[%s9253 + $0x154] sm:$0xf]
  %v9308 = vld [vmem:[%s9253 + $0x15c] sm:$0xf]
  %v9309 = vld [vmem:[%s9253 + $0x160] sm:$0xf]
  %v9310 = vld [vmem:[%s9253 + $0x168] sm:$0xf]
  %v9311 = vld [vmem:[%s9253 + $0x16c] sm:$0xf]
  %v9312 = vld [vmem:[%s9253 + $0x174] sm:$0xf]
  %v9313 = vld [vmem:[%s9253 + $0x178] sm:$0xf]
  %v9314 = vld [vmem:[%s9253 + $0x180] sm:$0xf]
  %v9315 = vld [vmem:[%s9253 + $0x184] sm:$0xf]
  %v9316 = vld [vmem:[%s9253 + $0x18c] sm:$0xf]
  %v9317 = vld [vmem:[%s9253 + $0x190] sm:$0xf]
  %v9318 = vld [vmem:[%s9253 + $0x8] sm:$0x1]
  %v9319 = vld [vmem:[%s9253 + $0x14] sm:$0x1]
  %v9320 = vld [vmem:[%s9253 + $0x20] sm:$0x1]
  %v9321 = vld [vmem:[%s9253 + $0x2c] sm:$0x1]
  %v9322 = vld [vmem:[%s9253 + $0x38] sm:$0x1]
  %v9323 = vld [vmem:[%s9253 + $0x44] sm:$0x1]
  %v9324 = vld [vmem:[%s9253 + $0x50] sm:$0x1]
  %v9325 = vld [vmem:[%s9253 + $0x5c] sm:$0x1]
  %v9326 = vld [vmem:[%s9253 + $0x68] sm:$0x1]
  %v9327 = vld [vmem:[%s9253 + $0x74] sm:$0x1]
  %v9328 = vld [vmem:[%s9253 + $0x80] sm:$0x1]
  %v9329 = vld [vmem:[%s9253 + $0x8c] sm:$0x1]
  %v9330 = vld [vmem:[%s9253 + $0x98] sm:$0x1]
  %v9331 = vld [vmem:[%s9253 + $0xa4] sm:$0x1]
  %v9332 = vld [vmem:[%s9253 + $0xb0] sm:$0x1]
  %v9333 = vld [vmem:[%s9253 + $0xbc] sm:$0x1]
  %v9334 = vld [vmem:[%s9253 + $0xe0] sm:$0x1]
  %v9335 = vld [vmem:[%s9253 + $0xec] sm:$0x1]
  %v9336 = vld [vmem:[%s9253 + $0xf8] sm:$0x1]
  %v9337 = vld [vmem:[%s9253 + $0x104] sm:$0x1]
  %v9338 = vld [vmem:[%s9253 + $0x110] sm:$0x1]
  %v9339 = vld [vmem:[%s9253 + $0x11c] sm:$0x1]
  %v9340 = vld [vmem:[%s9253 + $0x128] sm:$0x1]
  %v9341 = vld [vmem:[%s9253 + $0x134] sm:$0x1]
  %v9342 = vld [vmem:[%s9253 + $0x140] sm:$0x1]
  %v9343 = vld [vmem:[%s9253 + $0x14c] sm:$0x1]
  %v9344 = vld [vmem:[%s9253 + $0x158] sm:$0x1]
  %v9345 = vld [vmem:[%s9253 + $0x164] sm:$0x1]
  %v9346 = vld [vmem:[%s9253 + $0x170] sm:$0x1]
  %v9347 = vld [vmem:[%s9253 + $0x17c] sm:$0x1]
  %v9348 = vld [vmem:[%s9253 + $0x188] sm:$0x1]
  %v9349 = vld [vmem:[%s9253 + $0x194] sm:$0x1]
  %v9351 = vshrl.u32 %v9254, 16
  %v9353 = vrot.slane %v9351, 4
  %v9354 = vshll.u32 %v9254, 16
  %v9356 = vrot.slane %v9354, 5
  %v9357 = vor.u32 %v9353, %v9356
  %v9358 = vrot.slane %v9357, 4
  %v9360 = vshll.u32 %v9255, 16
  %v9362 = vrot.slane %v9360, 5
  %v9363 = vsel %vm1475, %v9358, %v9362
  %v9364 = vshrl.u32 %v9255, 16
  %v9366 = vrot.slane %v9364, 4
  %v9367 = vor.u32 %v9366, %v9362
  %v9368 = vrot.slane %v9367, 4
  %v9370 = vshll.u32 %v9318, 16
  %v9372 = vrot.slane %v9370, 5
  %v9373 = vsel %vm1475, %v9368, %v9372
  %v9375 = vshrl.u32 %v9256, 16
  %v9377 = vrot.slane %v9375, 4
  %v9378 = vshll.u32 %v9256, 16
  %v9380 = vrot.slane %v9378, 5
  %v9381 = vor.u32 %v9377, %v9380
  %v9382 = vrot.slane %v9381, 4
  %v9384 = vshll.u32 %v9257, 16
  %v9386 = vrot.slane %v9384, 5
  %v9387 = vsel %vm1475, %v9382, %v9386
  %v9388 = vshrl.u32 %v9257, 16
  %v9390 = vrot.slane %v9388, 4
  %v9391 = vor.u32 %v9390, %v9386
  %v9392 = vrot.slane %v9391, 4
  %v9394 = vshll.u32 %v9319, 16
  %v9396 = vrot.slane %v9394, 5
  %v9397 = vsel %vm1475, %v9392, %v9396
  %v9399 = vshrl.u32 %v9258, 16
  %v9401 = vrot.slane %v9399, 4
  %v9402 = vshll.u32 %v9258, 16
  %v9404 = vrot.slane %v9402, 5
  %v9405 = vor.u32 %v9401, %v9404
  %v9406 = vrot.slane %v9405, 4
  %v9408 = vshll.u32 %v9259, 16
  %v9410 = vrot.slane %v9408, 5
  %v9411 = vsel %vm1475, %v9406, %v9410
  %v9412 = vshrl.u32 %v9259, 16
  %v9414 = vrot.slane %v9412, 4
  %v9415 = vor.u32 %v9414, %v9410
  %v9416 = vrot.slane %v9415, 4
  %v9418 = vshll.u32 %v9320, 16
  %v9420 = vrot.slane %v9418, 5
  %v9421 = vsel %vm1475, %v9416, %v9420
  %v9423 = vshrl.u32 %v9260, 16
  %v9425 = vrot.slane %v9423, 4
  %v9426 = vshll.u32 %v9260, 16
  %v9428 = vrot.slane %v9426, 5
  %v9429 = vor.u32 %v9425, %v9428
  %v9430 = vrot.slane %v9429, 4
  %v9432 = vshll.u32 %v9261, 16
  %v9434 = vrot.slane %v9432, 5
  %v9435 = vsel %vm1475, %v9430, %v9434
  %v9436 = vshrl.u32 %v9261, 16
  %v9438 = vrot.slane %v9436, 4
  %v9439 = vor.u32 %v9438, %v9434
  %v9440 = vrot.slane %v9439, 4
  %v9442 = vshll.u32 %v9321, 16
  %v9444 = vrot.slane %v9442, 5
  %v9445 = vsel %vm1475, %v9440, %v9444
  %v9447 = vshrl.u32 %v9262, 16
  %v9449 = vrot.slane %v9447, 4
  %v9450 = vshll.u32 %v9262, 16
  %v9452 = vrot.slane %v9450, 5
  %v9453 = vor.u32 %v9449, %v9452
  %v9454 = vrot.slane %v9453, 4
  %v9456 = vshll.u32 %v9263, 16
  %v9458 = vrot.slane %v9456, 5
  %v9459 = vsel %vm1475, %v9454, %v9458
  %v9460 = vshrl.u32 %v9263, 16
  %v9462 = vrot.slane %v9460, 4
  %v9463 = vor.u32 %v9462, %v9458
  %v9464 = vrot.slane %v9463, 4
  %v9466 = vshll.u32 %v9322, 16
  %v9468 = vrot.slane %v9466, 5
  %v9469 = vsel %vm1475, %v9464, %v9468
  %v9471 = vshrl.u32 %v9264, 16
  %v9473 = vrot.slane %v9471, 4
  %v9474 = vshll.u32 %v9264, 16
  %v9476 = vrot.slane %v9474, 5
  %v9477 = vor.u32 %v9473, %v9476
  %v9478 = vrot.slane %v9477, 4
  %v9480 = vshll.u32 %v9265, 16
  %v9482 = vrot.slane %v9480, 5
  %v9483 = vsel %vm1475, %v9478, %v9482
  %v9484 = vshrl.u32 %v9265, 16
  %v9486 = vrot.slane %v9484, 4
  %v9487 = vor.u32 %v9486, %v9482
  %v9488 = vrot.slane %v9487, 4
  %v9490 = vshll.u32 %v9323, 16
  %v9492 = vrot.slane %v9490, 5
  %v9493 = vsel %vm1475, %v9488, %v9492
  %v9495 = vshrl.u32 %v9266, 16
  %v9497 = vrot.slane %v9495, 4
  %v9498 = vshll.u32 %v9266, 16
  %v9500 = vrot.slane %v9498, 5
  %v9501 = vor.u32 %v9497, %v9500
  %v9502 = vrot.slane %v9501, 4
  %v9504 = vshll.u32 %v9267, 16
  %v9506 = vrot.slane %v9504, 5
  %v9507 = vsel %vm1475, %v9502, %v9506
  %v9508 = vshrl.u32 %v9267, 16
  %v9510 = vrot.slane %v9508, 4
  %v9511 = vor.u32 %v9510, %v9506
  %v9512 = vrot.slane %v9511, 4
  %v9514 = vshll.u32 %v9324, 16
  %v9516 = vrot.slane %v9514, 5
  %v9517 = vsel %vm1475, %v9512, %v9516
  %v9519 = vshrl.u32 %v9268, 16
  %v9521 = vrot.slane %v9519, 4
  %v9522 = vshll.u32 %v9268, 16
  %v9524 = vrot.slane %v9522, 5
  %v9525 = vor.u32 %v9521, %v9524
  %v9526 = vrot.slane %v9525, 4
  %v9528 = vshll.u32 %v9269, 16
  %v9530 = vrot.slane %v9528, 5
  %v9531 = vsel %vm1475, %v9526, %v9530
  %v9532 = vshrl.u32 %v9269, 16
  %v9534 = vrot.slane %v9532, 4
  %v9535 = vor.u32 %v9534, %v9530
  %v9536 = vrot.slane %v9535, 4
  %v9538 = vshll.u32 %v9325, 16
  %v9540 = vrot.slane %v9538, 5
  %v9541 = vsel %vm1475, %v9536, %v9540
  %v9543 = vshrl.u32 %v9270, 16
  %v9545 = vrot.slane %v9543, 4
  %v9546 = vshll.u32 %v9270, 16
  %v9548 = vrot.slane %v9546, 5
  %v9549 = vor.u32 %v9545, %v9548
  %v9550 = vrot.slane %v9549, 4
  %v9552 = vshll.u32 %v9271, 16
  %v9554 = vrot.slane %v9552, 5
  %v9555 = vsel %vm1475, %v9550, %v9554
  %v9556 = vshrl.u32 %v9271, 16
  %v9558 = vrot.slane %v9556, 4
  %v9559 = vor.u32 %v9558, %v9554
  %v9560 = vrot.slane %v9559, 4
  %v9562 = vshll.u32 %v9326, 16
  %v9564 = vrot.slane %v9562, 5
  %v9565 = vsel %vm1475, %v9560, %v9564
  %v9567 = vshrl.u32 %v9272, 16
  %v9569 = vrot.slane %v9567, 4
  %v9570 = vshll.u32 %v9272, 16
  %v9572 = vrot.slane %v9570, 5
  %v9573 = vor.u32 %v9569, %v9572
  %v9574 = vrot.slane %v9573, 4
  %v9576 = vshll.u32 %v9273, 16
  %v9578 = vrot.slane %v9576, 5
  %v9579 = vsel %vm1475, %v9574, %v9578
  %v9580 = vshrl.u32 %v9273, 16
  %v9582 = vrot.slane %v9580, 4
  %v9583 = vor.u32 %v9582, %v9578
  %v9584 = vrot.slane %v9583, 4
  %v9586 = vshll.u32 %v9327, 16
  %v9588 = vrot.slane %v9586, 5
  %v9589 = vsel %vm1475, %v9584, %v9588
  %v9591 = vshrl.u32 %v9274, 16
  %v9593 = vrot.slane %v9591, 4
  %v9594 = vshll.u32 %v9274, 16
  %v9596 = vrot.slane %v9594, 5
  %v9597 = vor.u32 %v9593, %v9596
  %v9598 = vrot.slane %v9597, 4
  %v9600 = vshll.u32 %v9275, 16
  %v9602 = vrot.slane %v9600, 5
  %v9603 = vsel %vm1475, %v9598, %v9602
  %v9604 = vshrl.u32 %v9275, 16
  %v9606 = vrot.slane %v9604, 4
  %v9607 = vor.u32 %v9606, %v9602
  %v9608 = vrot.slane %v9607, 4
  %v9610 = vshll.u32 %v9328, 16
  %v9612 = vrot.slane %v9610, 5
  %v9613 = vsel %vm1475, %v9608, %v9612
  %v9615 = vshrl.u32 %v9276, 16
  %v9617 = vrot.slane %v9615, 4
  %v9618 = vshll.u32 %v9276, 16
  %v9620 = vrot.slane %v9618, 5
  %v9621 = vor.u32 %v9617, %v9620
  %v9622 = vrot.slane %v9621, 4
  %v9624 = vshll.u32 %v9277, 16
  %v9626 = vrot.slane %v9624, 5
  %v9627 = vsel %vm1475, %v9622, %v9626
  %v9628 = vshrl.u32 %v9277, 16
  %v9630 = vrot.slane %v9628, 4
  %v9631 = vor.u32 %v9630, %v9626
  %v9632 = vrot.slane %v9631, 4
  %v9634 = vshll.u32 %v9329, 16
  %v9636 = vrot.slane %v9634, 5
  %v9637 = vsel %vm1475, %v9632, %v9636
  %v9639 = vshrl.u32 %v9278, 16
  %v9641 = vrot.slane %v9639, 4
  %v9642 = vshll.u32 %v9278, 16
  %v9644 = vrot.slane %v9642, 5
  %v9645 = vor.u32 %v9641, %v9644
  %v9646 = vrot.slane %v9645, 4
  %v9648 = vshll.u32 %v9279, 16
  %v9650 = vrot.slane %v9648, 5
  %v9651 = vsel %vm1475, %v9646, %v9650
  %v9652 = vshrl.u32 %v9279, 16
  %v9654 = vrot.slane %v9652, 4
  %v9655 = vor.u32 %v9654, %v9650
  %v9656 = vrot.slane %v9655, 4
  %v9658 = vshll.u32 %v9330, 16
  %v9660 = vrot.slane %v9658, 5
  %v9661 = vsel %vm1475, %v9656, %v9660
  %v9663 = vshrl.u32 %v9280, 16
  %v9665 = vrot.slane %v9663, 4
  %v9666 = vshll.u32 %v9280, 16
  %v9668 = vrot.slane %v9666, 5
  %v9669 = vor.u32 %v9665, %v9668
  %v9670 = vrot.slane %v9669, 4
  %v9672 = vshll.u32 %v9281, 16
  %v9674 = vrot.slane %v9672, 5
  %v9675 = vsel %vm1475, %v9670, %v9674
  %v9676 = vshrl.u32 %v9281, 16
  %v9678 = vrot.slane %v9676, 4
  %v9679 = vor.u32 %v9678, %v9674
  %v9680 = vrot.slane %v9679, 4
  %v9682 = vshll.u32 %v9331, 16
  %v9684 = vrot.slane %v9682, 5
  %v9685 = vsel %vm1475, %v9680, %v9684
  %v9687 = vshrl.u32 %v9282, 16
  %v9689 = vrot.slane %v9687, 4
  %v9690 = vshll.u32 %v9282, 16
  %v9692 = vrot.slane %v9690, 5
  %v9693 = vor.u32 %v9689, %v9692
  %v9694 = vrot.slane %v9693, 4
  %v9696 = vshll.u32 %v9283, 16
  %v9698 = vrot.slane %v9696, 5
  %v9699 = vsel %vm1475, %v9694, %v9698
  %v9700 = vshrl.u32 %v9283, 16
  %v9702 = vrot.slane %v9700, 4
  %v9703 = vor.u32 %v9702, %v9698
  %v9704 = vrot.slane %v9703, 4
  %v9706 = vshll.u32 %v9332, 16
  %v9708 = vrot.slane %v9706, 5
  %v9709 = vsel %vm1475, %v9704, %v9708
  %v9711 = vshrl.u32 %v9284, 16
  %v9713 = vrot.slane %v9711, 4
  %v9714 = vshll.u32 %v9284, 16
  %v9716 = vrot.slane %v9714, 5
  %v9717 = vor.u32 %v9713, %v9716
  %v9718 = vrot.slane %v9717, 4
  %v9720 = vshll.u32 %v9285, 16
  %v9722 = vrot.slane %v9720, 5
  %v9723 = vsel %vm1475, %v9718, %v9722
  %v9724 = vshrl.u32 %v9285, 16
  %v9726 = vrot.slane %v9724, 4
  %v9727 = vor.u32 %v9726, %v9722
  %v9728 = vrot.slane %v9727, 4
  %v9730 = vshll.u32 %v9333, 16
  %v9732 = vrot.slane %v9730, 5
  %v9733 = vsel %vm1475, %v9728, %v9732
  %v9735 = vshrl.u32 %v9286, 16
  %v9737 = vrot.slane %v9735, 4
  %v9738 = vshll.u32 %v9286, 16
  %v9740 = vrot.slane %v9738, 5
  %v9741 = vor.u32 %v9737, %v9740
  %v9742 = vrot.slane %v9741, 4
  %v9744 = vshll.u32 %v9287, 16
  %v9746 = vrot.slane %v9744, 5
  %v9747 = vsel %vm1475, %v9742, %v9746
  %v9748 = vshrl.u32 %v9287, 16
  %v9750 = vrot.slane %v9748, 4
  %v9751 = vor.u32 %v9750, %v9746
  %v9752 = vrot.slane %v9751, 4
  %v9754 = vshll.u32 %v9334, 16
  %v9756 = vrot.slane %v9754, 5
  %v9757 = vsel %vm1475, %v9752, %v9756
  %v9759 = vshrl.u32 %v9288, 16
  %v9761 = vrot.slane %v9759, 4
  %v9762 = vshll.u32 %v9288, 16
  %v9764 = vrot.slane %v9762, 5
  %v9765 = vor.u32 %v9761, %v9764
  %v9766 = vrot.slane %v9765, 4
  %v9768 = vshll.u32 %v9289, 16
  %v9770 = vrot.slane %v9768, 5
  %v9771 = vsel %vm1475, %v9766, %v9770
  %v9772 = vshrl.u32 %v9289, 16
  %v9774 = vrot.slane %v9772, 4
  %v9775 = vor.u32 %v9774, %v9770
  %v9776 = vrot.slane %v9775, 4
  %v9778 = vshll.u32 %v9335, 16
  %v9780 = vrot.slane %v9778, 5
  %v9781 = vsel %vm1475, %v9776, %v9780
  %v9783 = vshrl.u32 %v9290, 16
  %v9785 = vrot.slane %v9783, 4
  %v9786 = vshll.u32 %v9290, 16
  %v9788 = vrot.slane %v9786, 5
  %v9789 = vor.u32 %v9785, %v9788
  %v9790 = vrot.slane %v9789, 4
  %v9792 = vshll.u32 %v9291, 16
  %v9794 = vrot.slane %v9792, 5
  %v9795 = vsel %vm1475, %v9790, %v9794
  %v9796 = vshrl.u32 %v9291, 16
  %v9798 = vrot.slane %v9796, 4
  %v9799 = vor.u32 %v9798, %v9794
  %v9800 = vrot.slane %v9799, 4
  %v9802 = vshll.u32 %v9336, 16
  %v9804 = vrot.slane %v9802, 5
  %v9805 = vsel %vm1475, %v9800, %v9804
  %v9807 = vshrl.u32 %v9292, 16
  %v9809 = vrot.slane %v9807, 4
  %v9810 = vshll.u32 %v9292, 16
  %v9812 = vrot.slane %v9810, 5
  %v9813 = vor.u32 %v9809, %v9812
  %v9814 = vrot.slane %v9813, 4
  %v9816 = vshll.u32 %v9293, 16
  %v9818 = vrot.slane %v9816, 5
  %v9819 = vsel %vm1475, %v9814, %v9818
  %v9820 = vshrl.u32 %v9293, 16
  %v9822 = vrot.slane %v9820, 4
  %v9823 = vor.u32 %v9822, %v9818
  %v9824 = vrot.slane %v9823, 4
  %v9826 = vshll.u32 %v9337, 16
  %v9828 = vrot.slane %v9826, 5
  %v9829 = vsel %vm1475, %v9824, %v9828
  %v9831 = vshrl.u32 %v9294, 16
  %v9833 = vrot.slane %v9831, 4
  %v9834 = vshll.u32 %v9294, 16
  %v9836 = vrot.slane %v9834, 5
  %v9837 = vor.u32 %v9833, %v9836
  %v9838 = vrot.slane %v9837, 4
  %v9840 = vshll.u32 %v9295, 16
  %v9842 = vrot.slane %v9840, 5
  %v9843 = vsel %vm1475, %v9838, %v9842
  %v9844 = vshrl.u32 %v9295, 16
  %v9846 = vrot.slane %v9844, 4
  %v9847 = vor.u32 %v9846, %v9842
  %v9848 = vrot.slane %v9847, 4
  %v9850 = vshll.u32 %v9338, 16
  %v9852 = vrot.slane %v9850, 5
  %v9853 = vsel %vm1475, %v9848, %v9852
  %v9855 = vshrl.u32 %v9296, 16
  %v9857 = vrot.slane %v9855, 4
  %v9858 = vshll.u32 %v9296, 16
  %v9860 = vrot.slane %v9858, 5
  %v9861 = vor.u32 %v9857, %v9860
  %v9862 = vrot.slane %v9861, 4
  %v9864 = vshll.u32 %v9297, 16
  %v9866 = vrot.slane %v9864, 5
  %v9867 = vsel %vm1475, %v9862, %v9866
  %v9868 = vshrl.u32 %v9297, 16
  %v9870 = vrot.slane %v9868, 4
  %v9871 = vor.u32 %v9870, %v9866
  %v9872 = vrot.slane %v9871, 4
  %v9874 = vshll.u32 %v9339, 16
  %v9876 = vrot.slane %v9874, 5
  %v9877 = vsel %vm1475, %v9872, %v9876
  %v9879 = vshrl.u32 %v9298, 16
  %v9881 = vrot.slane %v9879, 4
  %v9882 = vshll.u32 %v9298, 16
  %v9884 = vrot.slane %v9882, 5
  %v9885 = vor.u32 %v9881, %v9884
  %v9886 = vrot.slane %v9885, 4
  %v9888 = vshll.u32 %v9299, 16
  %v9890 = vrot.slane %v9888, 5
  %v9891 = vsel %vm1475, %v9886, %v9890
  %v9892 = vshrl.u32 %v9299, 16
  %v9894 = vrot.slane %v9892, 4
  %v9895 = vor.u32 %v9894, %v9890
  %v9896 = vrot.slane %v9895, 4
  %v9898 = vshll.u32 %v9340, 16
  %v9900 = vrot.slane %v9898, 5
  %v9901 = vsel %vm1475, %v9896, %v9900
  %v9903 = vshrl.u32 %v9300, 16
  %v9905 = vrot.slane %v9903, 4
  %v9906 = vshll.u32 %v9300, 16
  %v9908 = vrot.slane %v9906, 5
  %v9909 = vor.u32 %v9905, %v9908
  %v9910 = vrot.slane %v9909, 4
  %v9912 = vshll.u32 %v9301, 16
  %v9914 = vrot.slane %v9912, 5
  %v9915 = vsel %vm1475, %v9910, %v9914
  %v9916 = vshrl.u32 %v9301, 16
  %v9918 = vrot.slane %v9916, 4
  %v9919 = vor.u32 %v9918, %v9914
  %v9920 = vrot.slane %v9919, 4
  %v9922 = vshll.u32 %v9341, 16
  %v9924 = vrot.slane %v9922, 5
  %v9925 = vsel %vm1475, %v9920, %v9924
  %v9927 = vshrl.u32 %v9302, 16
  %v9929 = vrot.slane %v9927, 4
  %v9930 = vshll.u32 %v9302, 16
  %v9932 = vrot.slane %v9930, 5
  %v9933 = vor.u32 %v9929, %v9932
  %v9934 = vrot.slane %v9933, 4
  %v9936 = vshll.u32 %v9303, 16
  %v9938 = vrot.slane %v9936, 5
  %v9939 = vsel %vm1475, %v9934, %v9938
  %v9940 = vshrl.u32 %v9303, 16
  %v9942 = vrot.slane %v9940, 4
  %v9943 = vor.u32 %v9942, %v9938
  %v9944 = vrot.slane %v9943, 4
  %v9946 = vshll.u32 %v9342, 16
  %v9948 = vrot.slane %v9946, 5
  %v9949 = vsel %vm1475, %v9944, %v9948
  %v9951 = vshrl.u32 %v9304, 16
  %v9953 = vrot.slane %v9951, 4
  %v9954 = vshll.u32 %v9304, 16
  %v9956 = vrot.slane %v9954, 5
  %v9957 = vor.u32 %v9953, %v9956
  %v9958 = vrot.slane %v9957, 4
  %v9960 = vshll.u32 %v9305, 16
  %v9962 = vrot.slane %v9960, 5
  %v9963 = vsel %vm1475, %v9958, %v9962
  %v9964 = vshrl.u32 %v9305, 16
  %v9966 = vrot.slane %v9964, 4
  %v9967 = vor.u32 %v9966, %v9962
  %v9968 = vrot.slane %v9967, 4
  %v9970 = vshll.u32 %v9343, 16
  %v9972 = vrot.slane %v9970, 5
  %v9973 = vsel %vm1475, %v9968, %v9972
  %v9975 = vshrl.u32 %v9306, 16
  %v9977 = vrot.slane %v9975, 4
  %v9978 = vshll.u32 %v9306, 16
  %v9980 = vrot.slane %v9978, 5
  %v9981 = vor.u32 %v9977, %v9980
  %v9982 = vrot.slane %v9981, 4
  %v9984 = vshll.u32 %v9307, 16
  %v9986 = vrot.slane %v9984, 5
  %v9987 = vsel %vm1475, %v9982, %v9986
  %v9988 = vshrl.u32 %v9307, 16
  %v9990 = vrot.slane %v9988, 4
  %v9991 = vor.u32 %v9990, %v9986
  %v9992 = vrot.slane %v9991, 4
  %v9994 = vshll.u32 %v9344, 16
  %v9996 = vrot.slane %v9994, 5
  %v9997 = vsel %vm1475, %v9992, %v9996
  %v9999 = vshrl.u32 %v9308, 16
  %v10001 = vrot.slane %v9999, 4
  %v10002 = vshll.u32 %v9308, 16
  %v10004 = vrot.slane %v10002, 5
  %v10005 = vor.u32 %v10001, %v10004
  %v10006 = vrot.slane %v10005, 4
  %v10008 = vshll.u32 %v9309, 16
  %v10010 = vrot.slane %v10008, 5
  %v10011 = vsel %vm1475, %v10006, %v10010
  %v10012 = vshrl.u32 %v9309, 16
  %v10014 = vrot.slane %v10012, 4
  %v10015 = vor.u32 %v10014, %v10010
  %v10016 = vrot.slane %v10015, 4
  %v10018 = vshll.u32 %v9345, 16
  %v10020 = vrot.slane %v10018, 5
  %v10021 = vsel %vm1475, %v10016, %v10020
  %v10023 = vshrl.u32 %v9310, 16
  %v10025 = vrot.slane %v10023, 4
  %v10026 = vshll.u32 %v9310, 16
  %v10028 = vrot.slane %v10026, 5
  %v10029 = vor.u32 %v10025, %v10028
  %v10030 = vrot.slane %v10029, 4
  %v10032 = vshll.u32 %v9311, 16
  %v10034 = vrot.slane %v10032, 5
  %v10035 = vsel %vm1475, %v10030, %v10034
  %v10036 = vshrl.u32 %v9311, 16
  %v10038 = vrot.slane %v10036, 4
  %v10039 = vor.u32 %v10038, %v10034
  %v10040 = vrot.slane %v10039, 4
  %v10042 = vshll.u32 %v9346, 16
  %v10044 = vrot.slane %v10042, 5
  %v10045 = vsel %vm1475, %v10040, %v10044
  %v10047 = vshrl.u32 %v9312, 16
  %v10049 = vrot.slane %v10047, 4
  %v10050 = vshll.u32 %v9312, 16
  %v10052 = vrot.slane %v10050, 5
  %v10053 = vor.u32 %v10049, %v10052
  %v10054 = vrot.slane %v10053, 4
  %v10056 = vshll.u32 %v9313, 16
  %v10058 = vrot.slane %v10056, 5
  %v10059 = vsel %vm1475, %v10054, %v10058
  %v10060 = vshrl.u32 %v9313, 16
  %v10062 = vrot.slane %v10060, 4
  %v10063 = vor.u32 %v10062, %v10058
  %v10064 = vrot.slane %v10063, 4
  %v10066 = vshll.u32 %v9347, 16
  %v10068 = vrot.slane %v10066, 5
  %v10069 = vsel %vm1475, %v10064, %v10068
  %v10071 = vshrl.u32 %v9314, 16
  %v10073 = vrot.slane %v10071, 4
  %v10074 = vshll.u32 %v9314, 16
  %v10076 = vrot.slane %v10074, 5
  %v10077 = vor.u32 %v10073, %v10076
  %v10078 = vrot.slane %v10077, 4
  %v10080 = vshll.u32 %v9315, 16
  %v10082 = vrot.slane %v10080, 5
  %v10083 = vsel %vm1475, %v10078, %v10082
  %v10084 = vshrl.u32 %v9315, 16
  %v10086 = vrot.slane %v10084, 4
  %v10087 = vor.u32 %v10086, %v10082
  %v10088 = vrot.slane %v10087, 4
  %v10090 = vshll.u32 %v9348, 16
  %v10092 = vrot.slane %v10090, 5
  %v10093 = vsel %vm1475, %v10088, %v10092
  %v10095 = vshrl.u32 %v9316, 16
  %v10097 = vrot.slane %v10095, 4
  %v10098 = vshll.u32 %v9316, 16
  %v10100 = vrot.slane %v10098, 5
  %v10101 = vor.u32 %v10097, %v10100
  %v10102 = vrot.slane %v10101, 4
  %v10104 = vshll.u32 %v9317, 16
  %v10106 = vrot.slane %v10104, 5
  %v10107 = vsel %vm1475, %v10102, %v10106
  %v10108 = vshrl.u32 %v9317, 16
  %v10110 = vrot.slane %v10108, 4
  %v10111 = vor.u32 %v10110, %v10106
  %v10112 = vrot.slane %v10111, 4
  %v10114 = vshll.u32 %v9349, 16
  %v10116 = vrot.slane %v10114, 5
  %v10117 = vsel %vm1475, %v10112, %v10116
  %v10182 = vunpack.c.l.b16 %v8389
  %v10183 = vunpack.c.l.b16 %v8390
  %v10184 = vunpack.c.l.b16 %v8391
  %v10185 = vunpack.c.l.b16 %v8392
  %v10186 = vunpack.c.l.b16 %v8393
  %v10187 = vunpack.c.l.b16 %v8394
  %v10188 = vunpack.c.l.b16 %v8395
  %v10189 = vunpack.c.l.b16 %v8396
  %v10190 = vunpack.c.l.b16 %v8397
  %v10191 = vunpack.c.l.b16 %v8398
  %v10192 = vunpack.c.l.b16 %v8399
  %v10193 = vunpack.c.l.b16 %v8400
  %v10194 = vunpack.c.l.b16 %v8401
  %v10195 = vunpack.c.l.b16 %v8402
  %v10196 = vunpack.c.l.b16 %v8403
  %v10197 = vunpack.c.l.b16 %v8404
  %v10198 = vunpack.c.l.b16 %v8405
  %v10199 = vunpack.c.l.b16 %v8406
  %v10200 = vunpack.c.l.b16 %v8407
  %v10201 = vunpack.c.l.b16 %v8408
  %v10202 = vunpack.c.l.b16 %v8409
  %v10203 = vunpack.c.l.b16 %v8410
  %v10204 = vunpack.c.l.b16 %v8411
  %v10205 = vunpack.c.l.b16 %v8412
  %v10206 = vunpack.c.l.b16 %v8413
  %v10207 = vunpack.c.l.b16 %v8414
  %v10208 = vunpack.c.l.b16 %v8415
  %v10209 = vunpack.c.l.b16 %v8416
  %v10210 = vunpack.c.l.b16 %v8417
  %v10211 = vunpack.c.l.b16 %v8418
  %v10212 = vunpack.c.l.b16 %v8419
  %v10213 = vunpack.c.l.b16 %v8420
  %v10214 = vunpack.c.l.b16 %v8421
  %v10215 = vunpack.c.l.b16 %v8422
  %v10216 = vunpack.c.l.b16 %v8423
  %v10217 = vunpack.c.l.b16 %v8424
  %v10218 = vunpack.c.l.b16 %v8425
  %v10219 = vunpack.c.l.b16 %v8426
  %v10220 = vunpack.c.l.b16 %v8427
  %v10221 = vunpack.c.l.b16 %v8428
  %v10222 = vunpack.c.l.b16 %v8429
  %v10223 = vunpack.c.l.b16 %v8430
  %v10224 = vunpack.c.l.b16 %v8431
  %v10225 = vunpack.c.l.b16 %v8432
  %v10226 = vunpack.c.l.b16 %v8433
  %v10227 = vunpack.c.l.b16 %v8434
  %v10228 = vunpack.c.l.b16 %v8435
  %v10229 = vunpack.c.l.b16 %v8436
  %v10230 = vunpack.c.l.b16 %v8437
  %v10231 = vunpack.c.l.b16 %v8438
  %v10232 = vunpack.c.l.b16 %v8439
  %v10233 = vunpack.c.l.b16 %v8440
  %v10234 = vunpack.c.l.b16 %v8441
  %v10235 = vunpack.c.l.b16 %v8442
  %v10236 = vunpack.c.l.b16 %v8443
  %v10237 = vunpack.c.l.b16 %v8444
  %v10238 = vunpack.c.l.b16 %v8445
  %v10239 = vunpack.c.l.b16 %v8446
  %v10240 = vunpack.c.l.b16 %v8447
  %v10241 = vunpack.c.l.b16 %v8448
  %v10242 = vunpack.c.l.b16 %v8449
  %v10243 = vunpack.c.l.b16 %v8450
  %v10244 = vunpack.c.l.b16 %v8451
  %v10245 = vunpack.c.l.b16 %v8452
  %v10246 = vpack.c.b16 %v10183, %v10182
  %v10247 = vpack.c.b16 %v10185, %v10184
  %v10248 = vpack.c.b16 %v10187, %v10186
  %v10249 = vpack.c.b16 %v10189, %v10188
  %v10250 = vpack.c.b16 %v10191, %v10190
  %v10251 = vpack.c.b16 %v10193, %v10192
  %v10252 = vpack.c.b16 %v10195, %v10194
  %v10253 = vpack.c.b16 %v10197, %v10196
  %v10254 = vpack.c.b16 %v10199, %v10198
  %v10255 = vpack.c.b16 %v10201, %v10200
  %v10256 = vpack.c.b16 %v10203, %v10202
  %v10257 = vpack.c.b16 %v10205, %v10204
  %v10258 = vpack.c.b16 %v10207, %v10206
  %v10259 = vpack.c.b16 %v10209, %v10208
  %v10260 = vpack.c.b16 %v10211, %v10210
  %v10261 = vpack.c.b16 %v10213, %v10212
  %v10262 = vpack.c.b16 %v10215, %v10214
  %v10263 = vpack.c.b16 %v10217, %v10216
  %v10264 = vpack.c.b16 %v10219, %v10218
  %v10265 = vpack.c.b16 %v10221, %v10220
  %v10266 = vpack.c.b16 %v10223, %v10222
  %v10267 = vpack.c.b16 %v10225, %v10224
  %v10268 = vpack.c.b16 %v10227, %v10226
  %v10269 = vpack.c.b16 %v10229, %v10228
  %v10270 = vpack.c.b16 %v10231, %v10230
  %v10271 = vpack.c.b16 %v10233, %v10232
  %v10272 = vpack.c.b16 %v10235, %v10234
  %v10273 = vpack.c.b16 %v10237, %v10236
  %v10274 = vpack.c.b16 %v10239, %v10238
  %v10275 = vpack.c.b16 %v10241, %v10240
  %v10276 = vpack.c.b16 %v10243, %v10242
  %v10277 = vpack.c.b16 %v10245, %v10244
  %v10278 = vunpack.c.l.b16 %v8498
  %v10279 = vunpack.c.l.b16 %v8508
  %v10280 = vunpack.c.l.b16 %v8522
  %v10281 = vunpack.c.l.b16 %v8532
  %v10282 = vunpack.c.l.b16 %v8546
  %v10283 = vunpack.c.l.b16 %v8556
  %v10284 = vunpack.c.l.b16 %v8570
  %v10285 = vunpack.c.l.b16 %v8580
  %v10286 = vunpack.c.l.b16 %v8594
  %v10287 = vunpack.c.l.b16 %v8604
  %v10288 = vunpack.c.l.b16 %v8618
  %v10289 = vunpack.c.l.b16 %v8628
  %v10290 = vunpack.c.l.b16 %v8642
  %v10291 = vunpack.c.l.b16 %v8652
  %v10292 = vunpack.c.l.b16 %v8666
  %v10293 = vunpack.c.l.b16 %v8676
  %v10294 = vunpack.c.l.b16 %v8690
  %v10295 = vunpack.c.l.b16 %v8700
  %v10296 = vunpack.c.l.b16 %v8714
  %v10297 = vunpack.c.l.b16 %v8724
  %v10298 = vunpack.c.l.b16 %v8738
  %v10299 = vunpack.c.l.b16 %v8748
  %v10300 = vunpack.c.l.b16 %v8762
  %v10301 = vunpack.c.l.b16 %v8772
  %v10302 = vunpack.c.l.b16 %v8786
  %v10303 = vunpack.c.l.b16 %v8796
  %v10304 = vunpack.c.l.b16 %v8810
  %v10305 = vunpack.c.l.b16 %v8820
  %v10306 = vunpack.c.l.b16 %v8834
  %v10307 = vunpack.c.l.b16 %v8844
  %v10308 = vunpack.c.l.b16 %v8858
  %v10309 = vunpack.c.l.b16 %v8868
  %v10310 = vunpack.c.l.b16 %v8882
  %v10311 = vunpack.c.l.b16 %v8892
  %v10312 = vunpack.c.l.b16 %v8906
  %v10313 = vunpack.c.l.b16 %v8916
  %v10314 = vunpack.c.l.b16 %v8930
  %v10315 = vunpack.c.l.b16 %v8940
  %v10316 = vunpack.c.l.b16 %v8954
  %v10317 = vunpack.c.l.b16 %v8964
  %v10318 = vunpack.c.l.b16 %v8978
  %v10319 = vunpack.c.l.b16 %v8988
  %v10320 = vunpack.c.l.b16 %v9002
  %v10321 = vunpack.c.l.b16 %v9012
  %v10322 = vunpack.c.l.b16 %v9026
  %v10323 = vunpack.c.l.b16 %v9036
  %v10324 = vunpack.c.l.b16 %v9050
  %v10325 = vunpack.c.l.b16 %v9060
  %v10326 = vunpack.c.l.b16 %v9074
  %v10327 = vunpack.c.l.b16 %v9084
  %v10328 = vunpack.c.l.b16 %v9098
  %v10329 = vunpack.c.l.b16 %v9108
  %v10330 = vunpack.c.l.b16 %v9122
  %v10331 = vunpack.c.l.b16 %v9132
  %v10332 = vunpack.c.l.b16 %v9146
  %v10333 = vunpack.c.l.b16 %v9156
  %v10334 = vunpack.c.l.b16 %v9170
  %v10335 = vunpack.c.l.b16 %v9180
  %v10336 = vunpack.c.l.b16 %v9194
  %v10337 = vunpack.c.l.b16 %v9204
  %v10338 = vunpack.c.l.b16 %v9218
  %v10339 = vunpack.c.l.b16 %v9228
  %v10340 = vunpack.c.l.b16 %v9242
  %v10341 = vunpack.c.l.b16 %v9252
  %v10342 = vpack.c.b16 %v10279, %v10278
  %v10343 = vpack.c.b16 %v10281, %v10280
  %v10344 = vpack.c.b16 %v10283, %v10282
  %v10345 = vpack.c.b16 %v10285, %v10284
  %v10346 = vpack.c.b16 %v10287, %v10286
  %v10347 = vpack.c.b16 %v10289, %v10288
  %v10348 = vpack.c.b16 %v10291, %v10290
  %v10349 = vpack.c.b16 %v10293, %v10292
  %v10350 = vpack.c.b16 %v10295, %v10294
  %v10351 = vpack.c.b16 %v10297, %v10296
  %v10352 = vpack.c.b16 %v10299, %v10298
  %v10353 = vpack.c.b16 %v10301, %v10300
  %v10354 = vpack.c.b16 %v10303, %v10302
  %v10355 = vpack.c.b16 %v10305, %v10304
  %v10356 = vpack.c.b16 %v10307, %v10306
  %v10357 = vpack.c.b16 %v10309, %v10308
  %v10358 = vpack.c.b16 %v10311, %v10310
  %v10359 = vpack.c.b16 %v10313, %v10312
  %v10360 = vpack.c.b16 %v10315, %v10314
  %v10361 = vpack.c.b16 %v10317, %v10316
  %v10362 = vpack.c.b16 %v10319, %v10318
  %v10363 = vpack.c.b16 %v10321, %v10320
  %v10364 = vpack.c.b16 %v10323, %v10322
  %v10365 = vpack.c.b16 %v10325, %v10324
  %v10366 = vpack.c.b16 %v10327, %v10326
  %v10367 = vpack.c.b16 %v10329, %v10328
  %v10368 = vpack.c.b16 %v10331, %v10330
  %v10369 = vpack.c.b16 %v10333, %v10332
  %v10370 = vpack.c.b16 %v10335, %v10334
  %v10371 = vpack.c.b16 %v10337, %v10336
  %v10372 = vpack.c.b16 %v10339, %v10338
  %v10373 = vpack.c.b16 %v10341, %v10340
  %10374 = vrot.lane.b32.xlu0 %v10342, 4
  %v10375 = vpop.permute.xlu0 %10374
  %10376 = vrot.lane.b32.xlu0 %v10343, 4
  %v10377 = vpop.permute.xlu0 %10376
  %10378 = vrot.lane.b32.xlu0 %v10344, 4
  %v10379 = vpop.permute.xlu0 %10378
  %10380 = vrot.lane.b32.xlu0 %v10345, 4
  %v10381 = vpop.permute.xlu0 %10380
  %10382 = vrot.lane.b32.xlu0 %v10346, 4
  %v10383 = vpop.permute.xlu0 %10382
  %10384 = vrot.lane.b32.xlu0 %v10347, 4
  %v10385 = vpop.permute.xlu0 %10384
  %10386 = vrot.lane.b32.xlu0 %v10348, 4
  %v10387 = vpop.permute.xlu0 %10386
  %10388 = vrot.lane.b32.xlu0 %v10349, 4
  %v10389 = vpop.permute.xlu0 %10388
  %10390 = vrot.lane.b32.xlu0 %v10350, 4
  %v10391 = vpop.permute.xlu0 %10390
  %10392 = vrot.lane.b32.xlu0 %v10351, 4
  %v10393 = vpop.permute.xlu0 %10392
  %10394 = vrot.lane.b32.xlu0 %v10352, 4
  %v10395 = vpop.permute.xlu0 %10394
  %10396 = vrot.lane.b32.xlu0 %v10353, 4
  %v10397 = vpop.permute.xlu0 %10396
  %10398 = vrot.lane.b32.xlu0 %v10354, 4
  %v10399 = vpop.permute.xlu0 %10398
  %10400 = vrot.lane.b32.xlu0 %v10355, 4
  %v10401 = vpop.permute.xlu0 %10400
  %10402 = vrot.lane.b32.xlu0 %v10356, 4
  %v10403 = vpop.permute.xlu0 %10402
  %10404 = vrot.lane.b32.xlu0 %v10357, 4
  %v10405 = vpop.permute.xlu0 %10404
  %10406 = vrot.lane.b32.xlu0 %v10358, 4
  %v10407 = vpop.permute.xlu0 %10406
  %10408 = vrot.lane.b32.xlu0 %v10359, 4
  %v10409 = vpop.permute.xlu0 %10408
  %10410 = vrot.lane.b32.xlu0 %v10360, 4
  %v10411 = vpop.permute.xlu0 %10410
  %10412 = vrot.lane.b32.xlu0 %v10361, 4
  %v10413 = vpop.permute.xlu0 %10412
  %10414 = vrot.lane.b32.xlu0 %v10362, 4
  %v10415 = vpop.permute.xlu0 %10414
  %10416 = vrot.lane.b32.xlu0 %v10363, 4
  %v10417 = vpop.permute.xlu0 %10416
  %10418 = vrot.lane.b32.xlu0 %v10364, 4
  %v10419 = vpop.permute.xlu0 %10418
  %10420 = vrot.lane.b32.xlu0 %v10365, 4
  %v10421 = vpop.permute.xlu0 %10420
  %10422 = vrot.lane.b32.xlu0 %v10366, 4
  %v10423 = vpop.permute.xlu0 %10422
  %10424 = vrot.lane.b32.xlu0 %v10367, 4
  %v10425 = vpop.permute.xlu0 %10424
  %10426 = vrot.lane.b32.xlu0 %v10368, 4
  %v10427 = vpop.permute.xlu0 %10426
  %10428 = vrot.lane.b32.xlu0 %v10369, 4
  %v10429 = vpop.permute.xlu0 %10428
  %10430 = vrot.lane.b32.xlu0 %v10370, 4
  %v10431 = vpop.permute.xlu0 %10430
  %10432 = vrot.lane.b32.xlu0 %v10371, 4
  %v10433 = vpop.permute.xlu0 %10432
  %10434 = vrot.lane.b32.xlu0 %v10372, 4
  %v10435 = vpop.permute.xlu0 %10434
  %10436 = vrot.lane.b32.xlu0 %v10373, 4
  %v10437 = vpop.permute.xlu0 %10436
  %v10502 = vunpack.c.l.b16 %v9254
  %v10503 = vunpack.c.l.b16 %v9255
  %v10504 = vunpack.c.l.b16 %v9256
  %v10505 = vunpack.c.l.b16 %v9257
  %v10506 = vunpack.c.l.b16 %v9258
  %v10507 = vunpack.c.l.b16 %v9259
  %v10508 = vunpack.c.l.b16 %v9260
  %v10509 = vunpack.c.l.b16 %v9261
  %v10510 = vunpack.c.l.b16 %v9262
  %v10511 = vunpack.c.l.b16 %v9263
  %v10512 = vunpack.c.l.b16 %v9264
  %v10513 = vunpack.c.l.b16 %v9265
  %v10514 = vunpack.c.l.b16 %v9266
  %v10515 = vunpack.c.l.b16 %v9267
  %v10516 = vunpack.c.l.b16 %v9268
  %v10517 = vunpack.c.l.b16 %v9269
  %v10518 = vunpack.c.l.b16 %v9270
  %v10519 = vunpack.c.l.b16 %v9271
  %v10520 = vunpack.c.l.b16 %v9272
  %v10521 = vunpack.c.l.b16 %v9273
  %v10522 = vunpack.c.l.b16 %v9274
  %v10523 = vunpack.c.l.b16 %v9275
  %v10524 = vunpack.c.l.b16 %v9276
  %v10525 = vunpack.c.l.b16 %v9277
  %v10526 = vunpack.c.l.b16 %v9278
  %v10527 = vunpack.c.l.b16 %v9279
  %v10528 = vunpack.c.l.b16 %v9280
  %v10529 = vunpack.c.l.b16 %v9281
  %v10530 = vunpack.c.l.b16 %v9282
  %v10531 = vunpack.c.l.b16 %v9283
  %v10532 = vunpack.c.l.b16 %v9284
  %v10533 = vunpack.c.l.b16 %v9285
  %v10534 = vunpack.c.l.b16 %v9286
  %v10535 = vunpack.c.l.b16 %v9287
  %v10536 = vunpack.c.l.b16 %v9288
  %v10537 = vunpack.c.l.b16 %v9289
  %v10538 = vunpack.c.l.b16 %v9290
  %v10539 = vunpack.c.l.b16 %v9291
  %v10540 = vunpack.c.l.b16 %v9292
  %v10541 = vunpack.c.l.b16 %v9293
  %v10542 = vunpack.c.l.b16 %v9294
  %v10543 = vunpack.c.l.b16 %v9295
  %v10544 = vunpack.c.l.b16 %v9296
  %v10545 = vunpack.c.l.b16 %v9297
  %v10546 = vunpack.c.l.b16 %v9298
  %v10547 = vunpack.c.l.b16 %v9299
  %v10548 = vunpack.c.l.b16 %v9300
  %v10549 = vunpack.c.l.b16 %v9301
  %v10550 = vunpack.c.l.b16 %v9302
  %v10551 = vunpack.c.l.b16 %v9303
  %v10552 = vunpack.c.l.b16 %v9304
  %v10553 = vunpack.c.l.b16 %v9305
  %v10554 = vunpack.c.l.b16 %v9306
  %v10555 = vunpack.c.l.b16 %v9307
  %v10556 = vunpack.c.l.b16 %v9308
  %v10557 = vunpack.c.l.b16 %v9309
  %v10558 = vunpack.c.l.b16 %v9310
  %v10559 = vunpack.c.l.b16 %v9311
  %v10560 = vunpack.c.l.b16 %v9312
  %v10561 = vunpack.c.l.b16 %v9313
  %v10562 = vunpack.c.l.b16 %v9314
  %v10563 = vunpack.c.l.b16 %v9315
  %v10564 = vunpack.c.l.b16 %v9316
  %v10565 = vunpack.c.l.b16 %v9317
  %v10566 = vpack.c.b16 %v10503, %v10502
  %v10567 = vpack.c.b16 %v10505, %v10504
  %v10568 = vpack.c.b16 %v10507, %v10506
  %v10569 = vpack.c.b16 %v10509, %v10508
  %v10570 = vpack.c.b16 %v10511, %v10510
  %v10571 = vpack.c.b16 %v10513, %v10512
  %v10572 = vpack.c.b16 %v10515, %v10514
  %v10573 = vpack.c.b16 %v10517, %v10516
  %v10574 = vpack.c.b16 %v10519, %v10518
  %v10575 = vpack.c.b16 %v10521, %v10520
  %v10576 = vpack.c.b16 %v10523, %v10522
  %v10577 = vpack.c.b16 %v10525, %v10524
  %v10578 = vpack.c.b16 %v10527, %v10526
  %v10579 = vpack.c.b16 %v10529, %v10528
  %v10580 = vpack.c.b16 %v10531, %v10530
  %v10581 = vpack.c.b16 %v10533, %v10532
  %v10582 = vpack.c.b16 %v10535, %v10534
  %v10583 = vpack.c.b16 %v10537, %v10536
  %v10584 = vpack.c.b16 %v10539, %v10538
  %v10585 = vpack.c.b16 %v10541, %v10540
  %v10586 = vpack.c.b16 %v10543, %v10542
  %v10587 = vpack.c.b16 %v10545, %v10544
  %v10588 = vpack.c.b16 %v10547, %v10546
  %v10589 = vpack.c.b16 %v10549, %v10548
  %v10590 = vpack.c.b16 %v10551, %v10550
  %v10591 = vpack.c.b16 %v10553, %v10552
  %v10592 = vpack.c.b16 %v10555, %v10554
  %v10593 = vpack.c.b16 %v10557, %v10556
  %v10594 = vpack.c.b16 %v10559, %v10558
  %v10595 = vpack.c.b16 %v10561, %v10560
  %v10596 = vpack.c.b16 %v10563, %v10562
  %v10597 = vpack.c.b16 %v10565, %v10564
  %10598 = vrot.lane.b32.xlu0 %v10566, 8
  %v10599 = vpop.permute.xlu0 %10598
  %10600 = vrot.lane.b32.xlu0 %v10567, 8
  %v10601 = vpop.permute.xlu0 %10600
  %10602 = vrot.lane.b32.xlu0 %v10568, 8
  %v10603 = vpop.permute.xlu0 %10602
  %10604 = vrot.lane.b32.xlu0 %v10569, 8
  %v10605 = vpop.permute.xlu0 %10604
  %10606 = vrot.lane.b32.xlu0 %v10570, 8
  %v10607 = vpop.permute.xlu0 %10606
  %10608 = vrot.lane.b32.xlu0 %v10571, 8
  %v10609 = vpop.permute.xlu0 %10608
  %10610 = vrot.lane.b32.xlu0 %v10572, 8
  %v10611 = vpop.permute.xlu0 %10610
  %10612 = vrot.lane.b32.xlu0 %v10573, 8
  %v10613 = vpop.permute.xlu0 %10612
  %10614 = vrot.lane.b32.xlu0 %v10574, 8
  %v10615 = vpop.permute.xlu0 %10614
  %10616 = vrot.lane.b32.xlu0 %v10575, 8
  %v10617 = vpop.permute.xlu0 %10616
  %10618 = vrot.lane.b32.xlu0 %v10576, 8
  %v10619 = vpop.permute.xlu0 %10618
  %10620 = vrot.lane.b32.xlu0 %v10577, 8
  %v10621 = vpop.permute.xlu0 %10620
  %10622 = vrot.lane.b32.xlu0 %v10578, 8
  %v10623 = vpop.permute.xlu0 %10622
  %10624 = vrot.lane.b32.xlu0 %v10579, 8
  %v10625 = vpop.permute.xlu0 %10624
  %10626 = vrot.lane.b32.xlu0 %v10580, 8
  %v10627 = vpop.permute.xlu0 %10626
  %10628 = vrot.lane.b32.xlu0 %v10581, 8
  %v10629 = vpop.permute.xlu0 %10628
  %10630 = vrot.lane.b32.xlu0 %v10582, 8
  %v10631 = vpop.permute.xlu0 %10630
  %10632 = vrot.lane.b32.xlu0 %v10583, 8
  %v10633 = vpop.permute.xlu0 %10632
  %10634 = vrot.lane.b32.xlu0 %v10584, 8
  %v10635 = vpop.permute.xlu0 %10634
  %10636 = vrot.lane.b32.xlu0 %v10585, 8
  %v10637 = vpop.permute.xlu0 %10636
  %10638 = vrot.lane.b32.xlu0 %v10586, 8
  %v10639 = vpop.permute.xlu0 %10638
  %10640 = vrot.lane.b32.xlu0 %v10587, 8
  %v10641 = vpop.permute.xlu0 %10640
  %10642 = vrot.lane.b32.xlu0 %v10588, 8
  %v10643 = vpop.permute.xlu0 %10642
  %10644 = vrot.lane.b32.xlu0 %v10589, 8
  %v10645 = vpop.permute.xlu0 %10644
  %10646 = vrot.lane.b32.xlu0 %v10590, 8
  %v10647 = vpop.permute.xlu0 %10646
  %10648 = vrot.lane.b32.xlu0 %v10591, 8
  %v10649 = vpop.permute.xlu0 %10648
  %10650 = vrot.lane.b32.xlu0 %v10592, 8
  %v10651 = vpop.permute.xlu0 %10650
  %10652 = vrot.lane.b32.xlu0 %v10593, 8
  %v10653 = vpop.permute.xlu0 %10652
  %10654 = vrot.lane.b32.xlu0 %v10594, 8
  %v10655 = vpop.permute.xlu0 %10654
  %10656 = vrot.lane.b32.xlu0 %v10595, 8
  %v10657 = vpop.permute.xlu0 %10656
  %10658 = vrot.lane.b32.xlu0 %v10596, 8
  %v10659 = vpop.permute.xlu0 %10658
  %10660 = vrot.lane.b32.xlu0 %v10597, 8
  %v10661 = vpop.permute.xlu0 %10660
  %v10662 = vunpack.c.l.b16 %v9363
  %v10663 = vunpack.c.l.b16 %v9373
  %v10664 = vunpack.c.l.b16 %v9387
  %v10665 = vunpack.c.l.b16 %v9397
  %v10666 = vunpack.c.l.b16 %v9411
  %v10667 = vunpack.c.l.b16 %v9421
  %v10668 = vunpack.c.l.b16 %v9435
  %v10669 = vunpack.c.l.b16 %v9445
  %v10670 = vunpack.c.l.b16 %v9459
  %v10671 = vunpack.c.l.b16 %v9469
  %v10672 = vunpack.c.l.b16 %v9483
  %v10673 = vunpack.c.l.b16 %v9493
  %v10674 = vunpack.c.l.b16 %v9507
  %v10675 = vunpack.c.l.b16 %v9517
  %v10676 = vunpack.c.l.b16 %v9531
  %v10677 = vunpack.c.l.b16 %v9541
  %v10678 = vunpack.c.l.b16 %v9555
  %v10679 = vunpack.c.l.b16 %v9565
  %v10680 = vunpack.c.l.b16 %v9579
  %v10681 = vunpack.c.l.b16 %v9589
  %v10682 = vunpack.c.l.b16 %v9603
  %v10683 = vunpack.c.l.b16 %v9613
  %v10684 = vunpack.c.l.b16 %v9627
  %v10685 = vunpack.c.l.b16 %v9637
  %v10686 = vunpack.c.l.b16 %v9651
  %v10687 = vunpack.c.l.b16 %v9661
  %v10688 = vunpack.c.l.b16 %v9675
  %v10689 = vunpack.c.l.b16 %v9685
  %v10690 = vunpack.c.l.b16 %v9699
  %v10691 = vunpack.c.l.b16 %v9709
  %v10692 = vunpack.c.l.b16 %v9723
  %v10693 = vunpack.c.l.b16 %v9733
  %v10694 = vunpack.c.l.b16 %v9747
  %v10695 = vunpack.c.l.b16 %v9757
  %v10696 = vunpack.c.l.b16 %v9771
  %v10697 = vunpack.c.l.b16 %v9781
  %v10698 = vunpack.c.l.b16 %v9795
  %v10699 = vunpack.c.l.b16 %v9805
  %v10700 = vunpack.c.l.b16 %v9819
  %v10701 = vunpack.c.l.b16 %v9829
  %v10702 = vunpack.c.l.b16 %v9843
  %v10703 = vunpack.c.l.b16 %v9853
  %v10704 = vunpack.c.l.b16 %v9867
  %v10705 = vunpack.c.l.b16 %v9877
  %v10706 = vunpack.c.l.b16 %v9891
  %v10707 = vunpack.c.l.b16 %v9901
  %v10708 = vunpack.c.l.b16 %v9915
  %v10709 = vunpack.c.l.b16 %v9925
  %v10710 = vunpack.c.l.b16 %v9939
  %v10711 = vunpack.c.l.b16 %v9949
  %v10712 = vunpack.c.l.b16 %v9963
  %v10713 = vunpack.c.l.b16 %v9973
  %v10714 = vunpack.c.l.b16 %v9987
  %v10715 = vunpack.c.l.b16 %v9997
  %v10716 = vunpack.c.l.b16 %v10011
  %v10717 = vunpack.c.l.b16 %v10021
  %v10718 = vunpack.c.l.b16 %v10035
  %v10719 = vunpack.c.l.b16 %v10045
  %v10720 = vunpack.c.l.b16 %v10059
  %v10721 = vunpack.c.l.b16 %v10069
  %v10722 = vunpack.c.l.b16 %v10083
  %v10723 = vunpack.c.l.b16 %v10093
  %v10724 = vunpack.c.l.b16 %v10107
  %v10725 = vunpack.c.l.b16 %v10117
  %v10726 = vpack.c.b16 %v10663, %v10662
  %v10727 = vpack.c.b16 %v10665, %v10664
  %v10728 = vpack.c.b16 %v10667, %v10666
  %v10729 = vpack.c.b16 %v10669, %v10668
  %v10730 = vpack.c.b16 %v10671, %v10670
  %v10731 = vpack.c.b16 %v10673, %v10672
  %v10732 = vpack.c.b16 %v10675, %v10674
  %v10733 = vpack.c.b16 %v10677, %v10676
  %v10734 = vpack.c.b16 %v10679, %v10678
  %v10735 = vpack.c.b16 %v10681, %v10680
  %v10736 = vpack.c.b16 %v10683, %v10682
  %v10737 = vpack.c.b16 %v10685, %v10684
  %v10738 = vpack.c.b16 %v10687, %v10686
  %v10739 = vpack.c.b16 %v10689, %v10688
  %v10740 = vpack.c.b16 %v10691, %v10690
  %v10741 = vpack.c.b16 %v10693, %v10692
  %v10742 = vpack.c.b16 %v10695, %v10694
  %v10743 = vpack.c.b16 %v10697, %v10696
  %v10744 = vpack.c.b16 %v10699, %v10698
  %v10745 = vpack.c.b16 %v10701, %v10700
  %v10746 = vpack.c.b16 %v10703, %v10702
  %v10747 = vpack.c.b16 %v10705, %v10704
  %v10748 = vpack.c.b16 %v10707, %v10706
  %v10749 = vpack.c.b16 %v10709, %v10708
  %v10750 = vpack.c.b16 %v10711, %v10710
  %v10751 = vpack.c.b16 %v10713, %v10712
  %v10752 = vpack.c.b16 %v10715, %v10714
  %v10753 = vpack.c.b16 %v10717, %v10716
  %v10754 = vpack.c.b16 %v10719, %v10718
  %v10755 = vpack.c.b16 %v10721, %v10720
  %v10756 = vpack.c.b16 %v10723, %v10722
  %v10757 = vpack.c.b16 %v10725, %v10724
  %10758 = vrot.lane.b32.xlu0 %v10726, 12
  %v10759 = vpop.permute.xlu0 %10758
  %10760 = vrot.lane.b32.xlu0 %v10727, 12
  %v10761 = vpop.permute.xlu0 %10760
  %10762 = vrot.lane.b32.xlu0 %v10728, 12
  %v10763 = vpop.permute.xlu0 %10762
  %10764 = vrot.lane.b32.xlu0 %v10729, 12
  %v10765 = vpop.permute.xlu0 %10764
  %10766 = vrot.lane.b32.xlu0 %v10730, 12
  %v10767 = vpop.permute.xlu0 %10766
  %10768 = vrot.lane.b32.xlu0 %v10731, 12
  %v10769 = vpop.permute.xlu0 %10768
  %10770 = vrot.lane.b32.xlu0 %v10732, 12
  %v10771 = vpop.permute.xlu0 %10770
  %10772 = vrot.lane.b32.xlu0 %v10733, 12
  %v10773 = vpop.permute.xlu0 %10772
  %10774 = vrot.lane.b32.xlu0 %v10734, 12
  %v10775 = vpop.permute.xlu0 %10774
  %10776 = vrot.lane.b32.xlu0 %v10735, 12
  %v10777 = vpop.permute.xlu0 %10776
  %10778 = vrot.lane.b32.xlu0 %v10736, 12
  %v10779 = vpop.permute.xlu0 %10778
  %10780 = vrot.lane.b32.xlu0 %v10737, 12
  %v10781 = vpop.permute.xlu0 %10780
  %10782 = vrot.lane.b32.xlu0 %v10738, 12
  %v10783 = vpop.permute.xlu0 %10782
  %10784 = vrot.lane.b32.xlu0 %v10739, 12
  %v10785 = vpop.permute.xlu0 %10784
  %10786 = vrot.lane.b32.xlu0 %v10740, 12
  %v10787 = vpop.permute.xlu0 %10786
  %10788 = vrot.lane.b32.xlu0 %v10741, 12
  %v10789 = vpop.permute.xlu0 %10788
  %10790 = vrot.lane.b32.xlu0 %v10742, 12
  %v10791 = vpop.permute.xlu0 %10790
  %10792 = vrot.lane.b32.xlu0 %v10743, 12
  %v10793 = vpop.permute.xlu0 %10792
  %10794 = vrot.lane.b32.xlu0 %v10744, 12
  %v10795 = vpop.permute.xlu0 %10794
  %10796 = vrot.lane.b32.xlu0 %v10745, 12
  %v10797 = vpop.permute.xlu0 %10796
  %10798 = vrot.lane.b32.xlu0 %v10746, 12
  %v10799 = vpop.permute.xlu0 %10798
  %10800 = vrot.lane.b32.xlu0 %v10747, 12
  %v10801 = vpop.permute.xlu0 %10800
  %10802 = vrot.lane.b32.xlu0 %v10748, 12
  %v10803 = vpop.permute.xlu0 %10802
  %10804 = vrot.lane.b32.xlu0 %v10749, 12
  %v10805 = vpop.permute.xlu0 %10804
  %10806 = vrot.lane.b32.xlu0 %v10750, 12
  %v10807 = vpop.permute.xlu0 %10806
  %10808 = vrot.lane.b32.xlu0 %v10751, 12
  %v10809 = vpop.permute.xlu0 %10808
  %10810 = vrot.lane.b32.xlu0 %v10752, 12
  %v10811 = vpop.permute.xlu0 %10810
  %10812 = vrot.lane.b32.xlu0 %v10753, 12
  %v10813 = vpop.permute.xlu0 %10812
  %10814 = vrot.lane.b32.xlu0 %v10754, 12
  %v10815 = vpop.permute.xlu0 %10814
  %10816 = vrot.lane.b32.xlu0 %v10755, 12
  %v10817 = vpop.permute.xlu0 %10816
  %10818 = vrot.lane.b32.xlu0 %v10756, 12
  %v10819 = vpop.permute.xlu0 %10818
  %10820 = vrot.lane.b32.xlu0 %v10757, 12
  %v10821 = vpop.permute.xlu0 %10820
  %v10824 = vsel %vm3812, %v10246, %v10375
  %v10827 = vsel %vm3812, %v10247, %v10377
  %v10830 = vsel %vm3812, %v10248, %v10379
  %v10833 = vsel %vm3812, %v10249, %v10381
  %v10836 = vsel %vm3812, %v10250, %v10383
  %v10839 = vsel %vm3812, %v10251, %v10385
  %v10842 = vsel %vm3812, %v10252, %v10387
  %v10845 = vsel %vm3812, %v10253, %v10389
  %v10848 = vsel %vm3812, %v10254, %v10391
  %v10851 = vsel %vm3812, %v10255, %v10393
  %v10854 = vsel %vm3812, %v10256, %v10395
  %v10857 = vsel %vm3812, %v10257, %v10397
  %v10860 = vsel %vm3812, %v10258, %v10399
  %v10863 = vsel %vm3812, %v10259, %v10401
  %v10866 = vsel %vm3812, %v10260, %v10403
  %v10869 = vsel %vm3812, %v10261, %v10405
  %v10872 = vsel %vm3812, %v10262, %v10407
  %v10875 = vsel %vm3812, %v10263, %v10409
  %v10878 = vsel %vm3812, %v10264, %v10411
  %v10881 = vsel %vm3812, %v10265, %v10413
  %v10884 = vsel %vm3812, %v10266, %v10415
  %v10887 = vsel %vm3812, %v10267, %v10417
  %v10890 = vsel %vm3812, %v10268, %v10419
  %v10893 = vsel %vm3812, %v10269, %v10421
  %v10896 = vsel %vm3812, %v10270, %v10423
  %v10899 = vsel %vm3812, %v10271, %v10425
  %v10902 = vsel %vm3812, %v10272, %v10427
  %v10905 = vsel %vm3812, %v10273, %v10429
  %v10908 = vsel %vm3812, %v10274, %v10431
  %v10911 = vsel %vm3812, %v10275, %v10433
  %v10914 = vsel %vm3812, %v10276, %v10435
  %v10917 = vsel %vm3812, %v10277, %v10437
  %v10919 = vsel %vm3909, %v10824, %v10599
  %v10921 = vsel %vm3909, %v10827, %v10601
  %v10923 = vsel %vm3909, %v10830, %v10603
  %v10925 = vsel %vm3909, %v10833, %v10605
  %v10927 = vsel %vm3909, %v10836, %v10607
  %v10929 = vsel %vm3909, %v10839, %v10609
  %v10931 = vsel %vm3909, %v10842, %v10611
  %v10933 = vsel %vm3909, %v10845, %v10613
  %v10935 = vsel %vm3909, %v10848, %v10615
  %v10937 = vsel %vm3909, %v10851, %v10617
  %v10939 = vsel %vm3909, %v10854, %v10619
  %v10941 = vsel %vm3909, %v10857, %v10621
  %v10943 = vsel %vm3909, %v10860, %v10623
  %v10945 = vsel %vm3909, %v10863, %v10625
  %v10947 = vsel %vm3909, %v10866, %v10627
  %v10949 = vsel %vm3909, %v10869, %v10629
  %v10951 = vsel %vm3909, %v10872, %v10631
  %v10953 = vsel %vm3909, %v10875, %v10633
  %v10955 = vsel %vm3909, %v10878, %v10635
  %v10957 = vsel %vm3909, %v10881, %v10637
  %v10959 = vsel %vm3909, %v10884, %v10639
  %v10961 = vsel %vm3909, %v10887, %v10641
  %v10963 = vsel %vm3909, %v10890, %v10643
  %v10965 = vsel %vm3909, %v10893, %v10645
  %v10967 = vsel %vm3909, %v10896, %v10647
  %v10969 = vsel %vm3909, %v10899, %v10649
  %v10971 = vsel %vm3909, %v10902, %v10651
  %v10973 = vsel %vm3909, %v10905, %v10653
  %v10975 = vsel %vm3909, %v10908, %v10655
  %v10977 = vsel %vm3909, %v10911, %v10657
  %v10979 = vsel %vm3909, %v10914, %v10659
  %v10981 = vsel %vm3909, %v10917, %v10661
  %v10983 = vsel %vm3974, %v10919, %v10759
  %v10985 = vsel %vm3974, %v10921, %v10761
  %v10987 = vsel %vm3974, %v10923, %v10763
  %v10989 = vsel %vm3974, %v10925, %v10765
  %v10991 = vsel %vm3974, %v10927, %v10767
  %v10993 = vsel %vm3974, %v10929, %v10769
  %v10995 = vsel %vm3974, %v10931, %v10771
  %v10997 = vsel %vm3974, %v10933, %v10773
  %v10999 = vsel %vm3974, %v10935, %v10775
  %v11001 = vsel %vm3974, %v10937, %v10777
  %v11003 = vsel %vm3974, %v10939, %v10779
  %v11005 = vsel %vm3974, %v10941, %v10781
  %v11007 = vsel %vm3974, %v10943, %v10783
  %v11009 = vsel %vm3974, %v10945, %v10785
  %v11011 = vsel %vm3974, %v10947, %v10787
  %v11013 = vsel %vm3974, %v10949, %v10789
  %v11015 = vsel %vm3974, %v10951, %v10791
  %v11017 = vsel %vm3974, %v10953, %v10793
  %v11019 = vsel %vm3974, %v10955, %v10795
  %v11021 = vsel %vm3974, %v10957, %v10797
  %v11023 = vsel %vm3974, %v10959, %v10799
  %v11025 = vsel %vm3974, %v10961, %v10801
  %v11027 = vsel %vm3974, %v10963, %v10803
  %v11029 = vsel %vm3974, %v10965, %v10805
  %v11031 = vsel %vm3974, %v10967, %v10807
  %v11033 = vsel %vm3974, %v10969, %v10809
  %v11035 = vsel %vm3974, %v10971, %v10811
  %v11037 = vsel %vm3974, %v10973, %v10813
  %v11039 = vsel %vm3974, %v10975, %v10815
  %v11041 = vsel %vm3974, %v10977, %v10817
  %v11043 = vsel %vm3974, %v10979, %v10819
  %v11045 = vsel %vm3974, %v10981, %v10821
  %s11046 = scalar_lea.vmem %s1, 16
  %v11047 = vld [vmem:[%s11046] sm:$0xf]
  %v11048 = vld [vmem:[%s11046 + $0x4] sm:$0xf]
  %v11051 = vunpack.c.l.b16 %v11047
  %v11052 = vunpack.c.l.b16 %v11048
  %v11053 = vpack.c.b16 %v11052, %v11051
  %v11055 = vsel %vm4053, %v10983, 0
  %v11057 = vsel %vm4053, %v10985, 0
  %v11059 = vsel %vm4053, %v10987, 0
  %v11061 = vsel %vm4053, %v10989, 0
  %v11063 = vsel %vm4053, %v10991, 0
  %v11065 = vsel %vm4053, %v10993, 0
  %v11067 = vsel %vm4053, %v10995, 0
  %v11069 = vsel %vm4053, %v10997, 0
  %v11071 = vsel %vm4053, %v10999, 0
  %v11073 = vsel %vm4053, %v11001, 0
  %v11075 = vsel %vm4053, %v11003, 0
  %v11077 = vsel %vm4053, %v11005, 0
  %v11079 = vsel %vm4053, %v11007, 0
  %v11081 = vsel %vm4053, %v11009, 0
  %v11083 = vsel %vm4053, %v11011, 0
  %v11085 = vsel %vm4053, %v11013, 0
  %v11087 = vsel %vm4053, %v11015, 0
  %v11089 = vsel %vm4053, %v11017, 0
  %v11091 = vsel %vm4053, %v11019, 0
  %v11093 = vsel %vm4053, %v11021, 0
  %v11095 = vsel %vm4053, %v11023, 0
  %v11097 = vsel %vm4053, %v11025, 0
  %v11099 = vsel %vm4053, %v11027, 0
  %v11101 = vsel %vm4053, %v11029, 0
  %v11103 = vsel %vm4053, %v11031, 0
  %v11105 = vsel %vm4053, %v11033, 0
  %v11107 = vsel %vm4053, %v11035, 0
  %v11109 = vsel %vm4053, %v11037, 0
  %v11111 = vsel %vm4053, %v11039, 0
  %v11113 = vsel %vm4053, %v11041, 0
  %v11115 = vsel %vm4053, %v11043, 0
  %v11117 = vsel %vm4053, %v11045, 0
  %11119 = vmatprep.subr.bf16.mxu0 0
  %11120 = vmatpush1.bf16.msra.mxu0 %v11053
  %11121 = vmatprep.subr.bf16.mxu0 0
  %11122 = vmatpush1.bf16.msra.mxu0 0
  %11123 = vmatprep.subr.bf16.mxu0 0
  %11124 = vmatpush1.bf16.msra.mxu0 0
  %11125 = vmatprep.subr.bf16.mxu0 0
  %11126 = vmatpush1.bf16.msra.mxu0 0
  %11127 = vmatprep.subr.bf16.mxu0 0
  %11128 = vmatpush1.bf16.msra.mxu0 0
  %11129 = vmatprep.subr.bf16.mxu0 0
  %11130 = vmatpush1.bf16.msra.mxu0 0
  %11131 = vmatprep.subr.bf16.mxu0 0
  %11132 = vmatpush1.bf16.msra.mxu0 0
  %11133 = vmatprep.subr.bf16.mxu0 0
  %11134 = vmatpush1.bf16.msra.mxu0 0
  %11135 = vmatprep.subr.bf16.mxu0 0
  %11136 = vmatpush1.bf16.msra.mxu0 0
  %11137 = vmatprep.subr.bf16.mxu0 0
  %11138 = vmatpush1.bf16.msra.mxu0 0
  %11139 = vmatprep.subr.bf16.mxu0 0
  %11140 = vmatpush1.bf16.msra.mxu0 0
  %11141 = vmatprep.subr.bf16.mxu0 0
  %11142 = vmatpush1.bf16.msra.mxu0 0
  %11143 = vmatprep.subr.bf16.mxu0 0
  %11144 = vmatpush1.bf16.msra.mxu0 0
  %11145 = vmatprep.subr.bf16.mxu0 0
  %11146 = vmatpush1.bf16.msra.mxu0 0
  %11147 = vmatprep.subr.bf16.mxu0 0
  %11148 = vmatpush1.bf16.msra.mxu0 0
  %11149 = vmatprep.subr.bf16.mxu0 0
  %11150 = vmatpush1.bf16.msra.mxu0 0
  %11151 = vmatprep.mubr.bf16.mxu0 0
  %11152 = vmatmul.mubr.bf16.gmra.mrb[0].mxu0 %v11055
  %v11153 = vpop.f32.mrb[0].mxu0
  %v11154 = vadd.f32 %v4045, %v11153
  %v11155 = vpop.f32.mrb[0].mxu0
  %v11156 = vpop.f32.mrb[0].mxu0
  %v11157 = vadd.f32 %v4045, %v11156
  %v11158 = vpop.f32.mrb[0].mxu0
  %11159 = vmatprep.mubr.bf16.mxu0 0
  %11160 = vmatmul.mubr.bf16.gmra.mrb[0].mxu0 %v11057
  %v11161 = vpop.f32.mrb[0].mxu0
  %v11162 = vadd.f32 %v4045, %v11161
  %v11163 = vpop.f32.mrb[0].mxu0
  %v11164 = vpop.f32.mrb[0].mxu0
  %v11165 = vadd.f32 %v4045, %v11164
  %v11166 = vpop.f32.mrb[0].mxu0
  %11167 = vmatprep.mubr.bf16.mxu0 0
  %11168 = vmatmul.mubr.bf16.gmra.mrb[0].mxu0 %v11059
  %v11169 = vpop.f32.mrb[0].mxu0
  %v11170 = vadd.f32 %v4045, %v11169
  %v11171 = vpop.f32.mrb[0].mxu0
  %v11172 = vpop.f32.mrb[0].mxu0
  %v11173 = vadd.f32 %v4045, %v11172
  %v11174 = vpop.f32.mrb[0].mxu0
  %11175 = vmatprep.mubr.bf16.mxu0 0
  %11176 = vmatmul.mubr.bf16.gmra.mrb[0].mxu0 %v11061
  %v11177 = vpop.f32.mrb[0].mxu0
  %v11178 = vadd.f32 %v4045, %v11177
  %v11179 = vpop.f32.mrb[0].mxu0
  %v11180 = vpop.f32.mrb[0].mxu0
  %v11181 = vadd.f32 %v4045, %v11180
  %v11182 = vpop.f32.mrb[0].mxu0
  %11183 = vmatprep.mubr.bf16.mxu0 0
  %11184 = vmatmul.mubr.bf16.gmra.mrb[0].mxu0 %v11063
  %v11185 = vpop.f32.mrb[0].mxu0
  %v11186 = vadd.f32 %v4045, %v11185
  %v11187 = vpop.f32.mrb[0].mxu0
  %v11188 = vpop.f32.mrb[0].mxu0
  %v11189 = vadd.f32 %v4045, %v11188
  %v11190 = vpop.f32.mrb[0].mxu0
  %11191 = vmatprep.mubr.bf16.mxu0 0
  %11192 = vmatmul.mubr.bf16.gmra.mrb[0].mxu0 %v11065
  %v11193 = vpop.f32.mrb[0].mxu0
  %v11194 = vadd.f32 %v4045, %v11193
  %v11195 = vpop.f32.mrb[0].mxu0
  %v11196 = vpop.f32.mrb[0].mxu0
  %v11197 = vadd.f32 %v4045, %v11196
  %v11198 = vpop.f32.mrb[0].mxu0
  %11199 = vmatprep.mubr.bf16.mxu0 0
  %11200 = vmatmul.mubr.bf16.gmra.mrb[0].mxu0 %v11067
  %v11201 = vpop.f32.mrb[0].mxu0
  %v11202 = vadd.f32 %v4045, %v11201
  %v11203 = vpop.f32.mrb[0].mxu0
  %v11204 = vpop.f32.mrb[0].mxu0
  %v11205 = vadd.f32 %v4045, %v11204
  %v11206 = vpop.f32.mrb[0].mxu0
  %11207 = vmatprep.mubr.bf16.mxu0 0
  %11208 = vmatmul.mubr.bf16.gmra.mrb[0].mxu0 %v11069
  %v11209 = vpop.f32.mrb[0].mxu0
  %v11210 = vadd.f32 %v4045, %v11209
  %v11211 = vpop.f32.mrb[0].mxu0
  %v11212 = vpop.f32.mrb[0].mxu0
  %v11213 = vadd.f32 %v4045, %v11212
  %v11214 = vpop.f32.mrb[0].mxu0
  %11215 = vmatprep.mubr.bf16.mxu0 0
  %11216 = vmatmul.mubr.bf16.gmra.mrb[0].mxu0 %v11071
  %v11217 = vpop.f32.mrb[0].mxu0
  %v11218 = vadd.f32 %v4045, %v11217
  %v11219 = vpop.f32.mrb[0].mxu0
  %v11220 = vpop.f32.mrb[0].mxu0
  %v11221 = vadd.f32 %v4045, %v11220
  %v11222 = vpop.f32.mrb[0].mxu0
  %11223 = vmatprep.mubr.bf16.mxu0 0
  %11224 = vmatmul.mubr.bf16.gmra.mrb[0].mxu0 %v11073
  %v11225 = vpop.f32.mrb[0].mxu0
  %v11226 = vadd.f32 %v4045, %v11225
  %v11227 = vpop.f32.mrb[0].mxu0
  %v11228 = vpop.f32.mrb[0].mxu0
  %v11229 = vadd.f32 %v4045, %v11228
  %v11230 = vpop.f32.mrb[0].mxu0
  %11231 = vmatprep.mubr.bf16.mxu0 0
  %11232 = vmatmul.mubr.bf16.gmra.mrb[0].mxu0 %v11075
  %v11233 = vpop.f32.mrb[0].mxu0
  %v11234 = vadd.f32 %v4045, %v11233
  %v11235 = vpop.f32.mrb[0].mxu0
  %v11236 = vpop.f32.mrb[0].mxu0
  %v11237 = vadd.f32 %v4045, %v11236
  %v11238 = vpop.f32.mrb[0].mxu0
  %11239 = vmatprep.mubr.bf16.mxu0 0
  %11240 = vmatmul.mubr.bf16.gmra.mrb[0].mxu0 %v11077
  %v11241 = vpop.f32.mrb[0].mxu0
  %v11242 = vadd.f32 %v4045, %v11241
  %v11243 = vpop.f32.mrb[0].mxu0
  %v11244 = vpop.f32.mrb[0].mxu0
  %v11245 = vadd.f32 %v4045, %v11244
  %v11246 = vpop.f32.mrb[0].mxu0
  %11247 = vmatprep.mubr.bf16.mxu0 0
  %11248 = vmatmul.mubr.bf16.gmra.mrb[0].mxu0 %v11079
  %v11249 = vpop.f32.mrb[0].mxu0
  %v11250 = vadd.f32 %v4045, %v11249
  %v11251 = vpop.f32.mrb[0].mxu0
  %v11252 = vpop.f32.mrb[0].mxu0
  %v11253 = vadd.f32 %v4045, %v11252
  %v11254 = vpop.f32.mrb[0].mxu0
  %11255 = vmatprep.mubr.bf16.mxu0 0
  %11256 = vmatmul.mubr.bf16.gmra.mrb[0].mxu0 %v11081
  %v11257 = vpop.f32.mrb[0].mxu0
  %v11258 = vadd.f32 %v4045, %v11257
  %v11259 = vpop.f32.mrb[0].mxu0
  %v11260 = vpop.f32.mrb[0].mxu0
  %v11261 = vadd.f32 %v4045, %v11260
  %v11262 = vpop.f32.mrb[0].mxu0
  %11263 = vmatprep.mubr.bf16.mxu0 0
  %11264 = vmatmul.mubr.bf16.gmra.mrb[0].mxu0 %v11083
  %v11265 = vpop.f32.mrb[0].mxu0
  %v11266 = vadd.f32 %v4045, %v11265
  %v11267 = vpop.f32.mrb[0].mxu0
  %v11268 = vpop.f32.mrb[0].mxu0
  %v11269 = vadd.f32 %v4045, %v11268
  %v11270 = vpop.f32.mrb[0].mxu0
  %11271 = vmatprep.mubr.bf16.mxu0 0
  %11272 = vmatmul.mubr.bf16.gmra.mrb[0].mxu0 %v11085
  %v11273 = vpop.f32.mrb[0].mxu0
  %v11274 = vadd.f32 %v4045, %v11273
  %v11275 = vpop.f32.mrb[0].mxu0
  %v11276 = vpop.f32.mrb[0].mxu0
  %v11277 = vadd.f32 %v4045, %v11276
  %v11278 = vpop.f32.mrb[0].mxu0
  %11279 = vmatprep.mubr.bf16.mxu0 0
  %11280 = vmatmul.mubr.bf16.gmra.mrb[0].mxu0 %v11087
  %v11281 = vpop.f32.mrb[0].mxu0
  %v11282 = vadd.f32 %v4045, %v11281
  %v11283 = vpop.f32.mrb[0].mxu0
  %v11284 = vpop.f32.mrb[0].mxu0
  %v11285 = vadd.f32 %v4045, %v11284
  %v11286 = vpop.f32.mrb[0].mxu0
  %11287 = vmatprep.mubr.bf16.mxu0 0
  %11288 = vmatmul.mubr.bf16.gmra.mrb[0].mxu0 %v11089
  %v11289 = vpop.f32.mrb[0].mxu0
  %v11290 = vadd.f32 %v4045, %v11289
  %v11291 = vpop.f32.mrb[0].mxu0
  %v11292 = vpop.f32.mrb[0].mxu0
  %v11293 = vadd.f32 %v4045, %v11292
  %v11294 = vpop.f32.mrb[0].mxu0
  %11295 = vmatprep.mubr.bf16.mxu0 0
  %11296 = vmatmul.mubr.bf16.gmra.mrb[0].mxu0 %v11091
  %v11297 = vpop.f32.mrb[0].mxu0
  %v11298 = vadd.f32 %v4045, %v11297
  %v11299 = vpop.f32.mrb[0].mxu0
  %v11300 = vpop.f32.mrb[0].mxu0
  %v11301 = vadd.f32 %v4045, %v11300
  %v11302 = vpop.f32.mrb[0].mxu0
  %11303 = vmatprep.mubr.bf16.mxu0 0
  %11304 = vmatmul.mubr.bf16.gmra.mrb[0].mxu0 %v11093
  %v11305 = vpop.f32.mrb[0].mxu0
  %v11306 = vadd.f32 %v4045, %v11305
  %v11307 = vpop.f32.mrb[0].mxu0
  %v11308 = vpop.f32.mrb[0].mxu0
  %v11309 = vadd.f32 %v4045, %v11308
  %v11310 = vpop.f32.mrb[0].mxu0
  %11311 = vmatprep.mubr.bf16.mxu0 0
  %11312 = vmatmul.mubr.bf16.gmra.mrb[0].mxu0 %v11095
  %v11313 = vpop.f32.mrb[0].mxu0
  %v11314 = vadd.f32 %v4045, %v11313
  %v11315 = vpop.f32.mrb[0].mxu0
  %v11316 = vpop.f32.mrb[0].mxu0
  %v11317 = vadd.f32 %v4045, %v11316
  %v11318 = vpop.f32.mrb[0].mxu0
  %11319 = vmatprep.mubr.bf16.mxu0 0
  %11320 = vmatmul.mubr.bf16.gmra.mrb[0].mxu0 %v11097
  %v11321 = vpop.f32.mrb[0].mxu0
  %v11322 = vadd.f32 %v4045, %v11321
  %v11323 = vpop.f32.mrb[0].mxu0
  %v11324 = vpop.f32.mrb[0].mxu0
  %v11325 = vadd.f32 %v4045, %v11324
  %v11326 = vpop.f32.mrb[0].mxu0
  %11327 = vmatprep.mubr.bf16.mxu0 0
  %11328 = vmatmul.mubr.bf16.gmra.mrb[0].mxu0 %v11099
  %v11329 = vpop.f32.mrb[0].mxu0
  %v11330 = vadd.f32 %v4045, %v11329
  %v11331 = vpop.f32.mrb[0].mxu0
  %v11332 = vpop.f32.mrb[0].mxu0
  %v11333 = vadd.f32 %v4045, %v11332
  %v11334 = vpop.f32.mrb[0].mxu0
  %11335 = vmatprep.mubr.bf16.mxu0 0
  %11336 = vmatmul.mubr.bf16.gmra.mrb[0].mxu0 %v11101
  %v11337 = vpop.f32.mrb[0].mxu0
  %v11338 = vadd.f32 %v4045, %v11337
  %v11339 = vpop.f32.mrb[0].mxu0
  %v11340 = vpop.f32.mrb[0].mxu0
  %v11341 = vadd.f32 %v4045, %v11340
  %v11342 = vpop.f32.mrb[0].mxu0
  %11343 = vmatprep.mubr.bf16.mxu0 0
  %11344 = vmatmul.mubr.bf16.gmra.mrb[0].mxu0 %v11103
  %v11345 = vpop.f32.mrb[0].mxu0
  %v11346 = vadd.f32 %v4045, %v11345
  %v11347 = vpop.f32.mrb[0].mxu0
  %v11348 = vpop.f32.mrb[0].mxu0
  %v11349 = vadd.f32 %v4045, %v11348
  %v11350 = vpop.f32.mrb[0].mxu0
  %11351 = vmatprep.mubr.bf16.mxu0 0
  %11352 = vmatmul.mubr.bf16.gmra.mrb[0].mxu0 %v11105
  %v11353 = vpop.f32.mrb[0].mxu0
  %v11354 = vadd.f32 %v4045, %v11353
  %v11355 = vpop.f32.mrb[0].mxu0
  %v11356 = vpop.f32.mrb[0].mxu0
  %v11357 = vadd.f32 %v4045, %v11356
  %v11358 = vpop.f32.mrb[0].mxu0
  %11359 = vmatprep.mubr.bf16.mxu0 0
  %11360 = vmatmul.mubr.bf16.gmra.mrb[0].mxu0 %v11107
  %v11361 = vpop.f32.mrb[0].mxu0
  %v11362 = vadd.f32 %v4045, %v11361
  %v11363 = vpop.f32.mrb[0].mxu0
  %v11364 = vpop.f32.mrb[0].mxu0
  %v11365 = vadd.f32 %v4045, %v11364
  %v11366 = vpop.f32.mrb[0].mxu0
  %11367 = vmatprep.mubr.bf16.mxu0 0
  %11368 = vmatmul.mubr.bf16.gmra.mrb[0].mxu0 %v11109
  %v11369 = vpop.f32.mrb[0].mxu0
  %v11370 = vadd.f32 %v4045, %v11369
  %v11371 = vpop.f32.mrb[0].mxu0
  %v11372 = vpop.f32.mrb[0].mxu0
  %v11373 = vadd.f32 %v4045, %v11372
  %v11374 = vpop.f32.mrb[0].mxu0
  %11375 = vmatprep.mubr.bf16.mxu0 0
  %11376 = vmatmul.mubr.bf16.gmra.mrb[0].mxu0 %v11111
  %v11377 = vpop.f32.mrb[0].mxu0
  %v11378 = vadd.f32 %v4045, %v11377
  %v11379 = vpop.f32.mrb[0].mxu0
  %v11380 = vpop.f32.mrb[0].mxu0
  %v11381 = vadd.f32 %v4045, %v11380
  %v11382 = vpop.f32.mrb[0].mxu0
  %11383 = vmatprep.mubr.bf16.mxu0 0
  %11384 = vmatmul.mubr.bf16.gmra.mrb[0].mxu0 %v11113
  %v11385 = vpop.f32.mrb[0].mxu0
  %v11386 = vadd.f32 %v4045, %v11385
  %v11387 = vpop.f32.mrb[0].mxu0
  %v11388 = vpop.f32.mrb[0].mxu0
  %v11389 = vadd.f32 %v4045, %v11388
  %v11390 = vpop.f32.mrb[0].mxu0
  %11391 = vmatprep.mubr.bf16.mxu0 0
  %11392 = vmatmul.mubr.bf16.gmra.mrb[0].mxu0 %v11115
  %v11393 = vpop.f32.mrb[0].mxu0
  %v11394 = vadd.f32 %v4045, %v11393
  %v11395 = vpop.f32.mrb[0].mxu0
  %v11396 = vpop.f32.mrb[0].mxu0
  %v11397 = vadd.f32 %v4045, %v11396
  %v11398 = vpop.f32.mrb[0].mxu0
  %11399 = vmatprep.mubr.bf16.mxu0 0
  %11400 = vmatmul.mubr.bf16.gmra.mrb[0].mxu0 %v11117
  %v11401 = vpop.f32.mrb[0].mxu0
  %v11402 = vadd.f32 %v4045, %v11401
  %v11403 = vpop.f32.mrb[0].mxu0
  %v11404 = vpop.f32.mrb[0].mxu0
  %v11405 = vadd.f32 %v4045, %v11404
  %v11406 = vpop.f32.mrb[0].mxu0
  %11407 = vdwg.mxu0
  %s11408 = scalar_lea.vmem %s3, 16
  %11409 = vst.msk [vmem:[%s11408] sm:$0xff] %vm3812, %v11154
  %11410 = vst.msk [vmem:[%s11408 + $0x8] sm:$0xff] %vm3812, %v11157
  %11411 = vst.msk [vmem:[%s11408 + $0x20] sm:$0xff] %vm3812, %v11162
  %11412 = vst.msk [vmem:[%s11408 + $0x28] sm:$0xff] %vm3812, %v11165
  %11413 = vst.msk [vmem:[%s11408 + $0x40] sm:$0xff] %vm3812, %v11170
  %11414 = vst.msk [vmem:[%s11408 + $0x48] sm:$0xff] %vm3812, %v11173
  %11415 = vst.msk [vmem:[%s11408 + $0x60] sm:$0xff] %vm3812, %v11178
  %11416 = vst.msk [vmem:[%s11408 + $0x68] sm:$0xff] %vm3812, %v11181
  %11417 = vst.msk [vmem:[%s11408 + $0x80] sm:$0xff] %vm3812, %v11186
  %11418 = vst.msk [vmem:[%s11408 + $0x88] sm:$0xff] %vm3812, %v11189
  %11419 = vst.msk [vmem:[%s11408 + $0xa0] sm:$0xff] %vm3812, %v11194
  %11420 = vst.msk [vmem:[%s11408 + $0xa8] sm:$0xff] %vm3812, %v11197
  %11421 = vst.msk [vmem:[%s11408 + $0xc0] sm:$0xff] %vm3812, %v11202
  %11422 = vst.msk [vmem:[%s11408 + $0xc8] sm:$0xff] %vm3812, %v11205
  %11423 = vst.msk [vmem:[%s11408 + $0xe0] sm:$0xff] %vm3812, %v11210
  %11424 = vst.msk [vmem:[%s11408 + $0xe8] sm:$0xff] %vm3812, %v11213
  %11425 = vst.msk [vmem:[%s11408 + $0x100] sm:$0xff] %vm3812, %v11218
  %11426 = vst.msk [vmem:[%s11408 + $0x108] sm:$0xff] %vm3812, %v11221
  %11427 = vst.msk [vmem:[%s11408 + $0x120] sm:$0xff] %vm3812, %v11226
  %11428 = vst.msk [vmem:[%s11408 + $0x128] sm:$0xff] %vm3812, %v11229
  %11429 = vst.msk [vmem:[%s11408 + $0x140] sm:$0xff] %vm3812, %v11234
  %11430 = vst.msk [vmem:[%s11408 + $0x148] sm:$0xff] %vm3812, %v11237
  %11431 = vst.msk [vmem:[%s11408 + $0x160] sm:$0xff] %vm3812, %v11242
  %11432 = vst.msk [vmem:[%s11408 + $0x168] sm:$0xff] %vm3812, %v11245
  %11433 = vst.msk [vmem:[%s11408 + $0x180] sm:$0xff] %vm3812, %v11250
  %11434 = vst.msk [vmem:[%s11408 + $0x188] sm:$0xff] %vm3812, %v11253
  %11435 = vst.msk [vmem:[%s11408 + $0x1a0] sm:$0xff] %vm3812, %v11258
  %11436 = vst.msk [vmem:[%s11408 + $0x1a8] sm:$0xff] %vm3812, %v11261
  %11437 = vst.msk [vmem:[%s11408 + $0x1c0] sm:$0xff] %vm3812, %v11266
  %11438 = vst.msk [vmem:[%s11408 + $0x1c8] sm:$0xff] %vm3812, %v11269
  %11439 = vst.msk [vmem:[%s11408 + $0x1e0] sm:$0xff] %vm3812, %v11274
  %11440 = vst.msk [vmem:[%s11408 + $0x1e8] sm:$0xff] %vm3812, %v11277
  %11441 = vst.msk [vmem:[%s11408 + $0x200] sm:$0xff] %vm3812, %v11282
  %11442 = vst.msk [vmem:[%s11408 + $0x208] sm:$0xff] %vm3812, %v11285
  %11443 = vst.msk [vmem:[%s11408 + $0x220] sm:$0xff] %vm3812, %v11290
  %11444 = vst.msk [vmem:[%s11408 + $0x228] sm:$0xff] %vm3812, %v11293
  %11445 = vst.msk [vmem:[%s11408 + $0x240] sm:$0xff] %vm3812, %v11298
  %11446 = vst.msk [vmem:[%s11408 + $0x248] sm:$0xff] %vm3812, %v11301
  %11447 = vst.msk [vmem:[%s11408 + $0x260] sm:$0xff] %vm3812, %v11306
  %11448 = vst.msk [vmem:[%s11408 + $0x268] sm:$0xff] %vm3812, %v11309
  %11449 = vst.msk [vmem:[%s11408 + $0x280] sm:$0xff] %vm3812, %v11314
  %11450 = vst.msk [vmem:[%s11408 + $0x288] sm:$0xff] %vm3812, %v11317
  %11451 = vst.msk [vmem:[%s11408 + $0x2a0] sm:$0xff] %vm3812, %v11322
  %11452 = vst.msk [vmem:[%s11408 + $0x2a8] sm:$0xff] %vm3812, %v11325
  %11453 = vst.msk [vmem:[%s11408 + $0x2c0] sm:$0xff] %vm3812, %v11330
  %11454 = vst.msk [vmem:[%s11408 + $0x2c8] sm:$0xff] %vm3812, %v11333
  %11455 = vst.msk [vmem:[%s11408 + $0x2e0] sm:$0xff] %vm3812, %v11338
  %11456 = vst.msk [vmem:[%s11408 + $0x2e8] sm:$0xff] %vm3812, %v11341
  %11457 = vst.msk [vmem:[%s11408 + $0x300] sm:$0xff] %vm3812, %v11346
  %11458 = vst.msk [vmem:[%s11408 + $0x308] sm:$0xff] %vm3812, %v11349
  %11459 = vst.msk [vmem:[%s11408 + $0x320] sm:$0xff] %vm3812, %v11354
  %11460 = vst.msk [vmem:[%s11408 + $0x328] sm:$0xff] %vm3812, %v11357
  %11461 = vst.msk [vmem:[%s11408 + $0x340] sm:$0xff] %vm3812, %v11362
  %11462 = vst.msk [vmem:[%s11408 + $0x348] sm:$0xff] %vm3812, %v11365
  %11463 = vst.msk [vmem:[%s11408 + $0x360] sm:$0xff] %vm3812, %v11370
  %11464 = vst.msk [vmem:[%s11408 + $0x368] sm:$0xff] %vm3812, %v11373
  %11465 = vst.msk [vmem:[%s11408 + $0x380] sm:$0xff] %vm3812, %v11378
  %11466 = vst.msk [vmem:[%s11408 + $0x388] sm:$0xff] %vm3812, %v11381
  %11467 = vst.msk [vmem:[%s11408 + $0x3a0] sm:$0xff] %vm3812, %v11386
  %11468 = vst.msk [vmem:[%s11408 + $0x3a8] sm:$0xff] %vm3812, %v11389
  %11469 = vst.msk [vmem:[%s11408 + $0x3c0] sm:$0xff] %vm3812, %v11394
  %11470 = vst.msk [vmem:[%s11408 + $0x3c8] sm:$0xff] %vm3812, %v11397
  %11471 = vst.msk [vmem:[%s11408 + $0x3e0] sm:$0xff] %vm3812, %v11402
  %11472 = vst.msk [vmem:[%s11408 + $0x3e8] sm:$0xff] %vm3812, %v11405
  %v11473 = vld [vmem:[%s1149] sm:$0xf]
  %v11474 = vld [vmem:[%s1149 + $0x4] sm:$0xf]
  %v11475 = vld [vmem:[%s1149 + $0x8] sm:$0x1]
  %v11476 = vld [vmem:[%s1149 + $0xc] sm:$0xf]
  %v11477 = vld [vmem:[%s1149 + $0x10] sm:$0xf]
  %v11478 = vld [vmem:[%s1149 + $0x14] sm:$0x1]
  %v11479 = vld [vmem:[%s1149 + $0x18] sm:$0xf]
  %v11480 = vld [vmem:[%s1149 + $0x1c] sm:$0xf]
  %v11481 = vld [vmem:[%s1149 + $0x20] sm:$0x1]
  %v11482 = vld [vmem:[%s1149 + $0x24] sm:$0xf]
  %v11483 = vld [vmem:[%s1149 + $0x28] sm:$0xf]
  %v11484 = vld [vmem:[%s1149 + $0x2c] sm:$0x1]
  %v11485 = vld [vmem:[%s1149 + $0x30] sm:$0xf]
  %v11486 = vld [vmem:[%s1149 + $0x34] sm:$0xf]
  %v11487 = vld [vmem:[%s1149 + $0x38] sm:$0x1]
  %v11488 = vld [vmem:[%s1149 + $0x3c] sm:$0xf]
  %v11489 = vld [vmem:[%s1149 + $0x40] sm:$0xf]
  %v11490 = vld [vmem:[%s1149 + $0x44] sm:$0x1]
  %v11491 = vld [vmem:[%s1149 + $0x48] sm:$0xf]
  %v11492 = vld [vmem:[%s1149 + $0x4c] sm:$0xf]
  %v11493 = vld [vmem:[%s1149 + $0x50] sm:$0x1]
  %v11494 = vld [vmem:[%s1149 + $0x54] sm:$0xf]
  %v11495 = vld [vmem:[%s1149 + $0x58] sm:$0xf]
  %v11496 = vld [vmem:[%s1149 + $0x5c] sm:$0x1]
  %v11497 = vld [vmem:[%s1149 + $0x60] sm:$0xf]
  %v11498 = vld [vmem:[%s1149 + $0x64] sm:$0xf]
  %v11499 = vld [vmem:[%s1149 + $0x68] sm:$0x1]
  %v11500 = vld [vmem:[%s1149 + $0x6c] sm:$0xf]
  %v11501 = vld [vmem:[%s1149 + $0x70] sm:$0xf]
  %v11502 = vld [vmem:[%s1149 + $0x74] sm:$0x1]
  %v11503 = vld [vmem:[%s1149 + $0x78] sm:$0xf]
  %v11504 = vld [vmem:[%s1149 + $0x7c] sm:$0xf]
  %v11505 = vld [vmem:[%s1149 + $0x80] sm:$0x1]
  %v11506 = vld [vmem:[%s1149 + $0x84] sm:$0xf]
  %v11507 = vld [vmem:[%s1149 + $0x88] sm:$0xf]
  %v11508 = vld [vmem:[%s1149 + $0x8c] sm:$0x1]
  %v11509 = vld [vmem:[%s1149 + $0x90] sm:$0xf]
  %v11510 = vld [vmem:[%s1149 + $0x94] sm:$0xf]
  %v11511 = vld [vmem:[%s1149 + $0x98] sm:$0x1]
  %v11512 = vld [vmem:[%s1149 + $0x9c] sm:$0xf]
  %v11513 = vld [vmem:[%s1149 + $0xa0] sm:$0xf]
  %v11514 = vld [vmem:[%s1149 + $0xa4] sm:$0x1]
  %v11515 = vld [vmem:[%s1149 + $0xa8] sm:$0xf]
  %v11516 = vld [vmem:[%s1149 + $0xac] sm:$0xf]
  %v11517 = vld [vmem:[%s1149 + $0xb0] sm:$0x1]
  %v11518 = vld [vmem:[%s1149 + $0xb4] sm:$0xf]
  %v11519 = vld [vmem:[%s1149 + $0xb8] sm:$0xf]
  %v11520 = vld [vmem:[%s1149 + $0xbc] sm:$0x1]
  %v11521 = vld [vmem:[%s1149 + $0xd8] sm:$0xf]
  %v11522 = vld [vmem:[%s1149 + $0xdc] sm:$0xf]
  %v11523 = vld [vmem:[%s1149 + $0xe0] sm:$0x1]
  %v11524 = vld [vmem:[%s1149 + $0xe4] sm:$0xf]
  %v11525 = vld [vmem:[%s1149 + $0xe8] sm:$0xf]
  %v11526 = vld [vmem:[%s1149 + $0xec] sm:$0x1]
  %v11527 = vld [vmem:[%s1149 + $0xf0] sm:$0xf]
  %v11528 = vld [vmem:[%s1149 + $0xf4] sm:$0xf]
  %v11529 = vld [vmem:[%s1149 + $0xf8] sm:$0x1]
  %v11530 = vld [vmem:[%s1149 + $0xfc] sm:$0xf]
  %v11531 = vld [vmem:[%s1149 + $0x100] sm:$0xf]
  %v11532 = vld [vmem:[%s1149 + $0x104] sm:$0x1]
  %v11533 = vld [vmem:[%s1149 + $0x108] sm:$0xf]
  %v11534 = vld [vmem:[%s1149 + $0x10c] sm:$0xf]
  %v11535 = vld [vmem:[%s1149 + $0x110] sm:$0x1]
  %v11536 = vld [vmem:[%s1149 + $0x114] sm:$0xf]
  %v11537 = vld [vmem:[%s1149 + $0x118] sm:$0xf]
  %v11538 = vld [vmem:[%s1149 + $0x11c] sm:$0x1]
  %v11539 = vld [vmem:[%s1149 + $0x120] sm:$0xf]
  %v11540 = vld [vmem:[%s1149 + $0x124] sm:$0xf]
  %v11541 = vld [vmem:[%s1149 + $0x128] sm:$0x1]
  %v11542 = vld [vmem:[%s1149 + $0x12c] sm:$0xf]
  %v11543 = vld [vmem:[%s1149 + $0x130] sm:$0xf]
  %v11544 = vld [vmem:[%s1149 + $0x134] sm:$0x1]
  %v11545 = vld [vmem:[%s1149 + $0x138] sm:$0xf]
  %v11546 = vld [vmem:[%s1149 + $0x13c] sm:$0xf]
  %v11547 = vld [vmem:[%s1149 + $0x140] sm:$0x1]
  %v11548 = vld [vmem:[%s1149 + $0x144] sm:$0xf]
  %v11549 = vld [vmem:[%s1149 + $0x148] sm:$0xf]
  %v11550 = vld [vmem:[%s1149 + $0x14c] sm:$0x1]
  %v11551 = vld [vmem:[%s1149 + $0x150] sm:$0xf]
  %v11552 = vld [vmem:[%s1149 + $0x154] sm:$0xf]
  %v11553 = vld [vmem:[%s1149 + $0x158] sm:$0x1]
  %v11554 = vld [vmem:[%s1149 + $0x15c] sm:$0xf]
  %v11555 = vld [vmem:[%s1149 + $0x160] sm:$0xf]
  %v11556 = vld [vmem:[%s1149 + $0x164] sm:$0x1]
  %v11557 = vld [vmem:[%s1149 + $0x168] sm:$0xf]
  %v11558 = vld [vmem:[%s1149 + $0x16c] sm:$0xf]
  %v11559 = vld [vmem:[%s1149 + $0x170] sm:$0x1]
  %v11560 = vld [vmem:[%s1149 + $0x174] sm:$0xf]
  %v11561 = vld [vmem:[%s1149 + $0x178] sm:$0xf]
  %v11562 = vld [vmem:[%s1149 + $0x17c] sm:$0x1]
  %v11563 = vld [vmem:[%s1149 + $0x180] sm:$0xf]
  %v11564 = vld [vmem:[%s1149 + $0x184] sm:$0xf]
  %v11565 = vld [vmem:[%s1149 + $0x188] sm:$0x1]
  %v11566 = vld [vmem:[%s1149 + $0x18c] sm:$0xf]
  %v11567 = vld [vmem:[%s1149 + $0x190] sm:$0xf]
  %v11568 = vld [vmem:[%s1149 + $0x194] sm:$0x1]
  %v11570 = vshrl.u32 %v11473, 16
  %v11572 = vrot.slane %v11570, 4
  %v11573 = vshll.u32 %v11473, 16
  %v11575 = vrot.slane %v11573, 5
  %v11576 = vor.u32 %v11572, %v11575
  %v11577 = vrot.slane %v11576, 4
  %v11579 = vshll.u32 %v11474, 16
  %v11581 = vrot.slane %v11579, 5
  %v11582 = vsel %vm1475, %v11577, %v11581
  %v11583 = vshrl.u32 %v11474, 16
  %v11585 = vrot.slane %v11583, 4
  %v11586 = vor.u32 %v11585, %v11581
  %v11587 = vrot.slane %v11586, 4
  %v11589 = vshll.u32 %v11475, 16
  %v11591 = vrot.slane %v11589, 5
  %v11592 = vsel %vm1475, %v11587, %v11591
  %v11594 = vshrl.u32 %v11476, 16
  %v11596 = vrot.slane %v11594, 4
  %v11597 = vshll.u32 %v11476, 16
  %v11599 = vrot.slane %v11597, 5
  %v11600 = vor.u32 %v11596, %v11599
  %v11601 = vrot.slane %v11600, 4
  %v11603 = vshll.u32 %v11477, 16
  %v11605 = vrot.slane %v11603, 5
  %v11606 = vsel %vm1475, %v11601, %v11605
  %v11607 = vshrl.u32 %v11477, 16
  %v11609 = vrot.slane %v11607, 4
  %v11610 = vor.u32 %v11609, %v11605
  %v11611 = vrot.slane %v11610, 4
  %v11613 = vshll.u32 %v11478, 16
  %v11615 = vrot.slane %v11613, 5
  %v11616 = vsel %vm1475, %v11611, %v11615
  %v11618 = vshrl.u32 %v11479, 16
  %v11620 = vrot.slane %v11618, 4
  %v11621 = vshll.u32 %v11479, 16
  %v11623 = vrot.slane %v11621, 5
  %v11624 = vor.u32 %v11620, %v11623
  %v11625 = vrot.slane %v11624, 4
  %v11627 = vshll.u32 %v11480, 16
  %v11629 = vrot.slane %v11627, 5
  %v11630 = vsel %vm1475, %v11625, %v11629
  %v11631 = vshrl.u32 %v11480, 16
  %v11633 = vrot.slane %v11631, 4
  %v11634 = vor.u32 %v11633, %v11629
  %v11635 = vrot.slane %v11634, 4
  %v11637 = vshll.u32 %v11481, 16
  %v11639 = vrot.slane %v11637, 5
  %v11640 = vsel %vm1475, %v11635, %v11639
  %v11642 = vshrl.u32 %v11482, 16
  %v11644 = vrot.slane %v11642, 4
  %v11645 = vshll.u32 %v11482, 16
  %v11647 = vrot.slane %v11645, 5
  %v11648 = vor.u32 %v11644, %v11647
  %v11649 = vrot.slane %v11648, 4
  %v11651 = vshll.u32 %v11483, 16
  %v11653 = vrot.slane %v11651, 5
  %v11654 = vsel %vm1475, %v11649, %v11653
  %v11655 = vshrl.u32 %v11483, 16
  %v11657 = vrot.slane %v11655, 4
  %v11658 = vor.u32 %v11657, %v11653
  %v11659 = vrot.slane %v11658, 4
  %v11661 = vshll.u32 %v11484, 16
  %v11663 = vrot.slane %v11661, 5
  %v11664 = vsel %vm1475, %v11659, %v11663
  %v11666 = vshrl.u32 %v11485, 16
  %v11668 = vrot.slane %v11666, 4
  %v11669 = vshll.u32 %v11485, 16
  %v11671 = vrot.slane %v11669, 5
  %v11672 = vor.u32 %v11668, %v11671
  %v11673 = vrot.slane %v11672, 4
  %v11675 = vshll.u32 %v11486, 16
  %v11677 = vrot.slane %v11675, 5
  %v11678 = vsel %vm1475, %v11673, %v11677
  %v11679 = vshrl.u32 %v11486, 16
  %v11681 = vrot.slane %v11679, 4
  %v11682 = vor.u32 %v11681, %v11677
  %v11683 = vrot.slane %v11682, 4
  %v11685 = vshll.u32 %v11487, 16
  %v11687 = vrot.slane %v11685, 5
  %v11688 = vsel %vm1475, %v11683, %v11687
  %v11690 = vshrl.u32 %v11488, 16
  %v11692 = vrot.slane %v11690, 4
  %v11693 = vshll.u32 %v11488, 16
  %v11695 = vrot.slane %v11693, 5
  %v11696 = vor.u32 %v11692, %v11695
  %v11697 = vrot.slane %v11696, 4
  %v11699 = vshll.u32 %v11489, 16
  %v11701 = vrot.slane %v11699, 5
  %v11702 = vsel %vm1475, %v11697, %v11701
  %v11703 = vshrl.u32 %v11489, 16
  %v11705 = vrot.slane %v11703, 4
  %v11706 = vor.u32 %v11705, %v11701
  %v11707 = vrot.slane %v11706, 4
  %v11709 = vshll.u32 %v11490, 16
  %v11711 = vrot.slane %v11709, 5
  %v11712 = vsel %vm1475, %v11707, %v11711
  %v11714 = vshrl.u32 %v11491, 16
  %v11716 = vrot.slane %v11714, 4
  %v11717 = vshll.u32 %v11491, 16
  %v11719 = vrot.slane %v11717, 5
  %v11720 = vor.u32 %v11716, %v11719
  %v11721 = vrot.slane %v11720, 4
  %v11723 = vshll.u32 %v11492, 16
  %v11725 = vrot.slane %v11723, 5
  %v11726 = vsel %vm1475, %v11721, %v11725
  %v11727 = vshrl.u32 %v11492, 16
  %v11729 = vrot.slane %v11727, 4
  %v11730 = vor.u32 %v11729, %v11725
  %v11731 = vrot.slane %v11730, 4
  %v11733 = vshll.u32 %v11493, 16
  %v11735 = vrot.slane %v11733, 5
  %v11736 = vsel %vm1475, %v11731, %v11735
  %v11738 = vshrl.u32 %v11494, 16
  %v11740 = vrot.slane %v11738, 4
  %v11741 = vshll.u32 %v11494, 16
  %v11743 = vrot.slane %v11741, 5
  %v11744 = vor.u32 %v11740, %v11743
  %v11745 = vrot.slane %v11744, 4
  %v11747 = vshll.u32 %v11495, 16
  %v11749 = vrot.slane %v11747, 5
  %v11750 = vsel %vm1475, %v11745, %v11749
  %v11751 = vshrl.u32 %v11495, 16
  %v11753 = vrot.slane %v11751, 4
  %v11754 = vor.u32 %v11753, %v11749
  %v11755 = vrot.slane %v11754, 4
  %v11757 = vshll.u32 %v11496, 16
  %v11759 = vrot.slane %v11757, 5
  %v11760 = vsel %vm1475, %v11755, %v11759
  %v11762 = vshrl.u32 %v11497, 16
  %v11764 = vrot.slane %v11762, 4
  %v11765 = vshll.u32 %v11497, 16
  %v11767 = vrot.slane %v11765, 5
  %v11768 = vor.u32 %v11764, %v11767
  %v11769 = vrot.slane %v11768, 4
  %v11771 = vshll.u32 %v11498, 16
  %v11773 = vrot.slane %v11771, 5
  %v11774 = vsel %vm1475, %v11769, %v11773
  %v11775 = vshrl.u32 %v11498, 16
  %v11777 = vrot.slane %v11775, 4
  %v11778 = vor.u32 %v11777, %v11773
  %v11779 = vrot.slane %v11778, 4
  %v11781 = vshll.u32 %v11499, 16
  %v11783 = vrot.slane %v11781, 5
  %v11784 = vsel %vm1475, %v11779, %v11783
  %v11786 = vshrl.u32 %v11500, 16
  %v11788 = vrot.slane %v11786, 4
  %v11789 = vshll.u32 %v11500, 16
  %v11791 = vrot.slane %v11789, 5
  %v11792 = vor.u32 %v11788, %v11791
  %v11793 = vrot.slane %v11792, 4
  %v11795 = vshll.u32 %v11501, 16
  %v11797 = vrot.slane %v11795, 5
  %v11798 = vsel %vm1475, %v11793, %v11797
  %v11799 = vshrl.u32 %v11501, 16
  %v11801 = vrot.slane %v11799, 4
  %v11802 = vor.u32 %v11801, %v11797
  %v11803 = vrot.slane %v11802, 4
  %v11805 = vshll.u32 %v11502, 16
  %v11807 = vrot.slane %v11805, 5
  %v11808 = vsel %vm1475, %v11803, %v11807
  %v11810 = vshrl.u32 %v11503, 16
  %v11812 = vrot.slane %v11810, 4
  %v11813 = vshll.u32 %v11503, 16
  %v11815 = vrot.slane %v11813, 5
  %v11816 = vor.u32 %v11812, %v11815
  %v11817 = vrot.slane %v11816, 4
  %v11819 = vshll.u32 %v11504, 16
  %v11821 = vrot.slane %v11819, 5
  %v11822 = vsel %vm1475, %v11817, %v11821
  %v11823 = vshrl.u32 %v11504, 16
  %v11825 = vrot.slane %v11823, 4
  %v11826 = vor.u32 %v11825, %v11821
  %v11827 = vrot.slane %v11826, 4
  %v11829 = vshll.u32 %v11505, 16
  %v11831 = vrot.slane %v11829, 5
  %v11832 = vsel %vm1475, %v11827, %v11831
  %v11834 = vshrl.u32 %v11506, 16
  %v11836 = vrot.slane %v11834, 4
  %v11837 = vshll.u32 %v11506, 16
  %v11839 = vrot.slane %v11837, 5
  %v11840 = vor.u32 %v11836, %v11839
  %v11841 = vrot.slane %v11840, 4
  %v11843 = vshll.u32 %v11507, 16
  %v11845 = vrot.slane %v11843, 5
  %v11846 = vsel %vm1475, %v11841, %v11845
  %v11847 = vshrl.u32 %v11507, 16
  %v11849 = vrot.slane %v11847, 4
  %v11850 = vor.u32 %v11849, %v11845
  %v11851 = vrot.slane %v11850, 4
  %v11853 = vshll.u32 %v11508, 16
  %v11855 = vrot.slane %v11853, 5
  %v11856 = vsel %vm1475, %v11851, %v11855
  %v11858 = vshrl.u32 %v11509, 16
  %v11860 = vrot.slane %v11858, 4
  %v11861 = vshll.u32 %v11509, 16
  %v11863 = vrot.slane %v11861, 5
  %v11864 = vor.u32 %v11860, %v11863
  %v11865 = vrot.slane %v11864, 4
  %v11867 = vshll.u32 %v11510, 16
  %v11869 = vrot.slane %v11867, 5
  %v11870 = vsel %vm1475, %v11865, %v11869
  %v11871 = vshrl.u32 %v11510, 16
  %v11873 = vrot.slane %v11871, 4
  %v11874 = vor.u32 %v11873, %v11869
  %v11875 = vrot.slane %v11874, 4
  %v11877 = vshll.u32 %v11511, 16
  %v11879 = vrot.slane %v11877, 5
  %v11880 = vsel %vm1475, %v11875, %v11879
  %v11882 = vshrl.u32 %v11512, 16
  %v11884 = vrot.slane %v11882, 4
  %v11885 = vshll.u32 %v11512, 16
  %v11887 = vrot.slane %v11885, 5
  %v11888 = vor.u32 %v11884, %v11887
  %v11889 = vrot.slane %v11888, 4
  %v11891 = vshll.u32 %v11513, 16
  %v11893 = vrot.slane %v11891, 5
  %v11894 = vsel %vm1475, %v11889, %v11893
  %v11895 = vshrl.u32 %v11513, 16
  %v11897 = vrot.slane %v11895, 4
  %v11898 = vor.u32 %v11897, %v11893
  %v11899 = vrot.slane %v11898, 4
  %v11901 = vshll.u32 %v11514, 16
  %v11903 = vrot.slane %v11901, 5
  %v11904 = vsel %vm1475, %v11899, %v11903
  %v11906 = vshrl.u32 %v11515, 16
  %v11908 = vrot.slane %v11906, 4
  %v11909 = vshll.u32 %v11515, 16
  %v11911 = vrot.slane %v11909, 5
  %v11912 = vor.u32 %v11908, %v11911
  %v11913 = vrot.slane %v11912, 4
  %v11915 = vshll.u32 %v11516, 16
  %v11917 = vrot.slane %v11915, 5
  %v11918 = vsel %vm1475, %v11913, %v11917
  %v11919 = vshrl.u32 %v11516, 16
  %v11921 = vrot.slane %v11919, 4
  %v11922 = vor.u32 %v11921, %v11917
  %v11923 = vrot.slane %v11922, 4
  %v11925 = vshll.u32 %v11517, 16
  %v11927 = vrot.slane %v11925, 5
  %v11928 = vsel %vm1475, %v11923, %v11927
  %v11930 = vshrl.u32 %v11518, 16
  %v11932 = vrot.slane %v11930, 4
  %v11933 = vshll.u32 %v11518, 16
  %v11935 = vrot.slane %v11933, 5
  %v11936 = vor.u32 %v11932, %v11935
  %v11937 = vrot.slane %v11936, 4
  %v11939 = vshll.u32 %v11519, 16
  %v11941 = vrot.slane %v11939, 5
  %v11942 = vsel %vm1475, %v11937, %v11941
  %v11943 = vshrl.u32 %v11519, 16
  %v11945 = vrot.slane %v11943, 4
  %v11946 = vor.u32 %v11945, %v11941
  %v11947 = vrot.slane %v11946, 4
  %v11949 = vshll.u32 %v11520, 16
  %v11951 = vrot.slane %v11949, 5
  %v11952 = vsel %vm1475, %v11947, %v11951
  %v11954 = vshrl.u32 %v11521, 16
  %v11956 = vrot.slane %v11954, 4
  %v11957 = vshll.u32 %v11521, 16
  %v11959 = vrot.slane %v11957, 5
  %v11960 = vor.u32 %v11956, %v11959
  %v11961 = vrot.slane %v11960, 4
  %v11963 = vshll.u32 %v11522, 16
  %v11965 = vrot.slane %v11963, 5
  %v11966 = vsel %vm1475, %v11961, %v11965
  %v11967 = vshrl.u32 %v11522, 16
  %v11969 = vrot.slane %v11967, 4
  %v11970 = vor.u32 %v11969, %v11965
  %v11971 = vrot.slane %v11970, 4
  %v11973 = vshll.u32 %v11523, 16
  %v11975 = vrot.slane %v11973, 5
  %v11976 = vsel %vm1475, %v11971, %v11975
  %v11978 = vshrl.u32 %v11524, 16
  %v11980 = vrot.slane %v11978, 4
  %v11981 = vshll.u32 %v11524, 16
  %v11983 = vrot.slane %v11981, 5
  %v11984 = vor.u32 %v11980, %v11983
  %v11985 = vrot.slane %v11984, 4
  %v11987 = vshll.u32 %v11525, 16
  %v11989 = vrot.slane %v11987, 5
  %v11990 = vsel %vm1475, %v11985, %v11989
  %v11991 = vshrl.u32 %v11525, 16
  %v11993 = vrot.slane %v11991, 4
  %v11994 = vor.u32 %v11993, %v11989
  %v11995 = vrot.slane %v11994, 4
  %v11997 = vshll.u32 %v11526, 16
  %v11999 = vrot.slane %v11997, 5
  %v12000 = vsel %vm1475, %v11995, %v11999
  %v12002 = vshrl.u32 %v11527, 16
  %v12004 = vrot.slane %v12002, 4
  %v12005 = vshll.u32 %v11527, 16
  %v12007 = vrot.slane %v12005, 5
  %v12008 = vor.u32 %v12004, %v12007
  %v12009 = vrot.slane %v12008, 4
  %v12011 = vshll.u32 %v11528, 16
  %v12013 = vrot.slane %v12011, 5
  %v12014 = vsel %vm1475, %v12009, %v12013
  %v12015 = vshrl.u32 %v11528, 16
  %v12017 = vrot.slane %v12015, 4
  %v12018 = vor.u32 %v12017, %v12013
  %v12019 = vrot.slane %v12018, 4
  %v12021 = vshll.u32 %v11529, 16
  %v12023 = vrot.slane %v12021, 5
  %v12024 = vsel %vm1475, %v12019, %v12023
  %v12026 = vshrl.u32 %v11530, 16
  %v12028 = vrot.slane %v12026, 4
  %v12029 = vshll.u32 %v11530, 16
  %v12031 = vrot.slane %v12029, 5
  %v12032 = vor.u32 %v12028, %v12031
  %v12033 = vrot.slane %v12032, 4
  %v12035 = vshll.u32 %v11531, 16
  %v12037 = vrot.slane %v12035, 5
  %v12038 = vsel %vm1475, %v12033, %v12037
  %v12039 = vshrl.u32 %v11531, 16
  %v12041 = vrot.slane %v12039, 4
  %v12042 = vor.u32 %v12041, %v12037
  %v12043 = vrot.slane %v12042, 4
  %v12045 = vshll.u32 %v11532, 16
  %v12047 = vrot.slane %v12045, 5
  %v12048 = vsel %vm1475, %v12043, %v12047
  %v12050 = vshrl.u32 %v11533, 16
  %v12052 = vrot.slane %v12050, 4
  %v12053 = vshll.u32 %v11533, 16
  %v12055 = vrot.slane %v12053, 5
  %v12056 = vor.u32 %v12052, %v12055
  %v12057 = vrot.slane %v12056, 4
  %v12059 = vshll.u32 %v11534, 16
  %v12061 = vrot.slane %v12059, 5
  %v12062 = vsel %vm1475, %v12057, %v12061
  %v12063 = vshrl.u32 %v11534, 16
  %v12065 = vrot.slane %v12063, 4
  %v12066 = vor.u32 %v12065, %v12061
  %v12067 = vrot.slane %v12066, 4
  %v12069 = vshll.u32 %v11535, 16
  %v12071 = vrot.slane %v12069, 5
  %v12072 = vsel %vm1475, %v12067, %v12071
  %v12074 = vshrl.u32 %v11536, 16
  %v12076 = vrot.slane %v12074, 4
  %v12077 = vshll.u32 %v11536, 16
  %v12079 = vrot.slane %v12077, 5
  %v12080 = vor.u32 %v12076, %v12079
  %v12081 = vrot.slane %v12080, 4
  %v12083 = vshll.u32 %v11537, 16
  %v12085 = vrot.slane %v12083, 5
  %v12086 = vsel %vm1475, %v12081, %v12085
  %v12087 = vshrl.u32 %v11537, 16
  %v12089 = vrot.slane %v12087, 4
  %v12090 = vor.u32 %v12089, %v12085
  %v12091 = vrot.slane %v12090, 4
  %v12093 = vshll.u32 %v11538, 16
  %v12095 = vrot.slane %v12093, 5
  %v12096 = vsel %vm1475, %v12091, %v12095
  %v12098 = vshrl.u32 %v11539, 16
  %v12100 = vrot.slane %v12098, 4
  %v12101 = vshll.u32 %v11539, 16
  %v12103 = vrot.slane %v12101, 5
  %v12104 = vor.u32 %v12100, %v12103
  %v12105 = vrot.slane %v12104, 4
  %v12107 = vshll.u32 %v11540, 16
  %v12109 = vrot.slane %v12107, 5
  %v12110 = vsel %vm1475, %v12105, %v12109
  %v12111 = vshrl.u32 %v11540, 16
  %v12113 = vrot.slane %v12111, 4
  %v12114 = vor.u32 %v12113, %v12109
  %v12115 = vrot.slane %v12114, 4
  %v12117 = vshll.u32 %v11541, 16
  %v12119 = vrot.slane %v12117, 5
  %v12120 = vsel %vm1475, %v12115, %v12119
  %v12122 = vshrl.u32 %v11542, 16
  %v12124 = vrot.slane %v12122, 4
  %v12125 = vshll.u32 %v11542, 16
  %v12127 = vrot.slane %v12125, 5
  %v12128 = vor.u32 %v12124, %v12127
  %v12129 = vrot.slane %v12128, 4
  %v12131 = vshll.u32 %v11543, 16
  %v12133 = vrot.slane %v12131, 5
  %v12134 = vsel %vm1475, %v12129, %v12133
  %v12135 = vshrl.u32 %v11543, 16
  %v12137 = vrot.slane %v12135, 4
  %v12138 = vor.u32 %v12137, %v12133
  %v12139 = vrot.slane %v12138, 4
  %v12141 = vshll.u32 %v11544, 16
  %v12143 = vrot.slane %v12141, 5
  %v12144 = vsel %vm1475, %v12139, %v12143
  %v12146 = vshrl.u32 %v11545, 16
  %v12148 = vrot.slane %v12146, 4
  %v12149 = vshll.u32 %v11545, 16
  %v12151 = vrot.slane %v12149, 5
  %v12152 = vor.u32 %v12148, %v12151
  %v12153 = vrot.slane %v12152, 4
  %v12155 = vshll.u32 %v11546, 16
  %v12157 = vrot.slane %v12155, 5
  %v12158 = vsel %vm1475, %v12153, %v12157
  %v12159 = vshrl.u32 %v11546, 16
  %v12161 = vrot.slane %v12159, 4
  %v12162 = vor.u32 %v12161, %v12157
  %v12163 = vrot.slane %v12162, 4
  %v12165 = vshll.u32 %v11547, 16
  %v12167 = vrot.slane %v12165, 5
  %v12168 = vsel %vm1475, %v12163, %v12167
  %v12170 = vshrl.u32 %v11548, 16
  %v12172 = vrot.slane %v12170, 4
  %v12173 = vshll.u32 %v11548, 16
  %v12175 = vrot.slane %v12173, 5
  %v12176 = vor.u32 %v12172, %v12175
  %v12177 = vrot.slane %v12176, 4
  %v12179 = vshll.u32 %v11549, 16
  %v12181 = vrot.slane %v12179, 5
  %v12182 = vsel %vm1475, %v12177, %v12181
  %v12183 = vshrl.u32 %v11549, 16
  %v12185 = vrot.slane %v12183, 4
  %v12186 = vor.u32 %v12185, %v12181
  %v12187 = vrot.slane %v12186, 4
  %v12189 = vshll.u32 %v11550, 16
  %v12191 = vrot.slane %v12189, 5
  %v12192 = vsel %vm1475, %v12187, %v12191
  %v12194 = vshrl.u32 %v11551, 16
  %v12196 = vrot.slane %v12194, 4
  %v12197 = vshll.u32 %v11551, 16
  %v12199 = vrot.slane %v12197, 5
  %v12200 = vor.u32 %v12196, %v12199
  %v12201 = vrot.slane %v12200, 4
  %v12203 = vshll.u32 %v11552, 16
  %v12205 = vrot.slane %v12203, 5
  %v12206 = vsel %vm1475, %v12201, %v12205
  %v12207 = vshrl.u32 %v11552, 16
  %v12209 = vrot.slane %v12207, 4
  %v12210 = vor.u32 %v12209, %v12205
  %v12211 = vrot.slane %v12210, 4
  %v12213 = vshll.u32 %v11553, 16
  %v12215 = vrot.slane %v12213, 5
  %v12216 = vsel %vm1475, %v12211, %v12215
  %v12218 = vshrl.u32 %v11554, 16
  %v12220 = vrot.slane %v12218, 4
  %v12221 = vshll.u32 %v11554, 16
  %v12223 = vrot.slane %v12221, 5
  %v12224 = vor.u32 %v12220, %v12223
  %v12225 = vrot.slane %v12224, 4
  %v12227 = vshll.u32 %v11555, 16
  %v12229 = vrot.slane %v12227, 5
  %v12230 = vsel %vm1475, %v12225, %v12229
  %v12231 = vshrl.u32 %v11555, 16
  %v12233 = vrot.slane %v12231, 4
  %v12234 = vor.u32 %v12233, %v12229
  %v12235 = vrot.slane %v12234, 4
  %v12237 = vshll.u32 %v11556, 16
  %v12239 = vrot.slane %v12237, 5
  %v12240 = vsel %vm1475, %v12235, %v12239
  %v12242 = vshrl.u32 %v11557, 16
  %v12244 = vrot.slane %v12242, 4
  %v12245 = vshll.u32 %v11557, 16
  %v12247 = vrot.slane %v12245, 5
  %v12248 = vor.u32 %v12244, %v12247
  %v12249 = vrot.slane %v12248, 4
  %v12251 = vshll.u32 %v11558, 16
  %v12253 = vrot.slane %v12251, 5
  %v12254 = vsel %vm1475, %v12249, %v12253
  %v12255 = vshrl.u32 %v11558, 16
  %v12257 = vrot.slane %v12255, 4
  %v12258 = vor.u32 %v12257, %v12253
  %v12259 = vrot.slane %v12258, 4
  %v12261 = vshll.u32 %v11559, 16
  %v12263 = vrot.slane %v12261, 5
  %v12264 = vsel %vm1475, %v12259, %v12263
  %v12266 = vshrl.u32 %v11560, 16
  %v12268 = vrot.slane %v12266, 4
  %v12269 = vshll.u32 %v11560, 16
  %v12271 = vrot.slane %v12269, 5
  %v12272 = vor.u32 %v12268, %v12271
  %v12273 = vrot.slane %v12272, 4
  %v12275 = vshll.u32 %v11561, 16
  %v12277 = vrot.slane %v12275, 5
  %v12278 = vsel %vm1475, %v12273, %v12277
  %v12279 = vshrl.u32 %v11561, 16
  %v12281 = vrot.slane %v12279, 4
  %v12282 = vor.u32 %v12281, %v12277
  %v12283 = vrot.slane %v12282, 4
  %v12285 = vshll.u32 %v11562, 16
  %v12287 = vrot.slane %v12285, 5
  %v12288 = vsel %vm1475, %v12283, %v12287
  %v12290 = vshrl.u32 %v11563, 16
  %v12292 = vrot.slane %v12290, 4
  %v12293 = vshll.u32 %v11563, 16
  %v12295 = vrot.slane %v12293, 5
  %v12296 = vor.u32 %v12292, %v12295
  %v12297 = vrot.slane %v12296, 4
  %v12299 = vshll.u32 %v11564, 16
  %v12301 = vrot.slane %v12299, 5
  %v12302 = vsel %vm1475, %v12297, %v12301
  %v12303 = vshrl.u32 %v11564, 16
  %v12305 = vrot.slane %v12303, 4
  %v12306 = vor.u32 %v12305, %v12301
  %v12307 = vrot.slane %v12306, 4
  %v12309 = vshll.u32 %v11565, 16
  %v12311 = vrot.slane %v12309, 5
  %v12312 = vsel %vm1475, %v12307, %v12311
  %v12314 = vshrl.u32 %v11566, 16
  %v12316 = vrot.slane %v12314, 4
  %v12317 = vshll.u32 %v11566, 16
  %v12319 = vrot.slane %v12317, 5
  %v12320 = vor.u32 %v12316, %v12319
  %v12321 = vrot.slane %v12320, 4
  %v12323 = vshll.u32 %v11567, 16
  %v12325 = vrot.slane %v12323, 5
  %v12326 = vsel %vm1475, %v12321, %v12325
  %v12327 = vshrl.u32 %v11567, 16
  %v12329 = vrot.slane %v12327, 4
  %v12330 = vor.u32 %v12329, %v12325
  %v12331 = vrot.slane %v12330, 4
  %v12333 = vshll.u32 %v11568, 16
  %v12335 = vrot.slane %v12333, 5
  %v12336 = vsel %vm1475, %v12331, %v12335
  %v12337 = vld [vmem:[%s1149] sm:$0xe]
  %v12338 = vld [vmem:[%s1149 + $0xc] sm:$0xe]
  %v12339 = vld [vmem:[%s1149 + $0x18] sm:$0xe]
  %v12340 = vld [vmem:[%s1149 + $0x24] sm:$0xe]
  %v12341 = vld [vmem:[%s1149 + $0x30] sm:$0xe]
  %v12342 = vld [vmem:[%s1149 + $0x3c] sm:$0xe]
  %v12343 = vld [vmem:[%s1149 + $0x48] sm:$0xe]
  %v12344 = vld [vmem:[%s1149 + $0x54] sm:$0xe]
  %v12345 = vld [vmem:[%s1149 + $0x60] sm:$0xe]
  %v12346 = vld [vmem:[%s1149 + $0x6c] sm:$0xe]
  %v12347 = vld [vmem:[%s1149 + $0x78] sm:$0xe]
  %v12348 = vld [vmem:[%s1149 + $0x84] sm:$0xe]
  %v12349 = vld [vmem:[%s1149 + $0x90] sm:$0xe]
  %v12350 = vld [vmem:[%s1149 + $0x9c] sm:$0xe]
  %v12351 = vld [vmem:[%s1149 + $0xa8] sm:$0xe]
  %v12352 = vld [vmem:[%s1149 + $0xb4] sm:$0xe]
  %v12353 = vld [vmem:[%s1149 + $0xd8] sm:$0xe]
  %v12354 = vld [vmem:[%s1149 + $0xe4] sm:$0xe]
  %v12355 = vld [vmem:[%s1149 + $0xf0] sm:$0xe]
  %v12356 = vld [vmem:[%s1149 + $0xfc] sm:$0xe]
  %v12357 = vld [vmem:[%s1149 + $0x108] sm:$0xe]
  %v12358 = vld [vmem:[%s1149 + $0x114] sm:$0xe]
  %v12359 = vld [vmem:[%s1149 + $0x120] sm:$0xe]
  %v12360 = vld [vmem:[%s1149 + $0x12c] sm:$0xe]
  %v12361 = vld [vmem:[%s1149 + $0x138] sm:$0xe]
  %v12362 = vld [vmem:[%s1149 + $0x144] sm:$0xe]
  %v12363 = vld [vmem:[%s1149 + $0x150] sm:$0xe]
  %v12364 = vld [vmem:[%s1149 + $0x15c] sm:$0xe]
  %v12365 = vld [vmem:[%s1149 + $0x168] sm:$0xe]
  %v12366 = vld [vmem:[%s1149 + $0x174] sm:$0xe]
  %v12367 = vld [vmem:[%s1149 + $0x180] sm:$0xe]
  %v12368 = vld [vmem:[%s1149 + $0x18c] sm:$0xe]
  %v12465 = vrot.slane %v12337, 5
  %v12466 = vrot.slane %v12465, 4
  %v12467 = vrot.slane %v11474, 5
  %v12468 = vsel %vm5465, %v12466, %v12467
  %v12469 = vrot.slane %v12467, 4
  %v12470 = vrot.slane %v11475, 5
  %v12471 = vsel %vm5465, %v12469, %v12470
  %v12472 = vrot.slane %v12338, 5
  %v12473 = vrot.slane %v12472, 4
  %v12474 = vrot.slane %v11477, 5
  %v12475 = vsel %vm5465, %v12473, %v12474
  %v12476 = vrot.slane %v12474, 4
  %v12477 = vrot.slane %v11478, 5
  %v12478 = vsel %vm5465, %v12476, %v12477
  %v12479 = vrot.slane %v12339, 5
  %v12480 = vrot.slane %v12479, 4
  %v12481 = vrot.slane %v11480, 5
  %v12482 = vsel %vm5465, %v12480, %v12481
  %v12483 = vrot.slane %v12481, 4
  %v12484 = vrot.slane %v11481, 5
  %v12485 = vsel %vm5465, %v12483, %v12484
  %v12486 = vrot.slane %v12340, 5
  %v12487 = vrot.slane %v12486, 4
  %v12488 = vrot.slane %v11483, 5
  %v12489 = vsel %vm5465, %v12487, %v12488
  %v12490 = vrot.slane %v12488, 4
  %v12491 = vrot.slane %v11484, 5
  %v12492 = vsel %vm5465, %v12490, %v12491
  %v12493 = vrot.slane %v12341, 5
  %v12494 = vrot.slane %v12493, 4
  %v12495 = vrot.slane %v11486, 5
  %v12496 = vsel %vm5465, %v12494, %v12495
  %v12497 = vrot.slane %v12495, 4
  %v12498 = vrot.slane %v11487, 5
  %v12499 = vsel %vm5465, %v12497, %v12498
  %v12500 = vrot.slane %v12342, 5
  %v12501 = vrot.slane %v12500, 4
  %v12502 = vrot.slane %v11489, 5
  %v12503 = vsel %vm5465, %v12501, %v12502
  %v12504 = vrot.slane %v12502, 4
  %v12505 = vrot.slane %v11490, 5
  %v12506 = vsel %vm5465, %v12504, %v12505
  %v12507 = vrot.slane %v12343, 5
  %v12508 = vrot.slane %v12507, 4
  %v12509 = vrot.slane %v11492, 5
  %v12510 = vsel %vm5465, %v12508, %v12509
  %v12511 = vrot.slane %v12509, 4
  %v12512 = vrot.slane %v11493, 5
  %v12513 = vsel %vm5465, %v12511, %v12512
  %v12514 = vrot.slane %v12344, 5
  %v12515 = vrot.slane %v12514, 4
  %v12516 = vrot.slane %v11495, 5
  %v12517 = vsel %vm5465, %v12515, %v12516
  %v12518 = vrot.slane %v12516, 4
  %v12519 = vrot.slane %v11496, 5
  %v12520 = vsel %vm5465, %v12518, %v12519
  %v12521 = vrot.slane %v12345, 5
  %v12522 = vrot.slane %v12521, 4
  %v12523 = vrot.slane %v11498, 5
  %v12524 = vsel %vm5465, %v12522, %v12523
  %v12525 = vrot.slane %v12523, 4
  %v12526 = vrot.slane %v11499, 5
  %v12527 = vsel %vm5465, %v12525, %v12526
  %v12528 = vrot.slane %v12346, 5
  %v12529 = vrot.slane %v12528, 4
  %v12530 = vrot.slane %v11501, 5
  %v12531 = vsel %vm5465, %v12529, %v12530
  %v12532 = vrot.slane %v12530, 4
  %v12533 = vrot.slane %v11502, 5
  %v12534 = vsel %vm5465, %v12532, %v12533
  %v12535 = vrot.slane %v12347, 5
  %v12536 = vrot.slane %v12535, 4
  %v12537 = vrot.slane %v11504, 5
  %v12538 = vsel %vm5465, %v12536, %v12537
  %v12539 = vrot.slane %v12537, 4
  %v12540 = vrot.slane %v11505, 5
  %v12541 = vsel %vm5465, %v12539, %v12540
  %v12542 = vrot.slane %v12348, 5
  %v12543 = vrot.slane %v12542, 4
  %v12544 = vrot.slane %v11507, 5
  %v12545 = vsel %vm5465, %v12543, %v12544
  %v12546 = vrot.slane %v12544, 4
  %v12547 = vrot.slane %v11508, 5
  %v12548 = vsel %vm5465, %v12546, %v12547
  %v12549 = vrot.slane %v12349, 5
  %v12550 = vrot.slane %v12549, 4
  %v12551 = vrot.slane %v11510, 5
  %v12552 = vsel %vm5465, %v12550, %v12551
  %v12553 = vrot.slane %v12551, 4
  %v12554 = vrot.slane %v11511, 5
  %v12555 = vsel %vm5465, %v12553, %v12554
  %v12556 = vrot.slane %v12350, 5
  %v12557 = vrot.slane %v12556, 4
  %v12558 = vrot.slane %v11513, 5
  %v12559 = vsel %vm5465, %v12557, %v12558
  %v12560 = vrot.slane %v12558, 4
  %v12561 = vrot.slane %v11514, 5
  %v12562 = vsel %vm5465, %v12560, %v12561
  %v12563 = vrot.slane %v12351, 5
  %v12564 = vrot.slane %v12563, 4
  %v12565 = vrot.slane %v11516, 5
  %v12566 = vsel %vm5465, %v12564, %v12565
  %v12567 = vrot.slane %v12565, 4
  %v12568 = vrot.slane %v11517, 5
  %v12569 = vsel %vm5465, %v12567, %v12568
  %v12570 = vrot.slane %v12352, 5
  %v12571 = vrot.slane %v12570, 4
  %v12572 = vrot.slane %v11519, 5
  %v12573 = vsel %vm5465, %v12571, %v12572
  %v12574 = vrot.slane %v12572, 4
  %v12575 = vrot.slane %v11520, 5
  %v12576 = vsel %vm5465, %v12574, %v12575
  %v12577 = vrot.slane %v12353, 5
  %v12578 = vrot.slane %v12577, 4
  %v12579 = vrot.slane %v11522, 5
  %v12580 = vsel %vm5465, %v12578, %v12579
  %v12581 = vrot.slane %v12579, 4
  %v12582 = vrot.slane %v11523, 5
  %v12583 = vsel %vm5465, %v12581, %v12582
  %v12584 = vrot.slane %v12354, 5
  %v12585 = vrot.slane %v12584, 4
  %v12586 = vrot.slane %v11525, 5
  %v12587 = vsel %vm5465, %v12585, %v12586
  %v12588 = vrot.slane %v12586, 4
  %v12589 = vrot.slane %v11526, 5
  %v12590 = vsel %vm5465, %v12588, %v12589
  %v12591 = vrot.slane %v12355, 5
  %v12592 = vrot.slane %v12591, 4
  %v12593 = vrot.slane %v11528, 5
  %v12594 = vsel %vm5465, %v12592, %v12593
  %v12595 = vrot.slane %v12593, 4
  %v12596 = vrot.slane %v11529, 5
  %v12597 = vsel %vm5465, %v12595, %v12596
  %v12598 = vrot.slane %v12356, 5
  %v12599 = vrot.slane %v12598, 4
  %v12600 = vrot.slane %v11531, 5
  %v12601 = vsel %vm5465, %v12599, %v12600
  %v12602 = vrot.slane %v12600, 4
  %v12603 = vrot.slane %v11532, 5
  %v12604 = vsel %vm5465, %v12602, %v12603
  %v12605 = vrot.slane %v12357, 5
  %v12606 = vrot.slane %v12605, 4
  %v12607 = vrot.slane %v11534, 5
  %v12608 = vsel %vm5465, %v12606, %v12607
  %v12609 = vrot.slane %v12607, 4
  %v12610 = vrot.slane %v11535, 5
  %v12611 = vsel %vm5465, %v12609, %v12610
  %v12612 = vrot.slane %v12358, 5
  %v12613 = vrot.slane %v12612, 4
  %v12614 = vrot.slane %v11537, 5
  %v12615 = vsel %vm5465, %v12613, %v12614
  %v12616 = vrot.slane %v12614, 4
  %v12617 = vrot.slane %v11538, 5
  %v12618 = vsel %vm5465, %v12616, %v12617
  %v12619 = vrot.slane %v12359, 5
  %v12620 = vrot.slane %v12619, 4
  %v12621 = vrot.slane %v11540, 5
  %v12622 = vsel %vm5465, %v12620, %v12621
  %v12623 = vrot.slane %v12621, 4
  %v12624 = vrot.slane %v11541, 5
  %v12625 = vsel %vm5465, %v12623, %v12624
  %v12626 = vrot.slane %v12360, 5
  %v12627 = vrot.slane %v12626, 4
  %v12628 = vrot.slane %v11543, 5
  %v12629 = vsel %vm5465, %v12627, %v12628
  %v12630 = vrot.slane %v12628, 4
  %v12631 = vrot.slane %v11544, 5
  %v12632 = vsel %vm5465, %v12630, %v12631
  %v12633 = vrot.slane %v12361, 5
  %v12634 = vrot.slane %v12633, 4
  %v12635 = vrot.slane %v11546, 5
  %v12636 = vsel %vm5465, %v12634, %v12635
  %v12637 = vrot.slane %v12635, 4
  %v12638 = vrot.slane %v11547, 5
  %v12639 = vsel %vm5465, %v12637, %v12638
  %v12640 = vrot.slane %v12362, 5
  %v12641 = vrot.slane %v12640, 4
  %v12642 = vrot.slane %v11549, 5
  %v12643 = vsel %vm5465, %v12641, %v12642
  %v12644 = vrot.slane %v12642, 4
  %v12645 = vrot.slane %v11550, 5
  %v12646 = vsel %vm5465, %v12644, %v12645
  %v12647 = vrot.slane %v12363, 5
  %v12648 = vrot.slane %v12647, 4
  %v12649 = vrot.slane %v11552, 5
  %v12650 = vsel %vm5465, %v12648, %v12649
  %v12651 = vrot.slane %v12649, 4
  %v12652 = vrot.slane %v11553, 5
  %v12653 = vsel %vm5465, %v12651, %v12652
  %v12654 = vrot.slane %v12364, 5
  %v12655 = vrot.slane %v12654, 4
  %v12656 = vrot.slane %v11555, 5
  %v12657 = vsel %vm5465, %v12655, %v12656
  %v12658 = vrot.slane %v12656, 4
  %v12659 = vrot.slane %v11556, 5
  %v12660 = vsel %vm5465, %v12658, %v12659
  %v12661 = vrot.slane %v12365, 5
  %v12662 = vrot.slane %v12661, 4
  %v12663 = vrot.slane %v11558, 5
  %v12664 = vsel %vm5465, %v12662, %v12663
  %v12665 = vrot.slane %v12663, 4
  %v12666 = vrot.slane %v11559, 5
  %v12667 = vsel %vm5465, %v12665, %v12666
  %v12668 = vrot.slane %v12366, 5
  %v12669 = vrot.slane %v12668, 4
  %v12670 = vrot.slane %v11561, 5
  %v12671 = vsel %vm5465, %v12669, %v12670
  %v12672 = vrot.slane %v12670, 4
  %v12673 = vrot.slane %v11562, 5
  %v12674 = vsel %vm5465, %v12672, %v12673
  %v12675 = vrot.slane %v12367, 5
  %v12676 = vrot.slane %v12675, 4
  %v12677 = vrot.slane %v11564, 5
  %v12678 = vsel %vm5465, %v12676, %v12677
  %v12679 = vrot.slane %v12677, 4
  %v12680 = vrot.slane %v11565, 5
  %v12681 = vsel %vm5465, %v12679, %v12680
  %v12682 = vrot.slane %v12368, 5
  %v12683 = vrot.slane %v12682, 4
  %v12684 = vrot.slane %v11567, 5
  %v12685 = vsel %vm5465, %v12683, %v12684
  %v12686 = vrot.slane %v12684, 4
  %v12687 = vrot.slane %v11568, 5
  %v12688 = vsel %vm5465, %v12686, %v12687
  %v12689 = vld [vmem:[%s9253] sm:$0xf]
  %v12690 = vld [vmem:[%s9253 + $0x4] sm:$0xf]
  %v12691 = vld [vmem:[%s9253 + $0x8] sm:$0x1]
  %v12692 = vld [vmem:[%s9253 + $0xc] sm:$0xf]
  %v12693 = vld [vmem:[%s9253 + $0x10] sm:$0xf]
  %v12694 = vld [vmem:[%s9253 + $0x14] sm:$0x1]
  %v12695 = vld [vmem:[%s9253 + $0x18] sm:$0xf]
  %v12696 = vld [vmem:[%s9253 + $0x1c] sm:$0xf]
  %v12697 = vld [vmem:[%s9253 + $0x20] sm:$0x1]
  %v12698 = vld [vmem:[%s9253 + $0x24] sm:$0xf]
  %v12699 = vld [vmem:[%s9253 + $0x28] sm:$0xf]
  %v12700 = vld [vmem:[%s9253 + $0x2c] sm:$0x1]
  %v12701 = vld [vmem:[%s9253 + $0x30] sm:$0xf]
  %v12702 = vld [vmem:[%s9253 + $0x34] sm:$0xf]
  %v12703 = vld [vmem:[%s9253 + $0x38] sm:$0x1]
  %v12704 = vld [vmem:[%s9253 + $0x3c] sm:$0xf]
  %v12705 = vld [vmem:[%s9253 + $0x40] sm:$0xf]
  %v12706 = vld [vmem:[%s9253 + $0x44] sm:$0x1]
  %v12707 = vld [vmem:[%s9253 + $0x48] sm:$0xf]
  %v12708 = vld [vmem:[%s9253 + $0x4c] sm:$0xf]
  %v12709 = vld [vmem:[%s9253 + $0x50] sm:$0x1]
  %v12710 = vld [vmem:[%s9253 + $0x54] sm:$0xf]
  %v12711 = vld [vmem:[%s9253 + $0x58] sm:$0xf]
  %v12712 = vld [vmem:[%s9253 + $0x5c] sm:$0x1]
  %v12713 = vld [vmem:[%s9253 + $0x60] sm:$0xf]
  %v12714 = vld [vmem:[%s9253 + $0x64] sm:$0xf]
  %v12715 = vld [vmem:[%s9253 + $0x68] sm:$0x1]
  %v12716 = vld [vmem:[%s9253 + $0x6c] sm:$0xf]
  %v12717 = vld [vmem:[%s9253 + $0x70] sm:$0xf]
  %v12718 = vld [vmem:[%s9253 + $0x74] sm:$0x1]
  %v12719 = vld [vmem:[%s9253 + $0x78] sm:$0xf]
  %v12720 = vld [vmem:[%s9253 + $0x7c] sm:$0xf]
  %v12721 = vld [vmem:[%s9253 + $0x80] sm:$0x1]
  %v12722 = vld [vmem:[%s9253 + $0x84] sm:$0xf]
  %v12723 = vld [vmem:[%s9253 + $0x88] sm:$0xf]
  %v12724 = vld [vmem:[%s9253 + $0x8c] sm:$0x1]
  %v12725 = vld [vmem:[%s9253 + $0x90] sm:$0xf]
  %v12726 = vld [vmem:[%s9253 + $0x94] sm:$0xf]
  %v12727 = vld [vmem:[%s9253 + $0x98] sm:$0x1]
  %v12728 = vld [vmem:[%s9253 + $0x9c] sm:$0xf]
  %v12729 = vld [vmem:[%s9253 + $0xa0] sm:$0xf]
  %v12730 = vld [vmem:[%s9253 + $0xa4] sm:$0x1]
  %v12731 = vld [vmem:[%s9253 + $0xa8] sm:$0xf]
  %v12732 = vld [vmem:[%s9253 + $0xac] sm:$0xf]
  %v12733 = vld [vmem:[%s9253 + $0xb0] sm:$0x1]
  %v12734 = vld [vmem:[%s9253 + $0xb4] sm:$0xf]
  %v12735 = vld [vmem:[%s9253 + $0xb8] sm:$0xf]
  %v12736 = vld [vmem:[%s9253 + $0xbc] sm:$0x1]
  %v12737 = vld [vmem:[%s9253 + $0xd8] sm:$0xf]
  %v12738 = vld [vmem:[%s9253 + $0xdc] sm:$0xf]
  %v12739 = vld [vmem:[%s9253 + $0xe0] sm:$0x1]
  %v12740 = vld [vmem:[%s9253 + $0xe4] sm:$0xf]
  %v12741 = vld [vmem:[%s9253 + $0xe8] sm:$0xf]
  %v12742 = vld [vmem:[%s9253 + $0xec] sm:$0x1]
  %v12743 = vld [vmem:[%s9253 + $0xf0] sm:$0xf]
  %v12744 = vld [vmem:[%s9253 + $0xf4] sm:$0xf]
  %v12745 = vld [vmem:[%s9253 + $0xf8] sm:$0x1]
  %v12746 = vld [vmem:[%s9253 + $0xfc] sm:$0xf]
  %v12747 = vld [vmem:[%s9253 + $0x100] sm:$0xf]
  %v12748 = vld [vmem:[%s9253 + $0x104] sm:$0x1]
  %v12749 = vld [vmem:[%s9253 + $0x108] sm:$0xf]
  %v12750 = vld [vmem:[%s9253 + $0x10c] sm:$0xf]
  %v12751 = vld [vmem:[%s9253 + $0x110] sm:$0x1]
  %v12752 = vld [vmem:[%s9253 + $0x114] sm:$0xf]
  %v12753 = vld [vmem:[%s9253 + $0x118] sm:$0xf]
  %v12754 = vld [vmem:[%s9253 + $0x11c] sm:$0x1]
  %v12755 = vld [vmem:[%s9253 + $0x120] sm:$0xf]
  %v12756 = vld [vmem:[%s9253 + $0x124] sm:$0xf]
  %v12757 = vld [vmem:[%s9253 + $0x128] sm:$0x1]
  %v12758 = vld [vmem:[%s9253 + $0x12c] sm:$0xf]
  %v12759 = vld [vmem:[%s9253 + $0x130] sm:$0xf]
  %v12760 = vld [vmem:[%s9253 + $0x134] sm:$0x1]
  %v12761 = vld [vmem:[%s9253 + $0x138] sm:$0xf]
  %v12762 = vld [vmem:[%s9253 + $0x13c] sm:$0xf]
  %v12763 = vld [vmem:[%s9253 + $0x140] sm:$0x1]
  %v12764 = vld [vmem:[%s9253 + $0x144] sm:$0xf]
  %v12765 = vld [vmem:[%s9253 + $0x148] sm:$0xf]
  %v12766 = vld [vmem:[%s9253 + $0x14c] sm:$0x1]
  %v12767 = vld [vmem:[%s9253 + $0x150] sm:$0xf]
  %v12768 = vld [vmem:[%s9253 + $0x154] sm:$0xf]
  %v12769 = vld [vmem:[%s9253 + $0x158] sm:$0x1]
  %v12770 = vld [vmem:[%s9253 + $0x15c] sm:$0xf]
  %v12771 = vld [vmem:[%s9253 + $0x160] sm:$0xf]
  %v12772 = vld [vmem:[%s9253 + $0x164] sm:$0x1]
  %v12773 = vld [vmem:[%s9253 + $0x168] sm:$0xf]
  %v12774 = vld [vmem:[%s9253 + $0x16c] sm:$0xf]
  %v12775 = vld [vmem:[%s9253 + $0x170] sm:$0x1]
  %v12776 = vld [vmem:[%s9253 + $0x174] sm:$0xf]
  %v12777 = vld [vmem:[%s9253 + $0x178] sm:$0xf]
  %v12778 = vld [vmem:[%s9253 + $0x17c] sm:$0x1]
  %v12779 = vld [vmem:[%s9253 + $0x180] sm:$0xf]
  %v12780 = vld [vmem:[%s9253 + $0x184] sm:$0xf]
  %v12781 = vld [vmem:[%s9253 + $0x188] sm:$0x1]
  %v12782 = vld [vmem:[%s9253 + $0x18c] sm:$0xf]
  %v12783 = vld [vmem:[%s9253 + $0x190] sm:$0xf]
  %v12784 = vld [vmem:[%s9253 + $0x194] sm:$0x1]
  %v12786 = vshrl.u32 %v12689, 16
  %v12788 = vrot.slane %v12786, 4
  %v12789 = vshll.u32 %v12689, 16
  %v12791 = vrot.slane %v12789, 5
  %v12792 = vor.u32 %v12788, %v12791
  %v12793 = vrot.slane %v12792, 4
  %v12795 = vshll.u32 %v12690, 16
  %v12797 = vrot.slane %v12795, 5
  %v12798 = vsel %vm1475, %v12793, %v12797
  %v12799 = vshrl.u32 %v12690, 16
  %v12801 = vrot.slane %v12799, 4
  %v12802 = vor.u32 %v12801, %v12797
  %v12803 = vrot.slane %v12802, 4
  %v12805 = vshll.u32 %v12691, 16
  %v12807 = vrot.slane %v12805, 5
  %v12808 = vsel %vm1475, %v12803, %v12807
  %v12810 = vshrl.u32 %v12692, 16
  %v12812 = vrot.slane %v12810, 4
  %v12813 = vshll.u32 %v12692, 16
  %v12815 = vrot.slane %v12813, 5
  %v12816 = vor.u32 %v12812, %v12815
  %v12817 = vrot.slane %v12816, 4
  %v12819 = vshll.u32 %v12693, 16
  %v12821 = vrot.slane %v12819, 5
  %v12822 = vsel %vm1475, %v12817, %v12821
  %v12823 = vshrl.u32 %v12693, 16
  %v12825 = vrot.slane %v12823, 4
  %v12826 = vor.u32 %v12825, %v12821
  %v12827 = vrot.slane %v12826, 4
  %v12829 = vshll.u32 %v12694, 16
  %v12831 = vrot.slane %v12829, 5
  %v12832 = vsel %vm1475, %v12827, %v12831
  %v12834 = vshrl.u32 %v12695, 16
  %v12836 = vrot.slane %v12834, 4
  %v12837 = vshll.u32 %v12695, 16
  %v12839 = vrot.slane %v12837, 5
  %v12840 = vor.u32 %v12836, %v12839
  %v12841 = vrot.slane %v12840, 4
  %v12843 = vshll.u32 %v12696, 16
  %v12845 = vrot.slane %v12843, 5
  %v12846 = vsel %vm1475, %v12841, %v12845
  %v12847 = vshrl.u32 %v12696, 16
  %v12849 = vrot.slane %v12847, 4
  %v12850 = vor.u32 %v12849, %v12845
  %v12851 = vrot.slane %v12850, 4
  %v12853 = vshll.u32 %v12697, 16
  %v12855 = vrot.slane %v12853, 5
  %v12856 = vsel %vm1475, %v12851, %v12855
  %v12858 = vshrl.u32 %v12698, 16
  %v12860 = vrot.slane %v12858, 4
  %v12861 = vshll.u32 %v12698, 16
  %v12863 = vrot.slane %v12861, 5
  %v12864 = vor.u32 %v12860, %v12863
  %v12865 = vrot.slane %v12864, 4
  %v12867 = vshll.u32 %v12699, 16
  %v12869 = vrot.slane %v12867, 5
  %v12870 = vsel %vm1475, %v12865, %v12869
  %v12871 = vshrl.u32 %v12699, 16
  %v12873 = vrot.slane %v12871, 4
  %v12874 = vor.u32 %v12873, %v12869
  %v12875 = vrot.slane %v12874, 4
  %v12877 = vshll.u32 %v12700, 16
  %v12879 = vrot.slane %v12877, 5
  %v12880 = vsel %vm1475, %v12875, %v12879
  %v12882 = vshrl.u32 %v12701, 16
  %v12884 = vrot.slane %v12882, 4
  %v12885 = vshll.u32 %v12701, 16
  %v12887 = vrot.slane %v12885, 5
  %v12888 = vor.u32 %v12884, %v12887
  %v12889 = vrot.slane %v12888, 4
  %v12891 = vshll.u32 %v12702, 16
  %v12893 = vrot.slane %v12891, 5
  %v12894 = vsel %vm1475, %v12889, %v12893
  %v12895 = vshrl.u32 %v12702, 16
  %v12897 = vrot.slane %v12895, 4
  %v12898 = vor.u32 %v12897, %v12893
  %v12899 = vrot.slane %v12898, 4
  %v12901 = vshll.u32 %v12703, 16
  %v12903 = vrot.slane %v12901, 5
  %v12904 = vsel %vm1475, %v12899, %v12903
  %v12906 = vshrl.u32 %v12704, 16
  %v12908 = vrot.slane %v12906, 4
  %v12909 = vshll.u32 %v12704, 16
  %v12911 = vrot.slane %v12909, 5
  %v12912 = vor.u32 %v12908, %v12911
  %v12913 = vrot.slane %v12912, 4
  %v12915 = vshll.u32 %v12705, 16
  %v12917 = vrot.slane %v12915, 5
  %v12918 = vsel %vm1475, %v12913, %v12917
  %v12919 = vshrl.u32 %v12705, 16
  %v12921 = vrot.slane %v12919, 4
  %v12922 = vor.u32 %v12921, %v12917
  %v12923 = vrot.slane %v12922, 4
  %v12925 = vshll.u32 %v12706, 16
  %v12927 = vrot.slane %v12925, 5
  %v12928 = vsel %vm1475, %v12923, %v12927
  %v12930 = vshrl.u32 %v12707, 16
  %v12932 = vrot.slane %v12930, 4
  %v12933 = vshll.u32 %v12707, 16
  %v12935 = vrot.slane %v12933, 5
  %v12936 = vor.u32 %v12932, %v12935
  %v12937 = vrot.slane %v12936, 4
  %v12939 = vshll.u32 %v12708, 16
  %v12941 = vrot.slane %v12939, 5
  %v12942 = vsel %vm1475, %v12937, %v12941
  %v12943 = vshrl.u32 %v12708, 16
  %v12945 = vrot.slane %v12943, 4
  %v12946 = vor.u32 %v12945, %v12941
  %v12947 = vrot.slane %v12946, 4
  %v12949 = vshll.u32 %v12709, 16
  %v12951 = vrot.slane %v12949, 5
  %v12952 = vsel %vm1475, %v12947, %v12951
  %v12954 = vshrl.u32 %v12710, 16
  %v12956 = vrot.slane %v12954, 4
  %v12957 = vshll.u32 %v12710, 16
  %v12959 = vrot.slane %v12957, 5
  %v12960 = vor.u32 %v12956, %v12959
  %v12961 = vrot.slane %v12960, 4
  %v12963 = vshll.u32 %v12711, 16
  %v12965 = vrot.slane %v12963, 5
  %v12966 = vsel %vm1475, %v12961, %v12965
  %v12967 = vshrl.u32 %v12711, 16
  %v12969 = vrot.slane %v12967, 4
  %v12970 = vor.u32 %v12969, %v12965
  %v12971 = vrot.slane %v12970, 4
  %v12973 = vshll.u32 %v12712, 16
  %v12975 = vrot.slane %v12973, 5
  %v12976 = vsel %vm1475, %v12971, %v12975
  %v12978 = vshrl.u32 %v12713, 16
  %v12980 = vrot.slane %v12978, 4
  %v12981 = vshll.u32 %v12713, 16
  %v12983 = vrot.slane %v12981, 5
  %v12984 = vor.u32 %v12980, %v12983
  %v12985 = vrot.slane %v12984, 4
  %v12987 = vshll.u32 %v12714, 16
  %v12989 = vrot.slane %v12987, 5
  %v12990 = vsel %vm1475, %v12985, %v12989
  %v12991 = vshrl.u32 %v12714, 16
  %v12993 = vrot.slane %v12991, 4
  %v12994 = vor.u32 %v12993, %v12989
  %v12995 = vrot.slane %v12994, 4
  %v12997 = vshll.u32 %v12715, 16
  %v12999 = vrot.slane %v12997, 5
  %v13000 = vsel %vm1475, %v12995, %v12999
  %v13002 = vshrl.u32 %v12716, 16
  %v13004 = vrot.slane %v13002, 4
  %v13005 = vshll.u32 %v12716, 16
  %v13007 = vrot.slane %v13005, 5
  %v13008 = vor.u32 %v13004, %v13007
  %v13009 = vrot.slane %v13008, 4
  %v13011 = vshll.u32 %v12717, 16
  %v13013 = vrot.slane %v13011, 5
  %v13014 = vsel %vm1475, %v13009, %v13013
  %v13015 = vshrl.u32 %v12717, 16
  %v13017 = vrot.slane %v13015, 4
  %v13018 = vor.u32 %v13017, %v13013
  %v13019 = vrot.slane %v13018, 4
  %v13021 = vshll.u32 %v12718, 16
  %v13023 = vrot.slane %v13021, 5
  %v13024 = vsel %vm1475, %v13019, %v13023
  %v13026 = vshrl.u32 %v12719, 16
  %v13028 = vrot.slane %v13026, 4
  %v13029 = vshll.u32 %v12719, 16
  %v13031 = vrot.slane %v13029, 5
  %v13032 = vor.u32 %v13028, %v13031
  %v13033 = vrot.slane %v13032, 4
  %v13035 = vshll.u32 %v12720, 16
  %v13037 = vrot.slane %v13035, 5
  %v13038 = vsel %vm1475, %v13033, %v13037
  %v13039 = vshrl.u32 %v12720, 16
  %v13041 = vrot.slane %v13039, 4
  %v13042 = vor.u32 %v13041, %v13037
  %v13043 = vrot.slane %v13042, 4
  %v13045 = vshll.u32 %v12721, 16
  %v13047 = vrot.slane %v13045, 5
  %v13048 = vsel %vm1475, %v13043, %v13047
  %v13050 = vshrl.u32 %v12722, 16
  %v13052 = vrot.slane %v13050, 4
  %v13053 = vshll.u32 %v12722, 16
  %v13055 = vrot.slane %v13053, 5
  %v13056 = vor.u32 %v13052, %v13055
  %v13057 = vrot.slane %v13056, 4
  %v13059 = vshll.u32 %v12723, 16
  %v13061 = vrot.slane %v13059, 5
  %v13062 = vsel %vm1475, %v13057, %v13061
  %v13063 = vshrl.u32 %v12723, 16
  %v13065 = vrot.slane %v13063, 4
  %v13066 = vor.u32 %v13065, %v13061
  %v13067 = vrot.slane %v13066, 4
  %v13069 = vshll.u32 %v12724, 16
  %v13071 = vrot.slane %v13069, 5
  %v13072 = vsel %vm1475, %v13067, %v13071
  %v13074 = vshrl.u32 %v12725, 16
  %v13076 = vrot.slane %v13074, 4
  %v13077 = vshll.u32 %v12725, 16
  %v13079 = vrot.slane %v13077, 5
  %v13080 = vor.u32 %v13076, %v13079
  %v13081 = vrot.slane %v13080, 4
  %v13083 = vshll.u32 %v12726, 16
  %v13085 = vrot.slane %v13083, 5
  %v13086 = vsel %vm1475, %v13081, %v13085
  %v13087 = vshrl.u32 %v12726, 16
  %v13089 = vrot.slane %v13087, 4
  %v13090 = vor.u32 %v13089, %v13085
  %v13091 = vrot.slane %v13090, 4
  %v13093 = vshll.u32 %v12727, 16
  %v13095 = vrot.slane %v13093, 5
  %v13096 = vsel %vm1475, %v13091, %v13095
  %v13098 = vshrl.u32 %v12728, 16
  %v13100 = vrot.slane %v13098, 4
  %v13101 = vshll.u32 %v12728, 16
  %v13103 = vrot.slane %v13101, 5
  %v13104 = vor.u32 %v13100, %v13103
  %v13105 = vrot.slane %v13104, 4
  %v13107 = vshll.u32 %v12729, 16
  %v13109 = vrot.slane %v13107, 5
  %v13110 = vsel %vm1475, %v13105, %v13109
  %v13111 = vshrl.u32 %v12729, 16
  %v13113 = vrot.slane %v13111, 4
  %v13114 = vor.u32 %v13113, %v13109
  %v13115 = vrot.slane %v13114, 4
  %v13117 = vshll.u32 %v12730, 16
  %v13119 = vrot.slane %v13117, 5
  %v13120 = vsel %vm1475, %v13115, %v13119
  %v13122 = vshrl.u32 %v12731, 16
  %v13124 = vrot.slane %v13122, 4
  %v13125 = vshll.u32 %v12731, 16
  %v13127 = vrot.slane %v13125, 5
  %v13128 = vor.u32 %v13124, %v13127
  %v13129 = vrot.slane %v13128, 4
  %v13131 = vshll.u32 %v12732, 16
  %v13133 = vrot.slane %v13131, 5
  %v13134 = vsel %vm1475, %v13129, %v13133
  %v13135 = vshrl.u32 %v12732, 16
  %v13137 = vrot.slane %v13135, 4
  %v13138 = vor.u32 %v13137, %v13133
  %v13139 = vrot.slane %v13138, 4
  %v13141 = vshll.u32 %v12733, 16
  %v13143 = vrot.slane %v13141, 5
  %v13144 = vsel %vm1475, %v13139, %v13143
  %v13146 = vshrl.u32 %v12734, 16
  %v13148 = vrot.slane %v13146, 4
  %v13149 = vshll.u32 %v12734, 16
  %v13151 = vrot.slane %v13149, 5
  %v13152 = vor.u32 %v13148, %v13151
  %v13153 = vrot.slane %v13152, 4
  %v13155 = vshll.u32 %v12735, 16
  %v13157 = vrot.slane %v13155, 5
  %v13158 = vsel %vm1475, %v13153, %v13157
  %v13159 = vshrl.u32 %v12735, 16
  %v13161 = vrot.slane %v13159, 4
  %v13162 = vor.u32 %v13161, %v13157
  %v13163 = vrot.slane %v13162, 4
  %v13165 = vshll.u32 %v12736, 16
  %v13167 = vrot.slane %v13165, 5
  %v13168 = vsel %vm1475, %v13163, %v13167
  %v13170 = vshrl.u32 %v12737, 16
  %v13172 = vrot.slane %v13170, 4
  %v13173 = vshll.u32 %v12737, 16
  %v13175 = vrot.slane %v13173, 5
  %v13176 = vor.u32 %v13172, %v13175
  %v13177 = vrot.slane %v13176, 4
  %v13179 = vshll.u32 %v12738, 16
  %v13181 = vrot.slane %v13179, 5
  %v13182 = vsel %vm1475, %v13177, %v13181
  %v13183 = vshrl.u32 %v12738, 16
  %v13185 = vrot.slane %v13183, 4
  %v13186 = vor.u32 %v13185, %v13181
  %v13187 = vrot.slane %v13186, 4
  %v13189 = vshll.u32 %v12739, 16
  %v13191 = vrot.slane %v13189, 5
  %v13192 = vsel %vm1475, %v13187, %v13191
  %v13194 = vshrl.u32 %v12740, 16
  %v13196 = vrot.slane %v13194, 4
  %v13197 = vshll.u32 %v12740, 16
  %v13199 = vrot.slane %v13197, 5
  %v13200 = vor.u32 %v13196, %v13199
  %v13201 = vrot.slane %v13200, 4
  %v13203 = vshll.u32 %v12741, 16
  %v13205 = vrot.slane %v13203, 5
  %v13206 = vsel %vm1475, %v13201, %v13205
  %v13207 = vshrl.u32 %v12741, 16
  %v13209 = vrot.slane %v13207, 4
  %v13210 = vor.u32 %v13209, %v13205
  %v13211 = vrot.slane %v13210, 4
  %v13213 = vshll.u32 %v12742, 16
  %v13215 = vrot.slane %v13213, 5
  %v13216 = vsel %vm1475, %v13211, %v13215
  %v13218 = vshrl.u32 %v12743, 16
  %v13220 = vrot.slane %v13218, 4
  %v13221 = vshll.u32 %v12743, 16
  %v13223 = vrot.slane %v13221, 5
  %v13224 = vor.u32 %v13220, %v13223
  %v13225 = vrot.slane %v13224, 4
  %v13227 = vshll.u32 %v12744, 16
  %v13229 = vrot.slane %v13227, 5
  %v13230 = vsel %vm1475, %v13225, %v13229
  %v13231 = vshrl.u32 %v12744, 16
  %v13233 = vrot.slane %v13231, 4
  %v13234 = vor.u32 %v13233, %v13229
  %v13235 = vrot.slane %v13234, 4
  %v13237 = vshll.u32 %v12745, 16
  %v13239 = vrot.slane %v13237, 5
  %v13240 = vsel %vm1475, %v13235, %v13239
  %v13242 = vshrl.u32 %v12746, 16
  %v13244 = vrot.slane %v13242, 4
  %v13245 = vshll.u32 %v12746, 16
  %v13247 = vrot.slane %v13245, 5
  %v13248 = vor.u32 %v13244, %v13247
  %v13249 = vrot.slane %v13248, 4
  %v13251 = vshll.u32 %v12747, 16
  %v13253 = vrot.slane %v13251, 5
  %v13254 = vsel %vm1475, %v13249, %v13253
  %v13255 = vshrl.u32 %v12747, 16
  %v13257 = vrot.slane %v13255, 4
  %v13258 = vor.u32 %v13257, %v13253
  %v13259 = vrot.slane %v13258, 4
  %v13261 = vshll.u32 %v12748, 16
  %v13263 = vrot.slane %v13261, 5
  %v13264 = vsel %vm1475, %v13259, %v13263
  %v13266 = vshrl.u32 %v12749, 16
  %v13268 = vrot.slane %v13266, 4
  %v13269 = vshll.u32 %v12749, 16
  %v13271 = vrot.slane %v13269, 5
  %v13272 = vor.u32 %v13268, %v13271
  %v13273 = vrot.slane %v13272, 4
  %v13275 = vshll.u32 %v12750, 16
  %v13277 = vrot.slane %v13275, 5
  %v13278 = vsel %vm1475, %v13273, %v13277
  %v13279 = vshrl.u32 %v12750, 16
  %v13281 = vrot.slane %v13279, 4
  %v13282 = vor.u32 %v13281, %v13277
  %v13283 = vrot.slane %v13282, 4
  %v13285 = vshll.u32 %v12751, 16
  %v13287 = vrot.slane %v13285, 5
  %v13288 = vsel %vm1475, %v13283, %v13287
  %v13290 = vshrl.u32 %v12752, 16
  %v13292 = vrot.slane %v13290, 4
  %v13293 = vshll.u32 %v12752, 16
  %v13295 = vrot.slane %v13293, 5
  %v13296 = vor.u32 %v13292, %v13295
  %v13297 = vrot.slane %v13296, 4
  %v13299 = vshll.u32 %v12753, 16
  %v13301 = vrot.slane %v13299, 5
  %v13302 = vsel %vm1475, %v13297, %v13301
  %v13303 = vshrl.u32 %v12753, 16
  %v13305 = vrot.slane %v13303, 4
  %v13306 = vor.u32 %v13305, %v13301
  %v13307 = vrot.slane %v13306, 4
  %v13309 = vshll.u32 %v12754, 16
  %v13311 = vrot.slane %v13309, 5
  %v13312 = vsel %vm1475, %v13307, %v13311
  %v13314 = vshrl.u32 %v12755, 16
  %v13316 = vrot.slane %v13314, 4
  %v13317 = vshll.u32 %v12755, 16
  %v13319 = vrot.slane %v13317, 5
  %v13320 = vor.u32 %v13316, %v13319
  %v13321 = vrot.slane %v13320, 4
  %v13323 = vshll.u32 %v12756, 16
  %v13325 = vrot.slane %v13323, 5
  %v13326 = vsel %vm1475, %v13321, %v13325
  %v13327 = vshrl.u32 %v12756, 16
  %v13329 = vrot.slane %v13327, 4
  %v13330 = vor.u32 %v13329, %v13325
  %v13331 = vrot.slane %v13330, 4
  %v13333 = vshll.u32 %v12757, 16
  %v13335 = vrot.slane %v13333, 5
  %v13336 = vsel %vm1475, %v13331, %v13335
  %v13338 = vshrl.u32 %v12758, 16
  %v13340 = vrot.slane %v13338, 4
  %v13341 = vshll.u32 %v12758, 16
  %v13343 = vrot.slane %v13341, 5
  %v13344 = vor.u32 %v13340, %v13343
  %v13345 = vrot.slane %v13344, 4
  %v13347 = vshll.u32 %v12759, 16
  %v13349 = vrot.slane %v13347, 5
  %v13350 = vsel %vm1475, %v13345, %v13349
  %v13351 = vshrl.u32 %v12759, 16
  %v13353 = vrot.slane %v13351, 4
  %v13354 = vor.u32 %v13353, %v13349
  %v13355 = vrot.slane %v13354, 4
  %v13357 = vshll.u32 %v12760, 16
  %v13359 = vrot.slane %v13357, 5
  %v13360 = vsel %vm1475, %v13355, %v13359
  %v13362 = vshrl.u32 %v12761, 16
  %v13364 = vrot.slane %v13362, 4
  %v13365 = vshll.u32 %v12761, 16
  %v13367 = vrot.slane %v13365, 5
  %v13368 = vor.u32 %v13364, %v13367
  %v13369 = vrot.slane %v13368, 4
  %v13371 = vshll.u32 %v12762, 16
  %v13373 = vrot.slane %v13371, 5
  %v13374 = vsel %vm1475, %v13369, %v13373
  %v13375 = vshrl.u32 %v12762, 16
  %v13377 = vrot.slane %v13375, 4
  %v13378 = vor.u32 %v13377, %v13373
  %v13379 = vrot.slane %v13378, 4
  %v13381 = vshll.u32 %v12763, 16
  %v13383 = vrot.slane %v13381, 5
  %v13384 = vsel %vm1475, %v13379, %v13383
  %v13386 = vshrl.u32 %v12764, 16
  %v13388 = vrot.slane %v13386, 4
  %v13389 = vshll.u32 %v12764, 16
  %v13391 = vrot.slane %v13389, 5
  %v13392 = vor.u32 %v13388, %v13391
  %v13393 = vrot.slane %v13392, 4
  %v13395 = vshll.u32 %v12765, 16
  %v13397 = vrot.slane %v13395, 5
  %v13398 = vsel %vm1475, %v13393, %v13397
  %v13399 = vshrl.u32 %v12765, 16
  %v13401 = vrot.slane %v13399, 4
  %v13402 = vor.u32 %v13401, %v13397
  %v13403 = vrot.slane %v13402, 4
  %v13405 = vshll.u32 %v12766, 16
  %v13407 = vrot.slane %v13405, 5
  %v13408 = vsel %vm1475, %v13403, %v13407
  %v13410 = vshrl.u32 %v12767, 16
  %v13412 = vrot.slane %v13410, 4
  %v13413 = vshll.u32 %v12767, 16
  %v13415 = vrot.slane %v13413, 5
  %v13416 = vor.u32 %v13412, %v13415
  %v13417 = vrot.slane %v13416, 4
  %v13419 = vshll.u32 %v12768, 16
  %v13421 = vrot.slane %v13419, 5
  %v13422 = vsel %vm1475, %v13417, %v13421
  %v13423 = vshrl.u32 %v12768, 16
  %v13425 = vrot.slane %v13423, 4
  %v13426 = vor.u32 %v13425, %v13421
  %v13427 = vrot.slane %v13426, 4
  %v13429 = vshll.u32 %v12769, 16
  %v13431 = vrot.slane %v13429, 5
  %v13432 = vsel %vm1475, %v13427, %v13431
  %v13434 = vshrl.u32 %v12770, 16
  %v13436 = vrot.slane %v13434, 4
  %v13437 = vshll.u32 %v12770, 16
  %v13439 = vrot.slane %v13437, 5
  %v13440 = vor.u32 %v13436, %v13439
  %v13441 = vrot.slane %v13440, 4
  %v13443 = vshll.u32 %v12771, 16
  %v13445 = vrot.slane %v13443, 5
  %v13446 = vsel %vm1475, %v13441, %v13445
  %v13447 = vshrl.u32 %v12771, 16
  %v13449 = vrot.slane %v13447, 4
  %v13450 = vor.u32 %v13449, %v13445
  %v13451 = vrot.slane %v13450, 4
  %v13453 = vshll.u32 %v12772, 16
  %v13455 = vrot.slane %v13453, 5
  %v13456 = vsel %vm1475, %v13451, %v13455
  %v13458 = vshrl.u32 %v12773, 16
  %v13460 = vrot.slane %v13458, 4
  %v13461 = vshll.u32 %v12773, 16
  %v13463 = vrot.slane %v13461, 5
  %v13464 = vor.u32 %v13460, %v13463
  %v13465 = vrot.slane %v13464, 4
  %v13467 = vshll.u32 %v12774, 16
  %v13469 = vrot.slane %v13467, 5
  %v13470 = vsel %vm1475, %v13465, %v13469
  %v13471 = vshrl.u32 %v12774, 16
  %v13473 = vrot.slane %v13471, 4
  %v13474 = vor.u32 %v13473, %v13469
  %v13475 = vrot.slane %v13474, 4
  %v13477 = vshll.u32 %v12775, 16
  %v13479 = vrot.slane %v13477, 5
  %v13480 = vsel %vm1475, %v13475, %v13479
  %v13482 = vshrl.u32 %v12776, 16
  %v13484 = vrot.slane %v13482, 4
  %v13485 = vshll.u32 %v12776, 16
  %v13487 = vrot.slane %v13485, 5
  %v13488 = vor.u32 %v13484, %v13487
  %v13489 = vrot.slane %v13488, 4
  %v13491 = vshll.u32 %v12777, 16
  %v13493 = vrot.slane %v13491, 5
  %v13494 = vsel %vm1475, %v13489, %v13493
  %v13495 = vshrl.u32 %v12777, 16
  %v13497 = vrot.slane %v13495, 4
  %v13498 = vor.u32 %v13497, %v13493
  %v13499 = vrot.slane %v13498, 4
  %v13501 = vshll.u32 %v12778, 16
  %v13503 = vrot.slane %v13501, 5
  %v13504 = vsel %vm1475, %v13499, %v13503
  %v13506 = vshrl.u32 %v12779, 16
  %v13508 = vrot.slane %v13506, 4
  %v13509 = vshll.u32 %v12779, 16
  %v13511 = vrot.slane %v13509, 5
  %v13512 = vor.u32 %v13508, %v13511
  %v13513 = vrot.slane %v13512, 4
  %v13515 = vshll.u32 %v12780, 16
  %v13517 = vrot.slane %v13515, 5
  %v13518 = vsel %vm1475, %v13513, %v13517
  %v13519 = vshrl.u32 %v12780, 16
  %v13521 = vrot.slane %v13519, 4
  %v13522 = vor.u32 %v13521, %v13517
  %v13523 = vrot.slane %v13522, 4
  %v13525 = vshll.u32 %v12781, 16
  %v13527 = vrot.slane %v13525, 5
  %v13528 = vsel %vm1475, %v13523, %v13527
  %v13530 = vshrl.u32 %v12782, 16
  %v13532 = vrot.slane %v13530, 4
  %v13533 = vshll.u32 %v12782, 16
  %v13535 = vrot.slane %v13533, 5
  %v13536 = vor.u32 %v13532, %v13535
  %v13537 = vrot.slane %v13536, 4
  %v13539 = vshll.u32 %v12783, 16
  %v13541 = vrot.slane %v13539, 5
  %v13542 = vsel %vm1475, %v13537, %v13541
  %v13543 = vshrl.u32 %v12783, 16
  %v13545 = vrot.slane %v13543, 4
  %v13546 = vor.u32 %v13545, %v13541
  %v13547 = vrot.slane %v13546, 4
  %v13549 = vshll.u32 %v12784, 16
  %v13551 = vrot.slane %v13549, 5
  %v13552 = vsel %vm1475, %v13547, %v13551
  %v13553 = vld [vmem:[%s9253] sm:$0xe]
  %v13554 = vld [vmem:[%s9253 + $0xc] sm:$0xe]
  %v13555 = vld [vmem:[%s9253 + $0x18] sm:$0xe]
  %v13556 = vld [vmem:[%s9253 + $0x24] sm:$0xe]
  %v13557 = vld [vmem:[%s9253 + $0x30] sm:$0xe]
  %v13558 = vld [vmem:[%s9253 + $0x3c] sm:$0xe]
  %v13559 = vld [vmem:[%s9253 + $0x48] sm:$0xe]
  %v13560 = vld [vmem:[%s9253 + $0x54] sm:$0xe]
  %v13561 = vld [vmem:[%s9253 + $0x60] sm:$0xe]
  %v13562 = vld [vmem:[%s9253 + $0x6c] sm:$0xe]
  %v13563 = vld [vmem:[%s9253 + $0x78] sm:$0xe]
  %v13564 = vld [vmem:[%s9253 + $0x84] sm:$0xe]
  %v13565 = vld [vmem:[%s9253 + $0x90] sm:$0xe]
  %v13566 = vld [vmem:[%s9253 + $0x9c] sm:$0xe]
  %v13567 = vld [vmem:[%s9253 + $0xa8] sm:$0xe]
  %v13568 = vld [vmem:[%s9253 + $0xb4] sm:$0xe]
  %v13569 = vld [vmem:[%s9253 + $0xd8] sm:$0xe]
  %v13570 = vld [vmem:[%s9253 + $0xe4] sm:$0xe]
  %v13571 = vld [vmem:[%s9253 + $0xf0] sm:$0xe]
  %v13572 = vld [vmem:[%s9253 + $0xfc] sm:$0xe]
  %v13573 = vld [vmem:[%s9253 + $0x108] sm:$0xe]
  %v13574 = vld [vmem:[%s9253 + $0x114] sm:$0xe]
  %v13575 = vld [vmem:[%s9253 + $0x120] sm:$0xe]
  %v13576 = vld [vmem:[%s9253 + $0x12c] sm:$0xe]
  %v13577 = vld [vmem:[%s9253 + $0x138] sm:$0xe]
  %v13578 = vld [vmem:[%s9253 + $0x144] sm:$0xe]
  %v13579 = vld [vmem:[%s9253 + $0x150] sm:$0xe]
  %v13580 = vld [vmem:[%s9253 + $0x15c] sm:$0xe]
  %v13581 = vld [vmem:[%s9253 + $0x168] sm:$0xe]
  %v13582 = vld [vmem:[%s9253 + $0x174] sm:$0xe]
  %v13583 = vld [vmem:[%s9253 + $0x180] sm:$0xe]
  %v13584 = vld [vmem:[%s9253 + $0x18c] sm:$0xe]
  %v13681 = vrot.slane %v13553, 5
  %v13682 = vrot.slane %v13681, 4
  %v13683 = vrot.slane %v12690, 5
  %v13684 = vsel %vm5465, %v13682, %v13683
  %v13685 = vrot.slane %v13683, 4
  %v13686 = vrot.slane %v12691, 5
  %v13687 = vsel %vm5465, %v13685, %v13686
  %v13688 = vrot.slane %v13554, 5
  %v13689 = vrot.slane %v13688, 4
  %v13690 = vrot.slane %v12693, 5
  %v13691 = vsel %vm5465, %v13689, %v13690
  %v13692 = vrot.slane %v13690, 4
  %v13693 = vrot.slane %v12694, 5
  %v13694 = vsel %vm5465, %v13692, %v13693
  %v13695 = vrot.slane %v13555, 5
  %v13696 = vrot.slane %v13695, 4
  %v13697 = vrot.slane %v12696, 5
  %v13698 = vsel %vm5465, %v13696, %v13697
  %v13699 = vrot.slane %v13697, 4
  %v13700 = vrot.slane %v12697, 5
  %v13701 = vsel %vm5465, %v13699, %v13700
  %v13702 = vrot.slane %v13556, 5
  %v13703 = vrot.slane %v13702, 4
  %v13704 = vrot.slane %v12699, 5
  %v13705 = vsel %vm5465, %v13703, %v13704
  %v13706 = vrot.slane %v13704, 4
  %v13707 = vrot.slane %v12700, 5
  %v13708 = vsel %vm5465, %v13706, %v13707
  %v13709 = vrot.slane %v13557, 5
  %v13710 = vrot.slane %v13709, 4
  %v13711 = vrot.slane %v12702, 5
  %v13712 = vsel %vm5465, %v13710, %v13711
  %v13713 = vrot.slane %v13711, 4
  %v13714 = vrot.slane %v12703, 5
  %v13715 = vsel %vm5465, %v13713, %v13714
  %v13716 = vrot.slane %v13558, 5
  %v13717 = vrot.slane %v13716, 4
  %v13718 = vrot.slane %v12705, 5
  %v13719 = vsel %vm5465, %v13717, %v13718
  %v13720 = vrot.slane %v13718, 4
  %v13721 = vrot.slane %v12706, 5
  %v13722 = vsel %vm5465, %v13720, %v13721
  %v13723 = vrot.slane %v13559, 5
  %v13724 = vrot.slane %v13723, 4
  %v13725 = vrot.slane %v12708, 5
  %v13726 = vsel %vm5465, %v13724, %v13725
  %v13727 = vrot.slane %v13725, 4
  %v13728 = vrot.slane %v12709, 5
  %v13729 = vsel %vm5465, %v13727, %v13728
  %v13730 = vrot.slane %v13560, 5
  %v13731 = vrot.slane %v13730, 4
  %v13732 = vrot.slane %v12711, 5
  %v13733 = vsel %vm5465, %v13731, %v13732
  %v13734 = vrot.slane %v13732, 4
  %v13735 = vrot.slane %v12712, 5
  %v13736 = vsel %vm5465, %v13734, %v13735
  %v13737 = vrot.slane %v13561, 5
  %v13738 = vrot.slane %v13737, 4
  %v13739 = vrot.slane %v12714, 5
  %v13740 = vsel %vm5465, %v13738, %v13739
  %v13741 = vrot.slane %v13739, 4
  %v13742 = vrot.slane %v12715, 5
  %v13743 = vsel %vm5465, %v13741, %v13742
  %v13744 = vrot.slane %v13562, 5
  %v13745 = vrot.slane %v13744, 4
  %v13746 = vrot.slane %v12717, 5
  %v13747 = vsel %vm5465, %v13745, %v13746
  %v13748 = vrot.slane %v13746, 4
  %v13749 = vrot.slane %v12718, 5
  %v13750 = vsel %vm5465, %v13748, %v13749
  %v13751 = vrot.slane %v13563, 5
  %v13752 = vrot.slane %v13751, 4
  %v13753 = vrot.slane %v12720, 5
  %v13754 = vsel %vm5465, %v13752, %v13753
  %v13755 = vrot.slane %v13753, 4
  %v13756 = vrot.slane %v12721, 5
  %v13757 = vsel %vm5465, %v13755, %v13756
  %v13758 = vrot.slane %v13564, 5
  %v13759 = vrot.slane %v13758, 4
  %v13760 = vrot.slane %v12723, 5
  %v13761 = vsel %vm5465, %v13759, %v13760
  %v13762 = vrot.slane %v13760, 4
  %v13763 = vrot.slane %v12724, 5
  %v13764 = vsel %vm5465, %v13762, %v13763
  %v13765 = vrot.slane %v13565, 5
  %v13766 = vrot.slane %v13765, 4
  %v13767 = vrot.slane %v12726, 5
  %v13768 = vsel %vm5465, %v13766, %v13767
  %v13769 = vrot.slane %v13767, 4
  %v13770 = vrot.slane %v12727, 5
  %v13771 = vsel %vm5465, %v13769, %v13770
  %v13772 = vrot.slane %v13566, 5
  %v13773 = vrot.slane %v13772, 4
  %v13774 = vrot.slane %v12729, 5
  %v13775 = vsel %vm5465, %v13773, %v13774
  %v13776 = vrot.slane %v13774, 4
  %v13777 = vrot.slane %v12730, 5
  %v13778 = vsel %vm5465, %v13776, %v13777
  %v13779 = vrot.slane %v13567, 5
  %v13780 = vrot.slane %v13779, 4
  %v13781 = vrot.slane %v12732, 5
  %v13782 = vsel %vm5465, %v13780, %v13781
  %v13783 = vrot.slane %v13781, 4
  %v13784 = vrot.slane %v12733, 5
  %v13785 = vsel %vm5465, %v13783, %v13784
  %v13786 = vrot.slane %v13568, 5
  %v13787 = vrot.slane %v13786, 4
  %v13788 = vrot.slane %v12735, 5
  %v13789 = vsel %vm5465, %v13787, %v13788
  %v13790 = vrot.slane %v13788, 4
  %v13791 = vrot.slane %v12736, 5
  %v13792 = vsel %vm5465, %v13790, %v13791
  %v13793 = vrot.slane %v13569, 5
  %v13794 = vrot.slane %v13793, 4
  %v13795 = vrot.slane %v12738, 5
  %v13796 = vsel %vm5465, %v13794, %v13795
  %v13797 = vrot.slane %v13795, 4
  %v13798 = vrot.slane %v12739, 5
  %v13799 = vsel %vm5465, %v13797, %v13798
  %v13800 = vrot.slane %v13570, 5
  %v13801 = vrot.slane %v13800, 4
  %v13802 = vrot.slane %v12741, 5
  %v13803 = vsel %vm5465, %v13801, %v13802
  %v13804 = vrot.slane %v13802, 4
  %v13805 = vrot.slane %v12742, 5
  %v13806 = vsel %vm5465, %v13804, %v13805
  %v13807 = vrot.slane %v13571, 5
  %v13808 = vrot.slane %v13807, 4
  %v13809 = vrot.slane %v12744, 5
  %v13810 = vsel %vm5465, %v13808, %v13809
  %v13811 = vrot.slane %v13809, 4
  %v13812 = vrot.slane %v12745, 5
  %v13813 = vsel %vm5465, %v13811, %v13812
  %v13814 = vrot.slane %v13572, 5
  %v13815 = vrot.slane %v13814, 4
  %v13816 = vrot.slane %v12747, 5
  %v13817 = vsel %vm5465, %v13815, %v13816
  %v13818 = vrot.slane %v13816, 4
  %v13819 = vrot.slane %v12748, 5
  %v13820 = vsel %vm5465, %v13818, %v13819
  %v13821 = vrot.slane %v13573, 5
  %v13822 = vrot.slane %v13821, 4
  %v13823 = vrot.slane %v12750, 5
  %v13824 = vsel %vm5465, %v13822, %v13823
  %v13825 = vrot.slane %v13823, 4
  %v13826 = vrot.slane %v12751, 5
  %v13827 = vsel %vm5465, %v13825, %v13826
  %v13828 = vrot.slane %v13574, 5
  %v13829 = vrot.slane %v13828, 4
  %v13830 = vrot.slane %v12753, 5
  %v13831 = vsel %vm5465, %v13829, %v13830
  %v13832 = vrot.slane %v13830, 4
  %v13833 = vrot.slane %v12754, 5
  %v13834 = vsel %vm5465, %v13832, %v13833
  %v13835 = vrot.slane %v13575, 5
  %v13836 = vrot.slane %v13835, 4
  %v13837 = vrot.slane %v12756, 5
  %v13838 = vsel %vm5465, %v13836, %v13837
  %v13839 = vrot.slane %v13837, 4
  %v13840 = vrot.slane %v12757, 5
  %v13841 = vsel %vm5465, %v13839, %v13840
  %v13842 = vrot.slane %v13576, 5
  %v13843 = vrot.slane %v13842, 4
  %v13844 = vrot.slane %v12759, 5
  %v13845 = vsel %vm5465, %v13843, %v13844
  %v13846 = vrot.slane %v13844, 4
  %v13847 = vrot.slane %v12760, 5
  %v13848 = vsel %vm5465, %v13846, %v13847
  %v13849 = vrot.slane %v13577, 5
  %v13850 = vrot.slane %v13849, 4
  %v13851 = vrot.slane %v12762, 5
  %v13852 = vsel %vm5465, %v13850, %v13851
  %v13853 = vrot.slane %v13851, 4
  %v13854 = vrot.slane %v12763, 5
  %v13855 = vsel %vm5465, %v13853, %v13854
  %v13856 = vrot.slane %v13578, 5
  %v13857 = vrot.slane %v13856, 4
  %v13858 = vrot.slane %v12765, 5
  %v13859 = vsel %vm5465, %v13857, %v13858
  %v13860 = vrot.slane %v13858, 4
  %v13861 = vrot.slane %v12766, 5
  %v13862 = vsel %vm5465, %v13860, %v13861
  %v13863 = vrot.slane %v13579, 5
  %v13864 = vrot.slane %v13863, 4
  %v13865 = vrot.slane %v12768, 5
  %v13866 = vsel %vm5465, %v13864, %v13865
  %v13867 = vrot.slane %v13865, 4
  %v13868 = vrot.slane %v12769, 5
  %v13869 = vsel %vm5465, %v13867, %v13868
  %v13870 = vrot.slane %v13580, 5
  %v13871 = vrot.slane %v13870, 4
  %v13872 = vrot.slane %v12771, 5
  %v13873 = vsel %vm5465, %v13871, %v13872
  %v13874 = vrot.slane %v13872, 4
  %v13875 = vrot.slane %v12772, 5
  %v13876 = vsel %vm5465, %v13874, %v13875
  %v13877 = vrot.slane %v13581, 5
  %v13878 = vrot.slane %v13877, 4
  %v13879 = vrot.slane %v12774, 5
  %v13880 = vsel %vm5465, %v13878, %v13879
  %v13881 = vrot.slane %v13879, 4
  %v13882 = vrot.slane %v12775, 5
  %v13883 = vsel %vm5465, %v13881, %v13882
  %v13884 = vrot.slane %v13582, 5
  %v13885 = vrot.slane %v13884, 4
  %v13886 = vrot.slane %v12777, 5
  %v13887 = vsel %vm5465, %v13885, %v13886
  %v13888 = vrot.slane %v13886, 4
  %v13889 = vrot.slane %v12778, 5
  %v13890 = vsel %vm5465, %v13888, %v13889
  %v13891 = vrot.slane %v13583, 5
  %v13892 = vrot.slane %v13891, 4
  %v13893 = vrot.slane %v12780, 5
  %v13894 = vsel %vm5465, %v13892, %v13893
  %v13895 = vrot.slane %v13893, 4
  %v13896 = vrot.slane %v12781, 5
  %v13897 = vsel %vm5465, %v13895, %v13896
  %v13898 = vrot.slane %v13584, 5
  %v13899 = vrot.slane %v13898, 4
  %v13900 = vrot.slane %v12783, 5
  %v13901 = vsel %vm5465, %v13899, %v13900
  %v13902 = vrot.slane %v13900, 4
  %v13903 = vrot.slane %v12784, 5
  %v13904 = vsel %vm5465, %v13902, %v13903
  %v13905 = vunpack.c.l.b16 %v11582
  %v13906 = vunpack.c.l.b16 %v11592
  %v13907 = vunpack.c.l.b16 %v11606
  %v13908 = vunpack.c.l.b16 %v11616
  %v13909 = vunpack.c.l.b16 %v11630
  %v13910 = vunpack.c.l.b16 %v11640
  %v13911 = vunpack.c.l.b16 %v11654
  %v13912 = vunpack.c.l.b16 %v11664
  %v13913 = vunpack.c.l.b16 %v11678
  %v13914 = vunpack.c.l.b16 %v11688
  %v13915 = vunpack.c.l.b16 %v11702
  %v13916 = vunpack.c.l.b16 %v11712
  %v13917 = vunpack.c.l.b16 %v11726
  %v13918 = vunpack.c.l.b16 %v11736
  %v13919 = vunpack.c.l.b16 %v11750
  %v13920 = vunpack.c.l.b16 %v11760
  %v13921 = vunpack.c.l.b16 %v11774
  %v13922 = vunpack.c.l.b16 %v11784
  %v13923 = vunpack.c.l.b16 %v11798
  %v13924 = vunpack.c.l.b16 %v11808
  %v13925 = vunpack.c.l.b16 %v11822
  %v13926 = vunpack.c.l.b16 %v11832
  %v13927 = vunpack.c.l.b16 %v11846
  %v13928 = vunpack.c.l.b16 %v11856
  %v13929 = vunpack.c.l.b16 %v11870
  %v13930 = vunpack.c.l.b16 %v11880
  %v13931 = vunpack.c.l.b16 %v11894
  %v13932 = vunpack.c.l.b16 %v11904
  %v13933 = vunpack.c.l.b16 %v11918
  %v13934 = vunpack.c.l.b16 %v11928
  %v13935 = vunpack.c.l.b16 %v11942
  %v13936 = vunpack.c.l.b16 %v11952
  %v13937 = vunpack.c.l.b16 %v11966
  %v13938 = vunpack.c.l.b16 %v11976
  %v13939 = vunpack.c.l.b16 %v11990
  %v13940 = vunpack.c.l.b16 %v12000
  %v13941 = vunpack.c.l.b16 %v12014
  %v13942 = vunpack.c.l.b16 %v12024
  %v13943 = vunpack.c.l.b16 %v12038
  %v13944 = vunpack.c.l.b16 %v12048
  %v13945 = vunpack.c.l.b16 %v12062
  %v13946 = vunpack.c.l.b16 %v12072
  %v13947 = vunpack.c.l.b16 %v12086
  %v13948 = vunpack.c.l.b16 %v12096
  %v13949 = vunpack.c.l.b16 %v12110
  %v13950 = vunpack.c.l.b16 %v12120
  %v13951 = vunpack.c.l.b16 %v12134
  %v13952 = vunpack.c.l.b16 %v12144
  %v13953 = vunpack.c.l.b16 %v12158
  %v13954 = vunpack.c.l.b16 %v12168
  %v13955 = vunpack.c.l.b16 %v12182
  %v13956 = vunpack.c.l.b16 %v12192
  %v13957 = vunpack.c.l.b16 %v12206
  %v13958 = vunpack.c.l.b16 %v12216
  %v13959 = vunpack.c.l.b16 %v12230
  %v13960 = vunpack.c.l.b16 %v12240
  %v13961 = vunpack.c.l.b16 %v12254
  %v13962 = vunpack.c.l.b16 %v12264
  %v13963 = vunpack.c.l.b16 %v12278
  %v13964 = vunpack.c.l.b16 %v12288
  %v13965 = vunpack.c.l.b16 %v12302
  %v13966 = vunpack.c.l.b16 %v12312
  %v13967 = vunpack.c.l.b16 %v12326
  %v13968 = vunpack.c.l.b16 %v12336
  %v13969 = vpack.c.b16 %v13906, %v13905
  %v13970 = vpack.c.b16 %v13908, %v13907
  %v13971 = vpack.c.b16 %v13910, %v13909
  %v13972 = vpack.c.b16 %v13912, %v13911
  %v13973 = vpack.c.b16 %v13914, %v13913
  %v13974 = vpack.c.b16 %v13916, %v13915
  %v13975 = vpack.c.b16 %v13918, %v13917
  %v13976 = vpack.c.b16 %v13920, %v13919
  %v13977 = vpack.c.b16 %v13922, %v13921
  %v13978 = vpack.c.b16 %v13924, %v13923
  %v13979 = vpack.c.b16 %v13926, %v13925
  %v13980 = vpack.c.b16 %v13928, %v13927
  %v13981 = vpack.c.b16 %v13930, %v13929
  %v13982 = vpack.c.b16 %v13932, %v13931
  %v13983 = vpack.c.b16 %v13934, %v13933
  %v13984 = vpack.c.b16 %v13936, %v13935
  %v13985 = vpack.c.b16 %v13938, %v13937
  %v13986 = vpack.c.b16 %v13940, %v13939
  %v13987 = vpack.c.b16 %v13942, %v13941
  %v13988 = vpack.c.b16 %v13944, %v13943
  %v13989 = vpack.c.b16 %v13946, %v13945
  %v13990 = vpack.c.b16 %v13948, %v13947
  %v13991 = vpack.c.b16 %v13950, %v13949
  %v13992 = vpack.c.b16 %v13952, %v13951
  %v13993 = vpack.c.b16 %v13954, %v13953
  %v13994 = vpack.c.b16 %v13956, %v13955
  %v13995 = vpack.c.b16 %v13958, %v13957
  %v13996 = vpack.c.b16 %v13960, %v13959
  %v13997 = vpack.c.b16 %v13962, %v13961
  %v13998 = vpack.c.b16 %v13964, %v13963
  %v13999 = vpack.c.b16 %v13966, %v13965
  %v14000 = vpack.c.b16 %v13968, %v13967
  %v14001 = vunpack.c.l.b16 %v12468
  %v14002 = vunpack.c.l.b16 %v12471
  %v14003 = vunpack.c.l.b16 %v12475
  %v14004 = vunpack.c.l.b16 %v12478
  %v14005 = vunpack.c.l.b16 %v12482
  %v14006 = vunpack.c.l.b16 %v12485
  %v14007 = vunpack.c.l.b16 %v12489
  %v14008 = vunpack.c.l.b16 %v12492
  %v14009 = vunpack.c.l.b16 %v12496
  %v14010 = vunpack.c.l.b16 %v12499
  %v14011 = vunpack.c.l.b16 %v12503
  %v14012 = vunpack.c.l.b16 %v12506
  %v14013 = vunpack.c.l.b16 %v12510
  %v14014 = vunpack.c.l.b16 %v12513
  %v14015 = vunpack.c.l.b16 %v12517
  %v14016 = vunpack.c.l.b16 %v12520
  %v14017 = vunpack.c.l.b16 %v12524
  %v14018 = vunpack.c.l.b16 %v12527
  %v14019 = vunpack.c.l.b16 %v12531
  %v14020 = vunpack.c.l.b16 %v12534
  %v14021 = vunpack.c.l.b16 %v12538
  %v14022 = vunpack.c.l.b16 %v12541
  %v14023 = vunpack.c.l.b16 %v12545
  %v14024 = vunpack.c.l.b16 %v12548
  %v14025 = vunpack.c.l.b16 %v12552
  %v14026 = vunpack.c.l.b16 %v12555
  %v14027 = vunpack.c.l.b16 %v12559
  %v14028 = vunpack.c.l.b16 %v12562
  %v14029 = vunpack.c.l.b16 %v12566
  %v14030 = vunpack.c.l.b16 %v12569
  %v14031 = vunpack.c.l.b16 %v12573
  %v14032 = vunpack.c.l.b16 %v12576
  %v14033 = vunpack.c.l.b16 %v12580
  %v14034 = vunpack.c.l.b16 %v12583
  %v14035 = vunpack.c.l.b16 %v12587
  %v14036 = vunpack.c.l.b16 %v12590
  %v14037 = vunpack.c.l.b16 %v12594
  %v14038 = vunpack.c.l.b16 %v12597
  %v14039 = vunpack.c.l.b16 %v12601
  %v14040 = vunpack.c.l.b16 %v12604
  %v14041 = vunpack.c.l.b16 %v12608
  %v14042 = vunpack.c.l.b16 %v12611
  %v14043 = vunpack.c.l.b16 %v12615
  %v14044 = vunpack.c.l.b16 %v12618
  %v14045 = vunpack.c.l.b16 %v12622
  %v14046 = vunpack.c.l.b16 %v12625
  %v14047 = vunpack.c.l.b16 %v12629
  %v14048 = vunpack.c.l.b16 %v12632
  %v14049 = vunpack.c.l.b16 %v12636
  %v14050 = vunpack.c.l.b16 %v12639
  %v14051 = vunpack.c.l.b16 %v12643
  %v14052 = vunpack.c.l.b16 %v12646
  %v14053 = vunpack.c.l.b16 %v12650
  %v14054 = vunpack.c.l.b16 %v12653
  %v14055 = vunpack.c.l.b16 %v12657
  %v14056 = vunpack.c.l.b16 %v12660
  %v14057 = vunpack.c.l.b16 %v12664
  %v14058 = vunpack.c.l.b16 %v12667
  %v14059 = vunpack.c.l.b16 %v12671
  %v14060 = vunpack.c.l.b16 %v12674
  %v14061 = vunpack.c.l.b16 %v12678
  %v14062 = vunpack.c.l.b16 %v12681
  %v14063 = vunpack.c.l.b16 %v12685
  %v14064 = vunpack.c.l.b16 %v12688
  %v14065 = vpack.c.b16 %v14002, %v14001
  %v14066 = vpack.c.b16 %v14004, %v14003
  %v14067 = vpack.c.b16 %v14006, %v14005
  %v14068 = vpack.c.b16 %v14008, %v14007
  %v14069 = vpack.c.b16 %v14010, %v14009
  %v14070 = vpack.c.b16 %v14012, %v14011
  %v14071 = vpack.c.b16 %v14014, %v14013
  %v14072 = vpack.c.b16 %v14016, %v14015
  %v14073 = vpack.c.b16 %v14018, %v14017
  %v14074 = vpack.c.b16 %v14020, %v14019
  %v14075 = vpack.c.b16 %v14022, %v14021
  %v14076 = vpack.c.b16 %v14024, %v14023
  %v14077 = vpack.c.b16 %v14026, %v14025
  %v14078 = vpack.c.b16 %v14028, %v14027
  %v14079 = vpack.c.b16 %v14030, %v14029
  %v14080 = vpack.c.b16 %v14032, %v14031
  %v14081 = vpack.c.b16 %v14034, %v14033
  %v14082 = vpack.c.b16 %v14036, %v14035
  %v14083 = vpack.c.b16 %v14038, %v14037
  %v14084 = vpack.c.b16 %v14040, %v14039
  %v14085 = vpack.c.b16 %v14042, %v14041
  %v14086 = vpack.c.b16 %v14044, %v14043
  %v14087 = vpack.c.b16 %v14046, %v14045
  %v14088 = vpack.c.b16 %v14048, %v14047
  %v14089 = vpack.c.b16 %v14050, %v14049
  %v14090 = vpack.c.b16 %v14052, %v14051
  %v14091 = vpack.c.b16 %v14054, %v14053
  %v14092 = vpack.c.b16 %v14056, %v14055
  %v14093 = vpack.c.b16 %v14058, %v14057
  %v14094 = vpack.c.b16 %v14060, %v14059
  %v14095 = vpack.c.b16 %v14062, %v14061
  %v14096 = vpack.c.b16 %v14064, %v14063
  %14097 = vrot.lane.b32.xlu0 %v14065, 4
  %v14098 = vpop.permute.xlu0 %14097
  %14099 = vrot.lane.b32.xlu0 %v14066, 4
  %v14100 = vpop.permute.xlu0 %14099
  %14101 = vrot.lane.b32.xlu0 %v14067, 4
  %v14102 = vpop.permute.xlu0 %14101
  %14103 = vrot.lane.b32.xlu0 %v14068, 4
  %v14104 = vpop.permute.xlu0 %14103
  %14105 = vrot.lane.b32.xlu0 %v14069, 4
  %v14106 = vpop.permute.xlu0 %14105
  %14107 = vrot.lane.b32.xlu0 %v14070, 4
  %v14108 = vpop.permute.xlu0 %14107
  %14109 = vrot.lane.b32.xlu0 %v14071, 4
  %v14110 = vpop.permute.xlu0 %14109
  %14111 = vrot.lane.b32.xlu0 %v14072, 4
  %v14112 = vpop.permute.xlu0 %14111
  %14113 = vrot.lane.b32.xlu0 %v14073, 4
  %v14114 = vpop.permute.xlu0 %14113
  %14115 = vrot.lane.b32.xlu0 %v14074, 4
  %v14116 = vpop.permute.xlu0 %14115
  %14117 = vrot.lane.b32.xlu0 %v14075, 4
  %v14118 = vpop.permute.xlu0 %14117
  %14119 = vrot.lane.b32.xlu0 %v14076, 4
  %v14120 = vpop.permute.xlu0 %14119
  %14121 = vrot.lane.b32.xlu0 %v14077, 4
  %v14122 = vpop.permute.xlu0 %14121
  %14123 = vrot.lane.b32.xlu0 %v14078, 4
  %v14124 = vpop.permute.xlu0 %14123
  %14125 = vrot.lane.b32.xlu0 %v14079, 4
  %v14126 = vpop.permute.xlu0 %14125
  %14127 = vrot.lane.b32.xlu0 %v14080, 4
  %v14128 = vpop.permute.xlu0 %14127
  %14129 = vrot.lane.b32.xlu0 %v14081, 4
  %v14130 = vpop.permute.xlu0 %14129
  %14131 = vrot.lane.b32.xlu0 %v14082, 4
  %v14132 = vpop.permute.xlu0 %14131
  %14133 = vrot.lane.b32.xlu0 %v14083, 4
  %v14134 = vpop.permute.xlu0 %14133
  %14135 = vrot.lane.b32.xlu0 %v14084, 4
  %v14136 = vpop.permute.xlu0 %14135
  %14137 = vrot.lane.b32.xlu0 %v14085, 4
  %v14138 = vpop.permute.xlu0 %14137
  %14139 = vrot.lane.b32.xlu0 %v14086, 4
  %v14140 = vpop.permute.xlu0 %14139
  %14141 = vrot.lane.b32.xlu0 %v14087, 4
  %v14142 = vpop.permute.xlu0 %14141
  %14143 = vrot.lane.b32.xlu0 %v14088, 4
  %v14144 = vpop.permute.xlu0 %14143
  %14145 = vrot.lane.b32.xlu0 %v14089, 4
  %v14146 = vpop.permute.xlu0 %14145
  %14147 = vrot.lane.b32.xlu0 %v14090, 4
  %v14148 = vpop.permute.xlu0 %14147
  %14149 = vrot.lane.b32.xlu0 %v14091, 4
  %v14150 = vpop.permute.xlu0 %14149
  %14151 = vrot.lane.b32.xlu0 %v14092, 4
  %v14152 = vpop.permute.xlu0 %14151
  %14153 = vrot.lane.b32.xlu0 %v14093, 4
  %v14154 = vpop.permute.xlu0 %14153
  %14155 = vrot.lane.b32.xlu0 %v14094, 4
  %v14156 = vpop.permute.xlu0 %14155
  %14157 = vrot.lane.b32.xlu0 %v14095, 4
  %v14158 = vpop.permute.xlu0 %14157
  %14159 = vrot.lane.b32.xlu0 %v14096, 4
  %v14160 = vpop.permute.xlu0 %14159
  %v14161 = vunpack.c.l.b16 %v12798
  %v14162 = vunpack.c.l.b16 %v12808
  %v14163 = vunpack.c.l.b16 %v12822
  %v14164 = vunpack.c.l.b16 %v12832
  %v14165 = vunpack.c.l.b16 %v12846
  %v14166 = vunpack.c.l.b16 %v12856
  %v14167 = vunpack.c.l.b16 %v12870
  %v14168 = vunpack.c.l.b16 %v12880
  %v14169 = vunpack.c.l.b16 %v12894
  %v14170 = vunpack.c.l.b16 %v12904
  %v14171 = vunpack.c.l.b16 %v12918
  %v14172 = vunpack.c.l.b16 %v12928
  %v14173 = vunpack.c.l.b16 %v12942
  %v14174 = vunpack.c.l.b16 %v12952
  %v14175 = vunpack.c.l.b16 %v12966
  %v14176 = vunpack.c.l.b16 %v12976
  %v14177 = vunpack.c.l.b16 %v12990
  %v14178 = vunpack.c.l.b16 %v13000
  %v14179 = vunpack.c.l.b16 %v13014
  %v14180 = vunpack.c.l.b16 %v13024
  %v14181 = vunpack.c.l.b16 %v13038
  %v14182 = vunpack.c.l.b16 %v13048
  %v14183 = vunpack.c.l.b16 %v13062
  %v14184 = vunpack.c.l.b16 %v13072
  %v14185 = vunpack.c.l.b16 %v13086
  %v14186 = vunpack.c.l.b16 %v13096
  %v14187 = vunpack.c.l.b16 %v13110
  %v14188 = vunpack.c.l.b16 %v13120
  %v14189 = vunpack.c.l.b16 %v13134
  %v14190 = vunpack.c.l.b16 %v13144
  %v14191 = vunpack.c.l.b16 %v13158
  %v14192 = vunpack.c.l.b16 %v13168
  %v14193 = vunpack.c.l.b16 %v13182
  %v14194 = vunpack.c.l.b16 %v13192
  %v14195 = vunpack.c.l.b16 %v13206
  %v14196 = vunpack.c.l.b16 %v13216
  %v14197 = vunpack.c.l.b16 %v13230
  %v14198 = vunpack.c.l.b16 %v13240
  %v14199 = vunpack.c.l.b16 %v13254
  %v14200 = vunpack.c.l.b16 %v13264
  %v14201 = vunpack.c.l.b16 %v13278
  %v14202 = vunpack.c.l.b16 %v13288
  %v14203 = vunpack.c.l.b16 %v13302
  %v14204 = vunpack.c.l.b16 %v13312
  %v14205 = vunpack.c.l.b16 %v13326
  %v14206 = vunpack.c.l.b16 %v13336
  %v14207 = vunpack.c.l.b16 %v13350
  %v14208 = vunpack.c.l.b16 %v13360
  %v14209 = vunpack.c.l.b16 %v13374
  %v14210 = vunpack.c.l.b16 %v13384
  %v14211 = vunpack.c.l.b16 %v13398
  %v14212 = vunpack.c.l.b16 %v13408
  %v14213 = vunpack.c.l.b16 %v13422
  %v14214 = vunpack.c.l.b16 %v13432
  %v14215 = vunpack.c.l.b16 %v13446
  %v14216 = vunpack.c.l.b16 %v13456
  %v14217 = vunpack.c.l.b16 %v13470
  %v14218 = vunpack.c.l.b16 %v13480
  %v14219 = vunpack.c.l.b16 %v13494
  %v14220 = vunpack.c.l.b16 %v13504
  %v14221 = vunpack.c.l.b16 %v13518
  %v14222 = vunpack.c.l.b16 %v13528
  %v14223 = vunpack.c.l.b16 %v13542
  %v14224 = vunpack.c.l.b16 %v13552
  %v14225 = vpack.c.b16 %v14162, %v14161
  %v14226 = vpack.c.b16 %v14164, %v14163
  %v14227 = vpack.c.b16 %v14166, %v14165
  %v14228 = vpack.c.b16 %v14168, %v14167
  %v14229 = vpack.c.b16 %v14170, %v14169
  %v14230 = vpack.c.b16 %v14172, %v14171
  %v14231 = vpack.c.b16 %v14174, %v14173
  %v14232 = vpack.c.b16 %v14176, %v14175
  %v14233 = vpack.c.b16 %v14178, %v14177
  %v14234 = vpack.c.b16 %v14180, %v14179
  %v14235 = vpack.c.b16 %v14182, %v14181
  %v14236 = vpack.c.b16 %v14184, %v14183
  %v14237 = vpack.c.b16 %v14186, %v14185
  %v14238 = vpack.c.b16 %v14188, %v14187
  %v14239 = vpack.c.b16 %v14190, %v14189
  %v14240 = vpack.c.b16 %v14192, %v14191
  %v14241 = vpack.c.b16 %v14194, %v14193
  %v14242 = vpack.c.b16 %v14196, %v14195
  %v14243 = vpack.c.b16 %v14198, %v14197
  %v14244 = vpack.c.b16 %v14200, %v14199
  %v14245 = vpack.c.b16 %v14202, %v14201
  %v14246 = vpack.c.b16 %v14204, %v14203
  %v14247 = vpack.c.b16 %v14206, %v14205
  %v14248 = vpack.c.b16 %v14208, %v14207
  %v14249 = vpack.c.b16 %v14210, %v14209
  %v14250 = vpack.c.b16 %v14212, %v14211
  %v14251 = vpack.c.b16 %v14214, %v14213
  %v14252 = vpack.c.b16 %v14216, %v14215
  %v14253 = vpack.c.b16 %v14218, %v14217
  %v14254 = vpack.c.b16 %v14220, %v14219
  %v14255 = vpack.c.b16 %v14222, %v14221
  %v14256 = vpack.c.b16 %v14224, %v14223
  %14257 = vrot.lane.b32.xlu0 %v14225, 8
  %v14258 = vpop.permute.xlu0 %14257
  %14259 = vrot.lane.b32.xlu0 %v14226, 8
  %v14260 = vpop.permute.xlu0 %14259
  %14261 = vrot.lane.b32.xlu0 %v14227, 8
  %v14262 = vpop.permute.xlu0 %14261
  %14263 = vrot.lane.b32.xlu0 %v14228, 8
  %v14264 = vpop.permute.xlu0 %14263
  %14265 = vrot.lane.b32.xlu0 %v14229, 8
  %v14266 = vpop.permute.xlu0 %14265
  %14267 = vrot.lane.b32.xlu0 %v14230, 8
  %v14268 = vpop.permute.xlu0 %14267
  %14269 = vrot.lane.b32.xlu0 %v14231, 8
  %v14270 = vpop.permute.xlu0 %14269
  %14271 = vrot.lane.b32.xlu0 %v14232, 8
  %v14272 = vpop.permute.xlu0 %14271
  %14273 = vrot.lane.b32.xlu0 %v14233, 8
  %v14274 = vpop.permute.xlu0 %14273
  %14275 = vrot.lane.b32.xlu0 %v14234, 8
  %v14276 = vpop.permute.xlu0 %14275
  %14277 = vrot.lane.b32.xlu0 %v14235, 8
  %v14278 = vpop.permute.xlu0 %14277
  %14279 = vrot.lane.b32.xlu0 %v14236, 8
  %v14280 = vpop.permute.xlu0 %14279
  %14281 = vrot.lane.b32.xlu0 %v14237, 8
  %v14282 = vpop.permute.xlu0 %14281
  %14283 = vrot.lane.b32.xlu0 %v14238, 8
  %v14284 = vpop.permute.xlu0 %14283
  %14285 = vrot.lane.b32.xlu0 %v14239, 8
  %v14286 = vpop.permute.xlu0 %14285
  %14287 = vrot.lane.b32.xlu0 %v14240, 8
  %v14288 = vpop.permute.xlu0 %14287
  %14289 = vrot.lane.b32.xlu0 %v14241, 8
  %v14290 = vpop.permute.xlu0 %14289
  %14291 = vrot.lane.b32.xlu0 %v14242, 8
  %v14292 = vpop.permute.xlu0 %14291
  %14293 = vrot.lane.b32.xlu0 %v14243, 8
  %v14294 = vpop.permute.xlu0 %14293
  %14295 = vrot.lane.b32.xlu0 %v14244, 8
  %v14296 = vpop.permute.xlu0 %14295
  %14297 = vrot.lane.b32.xlu0 %v14245, 8
  %v14298 = vpop.permute.xlu0 %14297
  %14299 = vrot.lane.b32.xlu0 %v14246, 8
  %v14300 = vpop.permute.xlu0 %14299
  %14301 = vrot.lane.b32.xlu0 %v14247, 8
  %v14302 = vpop.permute.xlu0 %14301
  %14303 = vrot.lane.b32.xlu0 %v14248, 8
  %v14304 = vpop.permute.xlu0 %14303
  %14305 = vrot.lane.b32.xlu0 %v14249, 8
  %v14306 = vpop.permute.xlu0 %14305
  %14307 = vrot.lane.b32.xlu0 %v14250, 8
  %v14308 = vpop.permute.xlu0 %14307
  %14309 = vrot.lane.b32.xlu0 %v14251, 8
  %v14310 = vpop.permute.xlu0 %14309
  %14311 = vrot.lane.b32.xlu0 %v14252, 8
  %v14312 = vpop.permute.xlu0 %14311
  %14313 = vrot.lane.b32.xlu0 %v14253, 8
  %v14314 = vpop.permute.xlu0 %14313
  %14315 = vrot.lane.b32.xlu0 %v14254, 8
  %v14316 = vpop.permute.xlu0 %14315
  %14317 = vrot.lane.b32.xlu0 %v14255, 8
  %v14318 = vpop.permute.xlu0 %14317
  %14319 = vrot.lane.b32.xlu0 %v14256, 8
  %v14320 = vpop.permute.xlu0 %14319
  %v14321 = vunpack.c.l.b16 %v13684
  %v14322 = vunpack.c.l.b16 %v13687
  %v14323 = vunpack.c.l.b16 %v13691
  %v14324 = vunpack.c.l.b16 %v13694
  %v14325 = vunpack.c.l.b16 %v13698
  %v14326 = vunpack.c.l.b16 %v13701
  %v14327 = vunpack.c.l.b16 %v13705
  %v14328 = vunpack.c.l.b16 %v13708
  %v14329 = vunpack.c.l.b16 %v13712
  %v14330 = vunpack.c.l.b16 %v13715
  %v14331 = vunpack.c.l.b16 %v13719
  %v14332 = vunpack.c.l.b16 %v13722
  %v14333 = vunpack.c.l.b16 %v13726
  %v14334 = vunpack.c.l.b16 %v13729
  %v14335 = vunpack.c.l.b16 %v13733
  %v14336 = vunpack.c.l.b16 %v13736
  %v14337 = vunpack.c.l.b16 %v13740
  %v14338 = vunpack.c.l.b16 %v13743
  %v14339 = vunpack.c.l.b16 %v13747
  %v14340 = vunpack.c.l.b16 %v13750
  %v14341 = vunpack.c.l.b16 %v13754
  %v14342 = vunpack.c.l.b16 %v13757
  %v14343 = vunpack.c.l.b16 %v13761
  %v14344 = vunpack.c.l.b16 %v13764
  %v14345 = vunpack.c.l.b16 %v13768
  %v14346 = vunpack.c.l.b16 %v13771
  %v14347 = vunpack.c.l.b16 %v13775
  %v14348 = vunpack.c.l.b16 %v13778
  %v14349 = vunpack.c.l.b16 %v13782
  %v14350 = vunpack.c.l.b16 %v13785
  %v14351 = vunpack.c.l.b16 %v13789
  %v14352 = vunpack.c.l.b16 %v13792
  %v14353 = vunpack.c.l.b16 %v13796
  %v14354 = vunpack.c.l.b16 %v13799
  %v14355 = vunpack.c.l.b16 %v13803
  %v14356 = vunpack.c.l.b16 %v13806
  %v14357 = vunpack.c.l.b16 %v13810
  %v14358 = vunpack.c.l.b16 %v13813
  %v14359 = vunpack.c.l.b16 %v13817
  %v14360 = vunpack.c.l.b16 %v13820
  %v14361 = vunpack.c.l.b16 %v13824
  %v14362 = vunpack.c.l.b16 %v13827
  %v14363 = vunpack.c.l.b16 %v13831
  %v14364 = vunpack.c.l.b16 %v13834
  %v14365 = vunpack.c.l.b16 %v13838
  %v14366 = vunpack.c.l.b16 %v13841
  %v14367 = vunpack.c.l.b16 %v13845
  %v14368 = vunpack.c.l.b16 %v13848
  %v14369 = vunpack.c.l.b16 %v13852
  %v14370 = vunpack.c.l.b16 %v13855
  %v14371 = vunpack.c.l.b16 %v13859
  %v14372 = vunpack.c.l.b16 %v13862
  %v14373 = vunpack.c.l.b16 %v13866
  %v14374 = vunpack.c.l.b16 %v13869
  %v14375 = vunpack.c.l.b16 %v13873
  %v14376 = vunpack.c.l.b16 %v13876
  %v14377 = vunpack.c.l.b16 %v13880
  %v14378 = vunpack.c.l.b16 %v13883
  %v14379 = vunpack.c.l.b16 %v13887
  %v14380 = vunpack.c.l.b16 %v13890
  %v14381 = vunpack.c.l.b16 %v13894
  %v14382 = vunpack.c.l.b16 %v13897
  %v14383 = vunpack.c.l.b16 %v13901
  %v14384 = vunpack.c.l.b16 %v13904
  %v14385 = vpack.c.b16 %v14322, %v14321
  %v14386 = vpack.c.b16 %v14324, %v14323
  %v14387 = vpack.c.b16 %v14326, %v14325
  %v14388 = vpack.c.b16 %v14328, %v14327
  %v14389 = vpack.c.b16 %v14330, %v14329
  %v14390 = vpack.c.b16 %v14332, %v14331
  %v14391 = vpack.c.b16 %v14334, %v14333
  %v14392 = vpack.c.b16 %v14336, %v14335
  %v14393 = vpack.c.b16 %v14338, %v14337
  %v14394 = vpack.c.b16 %v14340, %v14339
  %v14395 = vpack.c.b16 %v14342, %v14341
  %v14396 = vpack.c.b16 %v14344, %v14343
  %v14397 = vpack.c.b16 %v14346, %v14345
  %v14398 = vpack.c.b16 %v14348, %v14347
  %v14399 = vpack.c.b16 %v14350, %v14349
  %v14400 = vpack.c.b16 %v14352, %v14351
  %v14401 = vpack.c.b16 %v14354, %v14353
  %v14402 = vpack.c.b16 %v14356, %v14355
  %v14403 = vpack.c.b16 %v14358, %v14357
  %v14404 = vpack.c.b16 %v14360, %v14359
  %v14405 = vpack.c.b16 %v14362, %v14361
  %v14406 = vpack.c.b16 %v14364, %v14363
  %v14407 = vpack.c.b16 %v14366, %v14365
  %v14408 = vpack.c.b16 %v14368, %v14367
  %v14409 = vpack.c.b16 %v14370, %v14369
  %v14410 = vpack.c.b16 %v14372, %v14371
  %v14411 = vpack.c.b16 %v14374, %v14373
  %v14412 = vpack.c.b16 %v14376, %v14375
  %v14413 = vpack.c.b16 %v14378, %v14377
  %v14414 = vpack.c.b16 %v14380, %v14379
  %v14415 = vpack.c.b16 %v14382, %v14381
  %v14416 = vpack.c.b16 %v14384, %v14383
  %14417 = vrot.lane.b32.xlu0 %v14385, 12
  %v14418 = vpop.permute.xlu0 %14417
  %14419 = vrot.lane.b32.xlu0 %v14386, 12
  %v14420 = vpop.permute.xlu0 %14419
  %14421 = vrot.lane.b32.xlu0 %v14387, 12
  %v14422 = vpop.permute.xlu0 %14421
  %14423 = vrot.lane.b32.xlu0 %v14388, 12
  %v14424 = vpop.permute.xlu0 %14423
  %14425 = vrot.lane.b32.xlu0 %v14389, 12
  %v14426 = vpop.permute.xlu0 %14425
  %14427 = vrot.lane.b32.xlu0 %v14390, 12
  %v14428 = vpop.permute.xlu0 %14427
  %14429 = vrot.lane.b32.xlu0 %v14391, 12
  %v14430 = vpop.permute.xlu0 %14429
  %14431 = vrot.lane.b32.xlu0 %v14392, 12
  %v14432 = vpop.permute.xlu0 %14431
  %14433 = vrot.lane.b32.xlu0 %v14393, 12
  %v14434 = vpop.permute.xlu0 %14433
  %14435 = vrot.lane.b32.xlu0 %v14394, 12
  %v14436 = vpop.permute.xlu0 %14435
  %14437 = vrot.lane.b32.xlu0 %v14395, 12
  %v14438 = vpop.permute.xlu0 %14437
  %14439 = vrot.lane.b32.xlu0 %v14396, 12
  %v14440 = vpop.permute.xlu0 %14439
  %14441 = vrot.lane.b32.xlu0 %v14397, 12
  %v14442 = vpop.permute.xlu0 %14441
  %14443 = vrot.lane.b32.xlu0 %v14398, 12
  %v14444 = vpop.permute.xlu0 %14443
  %14445 = vrot.lane.b32.xlu0 %v14399, 12
  %v14446 = vpop.permute.xlu0 %14445
  %14447 = vrot.lane.b32.xlu0 %v14400, 12
  %v14448 = vpop.permute.xlu0 %14447
  %14449 = vrot.lane.b32.xlu0 %v14401, 12
  %v14450 = vpop.permute.xlu0 %14449
  %14451 = vrot.lane.b32.xlu0 %v14402, 12
  %v14452 = vpop.permute.xlu0 %14451
  %14453 = vrot.lane.b32.xlu0 %v14403, 12
  %v14454 = vpop.permute.xlu0 %14453
  %14455 = vrot.lane.b32.xlu0 %v14404, 12
  %v14456 = vpop.permute.xlu0 %14455
  %14457 = vrot.lane.b32.xlu0 %v14405, 12
  %v14458 = vpop.permute.xlu0 %14457
  %14459 = vrot.lane.b32.xlu0 %v14406, 12
  %v14460 = vpop.permute.xlu0 %14459
  %14461 = vrot.lane.b32.xlu0 %v14407, 12
  %v14462 = vpop.permute.xlu0 %14461
  %14463 = vrot.lane.b32.xlu0 %v14408, 12
  %v14464 = vpop.permute.xlu0 %14463
  %14465 = vrot.lane.b32.xlu0 %v14409, 12
  %v14466 = vpop.permute.xlu0 %14465
  %14467 = vrot.lane.b32.xlu0 %v14410, 12
  %v14468 = vpop.permute.xlu0 %14467
  %14469 = vrot.lane.b32.xlu0 %v14411, 12
  %v14470 = vpop.permute.xlu0 %14469
  %14471 = vrot.lane.b32.xlu0 %v14412, 12
  %v14472 = vpop.permute.xlu0 %14471
  %14473 = vrot.lane.b32.xlu0 %v14413, 12
  %v14474 = vpop.permute.xlu0 %14473
  %14475 = vrot.lane.b32.xlu0 %v14414, 12
  %v14476 = vpop.permute.xlu0 %14475
  %14477 = vrot.lane.b32.xlu0 %v14415, 12
  %v14478 = vpop.permute.xlu0 %14477
  %14479 = vrot.lane.b32.xlu0 %v14416, 12
  %v14480 = vpop.permute.xlu0 %14479
  %v14483 = vsel %vm3812, %v13969, %v14098
  %v14486 = vsel %vm3812, %v13970, %v14100
  %v14489 = vsel %vm3812, %v13971, %v14102
  %v14492 = vsel %vm3812, %v13972, %v14104
  %v14495 = vsel %vm3812, %v13973, %v14106
  %v14498 = vsel %vm3812, %v13974, %v14108
  %v14501 = vsel %vm3812, %v13975, %v14110
  %v14504 = vsel %vm3812, %v13976, %v14112
  %v14507 = vsel %vm3812, %v13977, %v14114
  %v14510 = vsel %vm3812, %v13978, %v14116
  %v14513 = vsel %vm3812, %v13979, %v14118
  %v14516 = vsel %vm3812, %v13980, %v14120
  %v14519 = vsel %vm3812, %v13981, %v14122
  %v14522 = vsel %vm3812, %v13982, %v14124
  %v14525 = vsel %vm3812, %v13983, %v14126
  %v14528 = vsel %vm3812, %v13984, %v14128
  %v14531 = vsel %vm3812, %v13985, %v14130
  %v14534 = vsel %vm3812, %v13986, %v14132
  %v14537 = vsel %vm3812, %v13987, %v14134
  %v14540 = vsel %vm3812, %v13988, %v14136
  %v14543 = vsel %vm3812, %v13989, %v14138
  %v14546 = vsel %vm3812, %v13990, %v14140
  %v14549 = vsel %vm3812, %v13991, %v14142
  %v14552 = vsel %vm3812, %v13992, %v14144
  %v14555 = vsel %vm3812, %v13993, %v14146
  %v14558 = vsel %vm3812, %v13994, %v14148
  %v14561 = vsel %vm3812, %v13995, %v14150
  %v14564 = vsel %vm3812, %v13996, %v14152
  %v14567 = vsel %vm3812, %v13997, %v14154
  %v14570 = vsel %vm3812, %v13998, %v14156
  %v14573 = vsel %vm3812, %v13999, %v14158
  %v14576 = vsel %vm3812, %v14000, %v14160
  %v14578 = vsel %vm3909, %v14483, %v14258
  %v14580 = vsel %vm3909, %v14486, %v14260
  %v14582 = vsel %vm3909, %v14489, %v14262
  %v14584 = vsel %vm3909, %v14492, %v14264
  %v14586 = vsel %vm3909, %v14495, %v14266
  %v14588 = vsel %vm3909, %v14498, %v14268
  %v14590 = vsel %vm3909, %v14501, %v14270
  %v14592 = vsel %vm3909, %v14504, %v14272
  %v14594 = vsel %vm3909, %v14507, %v14274
  %v14596 = vsel %vm3909, %v14510, %v14276
  %v14598 = vsel %vm3909, %v14513, %v14278
  %v14600 = vsel %vm3909, %v14516, %v14280
  %v14602 = vsel %vm3909, %v14519, %v14282
  %v14604 = vsel %vm3909, %v14522, %v14284
  %v14606 = vsel %vm3909, %v14525, %v14286
  %v14608 = vsel %vm3909, %v14528, %v14288
  %v14610 = vsel %vm3909, %v14531, %v14290
  %v14612 = vsel %vm3909, %v14534, %v14292
  %v14614 = vsel %vm3909, %v14537, %v14294
  %v14616 = vsel %vm3909, %v14540, %v14296
  %v14618 = vsel %vm3909, %v14543, %v14298
  %v14620 = vsel %vm3909, %v14546, %v14300
  %v14622 = vsel %vm3909, %v14549, %v14302
  %v14624 = vsel %vm3909, %v14552, %v14304
  %v14626 = vsel %vm3909, %v14555, %v14306
  %v14628 = vsel %vm3909, %v14558, %v14308
  %v14630 = vsel %vm3909, %v14561, %v14310
  %v14632 = vsel %vm3909, %v14564, %v14312
  %v14634 = vsel %vm3909, %v14567, %v14314
  %v14636 = vsel %vm3909, %v14570, %v14316
  %v14638 = vsel %vm3909, %v14573, %v14318
  %v14640 = vsel %vm3909, %v14576, %v14320
  %v14642 = vsel %vm3974, %v14578, %v14418
  %v14644 = vsel %vm3974, %v14580, %v14420
  %v14646 = vsel %vm3974, %v14582, %v14422
  %v14648 = vsel %vm3974, %v14584, %v14424
  %v14650 = vsel %vm3974, %v14586, %v14426
  %v14652 = vsel %vm3974, %v14588, %v14428
  %v14654 = vsel %vm3974, %v14590, %v14430
  %v14656 = vsel %vm3974, %v14592, %v14432
  %v14658 = vsel %vm3974, %v14594, %v14434
  %v14660 = vsel %vm3974, %v14596, %v14436
  %v14662 = vsel %vm3974, %v14598, %v14438
  %v14664 = vsel %vm3974, %v14600, %v14440
  %v14666 = vsel %vm3974, %v14602, %v14442
  %v14668 = vsel %vm3974, %v14604, %v14444
  %v14670 = vsel %vm3974, %v14606, %v14446
  %v14672 = vsel %vm3974, %v14608, %v14448
  %v14674 = vsel %vm3974, %v14610, %v14450
  %v14676 = vsel %vm3974, %v14612, %v14452
  %v14678 = vsel %vm3974, %v14614, %v14454
  %v14680 = vsel %vm3974, %v14616, %v14456
  %v14682 = vsel %vm3974, %v14618, %v14458
  %v14684 = vsel %vm3974, %v14620, %v14460
  %v14686 = vsel %vm3974, %v14622, %v14462
  %v14688 = vsel %vm3974, %v14624, %v14464
  %v14690 = vsel %vm3974, %v14626, %v14466
  %v14692 = vsel %vm3974, %v14628, %v14468
  %v14694 = vsel %vm3974, %v14630, %v14470
  %v14696 = vsel %vm3974, %v14632, %v14472
  %v14698 = vsel %vm3974, %v14634, %v14474
  %v14700 = vsel %vm3974, %v14636, %v14476
  %v14702 = vsel %vm3974, %v14638, %v14478
  %v14704 = vsel %vm3974, %v14640, %v14480
  %s14705 = scalar_lea.vmem %s1, 24
  %v14706 = vld [vmem:[%s14705] sm:$0xf]
  %v14707 = vld [vmem:[%s14705 + $0x4] sm:$0xf]
  %v14710 = vunpack.c.l.b16 %v14706
  %v14711 = vunpack.c.l.b16 %v14707
  %v14712 = vpack.c.b16 %v14711, %v14710
  %v14714 = vsel %vm4053, %v14642, 0
  %v14716 = vsel %vm4053, %v14644, 0
  %v14718 = vsel %vm4053, %v14646, 0
  %v14720 = vsel %vm4053, %v14648, 0
  %v14722 = vsel %vm4053, %v14650, 0
  %v14724 = vsel %vm4053, %v14652, 0
  %v14726 = vsel %vm4053, %v14654, 0
  %v14728 = vsel %vm4053, %v14656, 0
  %v14730 = vsel %vm4053, %v14658, 0
  %v14732 = vsel %vm4053, %v14660, 0
  %v14734 = vsel %vm4053, %v14662, 0
  %v14736 = vsel %vm4053, %v14664, 0
  %v14738 = vsel %vm4053, %v14666, 0
  %v14740 = vsel %vm4053, %v14668, 0
  %v14742 = vsel %vm4053, %v14670, 0
  %v14744 = vsel %vm4053, %v14672, 0
  %v14746 = vsel %vm4053, %v14674, 0
  %v14748 = vsel %vm4053, %v14676, 0
  %v14750 = vsel %vm4053, %v14678, 0
  %v14752 = vsel %vm4053, %v14680, 0
  %v14754 = vsel %vm4053, %v14682, 0
  %v14756 = vsel %vm4053, %v14684, 0
  %v14758 = vsel %vm4053, %v14686, 0
  %v14760 = vsel %vm4053, %v14688, 0
  %v14762 = vsel %vm4053, %v14690, 0
  %v14764 = vsel %vm4053, %v14692, 0
  %v14766 = vsel %vm4053, %v14694, 0
  %v14768 = vsel %vm4053, %v14696, 0
  %v14770 = vsel %vm4053, %v14698, 0
  %v14772 = vsel %vm4053, %v14700, 0
  %v14774 = vsel %vm4053, %v14702, 0
  %v14776 = vsel %vm4053, %v14704, 0
  %14778 = vmatprep.subr.bf16.mxu0 0
  %14779 = vmatpush1.bf16.msra.mxu0 %v14712
  %14780 = vmatprep.subr.bf16.mxu0 0
  %14781 = vmatpush1.bf16.msra.mxu0 0
  %14782 = vmatprep.subr.bf16.mxu0 0
  %14783 = vmatpush1.bf16.msra.mxu0 0
  %14784 = vmatprep.subr.bf16.mxu0 0
  %14785 = vmatpush1.bf16.msra.mxu0 0
  %14786 = vmatprep.subr.bf16.mxu0 0
  %14787 = vmatpush1.bf16.msra.mxu0 0
  %14788 = vmatprep.subr.bf16.mxu0 0
  %14789 = vmatpush1.bf16.msra.mxu0 0
  %14790 = vmatprep.subr.bf16.mxu0 0
  %14791 = vmatpush1.bf16.msra.mxu0 0
  %14792 = vmatprep.subr.bf16.mxu0 0
  %14793 = vmatpush1.bf16.msra.mxu0 0
  %14794 = vmatprep.subr.bf16.mxu0 0
  %14795 = vmatpush1.bf16.msra.mxu0 0
  %14796 = vmatprep.subr.bf16.mxu0 0
  %14797 = vmatpush1.bf16.msra.mxu0 0
  %14798 = vmatprep.subr.bf16.mxu0 0
  %14799 = vmatpush1.bf16.msra.mxu0 0
  %14800 = vmatprep.subr.bf16.mxu0 0
  %14801 = vmatpush1.bf16.msra.mxu0 0
  %14802 = vmatprep.subr.bf16.mxu0 0
  %14803 = vmatpush1.bf16.msra.mxu0 0
  %14804 = vmatprep.subr.bf16.mxu0 0
  %14805 = vmatpush1.bf16.msra.mxu0 0
  %14806 = vmatprep.subr.bf16.mxu0 0
  %14807 = vmatpush1.bf16.msra.mxu0 0
  %14808 = vmatprep.subr.bf16.mxu0 0
  %14809 = vmatpush1.bf16.msra.mxu0 0
  %14810 = vmatprep.mubr.bf16.mxu0 0
  %14811 = vmatmul.mubr.bf16.gmra.mrb[0].mxu0 %v14714
  %v14812 = vpop.f32.mrb[0].mxu0
  %v14813 = vadd.f32 %v4045, %v14812
  %v14814 = vpop.f32.mrb[0].mxu0
  %v14815 = vpop.f32.mrb[0].mxu0
  %v14816 = vadd.f32 %v4045, %v14815
  %v14817 = vpop.f32.mrb[0].mxu0
  %14818 = vmatprep.mubr.bf16.mxu0 0
  %14819 = vmatmul.mubr.bf16.gmra.mrb[0].mxu0 %v14716
  %v14820 = vpop.f32.mrb[0].mxu0
  %v14821 = vadd.f32 %v4045, %v14820
  %v14822 = vpop.f32.mrb[0].mxu0
  %v14823 = vpop.f32.mrb[0].mxu0
  %v14824 = vadd.f32 %v4045, %v14823
  %v14825 = vpop.f32.mrb[0].mxu0
  %14826 = vmatprep.mubr.bf16.mxu0 0
  %14827 = vmatmul.mubr.bf16.gmra.mrb[0].mxu0 %v14718
  %v14828 = vpop.f32.mrb[0].mxu0
  %v14829 = vadd.f32 %v4045, %v14828
  %v14830 = vpop.f32.mrb[0].mxu0
  %v14831 = vpop.f32.mrb[0].mxu0
  %v14832 = vadd.f32 %v4045, %v14831
  %v14833 = vpop.f32.mrb[0].mxu0
  %14834 = vmatprep.mubr.bf16.mxu0 0
  %14835 = vmatmul.mubr.bf16.gmra.mrb[0].mxu0 %v14720
  %v14836 = vpop.f32.mrb[0].mxu0
  %v14837 = vadd.f32 %v4045, %v14836
  %v14838 = vpop.f32.mrb[0].mxu0
  %v14839 = vpop.f32.mrb[0].mxu0
  %v14840 = vadd.f32 %v4045, %v14839
  %v14841 = vpop.f32.mrb[0].mxu0
  %14842 = vmatprep.mubr.bf16.mxu0 0
  %14843 = vmatmul.mubr.bf16.gmra.mrb[0].mxu0 %v14722
  %v14844 = vpop.f32.mrb[0].mxu0
  %v14845 = vadd.f32 %v4045, %v14844
  %v14846 = vpop.f32.mrb[0].mxu0
  %v14847 = vpop.f32.mrb[0].mxu0
  %v14848 = vadd.f32 %v4045, %v14847
  %v14849 = vpop.f32.mrb[0].mxu0
  %14850 = vmatprep.mubr.bf16.mxu0 0
  %14851 = vmatmul.mubr.bf16.gmra.mrb[0].mxu0 %v14724
  %v14852 = vpop.f32.mrb[0].mxu0
  %v14853 = vadd.f32 %v4045, %v14852
  %v14854 = vpop.f32.mrb[0].mxu0
  %v14855 = vpop.f32.mrb[0].mxu0
  %v14856 = vadd.f32 %v4045, %v14855
  %v14857 = vpop.f32.mrb[0].mxu0
  %14858 = vmatprep.mubr.bf16.mxu0 0
  %14859 = vmatmul.mubr.bf16.gmra.mrb[0].mxu0 %v14726
  %v14860 = vpop.f32.mrb[0].mxu0
  %v14861 = vadd.f32 %v4045, %v14860
  %v14862 = vpop.f32.mrb[0].mxu0
  %v14863 = vpop.f32.mrb[0].mxu0
  %v14864 = vadd.f32 %v4045, %v14863
  %v14865 = vpop.f32.mrb[0].mxu0
  %14866 = vmatprep.mubr.bf16.mxu0 0
  %14867 = vmatmul.mubr.bf16.gmra.mrb[0].mxu0 %v14728
  %v14868 = vpop.f32.mrb[0].mxu0
  %v14869 = vadd.f32 %v4045, %v14868
  %v14870 = vpop.f32.mrb[0].mxu0
  %v14871 = vpop.f32.mrb[0].mxu0
  %v14872 = vadd.f32 %v4045, %v14871
  %v14873 = vpop.f32.mrb[0].mxu0
  %14874 = vmatprep.mubr.bf16.mxu0 0
  %14875 = vmatmul.mubr.bf16.gmra.mrb[0].mxu0 %v14730
  %v14876 = vpop.f32.mrb[0].mxu0
  %v14877 = vadd.f32 %v4045, %v14876
  %v14878 = vpop.f32.mrb[0].mxu0
  %v14879 = vpop.f32.mrb[0].mxu0
  %v14880 = vadd.f32 %v4045, %v14879
  %v14881 = vpop.f32.mrb[0].mxu0
  %14882 = vmatprep.mubr.bf16.mxu0 0
  %14883 = vmatmul.mubr.bf16.gmra.mrb[0].mxu0 %v14732
  %v14884 = vpop.f32.mrb[0].mxu0
  %v14885 = vadd.f32 %v4045, %v14884
  %v14886 = vpop.f32.mrb[0].mxu0
  %v14887 = vpop.f32.mrb[0].mxu0
  %v14888 = vadd.f32 %v4045, %v14887
  %v14889 = vpop.f32.mrb[0].mxu0
  %14890 = vmatprep.mubr.bf16.mxu0 0
  %14891 = vmatmul.mubr.bf16.gmra.mrb[0].mxu0 %v14734
  %v14892 = vpop.f32.mrb[0].mxu0
  %v14893 = vadd.f32 %v4045, %v14892
  %v14894 = vpop.f32.mrb[0].mxu0
  %v14895 = vpop.f32.mrb[0].mxu0
  %v14896 = vadd.f32 %v4045, %v14895
  %v14897 = vpop.f32.mrb[0].mxu0
  %14898 = vmatprep.mubr.bf16.mxu0 0
  %14899 = vmatmul.mubr.bf16.gmra.mrb[0].mxu0 %v14736
  %v14900 = vpop.f32.mrb[0].mxu0
  %v14901 = vadd.f32 %v4045, %v14900
  %v14902 = vpop.f32.mrb[0].mxu0
  %v14903 = vpop.f32.mrb[0].mxu0
  %v14904 = vadd.f32 %v4045, %v14903
  %v14905 = vpop.f32.mrb[0].mxu0
  %14906 = vmatprep.mubr.bf16.mxu0 0
  %14907 = vmatmul.mubr.bf16.gmra.mrb[0].mxu0 %v14738
  %v14908 = vpop.f32.mrb[0].mxu0
  %v14909 = vadd.f32 %v4045, %v14908
  %v14910 = vpop.f32.mrb[0].mxu0
  %v14911 = vpop.f32.mrb[0].mxu0
  %v14912 = vadd.f32 %v4045, %v14911
  %v14913 = vpop.f32.mrb[0].mxu0
  %14914 = vmatprep.mubr.bf16.mxu0 0
  %14915 = vmatmul.mubr.bf16.gmra.mrb[0].mxu0 %v14740
  %v14916 = vpop.f32.mrb[0].mxu0
  %v14917 = vadd.f32 %v4045, %v14916
  %v14918 = vpop.f32.mrb[0].mxu0
  %v14919 = vpop.f32.mrb[0].mxu0
  %v14920 = vadd.f32 %v4045, %v14919
  %v14921 = vpop.f32.mrb[0].mxu0
  %14922 = vmatprep.mubr.bf16.mxu0 0
  %14923 = vmatmul.mubr.bf16.gmra.mrb[0].mxu0 %v14742
  %v14924 = vpop.f32.mrb[0].mxu0
  %v14925 = vadd.f32 %v4045, %v14924
  %v14926 = vpop.f32.mrb[0].mxu0
  %v14927 = vpop.f32.mrb[0].mxu0
  %v14928 = vadd.f32 %v4045, %v14927
  %v14929 = vpop.f32.mrb[0].mxu0
  %14930 = vmatprep.mubr.bf16.mxu0 0
  %14931 = vmatmul.mubr.bf16.gmra.mrb[0].mxu0 %v14744
  %v14932 = vpop.f32.mrb[0].mxu0
  %v14933 = vadd.f32 %v4045, %v14932
  %v14934 = vpop.f32.mrb[0].mxu0
  %v14935 = vpop.f32.mrb[0].mxu0
  %v14936 = vadd.f32 %v4045, %v14935
  %v14937 = vpop.f32.mrb[0].mxu0
  %14938 = vmatprep.mubr.bf16.mxu0 0
  %14939 = vmatmul.mubr.bf16.gmra.mrb[0].mxu0 %v14746
  %v14940 = vpop.f32.mrb[0].mxu0
  %v14941 = vadd.f32 %v4045, %v14940
  %v14942 = vpop.f32.mrb[0].mxu0
  %v14943 = vpop.f32.mrb[0].mxu0
  %v14944 = vadd.f32 %v4045, %v14943
  %v14945 = vpop.f32.mrb[0].mxu0
  %14946 = vmatprep.mubr.bf16.mxu0 0
  %14947 = vmatmul.mubr.bf16.gmra.mrb[0].mxu0 %v14748
  %v14948 = vpop.f32.mrb[0].mxu0
  %v14949 = vadd.f32 %v4045, %v14948
  %v14950 = vpop.f32.mrb[0].mxu0
  %v14951 = vpop.f32.mrb[0].mxu0
  %v14952 = vadd.f32 %v4045, %v14951
  %v14953 = vpop.f32.mrb[0].mxu0
  %14954 = vmatprep.mubr.bf16.mxu0 0
  %14955 = vmatmul.mubr.bf16.gmra.mrb[0].mxu0 %v14750
  %v14956 = vpop.f32.mrb[0].mxu0
  %v14957 = vadd.f32 %v4045, %v14956
  %v14958 = vpop.f32.mrb[0].mxu0
  %v14959 = vpop.f32.mrb[0].mxu0
  %v14960 = vadd.f32 %v4045, %v14959
  %v14961 = vpop.f32.mrb[0].mxu0
  %14962 = vmatprep.mubr.bf16.mxu0 0
  %14963 = vmatmul.mubr.bf16.gmra.mrb[0].mxu0 %v14752
  %v14964 = vpop.f32.mrb[0].mxu0
  %v14965 = vadd.f32 %v4045, %v14964
  %v14966 = vpop.f32.mrb[0].mxu0
  %v14967 = vpop.f32.mrb[0].mxu0
  %v14968 = vadd.f32 %v4045, %v14967
  %v14969 = vpop.f32.mrb[0].mxu0
  %14970 = vmatprep.mubr.bf16.mxu0 0
  %14971 = vmatmul.mubr.bf16.gmra.mrb[0].mxu0 %v14754
  %v14972 = vpop.f32.mrb[0].mxu0
  %v14973 = vadd.f32 %v4045, %v14972
  %v14974 = vpop.f32.mrb[0].mxu0
  %v14975 = vpop.f32.mrb[0].mxu0
  %v14976 = vadd.f32 %v4045, %v14975
  %v14977 = vpop.f32.mrb[0].mxu0
  %14978 = vmatprep.mubr.bf16.mxu0 0
  %14979 = vmatmul.mubr.bf16.gmra.mrb[0].mxu0 %v14756
  %v14980 = vpop.f32.mrb[0].mxu0
  %v14981 = vadd.f32 %v4045, %v14980
  %v14982 = vpop.f32.mrb[0].mxu0
  %v14983 = vpop.f32.mrb[0].mxu0
  %v14984 = vadd.f32 %v4045, %v14983
  %v14985 = vpop.f32.mrb[0].mxu0
  %14986 = vmatprep.mubr.bf16.mxu0 0
  %14987 = vmatmul.mubr.bf16.gmra.mrb[0].mxu0 %v14758
  %v14988 = vpop.f32.mrb[0].mxu0
  %v14989 = vadd.f32 %v4045, %v14988
  %v14990 = vpop.f32.mrb[0].mxu0
  %v14991 = vpop.f32.mrb[0].mxu0
  %v14992 = vadd.f32 %v4045, %v14991
  %v14993 = vpop.f32.mrb[0].mxu0
  %14994 = vmatprep.mubr.bf16.mxu0 0
  %14995 = vmatmul.mubr.bf16.gmra.mrb[0].mxu0 %v14760
  %v14996 = vpop.f32.mrb[0].mxu0
  %v14997 = vadd.f32 %v4045, %v14996
  %v14998 = vpop.f32.mrb[0].mxu0
  %v14999 = vpop.f32.mrb[0].mxu0
  %v15000 = vadd.f32 %v4045, %v14999
  %v15001 = vpop.f32.mrb[0].mxu0
  %15002 = vmatprep.mubr.bf16.mxu0 0
  %15003 = vmatmul.mubr.bf16.gmra.mrb[0].mxu0 %v14762
  %v15004 = vpop.f32.mrb[0].mxu0
  %v15005 = vadd.f32 %v4045, %v15004
  %v15006 = vpop.f32.mrb[0].mxu0
  %v15007 = vpop.f32.mrb[0].mxu0
  %v15008 = vadd.f32 %v4045, %v15007
  %v15009 = vpop.f32.mrb[0].mxu0
  %15010 = vmatprep.mubr.bf16.mxu0 0
  %15011 = vmatmul.mubr.bf16.gmra.mrb[0].mxu0 %v14764
  %v15012 = vpop.f32.mrb[0].mxu0
  %v15013 = vadd.f32 %v4045, %v15012
  %v15014 = vpop.f32.mrb[0].mxu0
  %v15015 = vpop.f32.mrb[0].mxu0
  %v15016 = vadd.f32 %v4045, %v15015
  %v15017 = vpop.f32.mrb[0].mxu0
  %15018 = vmatprep.mubr.bf16.mxu0 0
  %15019 = vmatmul.mubr.bf16.gmra.mrb[0].mxu0 %v14766
  %v15020 = vpop.f32.mrb[0].mxu0
  %v15021 = vadd.f32 %v4045, %v15020
  %v15022 = vpop.f32.mrb[0].mxu0
  %v15023 = vpop.f32.mrb[0].mxu0
  %v15024 = vadd.f32 %v4045, %v15023
  %v15025 = vpop.f32.mrb[0].mxu0
  %15026 = vmatprep.mubr.bf16.mxu0 0
  %15027 = vmatmul.mubr.bf16.gmra.mrb[0].mxu0 %v14768
  %v15028 = vpop.f32.mrb[0].mxu0
  %v15029 = vadd.f32 %v4045, %v15028
  %v15030 = vpop.f32.mrb[0].mxu0
  %v15031 = vpop.f32.mrb[0].mxu0
  %v15032 = vadd.f32 %v4045, %v15031
  %v15033 = vpop.f32.mrb[0].mxu0
  %15034 = vmatprep.mubr.bf16.mxu0 0
  %15035 = vmatmul.mubr.bf16.gmra.mrb[0].mxu0 %v14770
  %v15036 = vpop.f32.mrb[0].mxu0
  %v15037 = vadd.f32 %v4045, %v15036
  %v15038 = vpop.f32.mrb[0].mxu0
  %v15039 = vpop.f32.mrb[0].mxu0
  %v15040 = vadd.f32 %v4045, %v15039
  %v15041 = vpop.f32.mrb[0].mxu0
  %15042 = vmatprep.mubr.bf16.mxu0 0
  %15043 = vmatmul.mubr.bf16.gmra.mrb[0].mxu0 %v14772
  %v15044 = vpop.f32.mrb[0].mxu0
  %v15045 = vadd.f32 %v4045, %v15044
  %v15046 = vpop.f32.mrb[0].mxu0
  %v15047 = vpop.f32.mrb[0].mxu0
  %v15048 = vadd.f32 %v4045, %v15047
  %v15049 = vpop.f32.mrb[0].mxu0
  %15050 = vmatprep.mubr.bf16.mxu0 0
  %15051 = vmatmul.mubr.bf16.gmra.mrb[0].mxu0 %v14774
  %v15052 = vpop.f32.mrb[0].mxu0
  %v15053 = vadd.f32 %v4045, %v15052
  %v15054 = vpop.f32.mrb[0].mxu0
  %v15055 = vpop.f32.mrb[0].mxu0
  %v15056 = vadd.f32 %v4045, %v15055
  %v15057 = vpop.f32.mrb[0].mxu0
  %15058 = vmatprep.mubr.bf16.mxu0 0
  %15059 = vmatmul.mubr.bf16.gmra.mrb[0].mxu0 %v14776
  %v15060 = vpop.f32.mrb[0].mxu0
  %v15061 = vadd.f32 %v4045, %v15060
  %v15062 = vpop.f32.mrb[0].mxu0
  %v15063 = vpop.f32.mrb[0].mxu0
  %v15064 = vadd.f32 %v4045, %v15063
  %v15065 = vpop.f32.mrb[0].mxu0
  %15066 = vdwg.mxu0
  %15131 = vrot.lane.b32.xlu0 %v14813, 4
  %v15132 = vpop.permute.xlu0 %15131
  %15133 = vrot.lane.b32.xlu0 %v14816, 4
  %v15134 = vpop.permute.xlu0 %15133
  %15135 = vrot.lane.b32.xlu0 %v14821, 4
  %v15136 = vpop.permute.xlu0 %15135
  %15137 = vrot.lane.b32.xlu0 %v14824, 4
  %v15138 = vpop.permute.xlu0 %15137
  %15139 = vrot.lane.b32.xlu0 %v14829, 4
  %v15140 = vpop.permute.xlu0 %15139
  %15141 = vrot.lane.b32.xlu0 %v14832, 4
  %v15142 = vpop.permute.xlu0 %15141
  %15143 = vrot.lane.b32.xlu0 %v14837, 4
  %v15144 = vpop.permute.xlu0 %15143
  %15145 = vrot.lane.b32.xlu0 %v14840, 4
  %v15146 = vpop.permute.xlu0 %15145
  %15147 = vrot.lane.b32.xlu0 %v14845, 4
  %v15148 = vpop.permute.xlu0 %15147
  %15149 = vrot.lane.b32.xlu0 %v14848, 4
  %v15150 = vpop.permute.xlu0 %15149
  %15151 = vrot.lane.b32.xlu0 %v14853, 4
  %v15152 = vpop.permute.xlu0 %15151
  %15153 = vrot.lane.b32.xlu0 %v14856, 4
  %v15154 = vpop.permute.xlu0 %15153
  %15155 = vrot.lane.b32.xlu0 %v14861, 4
  %v15156 = vpop.permute.xlu0 %15155
  %15157 = vrot.lane.b32.xlu0 %v14864, 4
  %v15158 = vpop.permute.xlu0 %15157
  %15159 = vrot.lane.b32.xlu0 %v14869, 4
  %v15160 = vpop.permute.xlu0 %15159
  %15161 = vrot.lane.b32.xlu0 %v14872, 4
  %v15162 = vpop.permute.xlu0 %15161
  %15163 = vrot.lane.b32.xlu0 %v14877, 4
  %v15164 = vpop.permute.xlu0 %15163
  %15165 = vrot.lane.b32.xlu0 %v14880, 4
  %v15166 = vpop.permute.xlu0 %15165
  %15167 = vrot.lane.b32.xlu0 %v14885, 4
  %v15168 = vpop.permute.xlu0 %15167
  %15169 = vrot.lane.b32.xlu0 %v14888, 4
  %v15170 = vpop.permute.xlu0 %15169
  %15171 = vrot.lane.b32.xlu0 %v14893, 4
  %v15172 = vpop.permute.xlu0 %15171
  %15173 = vrot.lane.b32.xlu0 %v14896, 4
  %v15174 = vpop.permute.xlu0 %15173
  %15175 = vrot.lane.b32.xlu0 %v14901, 4
  %v15176 = vpop.permute.xlu0 %15175
  %15177 = vrot.lane.b32.xlu0 %v14904, 4
  %v15178 = vpop.permute.xlu0 %15177
  %15179 = vrot.lane.b32.xlu0 %v14909, 4
  %v15180 = vpop.permute.xlu0 %15179
  %15181 = vrot.lane.b32.xlu0 %v14912, 4
  %v15182 = vpop.permute.xlu0 %15181
  %15183 = vrot.lane.b32.xlu0 %v14917, 4
  %v15184 = vpop.permute.xlu0 %15183
  %15185 = vrot.lane.b32.xlu0 %v14920, 4
  %v15186 = vpop.permute.xlu0 %15185
  %15187 = vrot.lane.b32.xlu0 %v14925, 4
  %v15188 = vpop.permute.xlu0 %15187
  %15189 = vrot.lane.b32.xlu0 %v14928, 4
  %v15190 = vpop.permute.xlu0 %15189
  %15191 = vrot.lane.b32.xlu0 %v14933, 4
  %v15192 = vpop.permute.xlu0 %15191
  %15193 = vrot.lane.b32.xlu0 %v14936, 4
  %v15194 = vpop.permute.xlu0 %15193
  %15195 = vrot.lane.b32.xlu0 %v14941, 4
  %v15196 = vpop.permute.xlu0 %15195
  %15197 = vrot.lane.b32.xlu0 %v14944, 4
  %v15198 = vpop.permute.xlu0 %15197
  %15199 = vrot.lane.b32.xlu0 %v14949, 4
  %v15200 = vpop.permute.xlu0 %15199
  %15201 = vrot.lane.b32.xlu0 %v14952, 4
  %v15202 = vpop.permute.xlu0 %15201
  %15203 = vrot.lane.b32.xlu0 %v14957, 4
  %v15204 = vpop.permute.xlu0 %15203
  %15205 = vrot.lane.b32.xlu0 %v14960, 4
  %v15206 = vpop.permute.xlu0 %15205
  %15207 = vrot.lane.b32.xlu0 %v14965, 4
  %v15208 = vpop.permute.xlu0 %15207
  %15209 = vrot.lane.b32.xlu0 %v14968, 4
  %v15210 = vpop.permute.xlu0 %15209
  %15211 = vrot.lane.b32.xlu0 %v14973, 4
  %v15212 = vpop.permute.xlu0 %15211
  %15213 = vrot.lane.b32.xlu0 %v14976, 4
  %v15214 = vpop.permute.xlu0 %15213
  %15215 = vrot.lane.b32.xlu0 %v14981, 4
  %v15216 = vpop.permute.xlu0 %15215
  %15217 = vrot.lane.b32.xlu0 %v14984, 4
  %v15218 = vpop.permute.xlu0 %15217
  %15219 = vrot.lane.b32.xlu0 %v14989, 4
  %v15220 = vpop.permute.xlu0 %15219
  %15221 = vrot.lane.b32.xlu0 %v14992, 4
  %v15222 = vpop.permute.xlu0 %15221
  %15223 = vrot.lane.b32.xlu0 %v14997, 4
  %v15224 = vpop.permute.xlu0 %15223
  %15225 = vrot.lane.b32.xlu0 %v15000, 4
  %v15226 = vpop.permute.xlu0 %15225
  %15227 = vrot.lane.b32.xlu0 %v15005, 4
  %v15228 = vpop.permute.xlu0 %15227
  %15229 = vrot.lane.b32.xlu0 %v15008, 4
  %v15230 = vpop.permute.xlu0 %15229
  %15231 = vrot.lane.b32.xlu0 %v15013, 4
  %v15232 = vpop.permute.xlu0 %15231
  %15233 = vrot.lane.b32.xlu0 %v15016, 4
  %v15234 = vpop.permute.xlu0 %15233
  %15235 = vrot.lane.b32.xlu0 %v15021, 4
  %v15236 = vpop.permute.xlu0 %15235
  %15237 = vrot.lane.b32.xlu0 %v15024, 4
  %v15238 = vpop.permute.xlu0 %15237
  %15239 = vrot.lane.b32.xlu0 %v15029, 4
  %v15240 = vpop.permute.xlu0 %15239
  %15241 = vrot.lane.b32.xlu0 %v15032, 4
  %v15242 = vpop.permute.xlu0 %15241
  %15243 = vrot.lane.b32.xlu0 %v15037, 4
  %v15244 = vpop.permute.xlu0 %15243
  %15245 = vrot.lane.b32.xlu0 %v15040, 4
  %v15246 = vpop.permute.xlu0 %15245
  %15247 = vrot.lane.b32.xlu0 %v15045, 4
  %v15248 = vpop.permute.xlu0 %15247
  %15249 = vrot.lane.b32.xlu0 %v15048, 4
  %v15250 = vpop.permute.xlu0 %15249
  %15251 = vrot.lane.b32.xlu0 %v15053, 4
  %v15252 = vpop.permute.xlu0 %15251
  %15253 = vrot.lane.b32.xlu0 %v15056, 4
  %v15254 = vpop.permute.xlu0 %15253
  %15255 = vrot.lane.b32.xlu0 %v15061, 4
  %v15256 = vpop.permute.xlu0 %15255
  %15257 = vrot.lane.b32.xlu0 %v15064, 4
  %v15258 = vpop.permute.xlu0 %15257
  %15323 = vst.msk [vmem:[%s11408] sm:$0xff] %vm8324, %v15132
  %15324 = vst.msk [vmem:[%s11408 + $0x8] sm:$0xff] %vm8324, %v15134
  %15325 = vst.msk [vmem:[%s11408 + $0x20] sm:$0xff] %vm8324, %v15136
  %15326 = vst.msk [vmem:[%s11408 + $0x28] sm:$0xff] %vm8324, %v15138
  %15327 = vst.msk [vmem:[%s11408 + $0x40] sm:$0xff] %vm8324, %v15140
  %15328 = vst.msk [vmem:[%s11408 + $0x48] sm:$0xff] %vm8324, %v15142
  %15329 = vst.msk [vmem:[%s11408 + $0x60] sm:$0xff] %vm8324, %v15144
  %15330 = vst.msk [vmem:[%s11408 + $0x68] sm:$0xff] %vm8324, %v15146
  %15331 = vst.msk [vmem:[%s11408 + $0x80] sm:$0xff] %vm8324, %v15148
  %15332 = vst.msk [vmem:[%s11408 + $0x88] sm:$0xff] %vm8324, %v15150
  %15333 = vst.msk [vmem:[%s11408 + $0xa0] sm:$0xff] %vm8324, %v15152
  %15334 = vst.msk [vmem:[%s11408 + $0xa8] sm:$0xff] %vm8324, %v15154
  %15335 = vst.msk [vmem:[%s11408 + $0xc0] sm:$0xff] %vm8324, %v15156
  %15336 = vst.msk [vmem:[%s11408 + $0xc8] sm:$0xff] %vm8324, %v15158
  %15337 = vst.msk [vmem:[%s11408 + $0xe0] sm:$0xff] %vm8324, %v15160
  %15338 = vst.msk [vmem:[%s11408 + $0xe8] sm:$0xff] %vm8324, %v15162
  %15339 = vst.msk [vmem:[%s11408 + $0x100] sm:$0xff] %vm8324, %v15164
  %15340 = vst.msk [vmem:[%s11408 + $0x108] sm:$0xff] %vm8324, %v15166
  %15341 = vst.msk [vmem:[%s11408 + $0x120] sm:$0xff] %vm8324, %v15168
  %15342 = vst.msk [vmem:[%s11408 + $0x128] sm:$0xff] %vm8324, %v15170
  %15343 = vst.msk [vmem:[%s11408 + $0x140] sm:$0xff] %vm8324, %v15172
  %15344 = vst.msk [vmem:[%s11408 + $0x148] sm:$0xff] %vm8324, %v15174
  %15345 = vst.msk [vmem:[%s11408 + $0x160] sm:$0xff] %vm8324, %v15176
  %15346 = vst.msk [vmem:[%s11408 + $0x168] sm:$0xff] %vm8324, %v15178
  %15347 = vst.msk [vmem:[%s11408 + $0x180] sm:$0xff] %vm8324, %v15180
  %15348 = vst.msk [vmem:[%s11408 + $0x188] sm:$0xff] %vm8324, %v15182
  %15349 = vst.msk [vmem:[%s11408 + $0x1a0] sm:$0xff] %vm8324, %v15184
  %15350 = vst.msk [vmem:[%s11408 + $0x1a8] sm:$0xff] %vm8324, %v15186
  %15351 = vst.msk [vmem:[%s11408 + $0x1c0] sm:$0xff] %vm8324, %v15188
  %15352 = vst.msk [vmem:[%s11408 + $0x1c8] sm:$0xff] %vm8324, %v15190
  %15353 = vst.msk [vmem:[%s11408 + $0x1e0] sm:$0xff] %vm8324, %v15192
  %15354 = vst.msk [vmem:[%s11408 + $0x1e8] sm:$0xff] %vm8324, %v15194
  %15355 = vst.msk [vmem:[%s11408 + $0x200] sm:$0xff] %vm8324, %v15196
  %15356 = vst.msk [vmem:[%s11408 + $0x208] sm:$0xff] %vm8324, %v15198
  %15357 = vst.msk [vmem:[%s11408 + $0x220] sm:$0xff] %vm8324, %v15200
  %15358 = vst.msk [vmem:[%s11408 + $0x228] sm:$0xff] %vm8324, %v15202
  %15359 = vst.msk [vmem:[%s11408 + $0x240] sm:$0xff] %vm8324, %v15204
  %15360 = vst.msk [vmem:[%s11408 + $0x248] sm:$0xff] %vm8324, %v15206
  %15361 = vst.msk [vmem:[%s11408 + $0x260] sm:$0xff] %vm8324, %v15208
  %15362 = vst.msk [vmem:[%s11408 + $0x268] sm:$0xff] %vm8324, %v15210
  %15363 = vst.msk [vmem:[%s11408 + $0x280] sm:$0xff] %vm8324, %v15212
  %15364 = vst.msk [vmem:[%s11408 + $0x288] sm:$0xff] %vm8324, %v15214
  %15365 = vst.msk [vmem:[%s11408 + $0x2a0] sm:$0xff] %vm8324, %v15216
  %15366 = vst.msk [vmem:[%s11408 + $0x2a8] sm:$0xff] %vm8324, %v15218
  %15367 = vst.msk [vmem:[%s11408 + $0x2c0] sm:$0xff] %vm8324, %v15220
  %15368 = vst.msk [vmem:[%s11408 + $0x2c8] sm:$0xff] %vm8324, %v15222
  %15369 = vst.msk [vmem:[%s11408 + $0x2e0] sm:$0xff] %vm8324, %v15224
  %15370 = vst.msk [vmem:[%s11408 + $0x2e8] sm:$0xff] %vm8324, %v15226
  %15371 = vst.msk [vmem:[%s11408 + $0x300] sm:$0xff] %vm8324, %v15228
  %15372 = vst.msk [vmem:[%s11408 + $0x308] sm:$0xff] %vm8324, %v15230
  %15373 = vst.msk [vmem:[%s11408 + $0x320] sm:$0xff] %vm8324, %v15232
  %15374 = vst.msk [vmem:[%s11408 + $0x328] sm:$0xff] %vm8324, %v15234
  %15375 = vst.msk [vmem:[%s11408 + $0x340] sm:$0xff] %vm8324, %v15236
  %15376 = vst.msk [vmem:[%s11408 + $0x348] sm:$0xff] %vm8324, %v15238
  %15377 = vst.msk [vmem:[%s11408 + $0x360] sm:$0xff] %vm8324, %v15240
  %15378 = vst.msk [vmem:[%s11408 + $0x368] sm:$0xff] %vm8324, %v15242
  %15379 = vst.msk [vmem:[%s11408 + $0x380] sm:$0xff] %vm8324, %v15244
  %15380 = vst.msk [vmem:[%s11408 + $0x388] sm:$0xff] %vm8324, %v15246
  %15381 = vst.msk [vmem:[%s11408 + $0x3a0] sm:$0xff] %vm8324, %v15248
  %15382 = vst.msk [vmem:[%s11408 + $0x3a8] sm:$0xff] %vm8324, %v15250
  %15383 = vst.msk [vmem:[%s11408 + $0x3c0] sm:$0xff] %vm8324, %v15252
  %15384 = vst.msk [vmem:[%s11408 + $0x3c8] sm:$0xff] %vm8324, %v15254
  %15385 = vst.msk [vmem:[%s11408 + $0x3e0] sm:$0xff] %vm8324, %v15256
  %15386 = vst.msk [vmem:[%s11408 + $0x3e8] sm:$0xff] %vm8324, %v15258
  // Predicated region
  $region14: #{tpu_custom_call.1} parent=0 // pred_check
    _
  $region15: #{tpu_custom_call.1} parent=0 // pred_check_branch
    %15388 = sbr.rel (0) target = $region17
  $region16: #{tpu_custom_call.1} parent=0 // pred_region
    _
  $region17: #{tpu_custom_call.1} parent=0 // pred_fallthru
    _
  // Predicated region
  $region18: #{tpu_custom_call.1} parent=0 // pred_check
    _
  $region19: #{tpu_custom_call.1} parent=0 // pred_check_branch
    %15390 = sbr.rel (0) target = $region21
  $region20: #{tpu_custom_call.1} parent=0 // pred_region
    _
  $region21: #{tpu_custom_call.1} parent=0 // pred_fallthru
    _

</llo_original>
